<compile_context>
chip_gen: v6e
topology: v6e:2x2x1
jax: 0.10.0
libtpu: 0.0.40
codegen_flags: <defaults>
</compile_context>

<pallas_src>
import math

import jax
import jax.numpy as jnp
import numpy as np
from jax.experimental import pallas as pl
from jax.experimental.pallas import tpu as pltpu

# ----- model hyper-parameters (from the PyTorch script) ----------------------
EMBED = 256
HEADS = 8
HEAD_DIM = EMBED // HEADS          # 32
FF_DIM = EMBED * 2                 # 512
LN_EPS = 1e-5
MASK_BIAS = 1e9                    # additive bias magnitude for masked positions


# =============================================================================
# Pallas kernel (Bt batch elements per grid step)
# =============================================================================
def _decoder_layer_kernel(
    # data (one batch tile per grid step)
    x_ref,        # (Bt, S, E) f32   decoder input (residual stream + attn-1 q/k/v source)
    enc_ref,      # (Bt, S, E) bf16  encoder output (attn-2 k/v source)
    tbias_ref,    # (Bt, S, S) f32   additive target-mask bias (0 keep, -1e9 mask)
    sbias_ref,    # (Bt, S, S) f32   additive source-mask bias
    # masked self-attention weights
    wq1_ref, wk1_ref, wv1_ref, wo1_ref, bo1_ref, ln1w_ref, ln1b_ref,
    # encoder-decoder attention weights
    wq2_ref, wk2_ref, wv2_ref, wo2_ref, bo2_ref, ln2w_ref, ln2b_ref,
    # feed-forward + final layer norm
    w1_ref, b1_ref, w2_ref, b2_ref, ln3w_ref, ln3b_ref,
    # output
    out_ref,      # (Bt, S, E) f32
):
    bt, s, _ = x_ref.shape
    rows = bt * s

    x = x_ref[...].reshape(rows, EMBED)            # (Bt*S, E) f32 residual stream
    x_bf = x.astype(jnp.bfloat16)
    enc_bf = enc_ref[...].reshape(rows, EMBED)     # (Bt*S, E) bf16
    tbias = tbias_ref[...]                         # (Bt, S, S) f32
    sbias = sbias_ref[...]

    def layer_norm(h, w_r, b_r):
        mean = jnp.mean(h, axis=-1, keepdims=True)
        var = jnp.mean(jnp.square(h - mean), axis=-1, keepdims=True)
        return (h - mean) * jax.lax.rsqrt(var + LN_EPS) * w_r[...] + b_r[...]

    def to_heads(flat_f32):
        # (Bt*S, E) f32 -> (Bt*H, S, D) bf16, head-major for the leading-batch einsums.
        # TODO(synk): replace the static lane slices + concat with pltpu.einshape
        # once a 4-D "(bs)(hd)->(bh)sd" relayout is confirmed to lower; the copies
        # here are tiny (<= a few KiB each) relative to the 256-deep matmuls.
        t = flat_f32.astype(jnp.bfloat16).reshape(bt, s, EMBED)
        parts = [t[:, None, :, h * HEAD_DIM:(h + 1) * HEAD_DIM] for h in range(HEADS)]
        hm = jnp.concatenate(parts, axis=1)                        # (Bt, H, S, D)
        return hm.reshape(bt * HEADS, s, HEAD_DIM)

    def from_heads(ctx_f32):
        # (Bt*H, S, D) f32 -> (Bt*S, E) bf16 lane-dense (head-major column order),
        # so the output projection is ONE K=256 MXU matmul.
        c = ctx_f32.astype(jnp.bfloat16).reshape(bt, HEADS, s, HEAD_DIM)
        flat = jnp.concatenate([c[:, h, :, :] for h in range(HEADS)], axis=-1)
        return flat.reshape(rows, EMBED)

    def mha(q_src_bf, kv_src_bf, bias, wq_r, wk_r, wv_r, wo_r, bo_r):
        # Lane-dense block-diagonal QKV projections: one (Bt*S,256)@(256,256) each,
        # bf16 operands, f32 accumulation.  1/sqrt(E) is folded into wq.
        q = jnp.dot(q_src_bf, wq_r[...], preferred_element_type=jnp.float32)
        k = jnp.dot(kv_src_bf, wk_r[...], preferred_element_type=jnp.float32)
        v = jnp.dot(kv_src_bf, wv_r[...], preferred_element_type=jnp.float32)

        qh, kh, vh = to_heads(q), to_heads(k), to_heads(v)         # (Bt*H, S, D) bf16

        # batched scores for all (batch, head) pairs, single leading batch dim
        scores = jnp.einsum("zqd,zkd->zqk", qh, kh,
                            preferred_element_type=jnp.float32)    # (Bt*H, S, S)
        # additive mask bias applied once per batch element, broadcast over heads.
        # NOTE: for a fully-masked row the reference degrades to uniform attention
        # while this formulation ignores the mask for that row; neither occurs
        # with causal / all-ones masks.
        scores = scores.reshape(bt, HEADS, s, s) + bias[:, None, :, :]

        m = jnp.max(scores, axis=-1, keepdims=True)
        p = jnp.exp(scores - m)
        p = p * pl.reciprocal(jnp.sum(p, axis=-1, keepdims=True), approx=True)
        p = p.reshape(bt * HEADS, s, s).astype(jnp.bfloat16)

        ctx = jnp.einsum("zqk,zkd->zqd", p, vh,
                         preferred_element_type=jnp.float32)       # (Bt*H, S, D)

        # merged output projection: one (Bt*S,256)@(256,256) matmul + bias
        ctx_flat = from_heads(ctx)                                 # (Bt*S, E) bf16
        return jnp.dot(ctx_flat, wo_r[...],
                       preferred_element_type=jnp.float32) + bo_r[...]

    # ---- 1. masked self-attention + AddNorm ---------------------------------
    msa = mha(x_bf, x_bf, tbias, wq1_ref, wk1_ref, wv1_ref, wo1_ref, bo1_ref)
    out1 = layer_norm(x + msa, ln1w_ref, ln1b_ref)                 # (Bt*S, E) f32

    # ---- 2. encoder-decoder attention + AddNorm ------------------------------
    eda = mha(out1.astype(jnp.bfloat16), enc_bf, sbias,
              wq2_ref, wk2_ref, wv2_ref, wo2_ref, bo2_ref)
    out2 = layer_norm(out1 + eda, ln2w_ref, ln2b_ref)

    # ---- 3. feed-forward + AddNorm -------------------------------------------
    h1 = jnp.dot(out2.astype(jnp.bfloat16), w1_ref[...],
                 preferred_element_type=jnp.float32) + b1_ref[...]
    h1 = jnp.maximum(h1, 0.0)
    ff = jnp.dot(h1.astype(jnp.bfloat16), w2_ref[...],
                 preferred_element_type=jnp.float32) + b2_ref[...]
    out3 = layer_norm(out2 + ff, ln3w_ref, ln3b_ref)

    out_ref[...] = out3.reshape(bt, s, EMBED).astype(out_ref.dtype)


# =============================================================================
# Wrapper
# =============================================================================
def _pick_block_batch(n, max_bt=8):
    """Largest batch tile <= max_bt dividing n that leaves >= 2 grid steps
    (keeps both v7x TensorCores busy); falls back to 1."""
    if n <= 1:
        return 1
    for bt in range(min(n // 2, max_bt), 0, -1):
        if n % bt == 0:
            return bt
    return 1


def decoder_layer_pallas(params, x, encoder_output, src_mask, tgt_mask,
                         block_batch=None):
    N, S, E = x.shape
    assert E == EMBED
    f32, bf16 = jnp.float32, jnp.bfloat16
    scale = 1.0 / math.sqrt(EMBED)

    bt = block_batch if block_batch is not None else _pick_block_batch(N)
    assert N % bt == 0

    eye = jnp.eye(HEADS, dtype=f32)

    def attn_weights(p):
        # block-diagonal kron(I_H, W.T): shared per-head (D,D) weight applied to the
        # lane-dense (.., 256) activations as ONE (256,256) bf16 MXU tile.  The 87.5%
        # structural zeros cost nothing while all activation traffic is lane-dense.
        return (
            jnp.kron(eye, p["wq"].T * scale).astype(bf16),   # (E,E), scale folded
            jnp.kron(eye, p["wk"].T).astype(bf16),            # (E,E)
            jnp.kron(eye, p["wv"].T).astype(bf16),            # (E,E)
            p["wo"].T.astype(bf16),                           # (E,E)
            p["bo"].reshape(1, EMBED).astype(f32),
        )

    weight_args = (
        *attn_weights(params["att1"]),
        params["ln1_w"].reshape(1, E).astype(f32), params["ln1_b"].reshape(1, E).astype(f32),
        *attn_weights(params["att2"]),
        params["ln2_w"].reshape(1, E).astype(f32), params["ln2_b"].reshape(1, E).astype(f32),
        params["w1"].T.astype(bf16), params["b1"].reshape(1, FF_DIM).astype(f32),
        params["w2"].T.astype(bf16), params["b2"].reshape(1, E).astype(f32),
        params["ln3_w"].reshape(1, E).astype(f32), params["ln3_b"].reshape(1, E).astype(f32),
    )

    # compact additive mask bias (0 = keep, -1e9 = masked).
    # TODO(synk): when tgt_mask is known-causal it can be generated in-kernel with
    # broadcasted_iota and this HBM stream dropped entirely.
    tgt_bias = ((tgt_mask - 1.0) * MASK_BIAS).astype(f32)
    src_bias = ((src_mask - 1.0) * MASK_BIAS).astype(f32)

    data_args = (x.astype(f32), encoder_output.astype(bf16), tgt_bias, src_bias)
    data_specs = [
        pl.BlockSpec((bt, S, E), lambda b: (b, 0, 0)),   # x (single f32 stream)
        pl.BlockSpec((bt, S, E), lambda b: (b, 0, 0)),   # encoder output (bf16)
        pl.BlockSpec((bt, S, S), lambda b: (b, 0, 0)),   # tgt bias
        pl.BlockSpec((bt, S, S), lambda b: (b, 0, 0)),   # src bias
    ]

    def const_spec(a):
        return pl.BlockSpec(a.shape, lambda b, _n=a.ndim: (0,) * _n)

    weight_specs = [const_spec(w) for w in weight_args]

    return pl.pallas_call(
        _decoder_layer_kernel,
        out_shape=jax.ShapeDtypeStruct((N, S, E), jnp.float32),
        grid_spec=pltpu.PrefetchScalarGridSpec(
            num_scalar_prefetch=0,
            grid=(N // bt,),
            in_specs=data_specs + weight_specs,
            out_specs=pl.BlockSpec((bt, S, E), lambda b: (b, 0, 0)),
        ),
        compiler_params=pltpu.CompilerParams(
            dimension_semantics=("parallel",),      # batch tiles across TCs on v7x
            vmem_limit_bytes=32 * 1024 * 1024,      # well under v7x's 64 MiB
        ),
    )(*data_args, *weight_args)


# =============================================================================
# Pure-JAX reference (mirrors the PyTorch forward exactly, f32)
# =============================================================================
def _self_attention_ref(p, values, keys, query, mask):
    N, S, _ = query.shape
    v = values.reshape(N, S, HEADS, HEAD_DIM) @ p["wv"].T
    k = keys.reshape(N, S, HEADS, HEAD_DIM) @ p["wk"].T
    q = query.reshape(N, S, HEADS, HEAD_DIM) @ p["wq"].T
    energy = jnp.einsum("nqhd,nkhd->nhqk", q, k)
    energy = jnp.where(mask[:, None, :, :] == 0, -1e20, energy)
    attn = jax.nn.softmax(energy / (float(EMBED) ** 0.5), axis=-1)
    out = jnp.einsum("nhqk,nkhd->nqhd", attn, v).reshape(N, S, EMBED)
    return out @ p["wo"].T + p["bo"]


def _layer_norm_ref(h, w, b):
    m = h.mean(-1, keepdims=True)
    var = ((h - m) ** 2).mean(-1, keepdims=True)
    return (h - m) / jnp.sqrt(var + LN_EPS) * w + b


def decoder_layer_ref(params, x, encoder_output, src_mask, tgt_mask):
    msa = _self_attention_ref(params["att1"], x, x, x, tgt_mask)
    out1 = _layer_norm_ref(x + msa, params["ln1_w"], params["ln1_b"])
    eda = _self_attention_ref(params["att2"], encoder_output, encoder_output,
                              out1, src_mask)
    out2 = _layer_norm_ref(out1 + eda, params["ln2_w"], params["ln2_b"])
    h1 = jnp.maximum(out2 @ params["w1"].T + params["b1"], 0.0)
    ff = h1 @ params["w2"].T + params["b2"]
    return _layer_norm_ref(out2 + ff, params["ln3_w"], params["ln3_b"])


# =============================================================================
# Parameter construction (deterministic, synthetic)
# =============================================================================
def make_params(key):
    ks = iter(jax.random.split(key, 32))

    def rnd(shape, scale=0.05):
        return scale * jax.random.normal(next(ks), shape, dtype=jnp.float32)

    def attn_params():
        return {
            "wq": rnd((HEAD_DIM, HEAD_DIM)),   # torch Linear weight (out, in)
            "wk": rnd((HEAD_DIM, HEAD_DIM)),
            "wv": rnd((HEAD_DIM, HEAD_DIM)),
            "wo": rnd((EMBED, EMBED)),
            "bo": rnd((EMBED,)),
        }

    return {
        "att1": attn_params(),
        "ln1_w": 1.0 + rnd((EMBED,)), "ln1_b": rnd((EMBED,)),
        "att2": attn_params(),
        "ln2_w": 1.0 + rnd((EMBED,)), "ln2_b": rnd((EMBED,)),
        "w1": rnd((FF_DIM, EMBED)), "b1": rnd((FF_DIM,)),
        "w2": rnd((EMBED, FF_DIM)), "b2": rnd((EMBED,)),
        "ln3_w": 1.0 + rnd((EMBED,)), "ln3_b": rnd((EMBED,)),
    }


# =============================================================================
if __name__ == "__main__":
    N, S = 4, 8
    key = jax.random.PRNGKey(0)
    kp, kx, ke = jax.random.split(key, 3)

    params = make_params(kp)
    x = jax.random.normal(kx, (N, S, EMBED), dtype=jnp.float32)
    enc = jax.random.normal(ke, (N, S, EMBED), dtype=jnp.float32)

    # tgt_mask: causal (lower triangular); src_mask: all ones.  1=keep, 0=mask.
    tgt_mask = jnp.tril(jnp.ones((S, S), dtype=jnp.float32))[None].repeat(N, 0)
    src_mask = jnp.ones((N, S, S), dtype=jnp.float32)

    out = jax.block_until_ready(decoder_layer_pallas(params, x, enc, src_mask, tgt_mask))
    ref = jax.block_until_ready(decoder_layer_ref(params, x, enc, src_mask, tgt_mask))

    # bf16 matmuls with f32 accumulation (LN / softmax / residuals stay f32).
    np.testing.assert_allclose(np.asarray(out), np.asarray(ref), rtol=5e-2, atol=5e-2)

    print("KERNEL_OK")
</pallas_src>

<mosaic_0001>
module attributes {stable_mosaic.version = 11 : i64} {
  func.func @_decoder_layer_kernel(%arg0: i32, %arg1: memref<2x8x256xf32, #tpu.memory_space<vmem>>, %arg2: memref<2x8x256xbf16, #tpu.memory_space<vmem>>, %arg3: memref<2x8x8xf32, #tpu.memory_space<vmem>>, %arg4: memref<2x8x8xf32, #tpu.memory_space<vmem>>, %arg5: memref<256x256xbf16, #tpu.memory_space<vmem>>, %arg6: memref<256x256xbf16, #tpu.memory_space<vmem>>, %arg7: memref<256x256xbf16, #tpu.memory_space<vmem>>, %arg8: memref<256x256xbf16, #tpu.memory_space<vmem>>, %arg9: memref<1x256xf32, #tpu.memory_space<vmem>>, %arg10: memref<1x256xf32, #tpu.memory_space<vmem>>, %arg11: memref<1x256xf32, #tpu.memory_space<vmem>>, %arg12: memref<256x256xbf16, #tpu.memory_space<vmem>>, %arg13: memref<256x256xbf16, #tpu.memory_space<vmem>>, %arg14: memref<256x256xbf16, #tpu.memory_space<vmem>>, %arg15: memref<256x256xbf16, #tpu.memory_space<vmem>>, %arg16: memref<1x256xf32, #tpu.memory_space<vmem>>, %arg17: memref<1x256xf32, #tpu.memory_space<vmem>>, %arg18: memref<1x256xf32, #tpu.memory_space<vmem>>, %arg19: memref<256x512xbf16, #tpu.memory_space<vmem>>, %arg20: memref<1x512xf32, #tpu.memory_space<vmem>>, %arg21: memref<512x256xbf16, #tpu.memory_space<vmem>>, %arg22: memref<1x256xf32, #tpu.memory_space<vmem>>, %arg23: memref<1x256xf32, #tpu.memory_space<vmem>>, %arg24: memref<1x256xf32, #tpu.memory_space<vmem>>, %arg25: memref<2x8x256xf32, #tpu.memory_space<vmem>>) attributes {dimension_semantics = [#tpu.dimension_semantics<parallel>], iteration_bounds = array<i64: 2>, scalar_prefetch = 0 : i64, scratch_operands = 0 : i64, tpu.core_type = #tpu.core_type<tc>, window_params = [{transform_indices = @transform_0, window_bounds = array<i64: 2, 8, 256>}, {transform_indices = @transform_1, window_bounds = array<i64: 2, 8, 256>}, {transform_indices = @transform_2, window_bounds = array<i64: 2, 8, 8>}, {transform_indices = @transform_3, window_bounds = array<i64: 2, 8, 8>}, {pipeline_mode = #tpu.pipeline_mode<synchronous>, transform_indices = @transform_4, window_bounds = array<i64: 256, 256>}, {pipeline_mode = #tpu.pipeline_mode<synchronous>, transform_indices = @transform_5, window_bounds = array<i64: 256, 256>}, {pipeline_mode = #tpu.pipeline_mode<synchronous>, transform_indices = @transform_6, window_bounds = array<i64: 256, 256>}, {pipeline_mode = #tpu.pipeline_mode<synchronous>, transform_indices = @transform_7, window_bounds = array<i64: 256, 256>}, {pipeline_mode = #tpu.pipeline_mode<synchronous>, transform_indices = @transform_8, window_bounds = array<i64: 1, 256>}, {pipeline_mode = #tpu.pipeline_mode<synchronous>, transform_indices = @transform_9, window_bounds = array<i64: 1, 256>}, {pipeline_mode = #tpu.pipeline_mode<synchronous>, transform_indices = @transform_10, window_bounds = array<i64: 1, 256>}, {pipeline_mode = #tpu.pipeline_mode<synchronous>, transform_indices = @transform_11, window_bounds = array<i64: 256, 256>}, {pipeline_mode = #tpu.pipeline_mode<synchronous>, transform_indices = @transform_12, window_bounds = array<i64: 256, 256>}, {pipeline_mode = #tpu.pipeline_mode<synchronous>, transform_indices = @transform_13, window_bounds = array<i64: 256, 256>}, {pipeline_mode = #tpu.pipeline_mode<synchronous>, transform_indices = @transform_14, window_bounds = array<i64: 256, 256>}, {pipeline_mode = #tpu.pipeline_mode<synchronous>, transform_indices = @transform_15, window_bounds = array<i64: 1, 256>}, {pipeline_mode = #tpu.pipeline_mode<synchronous>, transform_indices = @transform_16, window_bounds = array<i64: 1, 256>}, {pipeline_mode = #tpu.pipeline_mode<synchronous>, transform_indices = @transform_17, window_bounds = array<i64: 1, 256>}, {pipeline_mode = #tpu.pipeline_mode<synchronous>, transform_indices = @transform_18, window_bounds = array<i64: 256, 512>}, {pipeline_mode = #tpu.pipeline_mode<synchronous>, transform_indices = @transform_19, window_bounds = array<i64: 1, 512>}, {pipeline_mode = #tpu.pipeline_mode<synchronous>, transform_indices = @transform_20, window_bounds = array<i64: 512, 256>}, {pipeline_mode = #tpu.pipeline_mode<synchronous>, transform_indices = @transform_21, window_bounds = array<i64: 1, 256>}, {pipeline_mode = #tpu.pipeline_mode<synchronous>, transform_indices = @transform_22, window_bounds = array<i64: 1, 256>}, {pipeline_mode = #tpu.pipeline_mode<synchronous>, transform_indices = @transform_23, window_bounds = array<i64: 1, 256>}, {transform_indices = @transform_24, window_bounds = array<i64: 2, 8, 256>}]} {
    %c0 = arith.constant 0 : index
    %c0_0 = arith.constant 0 : index
    %c0_1 = arith.constant 0 : index
    %0 = vector.load %arg1[%c0, %c0_0, %c0_1] : memref<2x8x256xf32, #tpu.memory_space<vmem>>, vector<2x8x256xf32>
    %1 = vector.shape_cast %0 : vector<2x8x256xf32> to vector<16x256xf32>
    %2 = arith.truncf %1 : vector<16x256xf32> to vector<16x256xbf16>
    %c0_2 = arith.constant 0 : index
    %c0_3 = arith.constant 0 : index
    %c0_4 = arith.constant 0 : index
    %3 = vector.load %arg2[%c0_2, %c0_3, %c0_4] : memref<2x8x256xbf16, #tpu.memory_space<vmem>>, vector<2x8x256xbf16>
    %4 = vector.shape_cast %3 : vector<2x8x256xbf16> to vector<16x256xbf16>
    %c0_5 = arith.constant 0 : index
    %c0_6 = arith.constant 0 : index
    %c0_7 = arith.constant 0 : index
    %5 = vector.load %arg3[%c0_5, %c0_6, %c0_7] : memref<2x8x8xf32, #tpu.memory_space<vmem>>, vector<2x8x8xf32>
    %c0_8 = arith.constant 0 : index
    %c0_9 = arith.constant 0 : index
    %c0_10 = arith.constant 0 : index
    %6 = vector.load %arg4[%c0_8, %c0_9, %c0_10] : memref<2x8x8xf32, #tpu.memory_space<vmem>>, vector<2x8x8xf32>
    %c0_11 = arith.constant 0 : index
    %c0_12 = arith.constant 0 : index
    %7 = vector.load %arg5[%c0_11, %c0_12] : memref<256x256xbf16, #tpu.memory_space<vmem>>, vector<256x256xbf16>
    %cst = arith.constant dense<0.000000e+00> : vector<16x256xf32>
    %8 = tpu.matmul %2, %7, %cst {dimension_numbers = #tpu.dot_dimension_numbers<[1], [0], [0], [1], [0, 0, 1, 1], [], []>} : vector<16x256xbf16>, vector<256x256xbf16>, vector<16x256xf32> -> vector<16x256xf32>
    %c0_13 = arith.constant 0 : index
    %c0_14 = arith.constant 0 : index
    %9 = vector.load %arg6[%c0_13, %c0_14] : memref<256x256xbf16, #tpu.memory_space<vmem>>, vector<256x256xbf16>
    %cst_15 = arith.constant dense<0.000000e+00> : vector<16x256xf32>
    %10 = tpu.matmul %2, %9, %cst_15 {dimension_numbers = #tpu.dot_dimension_numbers<[1], [0], [0], [1], [0, 0, 1, 1], [], []>} : vector<16x256xbf16>, vector<256x256xbf16>, vector<16x256xf32> -> vector<16x256xf32>
    %c0_16 = arith.constant 0 : index
    %c0_17 = arith.constant 0 : index
    %11 = vector.load %arg7[%c0_16, %c0_17] : memref<256x256xbf16, #tpu.memory_space<vmem>>, vector<256x256xbf16>
    %cst_18 = arith.constant dense<0.000000e+00> : vector<16x256xf32>
    %12 = tpu.matmul %2, %11, %cst_18 {dimension_numbers = #tpu.dot_dimension_numbers<[1], [0], [0], [1], [0, 0, 1, 1], [], []>} : vector<16x256xbf16>, vector<256x256xbf16>, vector<16x256xf32> -> vector<16x256xf32>
    %13 = arith.truncf %8 : vector<16x256xf32> to vector<16x256xbf16>
    %14 = vector.shape_cast %13 : vector<16x256xbf16> to vector<2x8x256xbf16>
    %15 = vector.extract_strided_slice %14 {offsets = [0, 0, 0], sizes = [2, 8, 32], strides = [1, 1, 1]} : vector<2x8x256xbf16> to vector<2x8x32xbf16>
    %16 = vector.shape_cast %15 : vector<2x8x32xbf16> to vector<2x1x8x32xbf16>
    %17 = vector.extract_strided_slice %14 {offsets = [0, 0, 32], sizes = [2, 8, 32], strides = [1, 1, 1]} : vector<2x8x256xbf16> to vector<2x8x32xbf16>
    %18 = vector.shape_cast %17 : vector<2x8x32xbf16> to vector<2x1x8x32xbf16>
    %19 = vector.extract_strided_slice %14 {offsets = [0, 0, 64], sizes = [2, 8, 32], strides = [1, 1, 1]} : vector<2x8x256xbf16> to vector<2x8x32xbf16>
    %20 = vector.shape_cast %19 : vector<2x8x32xbf16> to vector<2x1x8x32xbf16>
    %21 = vector.extract_strided_slice %14 {offsets = [0, 0, 96], sizes = [2, 8, 32], strides = [1, 1, 1]} : vector<2x8x256xbf16> to vector<2x8x32xbf16>
    %22 = vector.shape_cast %21 : vector<2x8x32xbf16> to vector<2x1x8x32xbf16>
    %23 = vector.extract_strided_slice %14 {offsets = [0, 0, 128], sizes = [2, 8, 32], strides = [1, 1, 1]} : vector<2x8x256xbf16> to vector<2x8x32xbf16>
    %24 = vector.shape_cast %23 : vector<2x8x32xbf16> to vector<2x1x8x32xbf16>
    %25 = vector.extract_strided_slice %14 {offsets = [0, 0, 160], sizes = [2, 8, 32], strides = [1, 1, 1]} : vector<2x8x256xbf16> to vector<2x8x32xbf16>
    %26 = vector.shape_cast %25 : vector<2x8x32xbf16> to vector<2x1x8x32xbf16>
    %27 = vector.extract_strided_slice %14 {offsets = [0, 0, 192], sizes = [2, 8, 32], strides = [1, 1, 1]} : vector<2x8x256xbf16> to vector<2x8x32xbf16>
    %28 = vector.shape_cast %27 : vector<2x8x32xbf16> to vector<2x1x8x32xbf16>
    %29 = vector.extract_strided_slice %14 {offsets = [0, 0, 224], sizes = [2, 8, 32], strides = [1, 1, 1]} : vector<2x8x256xbf16> to vector<2x8x32xbf16>
    %30 = vector.shape_cast %29 : vector<2x8x32xbf16> to vector<2x1x8x32xbf16>
    %31 = tpu.concatenate %16, %18, %20, %22, %24, %26, %28, %30 in 1 : vector<2x1x8x32xbf16>, vector<2x1x8x32xbf16>, vector<2x1x8x32xbf16>, vector<2x1x8x32xbf16>, vector<2x1x8x32xbf16>, vector<2x1x8x32xbf16>, vector<2x1x8x32xbf16>, vector<2x1x8x32xbf16> -> vector<2x8x8x32xbf16>
    %32 = vector.shape_cast %31 : vector<2x8x8x32xbf16> to vector<16x8x32xbf16>
    %33 = arith.truncf %10 : vector<16x256xf32> to vector<16x256xbf16>
    %34 = vector.shape_cast %33 : vector<16x256xbf16> to vector<2x8x256xbf16>
    %35 = vector.extract_strided_slice %34 {offsets = [0, 0, 0], sizes = [2, 8, 32], strides = [1, 1, 1]} : vector<2x8x256xbf16> to vector<2x8x32xbf16>
    %36 = vector.shape_cast %35 : vector<2x8x32xbf16> to vector<2x1x8x32xbf16>
    %37 = vector.extract_strided_slice %34 {offsets = [0, 0, 32], sizes = [2, 8, 32], strides = [1, 1, 1]} : vector<2x8x256xbf16> to vector<2x8x32xbf16>
    %38 = vector.shape_cast %37 : vector<2x8x32xbf16> to vector<2x1x8x32xbf16>
    %39 = vector.extract_strided_slice %34 {offsets = [0, 0, 64], sizes = [2, 8, 32], strides = [1, 1, 1]} : vector<2x8x256xbf16> to vector<2x8x32xbf16>
    %40 = vector.shape_cast %39 : vector<2x8x32xbf16> to vector<2x1x8x32xbf16>
    %41 = vector.extract_strided_slice %34 {offsets = [0, 0, 96], sizes = [2, 8, 32], strides = [1, 1, 1]} : vector<2x8x256xbf16> to vector<2x8x32xbf16>
    %42 = vector.shape_cast %41 : vector<2x8x32xbf16> to vector<2x1x8x32xbf16>
    %43 = vector.extract_strided_slice %34 {offsets = [0, 0, 128], sizes = [2, 8, 32], strides = [1, 1, 1]} : vector<2x8x256xbf16> to vector<2x8x32xbf16>
    %44 = vector.shape_cast %43 : vector<2x8x32xbf16> to vector<2x1x8x32xbf16>
    %45 = vector.extract_strided_slice %34 {offsets = [0, 0, 160], sizes = [2, 8, 32], strides = [1, 1, 1]} : vector<2x8x256xbf16> to vector<2x8x32xbf16>
    %46 = vector.shape_cast %45 : vector<2x8x32xbf16> to vector<2x1x8x32xbf16>
    %47 = vector.extract_strided_slice %34 {offsets = [0, 0, 192], sizes = [2, 8, 32], strides = [1, 1, 1]} : vector<2x8x256xbf16> to vector<2x8x32xbf16>
    %48 = vector.shape_cast %47 : vector<2x8x32xbf16> to vector<2x1x8x32xbf16>
    %49 = vector.extract_strided_slice %34 {offsets = [0, 0, 224], sizes = [2, 8, 32], strides = [1, 1, 1]} : vector<2x8x256xbf16> to vector<2x8x32xbf16>
    %50 = vector.shape_cast %49 : vector<2x8x32xbf16> to vector<2x1x8x32xbf16>
    %51 = tpu.concatenate %36, %38, %40, %42, %44, %46, %48, %50 in 1 : vector<2x1x8x32xbf16>, vector<2x1x8x32xbf16>, vector<2x1x8x32xbf16>, vector<2x1x8x32xbf16>, vector<2x1x8x32xbf16>, vector<2x1x8x32xbf16>, vector<2x1x8x32xbf16>, vector<2x1x8x32xbf16> -> vector<2x8x8x32xbf16>
    %52 = vector.shape_cast %51 : vector<2x8x8x32xbf16> to vector<16x8x32xbf16>
    %53 = arith.truncf %12 : vector<16x256xf32> to vector<16x256xbf16>
    %54 = vector.shape_cast %53 : vector<16x256xbf16> to vector<2x8x256xbf16>
    %55 = vector.extract_strided_slice %54 {offsets = [0, 0, 0], sizes = [2, 8, 32], strides = [1, 1, 1]} : vector<2x8x256xbf16> to vector<2x8x32xbf16>
    %56 = vector.shape_cast %55 : vector<2x8x32xbf16> to vector<2x1x8x32xbf16>
    %57 = vector.extract_strided_slice %54 {offsets = [0, 0, 32], sizes = [2, 8, 32], strides = [1, 1, 1]} : vector<2x8x256xbf16> to vector<2x8x32xbf16>
    %58 = vector.shape_cast %57 : vector<2x8x32xbf16> to vector<2x1x8x32xbf16>
    %59 = vector.extract_strided_slice %54 {offsets = [0, 0, 64], sizes = [2, 8, 32], strides = [1, 1, 1]} : vector<2x8x256xbf16> to vector<2x8x32xbf16>
    %60 = vector.shape_cast %59 : vector<2x8x32xbf16> to vector<2x1x8x32xbf16>
    %61 = vector.extract_strided_slice %54 {offsets = [0, 0, 96], sizes = [2, 8, 32], strides = [1, 1, 1]} : vector<2x8x256xbf16> to vector<2x8x32xbf16>
    %62 = vector.shape_cast %61 : vector<2x8x32xbf16> to vector<2x1x8x32xbf16>
    %63 = vector.extract_strided_slice %54 {offsets = [0, 0, 128], sizes = [2, 8, 32], strides = [1, 1, 1]} : vector<2x8x256xbf16> to vector<2x8x32xbf16>
    %64 = vector.shape_cast %63 : vector<2x8x32xbf16> to vector<2x1x8x32xbf16>
    %65 = vector.extract_strided_slice %54 {offsets = [0, 0, 160], sizes = [2, 8, 32], strides = [1, 1, 1]} : vector<2x8x256xbf16> to vector<2x8x32xbf16>
    %66 = vector.shape_cast %65 : vector<2x8x32xbf16> to vector<2x1x8x32xbf16>
    %67 = vector.extract_strided_slice %54 {offsets = [0, 0, 192], sizes = [2, 8, 32], strides = [1, 1, 1]} : vector<2x8x256xbf16> to vector<2x8x32xbf16>
    %68 = vector.shape_cast %67 : vector<2x8x32xbf16> to vector<2x1x8x32xbf16>
    %69 = vector.extract_strided_slice %54 {offsets = [0, 0, 224], sizes = [2, 8, 32], strides = [1, 1, 1]} : vector<2x8x256xbf16> to vector<2x8x32xbf16>
    %70 = vector.shape_cast %69 : vector<2x8x32xbf16> to vector<2x1x8x32xbf16>
    %71 = tpu.concatenate %56, %58, %60, %62, %64, %66, %68, %70 in 1 : vector<2x1x8x32xbf16>, vector<2x1x8x32xbf16>, vector<2x1x8x32xbf16>, vector<2x1x8x32xbf16>, vector<2x1x8x32xbf16>, vector<2x1x8x32xbf16>, vector<2x1x8x32xbf16>, vector<2x1x8x32xbf16> -> vector<2x8x8x32xbf16>
    %72 = vector.shape_cast %71 : vector<2x8x8x32xbf16> to vector<16x8x32xbf16>
    "tpu.trace_start"() <{level = 10 : i32, message = "zqd,zkd->zqk"}> : () -> ()
    %cst_19 = arith.constant dense<0.000000e+00> : vector<16x8x8xf32>
    %73 = tpu.matmul %32, %52, %cst_19 {dimension_numbers = #tpu.dot_dimension_numbers<[2], [2], [1], [1], [0, 0, 0, 1, 1, 1], [0], [0]>} : vector<16x8x32xbf16>, vector<16x8x32xbf16>, vector<16x8x8xf32> -> vector<16x8x8xf32>
    "tpu.trace_stop"() : () -> ()
    %74 = vector.shape_cast %73 : vector<16x8x8xf32> to vector<2x8x8x8xf32>
    %75 = vector.shape_cast %5 : vector<2x8x8xf32> to vector<2x1x8x8xf32>
    %76 = vector.broadcast %75 : vector<2x1x8x8xf32> to vector<2x8x8x8xf32>
    %77 = arith.addf %74, %76 : vector<2x8x8x8xf32>
    %cst_20 = arith.constant dense<0xFF800000> : vector<2x8x8xf32>
    %78 = vector.multi_reduction <maximumf>, %77, %cst_20 [3] : vector<2x8x8x8xf32> to vector<2x8x8xf32>
    %79 = vector.shape_cast %78 : vector<2x8x8xf32> to vector<2x8x8x1xf32>
    %80 = vector.broadcast %79 : vector<2x8x8x1xf32> to vector<2x8x8x8xf32>
    %81 = arith.subf %77, %80 : vector<2x8x8x8xf32>
    %82 = math.exp %81 : vector<2x8x8x8xf32>
    %cst_21 = arith.constant dense<0.000000e+00> : vector<2x8x8xf32>
    %83 = vector.multi_reduction <add>, %82, %cst_21 [3] : vector<2x8x8x8xf32> to vector<2x8x8xf32>
    %84 = vector.shape_cast %83 : vector<2x8x8xf32> to vector<2x8x8x1xf32>
    %85 = tpu.reciprocal %84 {approx = true} : vector<2x8x8x1xf32> -> vector<2x8x8x1xf32>
    %86 = vector.broadcast %85 : vector<2x8x8x1xf32> to vector<2x8x8x8xf32>
    %87 = arith.mulf %82, %86 : vector<2x8x8x8xf32>
    %88 = vector.shape_cast %87 : vector<2x8x8x8xf32> to vector<16x8x8xf32>
    %89 = arith.truncf %88 : vector<16x8x8xf32> to vector<16x8x8xbf16>
    "tpu.trace_start"() <{level = 10 : i32, message = "zqk,zkd->zqd"}> : () -> ()
    %cst_22 = arith.constant dense<0.000000e+00> : vector<16x8x32xf32>
    %90 = tpu.matmul %89, %72, %cst_22 {dimension_numbers = #tpu.dot_dimension_numbers<[2], [1], [1], [2], [0, 0, 0, 1, 1, 2], [0], [0]>} : vector<16x8x8xbf16>, vector<16x8x32xbf16>, vector<16x8x32xf32> -> vector<16x8x32xf32>
    "tpu.trace_stop"() : () -> ()
    %91 = arith.truncf %90 : vector<16x8x32xf32> to vector<16x8x32xbf16>
    %92 = vector.shape_cast %91 : vector<16x8x32xbf16> to vector<2x8x8x32xbf16>
    %93 = vector.extract_strided_slice %92 {offsets = [0, 0, 0, 0], sizes = [2, 1, 8, 32], strides = [1, 1, 1, 1]} : vector<2x8x8x32xbf16> to vector<2x1x8x32xbf16>
    %94 = vector.shape_cast %93 : vector<2x1x8x32xbf16> to vector<2x8x32xbf16>
    %95 = vector.extract_strided_slice %92 {offsets = [0, 1, 0, 0], sizes = [2, 1, 8, 32], strides = [1, 1, 1, 1]} : vector<2x8x8x32xbf16> to vector<2x1x8x32xbf16>
    %96 = vector.shape_cast %95 : vector<2x1x8x32xbf16> to vector<2x8x32xbf16>
    %97 = vector.extract_strided_slice %92 {offsets = [0, 2, 0, 0], sizes = [2, 1, 8, 32], strides = [1, 1, 1, 1]} : vector<2x8x8x32xbf16> to vector<2x1x8x32xbf16>
    %98 = vector.shape_cast %97 : vector<2x1x8x32xbf16> to vector<2x8x32xbf16>
    %99 = vector.extract_strided_slice %92 {offsets = [0, 3, 0, 0], sizes = [2, 1, 8, 32], strides = [1, 1, 1, 1]} : vector<2x8x8x32xbf16> to vector<2x1x8x32xbf16>
    %100 = vector.shape_cast %99 : vector<2x1x8x32xbf16> to vector<2x8x32xbf16>
    %101 = vector.extract_strided_slice %92 {offsets = [0, 4, 0, 0], sizes = [2, 1, 8, 32], strides = [1, 1, 1, 1]} : vector<2x8x8x32xbf16> to vector<2x1x8x32xbf16>
    %102 = vector.shape_cast %101 : vector<2x1x8x32xbf16> to vector<2x8x32xbf16>
    %103 = vector.extract_strided_slice %92 {offsets = [0, 5, 0, 0], sizes = [2, 1, 8, 32], strides = [1, 1, 1, 1]} : vector<2x8x8x32xbf16> to vector<2x1x8x32xbf16>
    %104 = vector.shape_cast %103 : vector<2x1x8x32xbf16> to vector<2x8x32xbf16>
    %105 = vector.extract_strided_slice %92 {offsets = [0, 6, 0, 0], sizes = [2, 1, 8, 32], strides = [1, 1, 1, 1]} : vector<2x8x8x32xbf16> to vector<2x1x8x32xbf16>
    %106 = vector.shape_cast %105 : vector<2x1x8x32xbf16> to vector<2x8x32xbf16>
    %107 = vector.extract_strided_slice %92 {offsets = [0, 7, 0, 0], sizes = [2, 1, 8, 32], strides = [1, 1, 1, 1]} : vector<2x8x8x32xbf16> to vector<2x1x8x32xbf16>
    %108 = vector.shape_cast %107 : vector<2x1x8x32xbf16> to vector<2x8x32xbf16>
    %109 = tpu.concatenate %94, %96, %98, %100, %102, %104, %106, %108 in 2 : vector<2x8x32xbf16>, vector<2x8x32xbf16>, vector<2x8x32xbf16>, vector<2x8x32xbf16>, vector<2x8x32xbf16>, vector<2x8x32xbf16>, vector<2x8x32xbf16>, vector<2x8x32xbf16> -> vector<2x8x256xbf16>
    %110 = vector.shape_cast %109 : vector<2x8x256xbf16> to vector<16x256xbf16>
    %c0_23 = arith.constant 0 : index
    %c0_24 = arith.constant 0 : index
    %111 = vector.load %arg8[%c0_23, %c0_24] : memref<256x256xbf16, #tpu.memory_space<vmem>>, vector<256x256xbf16>
    %cst_25 = arith.constant dense<0.000000e+00> : vector<16x256xf32>
    %112 = tpu.matmul %110, %111, %cst_25 {dimension_numbers = #tpu.dot_dimension_numbers<[1], [0], [0], [1], [0, 0, 1, 1], [], []>} : vector<16x256xbf16>, vector<256x256xbf16>, vector<16x256xf32> -> vector<16x256xf32>
    %c0_26 = arith.constant 0 : index
    %c0_27 = arith.constant 0 : index
    %113 = vector.load %arg9[%c0_26, %c0_27] : memref<1x256xf32, #tpu.memory_space<vmem>>, vector<1x256xf32>
    %114 = vector.broadcast %113 : vector<1x256xf32> to vector<16x256xf32>
    %115 = arith.addf %112, %114 : vector<16x256xf32>
    %116 = arith.addf %1, %115 : vector<16x256xf32>
    %cst_28 = arith.constant dense<0.000000e+00> : vector<16xf32>
    %117 = vector.multi_reduction <add>, %116, %cst_28 [1] : vector<16x256xf32> to vector<16xf32>
    %118 = vector.shape_cast %117 : vector<16xf32> to vector<16x1xf32>
    %cst_29 = arith.constant 2.560000e+02 : f32
    %119 = vector.broadcast %cst_29 : f32 to vector<16x1xf32>
    %120 = arith.divf %118, %119 : vector<16x1xf32>
    %121 = vector.broadcast %120 : vector<16x1xf32> to vector<16x256xf32>
    %122 = arith.subf %116, %121 : vector<16x256xf32>
    %123 = arith.mulf %122, %122 : vector<16x256xf32>
    %cst_30 = arith.constant dense<0.000000e+00> : vector<16xf32>
    %124 = vector.multi_reduction <add>, %123, %cst_30 [1] : vector<16x256xf32> to vector<16xf32>
    %125 = vector.shape_cast %124 : vector<16xf32> to vector<16x1xf32>
    %cst_31 = arith.constant 2.560000e+02 : f32
    %126 = vector.broadcast %cst_31 : f32 to vector<16x1xf32>
    %127 = arith.divf %125, %126 : vector<16x1xf32>
    %128 = vector.broadcast %120 : vector<16x1xf32> to vector<16x256xf32>
    %129 = arith.subf %116, %128 : vector<16x256xf32>
    %cst_32 = arith.constant 9.99999974E-6 : f32
    %130 = vector.broadcast %cst_32 : f32 to vector<16x1xf32>
    %131 = arith.addf %127, %130 : vector<16x1xf32>
    %132 = math.rsqrt %131 : vector<16x1xf32>
    %133 = vector.broadcast %132 : vector<16x1xf32> to vector<16x256xf32>
    %134 = arith.mulf %129, %133 : vector<16x256xf32>
    %c0_33 = arith.constant 0 : index
    %c0_34 = arith.constant 0 : index
    %135 = vector.load %arg10[%c0_33, %c0_34] : memref<1x256xf32, #tpu.memory_space<vmem>>, vector<1x256xf32>
    %136 = vector.broadcast %135 : vector<1x256xf32> to vector<16x256xf32>
    %137 = arith.mulf %134, %136 : vector<16x256xf32>
    %c0_35 = arith.constant 0 : index
    %c0_36 = arith.constant 0 : index
    %138 = vector.load %arg11[%c0_35, %c0_36] : memref<1x256xf32, #tpu.memory_space<vmem>>, vector<1x256xf32>
    %139 = vector.broadcast %138 : vector<1x256xf32> to vector<16x256xf32>
    %140 = arith.addf %137, %139 : vector<16x256xf32>
    %141 = arith.truncf %140 : vector<16x256xf32> to vector<16x256xbf16>
    %c0_37 = arith.constant 0 : index
    %c0_38 = arith.constant 0 : index
    %142 = vector.load %arg12[%c0_37, %c0_38] : memref<256x256xbf16, #tpu.memory_space<vmem>>, vector<256x256xbf16>
    %cst_39 = arith.constant dense<0.000000e+00> : vector<16x256xf32>
    %143 = tpu.matmul %141, %142, %cst_39 {dimension_numbers = #tpu.dot_dimension_numbers<[1], [0], [0], [1], [0, 0, 1, 1], [], []>} : vector<16x256xbf16>, vector<256x256xbf16>, vector<16x256xf32> -> vector<16x256xf32>
    %c0_40 = arith.constant 0 : index
    %c0_41 = arith.constant 0 : index
    %144 = vector.load %arg13[%c0_40, %c0_41] : memref<256x256xbf16, #tpu.memory_space<vmem>>, vector<256x256xbf16>
    %cst_42 = arith.constant dense<0.000000e+00> : vector<16x256xf32>
    %145 = tpu.matmul %4, %144, %cst_42 {dimension_numbers = #tpu.dot_dimension_numbers<[1], [0], [0], [1], [0, 0, 1, 1], [], []>} : vector<16x256xbf16>, vector<256x256xbf16>, vector<16x256xf32> -> vector<16x256xf32>
    %c0_43 = arith.constant 0 : index
    %c0_44 = arith.constant 0 : index
    %146 = vector.load %arg14[%c0_43, %c0_44] : memref<256x256xbf16, #tpu.memory_space<vmem>>, vector<256x256xbf16>
    %cst_45 = arith.constant dense<0.000000e+00> : vector<16x256xf32>
    %147 = tpu.matmul %4, %146, %cst_45 {dimension_numbers = #tpu.dot_dimension_numbers<[1], [0], [0], [1], [0, 0, 1, 1], [], []>} : vector<16x256xbf16>, vector<256x256xbf16>, vector<16x256xf32> -> vector<16x256xf32>
    %148 = arith.truncf %143 : vector<16x256xf32> to vector<16x256xbf16>
    %149 = vector.shape_cast %148 : vector<16x256xbf16> to vector<2x8x256xbf16>
    %150 = vector.extract_strided_slice %149 {offsets = [0, 0, 0], sizes = [2, 8, 32], strides = [1, 1, 1]} : vector<2x8x256xbf16> to vector<2x8x32xbf16>
    %151 = vector.shape_cast %150 : vector<2x8x32xbf16> to vector<2x1x8x32xbf16>
    %152 = vector.extract_strided_slice %149 {offsets = [0, 0, 32], sizes = [2, 8, 32], strides = [1, 1, 1]} : vector<2x8x256xbf16> to vector<2x8x32xbf16>
    %153 = vector.shape_cast %152 : vector<2x8x32xbf16> to vector<2x1x8x32xbf16>
    %154 = vector.extract_strided_slice %149 {offsets = [0, 0, 64], sizes = [2, 8, 32], strides = [1, 1, 1]} : vector<2x8x256xbf16> to vector<2x8x32xbf16>
    %155 = vector.shape_cast %154 : vector<2x8x32xbf16> to vector<2x1x8x32xbf16>
    %156 = vector.extract_strided_slice %149 {offsets = [0, 0, 96], sizes = [2, 8, 32], strides = [1, 1, 1]} : vector<2x8x256xbf16> to vector<2x8x32xbf16>
    %157 = vector.shape_cast %156 : vector<2x8x32xbf16> to vector<2x1x8x32xbf16>
    %158 = vector.extract_strided_slice %149 {offsets = [0, 0, 128], sizes = [2, 8, 32], strides = [1, 1, 1]} : vector<2x8x256xbf16> to vector<2x8x32xbf16>
    %159 = vector.shape_cast %158 : vector<2x8x32xbf16> to vector<2x1x8x32xbf16>
    %160 = vector.extract_strided_slice %149 {offsets = [0, 0, 160], sizes = [2, 8, 32], strides = [1, 1, 1]} : vector<2x8x256xbf16> to vector<2x8x32xbf16>
    %161 = vector.shape_cast %160 : vector<2x8x32xbf16> to vector<2x1x8x32xbf16>
    %162 = vector.extract_strided_slice %149 {offsets = [0, 0, 192], sizes = [2, 8, 32], strides = [1, 1, 1]} : vector<2x8x256xbf16> to vector<2x8x32xbf16>
    %163 = vector.shape_cast %162 : vector<2x8x32xbf16> to vector<2x1x8x32xbf16>
    %164 = vector.extract_strided_slice %149 {offsets = [0, 0, 224], sizes = [2, 8, 32], strides = [1, 1, 1]} : vector<2x8x256xbf16> to vector<2x8x32xbf16>
    %165 = vector.shape_cast %164 : vector<2x8x32xbf16> to vector<2x1x8x32xbf16>
    %166 = tpu.concatenate %151, %153, %155, %157, %159, %161, %163, %165 in 1 : vector<2x1x8x32xbf16>, vector<2x1x8x32xbf16>, vector<2x1x8x32xbf16>, vector<2x1x8x32xbf16>, vector<2x1x8x32xbf16>, vector<2x1x8x32xbf16>, vector<2x1x8x32xbf16>, vector<2x1x8x32xbf16> -> vector<2x8x8x32xbf16>
    %167 = vector.shape_cast %166 : vector<2x8x8x32xbf16> to vector<16x8x32xbf16>
    %168 = arith.truncf %145 : vector<16x256xf32> to vector<16x256xbf16>
    %169 = vector.shape_cast %168 : vector<16x256xbf16> to vector<2x8x256xbf16>
    %170 = vector.extract_strided_slice %169 {offsets = [0, 0, 0], sizes = [2, 8, 32], strides = [1, 1, 1]} : vector<2x8x256xbf16> to vector<2x8x32xbf16>
    %171 = vector.shape_cast %170 : vector<2x8x32xbf16> to vector<2x1x8x32xbf16>
    %172 = vector.extract_strided_slice %169 {offsets = [0, 0, 32], sizes = [2, 8, 32], strides = [1, 1, 1]} : vector<2x8x256xbf16> to vector<2x8x32xbf16>
    %173 = vector.shape_cast %172 : vector<2x8x32xbf16> to vector<2x1x8x32xbf16>
    %174 = vector.extract_strided_slice %169 {offsets = [0, 0, 64], sizes = [2, 8, 32], strides = [1, 1, 1]} : vector<2x8x256xbf16> to vector<2x8x32xbf16>
    %175 = vector.shape_cast %174 : vector<2x8x32xbf16> to vector<2x1x8x32xbf16>
    %176 = vector.extract_strided_slice %169 {offsets = [0, 0, 96], sizes = [2, 8, 32], strides = [1, 1, 1]} : vector<2x8x256xbf16> to vector<2x8x32xbf16>
    %177 = vector.shape_cast %176 : vector<2x8x32xbf16> to vector<2x1x8x32xbf16>
    %178 = vector.extract_strided_slice %169 {offsets = [0, 0, 128], sizes = [2, 8, 32], strides = [1, 1, 1]} : vector<2x8x256xbf16> to vector<2x8x32xbf16>
    %179 = vector.shape_cast %178 : vector<2x8x32xbf16> to vector<2x1x8x32xbf16>
    %180 = vector.extract_strided_slice %169 {offsets = [0, 0, 160], sizes = [2, 8, 32], strides = [1, 1, 1]} : vector<2x8x256xbf16> to vector<2x8x32xbf16>
    %181 = vector.shape_cast %180 : vector<2x8x32xbf16> to vector<2x1x8x32xbf16>
    %182 = vector.extract_strided_slice %169 {offsets = [0, 0, 192], sizes = [2, 8, 32], strides = [1, 1, 1]} : vector<2x8x256xbf16> to vector<2x8x32xbf16>
    %183 = vector.shape_cast %182 : vector<2x8x32xbf16> to vector<2x1x8x32xbf16>
    %184 = vector.extract_strided_slice %169 {offsets = [0, 0, 224], sizes = [2, 8, 32], strides = [1, 1, 1]} : vector<2x8x256xbf16> to vector<2x8x32xbf16>
    %185 = vector.shape_cast %184 : vector<2x8x32xbf16> to vector<2x1x8x32xbf16>
    %186 = tpu.concatenate %171, %173, %175, %177, %179, %181, %183, %185 in 1 : vector<2x1x8x32xbf16>, vector<2x1x8x32xbf16>, vector<2x1x8x32xbf16>, vector<2x1x8x32xbf16>, vector<2x1x8x32xbf16>, vector<2x1x8x32xbf16>, vector<2x1x8x32xbf16>, vector<2x1x8x32xbf16> -> vector<2x8x8x32xbf16>
    %187 = vector.shape_cast %186 : vector<2x8x8x32xbf16> to vector<16x8x32xbf16>
    %188 = arith.truncf %147 : vector<16x256xf32> to vector<16x256xbf16>
    %189 = vector.shape_cast %188 : vector<16x256xbf16> to vector<2x8x256xbf16>
    %190 = vector.extract_strided_slice %189 {offsets = [0, 0, 0], sizes = [2, 8, 32], strides = [1, 1, 1]} : vector<2x8x256xbf16> to vector<2x8x32xbf16>
    %191 = vector.shape_cast %190 : vector<2x8x32xbf16> to vector<2x1x8x32xbf16>
    %192 = vector.extract_strided_slice %189 {offsets = [0, 0, 32], sizes = [2, 8, 32], strides = [1, 1, 1]} : vector<2x8x256xbf16> to vector<2x8x32xbf16>
    %193 = vector.shape_cast %192 : vector<2x8x32xbf16> to vector<2x1x8x32xbf16>
    %194 = vector.extract_strided_slice %189 {offsets = [0, 0, 64], sizes = [2, 8, 32], strides = [1, 1, 1]} : vector<2x8x256xbf16> to vector<2x8x32xbf16>
    %195 = vector.shape_cast %194 : vector<2x8x32xbf16> to vector<2x1x8x32xbf16>
    %196 = vector.extract_strided_slice %189 {offsets = [0, 0, 96], sizes = [2, 8, 32], strides = [1, 1, 1]} : vector<2x8x256xbf16> to vector<2x8x32xbf16>
    %197 = vector.shape_cast %196 : vector<2x8x32xbf16> to vector<2x1x8x32xbf16>
    %198 = vector.extract_strided_slice %189 {offsets = [0, 0, 128], sizes = [2, 8, 32], strides = [1, 1, 1]} : vector<2x8x256xbf16> to vector<2x8x32xbf16>
    %199 = vector.shape_cast %198 : vector<2x8x32xbf16> to vector<2x1x8x32xbf16>
    %200 = vector.extract_strided_slice %189 {offsets = [0, 0, 160], sizes = [2, 8, 32], strides = [1, 1, 1]} : vector<2x8x256xbf16> to vector<2x8x32xbf16>
    %201 = vector.shape_cast %200 : vector<2x8x32xbf16> to vector<2x1x8x32xbf16>
    %202 = vector.extract_strided_slice %189 {offsets = [0, 0, 192], sizes = [2, 8, 32], strides = [1, 1, 1]} : vector<2x8x256xbf16> to vector<2x8x32xbf16>
    %203 = vector.shape_cast %202 : vector<2x8x32xbf16> to vector<2x1x8x32xbf16>
    %204 = vector.extract_strided_slice %189 {offsets = [0, 0, 224], sizes = [2, 8, 32], strides = [1, 1, 1]} : vector<2x8x256xbf16> to vector<2x8x32xbf16>
    %205 = vector.shape_cast %204 : vector<2x8x32xbf16> to vector<2x1x8x32xbf16>
    %206 = tpu.concatenate %191, %193, %195, %197, %199, %201, %203, %205 in 1 : vector<2x1x8x32xbf16>, vector<2x1x8x32xbf16>, vector<2x1x8x32xbf16>, vector<2x1x8x32xbf16>, vector<2x1x8x32xbf16>, vector<2x1x8x32xbf16>, vector<2x1x8x32xbf16>, vector<2x1x8x32xbf16> -> vector<2x8x8x32xbf16>
    %207 = vector.shape_cast %206 : vector<2x8x8x32xbf16> to vector<16x8x32xbf16>
    "tpu.trace_start"() <{level = 10 : i32, message = "zqd,zkd->zqk"}> : () -> ()
    %cst_46 = arith.constant dense<0.000000e+00> : vector<16x8x8xf32>
    %208 = tpu.matmul %167, %187, %cst_46 {dimension_numbers = #tpu.dot_dimension_numbers<[2], [2], [1], [1], [0, 0, 0, 1, 1, 1], [0], [0]>} : vector<16x8x32xbf16>, vector<16x8x32xbf16>, vector<16x8x8xf32> -> vector<16x8x8xf32>
    "tpu.trace_stop"() : () -> ()
    %209 = vector.shape_cast %208 : vector<16x8x8xf32> to vector<2x8x8x8xf32>
    %210 = vector.shape_cast %6 : vector<2x8x8xf32> to vector<2x1x8x8xf32>
    %211 = vector.broadcast %210 : vector<2x1x8x8xf32> to vector<2x8x8x8xf32>
    %212 = arith.addf %209, %211 : vector<2x8x8x8xf32>
    %cst_47 = arith.constant dense<0xFF800000> : vector<2x8x8xf32>
    %213 = vector.multi_reduction <maximumf>, %212, %cst_47 [3] : vector<2x8x8x8xf32> to vector<2x8x8xf32>
    %214 = vector.shape_cast %213 : vector<2x8x8xf32> to vector<2x8x8x1xf32>
    %215 = vector.broadcast %214 : vector<2x8x8x1xf32> to vector<2x8x8x8xf32>
    %216 = arith.subf %212, %215 : vector<2x8x8x8xf32>
    %217 = math.exp %216 : vector<2x8x8x8xf32>
    %cst_48 = arith.constant dense<0.000000e+00> : vector<2x8x8xf32>
    %218 = vector.multi_reduction <add>, %217, %cst_48 [3] : vector<2x8x8x8xf32> to vector<2x8x8xf32>
    %219 = vector.shape_cast %218 : vector<2x8x8xf32> to vector<2x8x8x1xf32>
    %220 = tpu.reciprocal %219 {approx = true} : vector<2x8x8x1xf32> -> vector<2x8x8x1xf32>
    %221 = vector.broadcast %220 : vector<2x8x8x1xf32> to vector<2x8x8x8xf32>
    %222 = arith.mulf %217, %221 : vector<2x8x8x8xf32>
    %223 = vector.shape_cast %222 : vector<2x8x8x8xf32> to vector<16x8x8xf32>
    %224 = arith.truncf %223 : vector<16x8x8xf32> to vector<16x8x8xbf16>
    "tpu.trace_start"() <{level = 10 : i32, message = "zqk,zkd->zqd"}> : () -> ()
    %cst_49 = arith.constant dense<0.000000e+00> : vector<16x8x32xf32>
    %225 = tpu.matmul %224, %207, %cst_49 {dimension_numbers = #tpu.dot_dimension_numbers<[2], [1], [1], [2], [0, 0, 0, 1, 1, 2], [0], [0]>} : vector<16x8x8xbf16>, vector<16x8x32xbf16>, vector<16x8x32xf32> -> vector<16x8x32xf32>
    "tpu.trace_stop"() : () -> ()
    %226 = arith.truncf %225 : vector<16x8x32xf32> to vector<16x8x32xbf16>
    %227 = vector.shape_cast %226 : vector<16x8x32xbf16> to vector<2x8x8x32xbf16>
    %228 = vector.extract_strided_slice %227 {offsets = [0, 0, 0, 0], sizes = [2, 1, 8, 32], strides = [1, 1, 1, 1]} : vector<2x8x8x32xbf16> to vector<2x1x8x32xbf16>
    %229 = vector.shape_cast %228 : vector<2x1x8x32xbf16> to vector<2x8x32xbf16>
    %230 = vector.extract_strided_slice %227 {offsets = [0, 1, 0, 0], sizes = [2, 1, 8, 32], strides = [1, 1, 1, 1]} : vector<2x8x8x32xbf16> to vector<2x1x8x32xbf16>
    %231 = vector.shape_cast %230 : vector<2x1x8x32xbf16> to vector<2x8x32xbf16>
    %232 = vector.extract_strided_slice %227 {offsets = [0, 2, 0, 0], sizes = [2, 1, 8, 32], strides = [1, 1, 1, 1]} : vector<2x8x8x32xbf16> to vector<2x1x8x32xbf16>
    %233 = vector.shape_cast %232 : vector<2x1x8x32xbf16> to vector<2x8x32xbf16>
    %234 = vector.extract_strided_slice %227 {offsets = [0, 3, 0, 0], sizes = [2, 1, 8, 32], strides = [1, 1, 1, 1]} : vector<2x8x8x32xbf16> to vector<2x1x8x32xbf16>
    %235 = vector.shape_cast %234 : vector<2x1x8x32xbf16> to vector<2x8x32xbf16>
    %236 = vector.extract_strided_slice %227 {offsets = [0, 4, 0, 0], sizes = [2, 1, 8, 32], strides = [1, 1, 1, 1]} : vector<2x8x8x32xbf16> to vector<2x1x8x32xbf16>
    %237 = vector.shape_cast %236 : vector<2x1x8x32xbf16> to vector<2x8x32xbf16>
    %238 = vector.extract_strided_slice %227 {offsets = [0, 5, 0, 0], sizes = [2, 1, 8, 32], strides = [1, 1, 1, 1]} : vector<2x8x8x32xbf16> to vector<2x1x8x32xbf16>
    %239 = vector.shape_cast %238 : vector<2x1x8x32xbf16> to vector<2x8x32xbf16>
    %240 = vector.extract_strided_slice %227 {offsets = [0, 6, 0, 0], sizes = [2, 1, 8, 32], strides = [1, 1, 1, 1]} : vector<2x8x8x32xbf16> to vector<2x1x8x32xbf16>
    %241 = vector.shape_cast %240 : vector<2x1x8x32xbf16> to vector<2x8x32xbf16>
    %242 = vector.extract_strided_slice %227 {offsets = [0, 7, 0, 0], sizes = [2, 1, 8, 32], strides = [1, 1, 1, 1]} : vector<2x8x8x32xbf16> to vector<2x1x8x32xbf16>
    %243 = vector.shape_cast %242 : vector<2x1x8x32xbf16> to vector<2x8x32xbf16>
    %244 = tpu.concatenate %229, %231, %233, %235, %237, %239, %241, %243 in 2 : vector<2x8x32xbf16>, vector<2x8x32xbf16>, vector<2x8x32xbf16>, vector<2x8x32xbf16>, vector<2x8x32xbf16>, vector<2x8x32xbf16>, vector<2x8x32xbf16>, vector<2x8x32xbf16> -> vector<2x8x256xbf16>
    %245 = vector.shape_cast %244 : vector<2x8x256xbf16> to vector<16x256xbf16>
    %c0_50 = arith.constant 0 : index
    %c0_51 = arith.constant 0 : index
    %246 = vector.load %arg15[%c0_50, %c0_51] : memref<256x256xbf16, #tpu.memory_space<vmem>>, vector<256x256xbf16>
    %cst_52 = arith.constant dense<0.000000e+00> : vector<16x256xf32>
    %247 = tpu.matmul %245, %246, %cst_52 {dimension_numbers = #tpu.dot_dimension_numbers<[1], [0], [0], [1], [0, 0, 1, 1], [], []>} : vector<16x256xbf16>, vector<256x256xbf16>, vector<16x256xf32> -> vector<16x256xf32>
    %c0_53 = arith.constant 0 : index
    %c0_54 = arith.constant 0 : index
    %248 = vector.load %arg16[%c0_53, %c0_54] : memref<1x256xf32, #tpu.memory_space<vmem>>, vector<1x256xf32>
    %249 = vector.broadcast %248 : vector<1x256xf32> to vector<16x256xf32>
    %250 = arith.addf %247, %249 : vector<16x256xf32>
    %251 = arith.addf %140, %250 : vector<16x256xf32>
    %cst_55 = arith.constant dense<0.000000e+00> : vector<16xf32>
    %252 = vector.multi_reduction <add>, %251, %cst_55 [1] : vector<16x256xf32> to vector<16xf32>
    %253 = vector.shape_cast %252 : vector<16xf32> to vector<16x1xf32>
    %cst_56 = arith.constant 2.560000e+02 : f32
    %254 = vector.broadcast %cst_56 : f32 to vector<16x1xf32>
    %255 = arith.divf %253, %254 : vector<16x1xf32>
    %256 = vector.broadcast %255 : vector<16x1xf32> to vector<16x256xf32>
    %257 = arith.subf %251, %256 : vector<16x256xf32>
    %258 = arith.mulf %257, %257 : vector<16x256xf32>
    %cst_57 = arith.constant dense<0.000000e+00> : vector<16xf32>
    %259 = vector.multi_reduction <add>, %258, %cst_57 [1] : vector<16x256xf32> to vector<16xf32>
    %260 = vector.shape_cast %259 : vector<16xf32> to vector<16x1xf32>
    %cst_58 = arith.constant 2.560000e+02 : f32
    %261 = vector.broadcast %cst_58 : f32 to vector<16x1xf32>
    %262 = arith.divf %260, %261 : vector<16x1xf32>
    %263 = vector.broadcast %255 : vector<16x1xf32> to vector<16x256xf32>
    %264 = arith.subf %251, %263 : vector<16x256xf32>
    %cst_59 = arith.constant 9.99999974E-6 : f32
    %265 = vector.broadcast %cst_59 : f32 to vector<16x1xf32>
    %266 = arith.addf %262, %265 : vector<16x1xf32>
    %267 = math.rsqrt %266 : vector<16x1xf32>
    %268 = vector.broadcast %267 : vector<16x1xf32> to vector<16x256xf32>
    %269 = arith.mulf %264, %268 : vector<16x256xf32>
    %c0_60 = arith.constant 0 : index
    %c0_61 = arith.constant 0 : index
    %270 = vector.load %arg17[%c0_60, %c0_61] : memref<1x256xf32, #tpu.memory_space<vmem>>, vector<1x256xf32>
    %271 = vector.broadcast %270 : vector<1x256xf32> to vector<16x256xf32>
    %272 = arith.mulf %269, %271 : vector<16x256xf32>
    %c0_62 = arith.constant 0 : index
    %c0_63 = arith.constant 0 : index
    %273 = vector.load %arg18[%c0_62, %c0_63] : memref<1x256xf32, #tpu.memory_space<vmem>>, vector<1x256xf32>
    %274 = vector.broadcast %273 : vector<1x256xf32> to vector<16x256xf32>
    %275 = arith.addf %272, %274 : vector<16x256xf32>
    %276 = arith.truncf %275 : vector<16x256xf32> to vector<16x256xbf16>
    %c0_64 = arith.constant 0 : index
    %c0_65 = arith.constant 0 : index
    %277 = vector.load %arg19[%c0_64, %c0_65] : memref<256x512xbf16, #tpu.memory_space<vmem>>, vector<256x512xbf16>
    %cst_66 = arith.constant dense<0.000000e+00> : vector<16x512xf32>
    %278 = tpu.matmul %276, %277, %cst_66 {dimension_numbers = #tpu.dot_dimension_numbers<[1], [0], [0], [1], [0, 0, 1, 1], [], []>} : vector<16x256xbf16>, vector<256x512xbf16>, vector<16x512xf32> -> vector<16x512xf32>
    %c0_67 = arith.constant 0 : index
    %c0_68 = arith.constant 0 : index
    %279 = vector.load %arg20[%c0_67, %c0_68] : memref<1x512xf32, #tpu.memory_space<vmem>>, vector<1x512xf32>
    %280 = vector.broadcast %279 : vector<1x512xf32> to vector<16x512xf32>
    %281 = arith.addf %278, %280 : vector<16x512xf32>
    %cst_69 = arith.constant 0.000000e+00 : f32
    %282 = vector.broadcast %cst_69 : f32 to vector<16x512xf32>
    %283 = arith.maximumf %281, %282 : vector<16x512xf32>
    %284 = arith.truncf %283 : vector<16x512xf32> to vector<16x512xbf16>
    %c0_70 = arith.constant 0 : index
    %c0_71 = arith.constant 0 : index
    %285 = vector.load %arg21[%c0_70, %c0_71] : memref<512x256xbf16, #tpu.memory_space<vmem>>, vector<512x256xbf16>
    %cst_72 = arith.constant dense<0.000000e+00> : vector<16x256xf32>
    %286 = tpu.matmul %284, %285, %cst_72 {dimension_numbers = #tpu.dot_dimension_numbers<[1], [0], [0], [1], [0, 0, 1, 1], [], []>} : vector<16x512xbf16>, vector<512x256xbf16>, vector<16x256xf32> -> vector<16x256xf32>
    %c0_73 = arith.constant 0 : index
    %c0_74 = arith.constant 0 : index
    %287 = vector.load %arg22[%c0_73, %c0_74] : memref<1x256xf32, #tpu.memory_space<vmem>>, vector<1x256xf32>
    %288 = vector.broadcast %287 : vector<1x256xf32> to vector<16x256xf32>
    %289 = arith.addf %286, %288 : vector<16x256xf32>
    %290 = arith.addf %275, %289 : vector<16x256xf32>
    %cst_75 = arith.constant dense<0.000000e+00> : vector<16xf32>
    %291 = vector.multi_reduction <add>, %290, %cst_75 [1] : vector<16x256xf32> to vector<16xf32>
    %292 = vector.shape_cast %291 : vector<16xf32> to vector<16x1xf32>
    %cst_76 = arith.constant 2.560000e+02 : f32
    %293 = vector.broadcast %cst_76 : f32 to vector<16x1xf32>
    %294 = arith.divf %292, %293 : vector<16x1xf32>
    %295 = vector.broadcast %294 : vector<16x1xf32> to vector<16x256xf32>
    %296 = arith.subf %290, %295 : vector<16x256xf32>
    %297 = arith.mulf %296, %296 : vector<16x256xf32>
    %cst_77 = arith.constant dense<0.000000e+00> : vector<16xf32>
    %298 = vector.multi_reduction <add>, %297, %cst_77 [1] : vector<16x256xf32> to vector<16xf32>
    %299 = vector.shape_cast %298 : vector<16xf32> to vector<16x1xf32>
    %cst_78 = arith.constant 2.560000e+02 : f32
    %300 = vector.broadcast %cst_78 : f32 to vector<16x1xf32>
    %301 = arith.divf %299, %300 : vector<16x1xf32>
    %302 = vector.broadcast %294 : vector<16x1xf32> to vector<16x256xf32>
    %303 = arith.subf %290, %302 : vector<16x256xf32>
    %cst_79 = arith.constant 9.99999974E-6 : f32
    %304 = vector.broadcast %cst_79 : f32 to vector<16x1xf32>
    %305 = arith.addf %301, %304 : vector<16x1xf32>
    %306 = math.rsqrt %305 : vector<16x1xf32>
    %307 = vector.broadcast %306 : vector<16x1xf32> to vector<16x256xf32>
    %308 = arith.mulf %303, %307 : vector<16x256xf32>
    %c0_80 = arith.constant 0 : index
    %c0_81 = arith.constant 0 : index
    %309 = vector.load %arg23[%c0_80, %c0_81] : memref<1x256xf32, #tpu.memory_space<vmem>>, vector<1x256xf32>
    %310 = vector.broadcast %309 : vector<1x256xf32> to vector<16x256xf32>
    %311 = arith.mulf %308, %310 : vector<16x256xf32>
    %c0_82 = arith.constant 0 : index
    %c0_83 = arith.constant 0 : index
    %312 = vector.load %arg24[%c0_82, %c0_83] : memref<1x256xf32, #tpu.memory_space<vmem>>, vector<1x256xf32>
    %313 = vector.broadcast %312 : vector<1x256xf32> to vector<16x256xf32>
    %314 = arith.addf %311, %313 : vector<16x256xf32>
    %315 = vector.shape_cast %314 : vector<16x256xf32> to vector<2x8x256xf32>
    %c0_84 = arith.constant 0 : index
    %c0_85 = arith.constant 0 : index
    %c0_86 = arith.constant 0 : index
    %316 = vector.load %arg25[%c0_84, %c0_85, %c0_86] : memref<2x8x256xf32, #tpu.memory_space<vmem>>, vector<2x8x256xf32>
    tpu.vector_store %arg25[%c0_84, %c0_85, %c0_86], %315 {strides = array<i32>} : memref<2x8x256xf32, #tpu.memory_space<vmem>>, vector<2x8x256xf32>,
    return
  }
  func.func @transform_0(%arg0: i32) -> (i32, i32, i32) {
    %c0_i32 = arith.constant 0 : i32
    %c0_i32_0 = arith.constant 0 : i32
    %c0_i32_1 = arith.constant 0 : i32
    return %arg0, %c0_i32, %c0_i32_0 : i32, i32, i32
  }
  func.func @transform_1(%arg0: i32) -> (i32, i32, i32) {
    %c0_i32 = arith.constant 0 : i32
    %c0_i32_0 = arith.constant 0 : i32
    %c0_i32_1 = arith.constant 0 : i32
    return %arg0, %c0_i32, %c0_i32_0 : i32, i32, i32
  }
  func.func @transform_2(%arg0: i32) -> (i32, i32, i32) {
    %c0_i32 = arith.constant 0 : i32
    %c0_i32_0 = arith.constant 0 : i32
    %c0_i32_1 = arith.constant 0 : i32
    return %arg0, %c0_i32, %c0_i32_0 : i32, i32, i32
  }
  func.func @transform_3(%arg0: i32) -> (i32, i32, i32) {
    %c0_i32 = arith.constant 0 : i32
    %c0_i32_0 = arith.constant 0 : i32
    %c0_i32_1 = arith.constant 0 : i32
    return %arg0, %c0_i32, %c0_i32_0 : i32, i32, i32
  }
  func.func @transform_4(%arg0: i32) -> (i32, i32) {
    %c0_i32 = arith.constant 0 : i32
    %c0_i32_0 = arith.constant 0 : i32
    %c0_i32_1 = arith.constant 0 : i32
    return %c0_i32, %c0_i32_0 : i32, i32
  }
  func.func @transform_5(%arg0: i32) -> (i32, i32) {
    %c0_i32 = arith.constant 0 : i32
    %c0_i32_0 = arith.constant 0 : i32
    %c0_i32_1 = arith.constant 0 : i32
    return %c0_i32, %c0_i32_0 : i32, i32
  }
  func.func @transform_6(%arg0: i32) -> (i32, i32) {
    %c0_i32 = arith.constant 0 : i32
    %c0_i32_0 = arith.constant 0 : i32
    %c0_i32_1 = arith.constant 0 : i32
    return %c0_i32, %c0_i32_0 : i32, i32
  }
  func.func @transform_7(%arg0: i32) -> (i32, i32) {
    %c0_i32 = arith.constant 0 : i32
    %c0_i32_0 = arith.constant 0 : i32
    %c0_i32_1 = arith.constant 0 : i32
    return %c0_i32, %c0_i32_0 : i32, i32
  }
  func.func @transform_8(%arg0: i32) -> (i32, i32) {
    %c0_i32 = arith.constant 0 : i32
    %c0_i32_0 = arith.constant 0 : i32
    %c0_i32_1 = arith.constant 0 : i32
    return %c0_i32, %c0_i32_0 : i32, i32
  }
  func.func @transform_9(%arg0: i32) -> (i32, i32) {
    %c0_i32 = arith.constant 0 : i32
    %c0_i32_0 = arith.constant 0 : i32
    %c0_i32_1 = arith.constant 0 : i32
    return %c0_i32, %c0_i32_0 : i32, i32
  }
  func.func @transform_10(%arg0: i32) -> (i32, i32) {
    %c0_i32 = arith.constant 0 : i32
    %c0_i32_0 = arith.constant 0 : i32
    %c0_i32_1 = arith.constant 0 : i32
    return %c0_i32, %c0_i32_0 : i32, i32
  }
  func.func @transform_11(%arg0: i32) -> (i32, i32) {
    %c0_i32 = arith.constant 0 : i32
    %c0_i32_0 = arith.constant 0 : i32
    %c0_i32_1 = arith.constant 0 : i32
    return %c0_i32, %c0_i32_0 : i32, i32
  }
  func.func @transform_12(%arg0: i32) -> (i32, i32) {
    %c0_i32 = arith.constant 0 : i32
    %c0_i32_0 = arith.constant 0 : i32
    %c0_i32_1 = arith.constant 0 : i32
    return %c0_i32, %c0_i32_0 : i32, i32
  }
  func.func @transform_13(%arg0: i32) -> (i32, i32) {
    %c0_i32 = arith.constant 0 : i32
    %c0_i32_0 = arith.constant 0 : i32
    %c0_i32_1 = arith.constant 0 : i32
    return %c0_i32, %c0_i32_0 : i32, i32
  }
  func.func @transform_14(%arg0: i32) -> (i32, i32) {
    %c0_i32 = arith.constant 0 : i32
    %c0_i32_0 = arith.constant 0 : i32
    %c0_i32_1 = arith.constant 0 : i32
    return %c0_i32, %c0_i32_0 : i32, i32
  }
  func.func @transform_15(%arg0: i32) -> (i32, i32) {
    %c0_i32 = arith.constant 0 : i32
    %c0_i32_0 = arith.constant 0 : i32
    %c0_i32_1 = arith.constant 0 : i32
    return %c0_i32, %c0_i32_0 : i32, i32
  }
  func.func @transform_16(%arg0: i32) -> (i32, i32) {
    %c0_i32 = arith.constant 0 : i32
    %c0_i32_0 = arith.constant 0 : i32
    %c0_i32_1 = arith.constant 0 : i32
    return %c0_i32, %c0_i32_0 : i32, i32
  }
  func.func @transform_17(%arg0: i32) -> (i32, i32) {
    %c0_i32 = arith.constant 0 : i32
    %c0_i32_0 = arith.constant 0 : i32
    %c0_i32_1 = arith.constant 0 : i32
    return %c0_i32, %c0_i32_0 : i32, i32
  }
  func.func @transform_18(%arg0: i32) -> (i32, i32) {
    %c0_i32 = arith.constant 0 : i32
    %c0_i32_0 = arith.constant 0 : i32
    %c0_i32_1 = arith.constant 0 : i32
    return %c0_i32, %c0_i32_0 : i32, i32
  }
  func.func @transform_19(%arg0: i32) -> (i32, i32) {
    %c0_i32 = arith.constant 0 : i32
    %c0_i32_0 = arith.constant 0 : i32
    %c0_i32_1 = arith.constant 0 : i32
    return %c0_i32, %c0_i32_0 : i32, i32
  }
  func.func @transform_20(%arg0: i32) -> (i32, i32) {
    %c0_i32 = arith.constant 0 : i32
    %c0_i32_0 = arith.constant 0 : i32
    %c0_i32_1 = arith.constant 0 : i32
    return %c0_i32, %c0_i32_0 : i32, i32
  }
  func.func @transform_21(%arg0: i32) -> (i32, i32) {
    %c0_i32 = arith.constant 0 : i32
    %c0_i32_0 = arith.constant 0 : i32
    %c0_i32_1 = arith.constant 0 : i32
    return %c0_i32, %c0_i32_0 : i32, i32
  }
  func.func @transform_22(%arg0: i32) -> (i32, i32) {
    %c0_i32 = arith.constant 0 : i32
    %c0_i32_0 = arith.constant 0 : i32
    %c0_i32_1 = arith.constant 0 : i32
    return %c0_i32, %c0_i32_0 : i32, i32
  }
  func.func @transform_23(%arg0: i32) -> (i32, i32) {
    %c0_i32 = arith.constant 0 : i32
    %c0_i32_0 = arith.constant 0 : i32
    %c0_i32_1 = arith.constant 0 : i32
    return %c0_i32, %c0_i32_0 : i32, i32
  }
  func.func @transform_24(%arg0: i32) -> (i32, i32, i32) {
    %c0_i32 = arith.constant 0 : i32
    %c0_i32_0 = arith.constant 0 : i32
    %c0_i32_1 = arith.constant 0 : i32
    return %arg0, %c0_i32, %c0_i32_0 : i32, i32, i32
  }
}

</mosaic_0001>

<llo_original>
// kernel: tpu_custom_call.1
$region0: #{tpu_custom_call.1}
  #allocation0 [shape = 'u32[]', space=smem, size = 0x4, offset = 0x4, fixed_abs, tag = 'smem constant byte address 0x4 - core index']
  #allocation1 [shape = 'u32[144,128]{1,0:T(1,128)}', space=vmem, size = 0x12000, scoped, tag = 'internal scratch']
  %s0 = inlined_call_operand.hbm [shape: f32[4,8,256], index: 0, kind: input, shape index: {}]
  %s1 = inlined_call_operand.hbm [shape: bf16[4,8,256], index: 1, kind: input, shape index: {}]
  %s2 = inlined_call_operand.hbm [shape: f32[4,8,8], index: 2, kind: input, shape index: {}]
  %s3 = inlined_call_operand.hbm [shape: f32[4,8,8], index: 3, kind: input, shape index: {}]
  %s4 = inlined_call_operand.hbm [shape: bf16[256,256], index: 4, kind: input, shape index: {}]
  %s5 = inlined_call_operand.hbm [shape: bf16[256,256], index: 5, kind: input, shape index: {}]
  %s6 = inlined_call_operand.hbm [shape: bf16[256,256], index: 6, kind: input, shape index: {}]
  %s7 = inlined_call_operand.hbm [shape: bf16[256,256], index: 7, kind: input, shape index: {}]
  %s8 = inlined_call_operand.vmem [shape: f32[1,256], index: 8, kind: input, shape index: {}]
  %s9 = inlined_call_operand.vmem [shape: f32[1,256], index: 9, kind: input, shape index: {}]
  %s10 = inlined_call_operand.vmem [shape: f32[1,256], index: 10, kind: input, shape index: {}]
  %s11 = inlined_call_operand.hbm [shape: bf16[256,256], index: 11, kind: input, shape index: {}]
  %s12 = inlined_call_operand.hbm [shape: bf16[256,256], index: 12, kind: input, shape index: {}]
  %s13 = inlined_call_operand.hbm [shape: bf16[256,256], index: 13, kind: input, shape index: {}]
  %s14 = inlined_call_operand.hbm [shape: bf16[256,256], index: 14, kind: input, shape index: {}]
  %s15 = inlined_call_operand.vmem [shape: f32[1,256], index: 15, kind: input, shape index: {}]
  %s16 = inlined_call_operand.vmem [shape: f32[1,256], index: 16, kind: input, shape index: {}]
  %s17 = inlined_call_operand.vmem [shape: f32[1,256], index: 17, kind: input, shape index: {}]
  %s18 = inlined_call_operand.hbm [shape: bf16[256,512], index: 18, kind: input, shape index: {}]
  %s19 = inlined_call_operand.vmem [shape: f32[1,512], index: 19, kind: input, shape index: {}]
  %s20 = inlined_call_operand.hbm [shape: bf16[512,256], index: 20, kind: input, shape index: {}]
  %s21 = inlined_call_operand.vmem [shape: f32[1,256], index: 21, kind: input, shape index: {}]
  %s22 = inlined_call_operand.vmem [shape: f32[1,256], index: 22, kind: input, shape index: {}]
  %s23 = inlined_call_operand.vmem [shape: f32[1,256], index: 23, kind: input, shape index: {}]
  %s24 = inlined_call_operand.hbm [shape: f32[4,8,256], index: 24, kind: output, shape index: {}]
  %s25 = sld [smem:[#allocation0]]
  $region185: #{tpu_custom_call.1} parent=0
    _
  %s27 = ssub.s32 1, %s25
  %s28 = scalar_select 0, %s27, %s25
  $region1: #{tpu_custom_call.1} parent=0
    #allocation2 [shape = 'u8[32768]{0}', space=vmem, size = 0x8000, scoped, tag = 'input window, operand 0']
    #allocation3 [shape = 's32[2]{0}', space=sflag, size = 0x8, scoped, tag = 'scoped memory for tpu_custom_call.1']
    #allocation4 [shape = 's32[2]{0}', space=sflag, size = 0x8, scoped, tag = 'scoped memory for tpu_custom_call.1']
    #allocation5 [shape = 'u8[16384]{0}', space=vmem, size = 0x4000, scoped, tag = 'input window, operand 1']
    #allocation6 [shape = 's32[2]{0}', space=sflag, size = 0x8, scoped, tag = 'scoped memory for tpu_custom_call.1']
    #allocation7 [shape = 'u8[16384]{0}', space=vmem, size = 0x4000, scoped, tag = 'input window, operand 2']
    #allocation8 [shape = 'u8[16384]{0}', space=vmem, size = 0x4000, scoped, tag = 'input window, operand 3']
    #allocation9 [shape = 's32[2]{0}', space=sflag, size = 0x8, scoped, tag = 'scoped memory for tpu_custom_call.1']
    #allocation10 [shape = 'u8[131072]{0}', space=vmem, size = 0x20000, scoped, tag = 'input window, operand 4, single buffered']
    #allocation11 [shape = 'u8[131072]{0}', space=vmem, size = 0x20000, scoped, tag = 'input window, operand 5, single buffered']
    #allocation12 [shape = 's32[1]{0}', space=sflag, size = 0x4, scoped, tag = 'scoped memory for tpu_custom_call.1']
    #allocation13 [shape = 'u8[131072]{0}', space=vmem, size = 0x20000, scoped, tag = 'input window, operand 6, single buffered']
    #allocation14 [shape = 'u8[131072]{0}', space=vmem, size = 0x20000, scoped, tag = 'input window, operand 7, single buffered']
    #allocation15 [shape = 's32[1]{0}', space=sflag, size = 0x4, scoped, tag = 'scoped memory for tpu_custom_call.1']
    #allocation16 [shape = 'u8[131072]{0}', space=vmem, size = 0x20000, scoped, tag = 'input window, operand 11, single buffered']
    #allocation17 [shape = 'u8[131072]{0}', space=vmem, size = 0x20000, scoped, tag = 'input window, operand 12, single buffered']
    #allocation18 [shape = 's32[1]{0}', space=sflag, size = 0x4, scoped, tag = 'scoped memory for tpu_custom_call.1']
    #allocation19 [shape = 'u8[131072]{0}', space=vmem, size = 0x20000, scoped, tag = 'input window, operand 13, single buffered']
    #allocation20 [shape = 'u8[131072]{0}', space=vmem, size = 0x20000, scoped, tag = 'input window, operand 14, single buffered']
    #allocation21 [shape = 's32[1]{0}', space=sflag, size = 0x4, scoped, tag = 'scoped memory for tpu_custom_call.1']
    #allocation22 [shape = 'u8[262144]{0}', space=vmem, size = 0x40000, scoped, tag = 'input window, operand 18, single buffered']
    #allocation23 [shape = 'u8[262144]{0}', space=vmem, size = 0x40000, scoped, tag = 'input window, operand 20, single buffered']
    #allocation24 [shape = 's32[1]{0}', space=sflag, size = 0x4, scoped, tag = 'scoped memory for tpu_custom_call.1']
    #allocation25 [shape = 'u8[32768]{0}', space=vmem, size = 0x8000, scoped, tag = 'output window, operand 0']
    %29 = vsyncpa [#allocation3], 0
    %s30 = scalar_lea.sflag [#allocation3], 1
    %31 = vsyncpa %s30, 0
    %32 = vsyncpa [#allocation6], 0
    %s33 = scalar_lea.sflag [#allocation6], 1
    %34 = vsyncpa %s33, 0
    %35 = vsyncpa [#allocation9], 0
    %s36 = scalar_lea.sflag [#allocation9], 1
    %37 = vsyncpa %s36, 0
    %38 = vsyncpa [#allocation12], 0
    %39 = vsyncpa [#allocation15], 0
    %40 = vsyncpa [#allocation18], 0
    %41 = vsyncpa [#allocation21], 0
    %42 = vsyncpa [#allocation24], 0
    %43 = vsyncpa [#allocation4], 0
    %s44 = scalar_lea.sflag [#allocation4], 1
    %45 = vsyncpa %s44, 0
    loop: start=0, step=1, limit=4
    $region2: #{tpu_custom_call.1} parent=1 // loop_pre_header
      _
    $region3: #{tpu_custom_call.1} parent=1 // loop_header
      %s47 = sphi 0, %s51
      %p48 = scmp.ge.s32.totalorder %s47, 4
      %s57 = sphi 0, %s59
      %s60 = sphi 0, %s57
      %s61 = sphi 0, %s60
      %s77 = sphi 0, %s61
      %s83 = sphi 0, %s85
      %s86 = sphi 0, %s83
      %s87 = sphi 0, %s86
      %s103 = sphi 0, %s87
      %s109 = sphi 0, %s111
      %s112 = sphi 0, %s109
      %s113 = sphi 0, %s112
      %s129 = sphi 0, %s113
      %s135 = sphi 0, %s137
      %s138 = sphi 0, %s135
      %s139 = sphi 0, %s138
      %s155 = sphi 0, %s139
      %s159 = sphi 0, %s159
      %s161 = sphi 0, %s159
      %s162 = sphi 0, %s161
      %s176 = sphi 0, %s162
      %s180 = sphi 0, %s180
      %s182 = sphi 0, %s180
      %s183 = sphi 0, %s182
      %s197 = sphi 0, %s183
      %s201 = sphi 0, %s201
      %s203 = sphi 0, %s201
      %s204 = sphi 0, %s203
      %s218 = sphi 0, %s204
      %s222 = sphi 0, %s222
      %s224 = sphi 0, %s222
      %s225 = sphi 0, %s224
      %s239 = sphi 0, %s225
      %s243 = sphi 0, %s243
      %s245 = sphi 0, %s243
      %s246 = sphi 0, %s245
      %s260 = sphi 0, %s246
      %s264 = sphi 0, %s264
      %s266 = sphi 0, %s264
      %s267 = sphi 0, %s266
      %s281 = sphi 0, %s267
      %s285 = sphi 0, %s285
      %s287 = sphi 0, %s285
      %s288 = sphi 0, %s287
      %s302 = sphi 0, %s288
      %s306 = sphi 0, %s306
      %s308 = sphi 0, %s306
      %s309 = sphi 0, %s308
      %s323 = sphi 0, %s309
      %s327 = sphi 0, %s327
      %s329 = sphi 0, %s327
      %s330 = sphi 0, %s329
      %s344 = sphi 0, %s330
      %s348 = sphi 0, %s348
      %s350 = sphi 0, %s348
      %s351 = sphi 0, %s350
      %s365 = sphi 0, %s351
      %s369 = sphi 0, %s369
      %s371 = sphi 0, %s369
      %s372 = sphi 0, %s371
      %s386 = sphi 0, %s372
      %s390 = sphi 0, %s390
      %s392 = sphi 0, %s390
      %s393 = sphi 0, %s392
      %s407 = sphi 0, %s393
      %s411 = sphi 0, %s411
      %s413 = sphi 0, %s411
      %s414 = sphi 0, %s413
      %s428 = sphi 0, %s414
      %s432 = sphi 0, %s432
      %s434 = sphi 0, %s432
      %s435 = sphi 0, %s434
      %s449 = sphi 0, %s435
      %s453 = sphi 0, %s453
      %s455 = sphi 0, %s453
      %s456 = sphi 0, %s455
      %s470 = sphi 0, %s456
      %s474 = sphi 0, %s474
      %s476 = sphi 0, %s474
      %s477 = sphi 0, %s476
      %s491 = sphi 0, %s477
      %s495 = sphi 0, %s495
      %s497 = sphi 0, %s495
      %s498 = sphi 0, %s497
      %s512 = sphi 0, %s498
      %s516 = sphi 0, %s516
      %s518 = sphi 0, %s516
      %s519 = sphi 0, %s518
      %s533 = sphi 0, %s519
      %s537 = sphi 0, %s537
      %s539 = sphi 0, %s537
      %s540 = sphi 0, %s539
      %s554 = sphi 0, %s540
      %s558 = sphi 0, %s558
      %s560 = sphi 0, %s558
      %s561 = sphi 0, %s560
      %s575 = sphi 0, %s561
      %s581 = sphi 0, %s583
      %s584 = sphi 0, %s581
      %s585 = sphi 0, %s584
      %s601 = sphi 0, %s585
    $region4: #{tpu_custom_call.1} parent=1 // loop_header_branch
      %50 = sbr.rel (%p48) target = $region8
    $region5: #{tpu_custom_call.1} parent=1 // loop_body
      %s52 = ssub.s32 %s47, 1
      %s53 = ssub.s32 %s47, 2
      %s54 = sadd.s32 %s47, 1
      %s55 = ssub.s32 %s47, %s54
      %p56 = scmp.eq.s32.totalorder %s55, 0
      %s58 = sadd.s32 %s57, 1
      %s59 = scalar_select %p56, %s57, %s58
      %p62 = pneg %p56
      %p63 = scmp.eq.s32.totalorder %s47, 1
      %p64 = por %p62, %p63
      %p65 = scmp.ne.s32.totalorder %s57, %s60
      %p66 = scmp.eq.s32.totalorder %s47, 0
      %p67 = por %p65, %p66
      %p68 = scmp.ne.s32.totalorder %s57, %s60
      %p69 = scmp.eq.s32.totalorder %s52, 1
      %p70 = por %p68, %p69
      %p71 = scmp.ne.s32.totalorder %s60, %s61
      %p72 = scmp.eq.s32.totalorder %s52, 0
      %p73 = por %p71, %p72
      %p74 = scmp.ne.s32.totalorder %s60, %s61
      %p75 = scmp.eq.s32.totalorder %s53, 1
      %p76 = por %p74, %p75
      %p78 = scmp.ne.s32.totalorder %s61, %s77
      %p79 = scmp.eq.s32.totalorder %s53, 0
      %p80 = por %p78, %p79
      %s81 = ssub.s32 %s47, %s54
      %p82 = scmp.eq.s32.totalorder %s81, 0
      %s84 = sadd.s32 %s83, 1
      %s85 = scalar_select %p82, %s83, %s84
      %p88 = pneg %p82
      %p89 = scmp.eq.s32.totalorder %s47, 1
      %p90 = por %p88, %p89
      %p91 = scmp.ne.s32.totalorder %s83, %s86
      %p92 = scmp.eq.s32.totalorder %s47, 0
      %p93 = por %p91, %p92
      %p94 = scmp.ne.s32.totalorder %s83, %s86
      %p95 = scmp.eq.s32.totalorder %s52, 1
      %p96 = por %p94, %p95
      %p97 = scmp.ne.s32.totalorder %s86, %s87
      %p98 = scmp.eq.s32.totalorder %s52, 0
      %p99 = por %p97, %p98
      %p100 = scmp.ne.s32.totalorder %s86, %s87
      %p101 = scmp.eq.s32.totalorder %s53, 1
      %p102 = por %p100, %p101
      %p104 = scmp.ne.s32.totalorder %s87, %s103
      %p105 = scmp.eq.s32.totalorder %s53, 0
      %p106 = por %p104, %p105
      %s107 = ssub.s32 %s47, %s54
      %p108 = scmp.eq.s32.totalorder %s107, 0
      %s110 = sadd.s32 %s109, 1
      %s111 = scalar_select %p108, %s109, %s110
      %p114 = pneg %p108
      %p115 = scmp.eq.s32.totalorder %s47, 1
      %p116 = por %p114, %p115
      %p117 = scmp.ne.s32.totalorder %s109, %s112
      %p118 = scmp.eq.s32.totalorder %s47, 0
      %p119 = por %p117, %p118
      %p120 = scmp.ne.s32.totalorder %s109, %s112
      %p121 = scmp.eq.s32.totalorder %s52, 1
      %p122 = por %p120, %p121
      %p123 = scmp.ne.s32.totalorder %s112, %s113
      %p124 = scmp.eq.s32.totalorder %s52, 0
      %p125 = por %p123, %p124
      %p126 = scmp.ne.s32.totalorder %s112, %s113
      %p127 = scmp.eq.s32.totalorder %s53, 1
      %p128 = por %p126, %p127
      %p130 = scmp.ne.s32.totalorder %s113, %s129
      %p131 = scmp.eq.s32.totalorder %s53, 0
      %p132 = por %p130, %p131
      %s133 = ssub.s32 %s47, %s54
      %p134 = scmp.eq.s32.totalorder %s133, 0
      %s136 = sadd.s32 %s135, 1
      %s137 = scalar_select %p134, %s135, %s136
      %p140 = pneg %p134
      %p141 = scmp.eq.s32.totalorder %s47, 1
      %p142 = por %p140, %p141
      %p143 = scmp.ne.s32.totalorder %s135, %s138
      %p144 = scmp.eq.s32.totalorder %s47, 0
      %p145 = por %p143, %p144
      %p146 = scmp.ne.s32.totalorder %s135, %s138
      %p147 = scmp.eq.s32.totalorder %s52, 1
      %p148 = por %p146, %p147
      %p149 = scmp.ne.s32.totalorder %s138, %s139
      %p150 = scmp.eq.s32.totalorder %s52, 0
      %p151 = por %p149, %p150
      %p152 = scmp.ne.s32.totalorder %s138, %s139
      %p153 = scmp.eq.s32.totalorder %s53, 1
      %p154 = por %p152, %p153
      %p156 = scmp.ne.s32.totalorder %s139, %s155
      %p157 = scmp.eq.s32.totalorder %s53, 0
      %p158 = por %p156, %p157
      %s160 = sadd.s32 %s159, 1
      %p163 = scmp.eq.s32.totalorder %s47, 1
      %p164 = scmp.ne.s32.totalorder %s159, %s161
      %p165 = scmp.eq.s32.totalorder %s47, 0
      %p166 = por %p164, %p165
      %p167 = scmp.ne.s32.totalorder %s159, %s161
      %p168 = scmp.eq.s32.totalorder %s52, 1
      %p169 = por %p167, %p168
      %p170 = scmp.ne.s32.totalorder %s161, %s162
      %p171 = scmp.eq.s32.totalorder %s52, 0
      %p172 = por %p170, %p171
      %p173 = scmp.ne.s32.totalorder %s161, %s162
      %p174 = scmp.eq.s32.totalorder %s53, 1
      %p175 = por %p173, %p174
      %p177 = scmp.ne.s32.totalorder %s162, %s176
      %p178 = scmp.eq.s32.totalorder %s53, 0
      %p179 = por %p177, %p178
      %s181 = sadd.s32 %s180, 1
      %p184 = scmp.eq.s32.totalorder %s47, 1
      %p185 = scmp.ne.s32.totalorder %s180, %s182
      %p186 = scmp.eq.s32.totalorder %s47, 0
      %p187 = por %p185, %p186
      %p188 = scmp.ne.s32.totalorder %s180, %s182
      %p189 = scmp.eq.s32.totalorder %s52, 1
      %p190 = por %p188, %p189
      %p191 = scmp.ne.s32.totalorder %s182, %s183
      %p192 = scmp.eq.s32.totalorder %s52, 0
      %p193 = por %p191, %p192
      %p194 = scmp.ne.s32.totalorder %s182, %s183
      %p195 = scmp.eq.s32.totalorder %s53, 1
      %p196 = por %p194, %p195
      %p198 = scmp.ne.s32.totalorder %s183, %s197
      %p199 = scmp.eq.s32.totalorder %s53, 0
      %p200 = por %p198, %p199
      %s202 = sadd.s32 %s201, 1
      %p205 = scmp.eq.s32.totalorder %s47, 1
      %p206 = scmp.ne.s32.totalorder %s201, %s203
      %p207 = scmp.eq.s32.totalorder %s47, 0
      %p208 = por %p206, %p207
      %p209 = scmp.ne.s32.totalorder %s201, %s203
      %p210 = scmp.eq.s32.totalorder %s52, 1
      %p211 = por %p209, %p210
      %p212 = scmp.ne.s32.totalorder %s203, %s204
      %p213 = scmp.eq.s32.totalorder %s52, 0
      %p214 = por %p212, %p213
      %p215 = scmp.ne.s32.totalorder %s203, %s204
      %p216 = scmp.eq.s32.totalorder %s53, 1
      %p217 = por %p215, %p216
      %p219 = scmp.ne.s32.totalorder %s204, %s218
      %p220 = scmp.eq.s32.totalorder %s53, 0
      %p221 = por %p219, %p220
      %s223 = sadd.s32 %s222, 1
      %p226 = scmp.eq.s32.totalorder %s47, 1
      %p227 = scmp.ne.s32.totalorder %s222, %s224
      %p228 = scmp.eq.s32.totalorder %s47, 0
      %p229 = por %p227, %p228
      %p230 = scmp.ne.s32.totalorder %s222, %s224
      %p231 = scmp.eq.s32.totalorder %s52, 1
      %p232 = por %p230, %p231
      %p233 = scmp.ne.s32.totalorder %s224, %s225
      %p234 = scmp.eq.s32.totalorder %s52, 0
      %p235 = por %p233, %p234
      %p236 = scmp.ne.s32.totalorder %s224, %s225
      %p237 = scmp.eq.s32.totalorder %s53, 1
      %p238 = por %p236, %p237
      %p240 = scmp.ne.s32.totalorder %s225, %s239
      %p241 = scmp.eq.s32.totalorder %s53, 0
      %p242 = por %p240, %p241
      %s244 = sadd.s32 %s243, 1
      %p247 = scmp.eq.s32.totalorder %s47, 1
      %p248 = scmp.ne.s32.totalorder %s243, %s245
      %p249 = scmp.eq.s32.totalorder %s47, 0
      %p250 = por %p248, %p249
      %p251 = scmp.ne.s32.totalorder %s243, %s245
      %p252 = scmp.eq.s32.totalorder %s52, 1
      %p253 = por %p251, %p252
      %p254 = scmp.ne.s32.totalorder %s245, %s246
      %p255 = scmp.eq.s32.totalorder %s52, 0
      %p256 = por %p254, %p255
      %p257 = scmp.ne.s32.totalorder %s245, %s246
      %p258 = scmp.eq.s32.totalorder %s53, 1
      %p259 = por %p257, %p258
      %p261 = scmp.ne.s32.totalorder %s246, %s260
      %p262 = scmp.eq.s32.totalorder %s53, 0
      %p263 = por %p261, %p262
      %s265 = sadd.s32 %s264, 1
      %p268 = scmp.eq.s32.totalorder %s47, 1
      %p269 = scmp.ne.s32.totalorder %s264, %s266
      %p270 = scmp.eq.s32.totalorder %s47, 0
      %p271 = por %p269, %p270
      %p272 = scmp.ne.s32.totalorder %s264, %s266
      %p273 = scmp.eq.s32.totalorder %s52, 1
      %p274 = por %p272, %p273
      %p275 = scmp.ne.s32.totalorder %s266, %s267
      %p276 = scmp.eq.s32.totalorder %s52, 0
      %p277 = por %p275, %p276
      %p278 = scmp.ne.s32.totalorder %s266, %s267
      %p279 = scmp.eq.s32.totalorder %s53, 1
      %p280 = por %p278, %p279
      %p282 = scmp.ne.s32.totalorder %s267, %s281
      %p283 = scmp.eq.s32.totalorder %s53, 0
      %p284 = por %p282, %p283
      %s286 = sadd.s32 %s285, 1
      %p289 = scmp.eq.s32.totalorder %s47, 1
      %p290 = scmp.ne.s32.totalorder %s285, %s287
      %p291 = scmp.eq.s32.totalorder %s47, 0
      %p292 = por %p290, %p291
      %p293 = scmp.ne.s32.totalorder %s285, %s287
      %p294 = scmp.eq.s32.totalorder %s52, 1
      %p295 = por %p293, %p294
      %p296 = scmp.ne.s32.totalorder %s287, %s288
      %p297 = scmp.eq.s32.totalorder %s52, 0
      %p298 = por %p296, %p297
      %p299 = scmp.ne.s32.totalorder %s287, %s288
      %p300 = scmp.eq.s32.totalorder %s53, 1
      %p301 = por %p299, %p300
      %p303 = scmp.ne.s32.totalorder %s288, %s302
      %p304 = scmp.eq.s32.totalorder %s53, 0
      %p305 = por %p303, %p304
      %s307 = sadd.s32 %s306, 1
      %p310 = scmp.eq.s32.totalorder %s47, 1
      %p311 = scmp.ne.s32.totalorder %s306, %s308
      %p312 = scmp.eq.s32.totalorder %s47, 0
      %p313 = por %p311, %p312
      %p314 = scmp.ne.s32.totalorder %s306, %s308
      %p315 = scmp.eq.s32.totalorder %s52, 1
      %p316 = por %p314, %p315
      %p317 = scmp.ne.s32.totalorder %s308, %s309
      %p318 = scmp.eq.s32.totalorder %s52, 0
      %p319 = por %p317, %p318
      %p320 = scmp.ne.s32.totalorder %s308, %s309
      %p321 = scmp.eq.s32.totalorder %s53, 1
      %p322 = por %p320, %p321
      %p324 = scmp.ne.s32.totalorder %s309, %s323
      %p325 = scmp.eq.s32.totalorder %s53, 0
      %p326 = por %p324, %p325
      %s328 = sadd.s32 %s327, 1
      %p331 = scmp.eq.s32.totalorder %s47, 1
      %p332 = scmp.ne.s32.totalorder %s327, %s329
      %p333 = scmp.eq.s32.totalorder %s47, 0
      %p334 = por %p332, %p333
      %p335 = scmp.ne.s32.totalorder %s327, %s329
      %p336 = scmp.eq.s32.totalorder %s52, 1
      %p337 = por %p335, %p336
      %p338 = scmp.ne.s32.totalorder %s329, %s330
      %p339 = scmp.eq.s32.totalorder %s52, 0
      %p340 = por %p338, %p339
      %p341 = scmp.ne.s32.totalorder %s329, %s330
      %p342 = scmp.eq.s32.totalorder %s53, 1
      %p343 = por %p341, %p342
      %p345 = scmp.ne.s32.totalorder %s330, %s344
      %p346 = scmp.eq.s32.totalorder %s53, 0
      %p347 = por %p345, %p346
      %s349 = sadd.s32 %s348, 1
      %p352 = scmp.eq.s32.totalorder %s47, 1
      %p353 = scmp.ne.s32.totalorder %s348, %s350
      %p354 = scmp.eq.s32.totalorder %s47, 0
      %p355 = por %p353, %p354
      %p356 = scmp.ne.s32.totalorder %s348, %s350
      %p357 = scmp.eq.s32.totalorder %s52, 1
      %p358 = por %p356, %p357
      %p359 = scmp.ne.s32.totalorder %s350, %s351
      %p360 = scmp.eq.s32.totalorder %s52, 0
      %p361 = por %p359, %p360
      %p362 = scmp.ne.s32.totalorder %s350, %s351
      %p363 = scmp.eq.s32.totalorder %s53, 1
      %p364 = por %p362, %p363
      %p366 = scmp.ne.s32.totalorder %s351, %s365
      %p367 = scmp.eq.s32.totalorder %s53, 0
      %p368 = por %p366, %p367
      %s370 = sadd.s32 %s369, 1
      %p373 = scmp.eq.s32.totalorder %s47, 1
      %p374 = scmp.ne.s32.totalorder %s369, %s371
      %p375 = scmp.eq.s32.totalorder %s47, 0
      %p376 = por %p374, %p375
      %p377 = scmp.ne.s32.totalorder %s369, %s371
      %p378 = scmp.eq.s32.totalorder %s52, 1
      %p379 = por %p377, %p378
      %p380 = scmp.ne.s32.totalorder %s371, %s372
      %p381 = scmp.eq.s32.totalorder %s52, 0
      %p382 = por %p380, %p381
      %p383 = scmp.ne.s32.totalorder %s371, %s372
      %p384 = scmp.eq.s32.totalorder %s53, 1
      %p385 = por %p383, %p384
      %p387 = scmp.ne.s32.totalorder %s372, %s386
      %p388 = scmp.eq.s32.totalorder %s53, 0
      %p389 = por %p387, %p388
      %s391 = sadd.s32 %s390, 1
      %p394 = scmp.eq.s32.totalorder %s47, 1
      %p395 = scmp.ne.s32.totalorder %s390, %s392
      %p396 = scmp.eq.s32.totalorder %s47, 0
      %p397 = por %p395, %p396
      %p398 = scmp.ne.s32.totalorder %s390, %s392
      %p399 = scmp.eq.s32.totalorder %s52, 1
      %p400 = por %p398, %p399
      %p401 = scmp.ne.s32.totalorder %s392, %s393
      %p402 = scmp.eq.s32.totalorder %s52, 0
      %p403 = por %p401, %p402
      %p404 = scmp.ne.s32.totalorder %s392, %s393
      %p405 = scmp.eq.s32.totalorder %s53, 1
      %p406 = por %p404, %p405
      %p408 = scmp.ne.s32.totalorder %s393, %s407
      %p409 = scmp.eq.s32.totalorder %s53, 0
      %p410 = por %p408, %p409
      %s412 = sadd.s32 %s411, 1
      %p415 = scmp.eq.s32.totalorder %s47, 1
      %p416 = scmp.ne.s32.totalorder %s411, %s413
      %p417 = scmp.eq.s32.totalorder %s47, 0
      %p418 = por %p416, %p417
      %p419 = scmp.ne.s32.totalorder %s411, %s413
      %p420 = scmp.eq.s32.totalorder %s52, 1
      %p421 = por %p419, %p420
      %p422 = scmp.ne.s32.totalorder %s413, %s414
      %p423 = scmp.eq.s32.totalorder %s52, 0
      %p424 = por %p422, %p423
      %p425 = scmp.ne.s32.totalorder %s413, %s414
      %p426 = scmp.eq.s32.totalorder %s53, 1
      %p427 = por %p425, %p426
      %p429 = scmp.ne.s32.totalorder %s414, %s428
      %p430 = scmp.eq.s32.totalorder %s53, 0
      %p431 = por %p429, %p430
      %s433 = sadd.s32 %s432, 1
      %p436 = scmp.eq.s32.totalorder %s47, 1
      %p437 = scmp.ne.s32.totalorder %s432, %s434
      %p438 = scmp.eq.s32.totalorder %s47, 0
      %p439 = por %p437, %p438
      %p440 = scmp.ne.s32.totalorder %s432, %s434
      %p441 = scmp.eq.s32.totalorder %s52, 1
      %p442 = por %p440, %p441
      %p443 = scmp.ne.s32.totalorder %s434, %s435
      %p444 = scmp.eq.s32.totalorder %s52, 0
      %p445 = por %p443, %p444
      %p446 = scmp.ne.s32.totalorder %s434, %s435
      %p447 = scmp.eq.s32.totalorder %s53, 1
      %p448 = por %p446, %p447
      %p450 = scmp.ne.s32.totalorder %s435, %s449
      %p451 = scmp.eq.s32.totalorder %s53, 0
      %p452 = por %p450, %p451
      %s454 = sadd.s32 %s453, 1
      %p457 = scmp.eq.s32.totalorder %s47, 1
      %p458 = scmp.ne.s32.totalorder %s453, %s455
      %p459 = scmp.eq.s32.totalorder %s47, 0
      %p460 = por %p458, %p459
      %p461 = scmp.ne.s32.totalorder %s453, %s455
      %p462 = scmp.eq.s32.totalorder %s52, 1
      %p463 = por %p461, %p462
      %p464 = scmp.ne.s32.totalorder %s455, %s456
      %p465 = scmp.eq.s32.totalorder %s52, 0
      %p466 = por %p464, %p465
      %p467 = scmp.ne.s32.totalorder %s455, %s456
      %p468 = scmp.eq.s32.totalorder %s53, 1
      %p469 = por %p467, %p468
      %p471 = scmp.ne.s32.totalorder %s456, %s470
      %p472 = scmp.eq.s32.totalorder %s53, 0
      %p473 = por %p471, %p472
      %s475 = sadd.s32 %s474, 1
      %p478 = scmp.eq.s32.totalorder %s47, 1
      %p479 = scmp.ne.s32.totalorder %s474, %s476
      %p480 = scmp.eq.s32.totalorder %s47, 0
      %p481 = por %p479, %p480
      %p482 = scmp.ne.s32.totalorder %s474, %s476
      %p483 = scmp.eq.s32.totalorder %s52, 1
      %p484 = por %p482, %p483
      %p485 = scmp.ne.s32.totalorder %s476, %s477
      %p486 = scmp.eq.s32.totalorder %s52, 0
      %p487 = por %p485, %p486
      %p488 = scmp.ne.s32.totalorder %s476, %s477
      %p489 = scmp.eq.s32.totalorder %s53, 1
      %p490 = por %p488, %p489
      %p492 = scmp.ne.s32.totalorder %s477, %s491
      %p493 = scmp.eq.s32.totalorder %s53, 0
      %p494 = por %p492, %p493
      %s496 = sadd.s32 %s495, 1
      %p499 = scmp.eq.s32.totalorder %s47, 1
      %p500 = scmp.ne.s32.totalorder %s495, %s497
      %p501 = scmp.eq.s32.totalorder %s47, 0
      %p502 = por %p500, %p501
      %p503 = scmp.ne.s32.totalorder %s495, %s497
      %p504 = scmp.eq.s32.totalorder %s52, 1
      %p505 = por %p503, %p504
      %p506 = scmp.ne.s32.totalorder %s497, %s498
      %p507 = scmp.eq.s32.totalorder %s52, 0
      %p508 = por %p506, %p507
      %p509 = scmp.ne.s32.totalorder %s497, %s498
      %p510 = scmp.eq.s32.totalorder %s53, 1
      %p511 = por %p509, %p510
      %p513 = scmp.ne.s32.totalorder %s498, %s512
      %p514 = scmp.eq.s32.totalorder %s53, 0
      %p515 = por %p513, %p514
      %s517 = sadd.s32 %s516, 1
      %p520 = scmp.eq.s32.totalorder %s47, 1
      %p521 = scmp.ne.s32.totalorder %s516, %s518
      %p522 = scmp.eq.s32.totalorder %s47, 0
      %p523 = por %p521, %p522
      %p524 = scmp.ne.s32.totalorder %s516, %s518
      %p525 = scmp.eq.s32.totalorder %s52, 1
      %p526 = por %p524, %p525
      %p527 = scmp.ne.s32.totalorder %s518, %s519
      %p528 = scmp.eq.s32.totalorder %s52, 0
      %p529 = por %p527, %p528
      %p530 = scmp.ne.s32.totalorder %s518, %s519
      %p531 = scmp.eq.s32.totalorder %s53, 1
      %p532 = por %p530, %p531
      %p534 = scmp.ne.s32.totalorder %s519, %s533
      %p535 = scmp.eq.s32.totalorder %s53, 0
      %p536 = por %p534, %p535
      %s538 = sadd.s32 %s537, 1
      %p541 = scmp.eq.s32.totalorder %s47, 1
      %p542 = scmp.ne.s32.totalorder %s537, %s539
      %p543 = scmp.eq.s32.totalorder %s47, 0
      %p544 = por %p542, %p543
      %p545 = scmp.ne.s32.totalorder %s537, %s539
      %p546 = scmp.eq.s32.totalorder %s52, 1
      %p547 = por %p545, %p546
      %p548 = scmp.ne.s32.totalorder %s539, %s540
      %p549 = scmp.eq.s32.totalorder %s52, 0
      %p550 = por %p548, %p549
      %p551 = scmp.ne.s32.totalorder %s539, %s540
      %p552 = scmp.eq.s32.totalorder %s53, 1
      %p553 = por %p551, %p552
      %p555 = scmp.ne.s32.totalorder %s540, %s554
      %p556 = scmp.eq.s32.totalorder %s53, 0
      %p557 = por %p555, %p556
      %s559 = sadd.s32 %s558, 1
      %p562 = scmp.eq.s32.totalorder %s47, 1
      %p563 = scmp.ne.s32.totalorder %s558, %s560
      %p564 = scmp.eq.s32.totalorder %s47, 0
      %p565 = por %p563, %p564
      %p566 = scmp.ne.s32.totalorder %s558, %s560
      %p567 = scmp.eq.s32.totalorder %s52, 1
      %p568 = por %p566, %p567
      %p569 = scmp.ne.s32.totalorder %s560, %s561
      %p570 = scmp.eq.s32.totalorder %s52, 0
      %p571 = por %p569, %p570
      %p572 = scmp.ne.s32.totalorder %s560, %s561
      %p573 = scmp.eq.s32.totalorder %s53, 1
      %p574 = por %p572, %p573
      %p576 = scmp.ne.s32.totalorder %s561, %s575
      %p577 = scmp.eq.s32.totalorder %s53, 0
      %p578 = por %p576, %p577
      %s579 = ssub.s32 %s47, %s54
      %p580 = scmp.eq.s32.totalorder %s579, 0
      %s582 = sadd.s32 %s581, 1
      %s583 = scalar_select %p580, %s581, %s582
      %p586 = pneg %p580
      %p587 = scmp.eq.s32.totalorder %s47, 1
      %p588 = por %p586, %p587
      %p589 = scmp.ne.s32.totalorder %s581, %s584
      %p590 = scmp.eq.s32.totalorder %s47, 0
      %p591 = por %p589, %p590
      %p592 = scmp.ne.s32.totalorder %s581, %s584
      %p593 = scmp.eq.s32.totalorder %s52, 1
      %p594 = por %p592, %p593
      %p595 = scmp.ne.s32.totalorder %s584, %s585
      %p596 = scmp.eq.s32.totalorder %s52, 0
      %p597 = por %p595, %p596
      %p598 = scmp.ne.s32.totalorder %s584, %s585
      %p599 = scmp.eq.s32.totalorder %s53, 1
      %p600 = por %p598, %p599
      %p602 = scmp.ne.s32.totalorder %s585, %s601
      %p603 = scmp.eq.s32.totalorder %s53, 0
      %p604 = por %p602, %p603
      %p605 = scmp.le.s32.totalorder 1, %s47
      %p606 = scmp.lt.s32.totalorder %s47, 3
      %p607 = pnand %p605, %p606
      %p608 = pneg %p607
      // Predicated region
      $region9: #{tpu_custom_call.1} parent=5 // pred_check
        _
      $region10: #{tpu_custom_call.1} parent=5 // pred_check_branch
        %610 = sbr.rel (%p607) target = $region12
      $region11: #{tpu_custom_call.1} parent=5 // pred_region
        %s611 = ssub.s32 %s47, 1
        // Predicated region
        $region13: #{tpu_custom_call.1} parent=11 // pred_check
          %p612 = pneg %p172
        $region14: #{tpu_custom_call.1} parent=11 // pred_check_branch
          %614 = sbr.rel (%p612) target = $region16
        $region15: #{tpu_custom_call.1} parent=11 // pred_region
          %s616 = ssub.s32 4096, 4096
          %617 = vsyncadd [#allocation9], %s616
          %s618 = sshll.u32 [#allocation10], 4
          %s619 = int_to_ptr.vmem [resolvable:$true] %s618
          %624 = dma.hbm_to_vmem [thread:$0]  %s4, 4096, %s619, [#allocation9], 128, 128, 8
        $region16: #{tpu_custom_call.1} parent=11 // pred_fallthru
          _
        // Predicated region
        $region17: #{tpu_custom_call.1} parent=11 // pred_check
          %p625 = pneg %p193
        $region18: #{tpu_custom_call.1} parent=11 // pred_check_branch
          %627 = sbr.rel (%p625) target = $region20
        $region19: #{tpu_custom_call.1} parent=11 // pred_region
          %s629 = ssub.s32 4096, 4096
          %630 = vsyncadd [#allocation12], %s629
          %s631 = sshll.u32 [#allocation11], 4
          %s632 = int_to_ptr.vmem [resolvable:$true] %s631
          %637 = dma.hbm_to_vmem [thread:$0]  %s5, 4096, %s632, [#allocation12], 128, 128, 8
        $region20: #{tpu_custom_call.1} parent=11 // pred_fallthru
          _
        // Predicated region
        $region21: #{tpu_custom_call.1} parent=11 // pred_check
          %p638 = pneg %p214
        $region22: #{tpu_custom_call.1} parent=11 // pred_check_branch
          %640 = sbr.rel (%p638) target = $region24
        $region23: #{tpu_custom_call.1} parent=11 // pred_region
          %s642 = ssub.s32 4096, 4096
          %643 = vsyncadd [#allocation12], %s642
          %s644 = sshll.u32 [#allocation13], 4
          %s645 = int_to_ptr.vmem [resolvable:$true] %s644
          %650 = dma.hbm_to_vmem [thread:$0]  %s6, 4096, %s645, [#allocation12], 128, 128, 8
        $region24: #{tpu_custom_call.1} parent=11 // pred_fallthru
          _
        // Predicated region
        $region25: #{tpu_custom_call.1} parent=11 // pred_check
          %p651 = pneg %p235
        $region26: #{tpu_custom_call.1} parent=11 // pred_check_branch
          %653 = sbr.rel (%p651) target = $region28
        $region27: #{tpu_custom_call.1} parent=11 // pred_region
          %s655 = ssub.s32 4096, 4096
          %656 = vsyncadd [#allocation15], %s655
          %s657 = sshll.u32 [#allocation14], 4
          %s658 = int_to_ptr.vmem [resolvable:$true] %s657
          %663 = dma.hbm_to_vmem [thread:$0]  %s7, 4096, %s658, [#allocation15], 128, 128, 8
        $region28: #{tpu_custom_call.1} parent=11 // pred_fallthru
          _
        // Predicated region
        $region29: #{tpu_custom_call.1} parent=11 // pred_check
          %p664 = pneg %p256
        $region30: #{tpu_custom_call.1} parent=11 // pred_check_branch
          %666 = sbr.rel (%p664) target = $region32
        $region31: #{tpu_custom_call.1} parent=11 // pred_region
          _
        $region32: #{tpu_custom_call.1} parent=11 // pred_fallthru
          _
        // Predicated region
        $region33: #{tpu_custom_call.1} parent=11 // pred_check
          %p667 = pneg %p277
        $region34: #{tpu_custom_call.1} parent=11 // pred_check_branch
          %669 = sbr.rel (%p667) target = $region36
        $region35: #{tpu_custom_call.1} parent=11 // pred_region
          _
        $region36: #{tpu_custom_call.1} parent=11 // pred_fallthru
          _
        // Predicated region
        $region37: #{tpu_custom_call.1} parent=11 // pred_check
          %p670 = pneg %p298
        $region38: #{tpu_custom_call.1} parent=11 // pred_check_branch
          %672 = sbr.rel (%p670) target = $region40
        $region39: #{tpu_custom_call.1} parent=11 // pred_region
          _
        $region40: #{tpu_custom_call.1} parent=11 // pred_fallthru
          _
        // Predicated region
        $region41: #{tpu_custom_call.1} parent=11 // pred_check
          %p673 = pneg %p319
        $region42: #{tpu_custom_call.1} parent=11 // pred_check_branch
          %675 = sbr.rel (%p673) target = $region44
        $region43: #{tpu_custom_call.1} parent=11 // pred_region
          %s677 = ssub.s32 4096, 4096
          %678 = vsyncadd [#allocation15], %s677
          %s679 = sshll.u32 [#allocation16], 4
          %s680 = int_to_ptr.vmem [resolvable:$true] %s679
          %685 = dma.hbm_to_vmem [thread:$0]  %s11, 4096, %s680, [#allocation15], 128, 128, 8
        $region44: #{tpu_custom_call.1} parent=11 // pred_fallthru
          _
        // Predicated region
        $region45: #{tpu_custom_call.1} parent=11 // pred_check
          %p686 = pneg %p340
        $region46: #{tpu_custom_call.1} parent=11 // pred_check_branch
          %688 = sbr.rel (%p686) target = $region48
        $region47: #{tpu_custom_call.1} parent=11 // pred_region
          %s690 = ssub.s32 4096, 4096
          %691 = vsyncadd [#allocation18], %s690
          %s692 = sshll.u32 [#allocation17], 4
          %s693 = int_to_ptr.vmem [resolvable:$true] %s692
          %698 = dma.hbm_to_vmem [thread:$0]  %s12, 4096, %s693, [#allocation18], 128, 128, 8
        $region48: #{tpu_custom_call.1} parent=11 // pred_fallthru
          _
        // Predicated region
        $region49: #{tpu_custom_call.1} parent=11 // pred_check
          %p699 = pneg %p361
        $region50: #{tpu_custom_call.1} parent=11 // pred_check_branch
          %701 = sbr.rel (%p699) target = $region52
        $region51: #{tpu_custom_call.1} parent=11 // pred_region
          %s703 = ssub.s32 4096, 4096
          %704 = vsyncadd [#allocation18], %s703
          %s705 = sshll.u32 [#allocation19], 4
          %s706 = int_to_ptr.vmem [resolvable:$true] %s705
          %711 = dma.hbm_to_vmem [thread:$0]  %s13, 4096, %s706, [#allocation18], 128, 128, 8
        $region52: #{tpu_custom_call.1} parent=11 // pred_fallthru
          _
        // Predicated region
        $region53: #{tpu_custom_call.1} parent=11 // pred_check
          %p712 = pneg %p382
        $region54: #{tpu_custom_call.1} parent=11 // pred_check_branch
          %714 = sbr.rel (%p712) target = $region56
        $region55: #{tpu_custom_call.1} parent=11 // pred_region
          %s716 = ssub.s32 4096, 4096
          %717 = vsyncadd [#allocation21], %s716
          %s718 = sshll.u32 [#allocation20], 4
          %s719 = int_to_ptr.vmem [resolvable:$true] %s718
          %724 = dma.hbm_to_vmem [thread:$0]  %s14, 4096, %s719, [#allocation21], 128, 128, 8
        $region56: #{tpu_custom_call.1} parent=11 // pred_fallthru
          _
        // Predicated region
        $region57: #{tpu_custom_call.1} parent=11 // pred_check
          %p725 = pneg %p403
        $region58: #{tpu_custom_call.1} parent=11 // pred_check_branch
          %727 = sbr.rel (%p725) target = $region60
        $region59: #{tpu_custom_call.1} parent=11 // pred_region
          _
        $region60: #{tpu_custom_call.1} parent=11 // pred_fallthru
          _
        // Predicated region
        $region61: #{tpu_custom_call.1} parent=11 // pred_check
          %p728 = pneg %p424
        $region62: #{tpu_custom_call.1} parent=11 // pred_check_branch
          %730 = sbr.rel (%p728) target = $region64
        $region63: #{tpu_custom_call.1} parent=11 // pred_region
          _
        $region64: #{tpu_custom_call.1} parent=11 // pred_fallthru
          _
        // Predicated region
        $region65: #{tpu_custom_call.1} parent=11 // pred_check
          %p731 = pneg %p445
        $region66: #{tpu_custom_call.1} parent=11 // pred_check_branch
          %733 = sbr.rel (%p731) target = $region68
        $region67: #{tpu_custom_call.1} parent=11 // pred_region
          _
        $region68: #{tpu_custom_call.1} parent=11 // pred_fallthru
          _
        // Predicated region
        $region69: #{tpu_custom_call.1} parent=11 // pred_check
          %p734 = pneg %p466
        $region70: #{tpu_custom_call.1} parent=11 // pred_check_branch
          %736 = sbr.rel (%p734) target = $region72
        $region71: #{tpu_custom_call.1} parent=11 // pred_region
          %s738 = ssub.s32 8192, 8192
          %739 = vsyncadd [#allocation21], %s738
          %s740 = sshll.u32 [#allocation22], 4
          %s741 = int_to_ptr.vmem [resolvable:$true] %s740
          %746 = dma.hbm_to_vmem [thread:$0]  %s18, 8192, %s741, [#allocation21], 256, 256, 16
        $region72: #{tpu_custom_call.1} parent=11 // pred_fallthru
          _
        // Predicated region
        $region73: #{tpu_custom_call.1} parent=11 // pred_check
          %p747 = pneg %p487
        $region74: #{tpu_custom_call.1} parent=11 // pred_check_branch
          %749 = sbr.rel (%p747) target = $region76
        $region75: #{tpu_custom_call.1} parent=11 // pred_region
          _
        $region76: #{tpu_custom_call.1} parent=11 // pred_fallthru
          _
        // Predicated region
        $region77: #{tpu_custom_call.1} parent=11 // pred_check
          %p750 = pneg %p508
        $region78: #{tpu_custom_call.1} parent=11 // pred_check_branch
          %752 = sbr.rel (%p750) target = $region80
        $region79: #{tpu_custom_call.1} parent=11 // pred_region
          %s754 = ssub.s32 8192, 8192
          %755 = vsyncadd [#allocation24], %s754
          %s756 = sshll.u32 [#allocation23], 4
          %s757 = int_to_ptr.vmem [resolvable:$true] %s756
          %762 = dma.hbm_to_vmem [thread:$0]  %s20, 8192, %s757, [#allocation24], 128, 128, 8
        $region80: #{tpu_custom_call.1} parent=11 // pred_fallthru
          _
        // Predicated region
        $region81: #{tpu_custom_call.1} parent=11 // pred_check
          %p763 = pneg %p529
        $region82: #{tpu_custom_call.1} parent=11 // pred_check_branch
          %765 = sbr.rel (%p763) target = $region84
        $region83: #{tpu_custom_call.1} parent=11 // pred_region
          _
        $region84: #{tpu_custom_call.1} parent=11 // pred_fallthru
          _
        // Predicated region
        $region85: #{tpu_custom_call.1} parent=11 // pred_check
          %p766 = pneg %p550
        $region86: #{tpu_custom_call.1} parent=11 // pred_check_branch
          %768 = sbr.rel (%p766) target = $region88
        $region87: #{tpu_custom_call.1} parent=11 // pred_region
          _
        $region88: #{tpu_custom_call.1} parent=11 // pred_fallthru
          _
        // Predicated region
        $region89: #{tpu_custom_call.1} parent=11 // pred_check
          %p769 = pneg %p571
        $region90: #{tpu_custom_call.1} parent=11 // pred_check_branch
          %771 = sbr.rel (%p769) target = $region92
        $region91: #{tpu_custom_call.1} parent=11 // pred_region
          _
        $region92: #{tpu_custom_call.1} parent=11 // pred_fallthru
          _
      $region12: #{tpu_custom_call.1} parent=5 // pred_fallthru
        _
      %p772 = scmp.lt.s32.totalorder %s47, 2
      // Predicated region
      $region93: #{tpu_custom_call.1} parent=5 // pred_check
        %p773 = pneg %p772
      $region94: #{tpu_custom_call.1} parent=5 // pred_check_branch
        %775 = sbr.rel (%p773) target = $region96
      $region95: #{tpu_custom_call.1} parent=5 // pred_region
        // Predicated region
        $region97: #{tpu_custom_call.1} parent=95 // pred_check
          %p776 = pneg %p67
        $region98: #{tpu_custom_call.1} parent=95 // pred_check_branch
          %778 = sbr.rel (%p776) target = $region100
        $region99: #{tpu_custom_call.1} parent=95 // pred_region
          %s779 = sand.u32 %s57, 1
          %s780 = scalar_lea.sflag [#allocation3], %s779
          %s781 = sand.u32 %s57, 1
          %s782 = smul.addr %s781, 32
          %s783 = scalar_lea.vmem [#allocation2], %s782
          %s784 = smul.u32 2, %s47
          %s786 = ssub.s32 512, 512
          %787 = vsyncadd %s780, %s786
          %s788 = smul.addr %s784, 2
          %s789 = smul.addr %s788, 128
          %s790 = scalar_lea.hbm %s0, %s789
          %s791 = sshll.u32 %s783, 4
          %s792 = int_to_ptr.vmem [resolvable:$true] %s791
          %797 = dma.hbm_to_vmem [thread:$0]  %s790, 512, %s792, %s780, 256, 256, 16
        $region100: #{tpu_custom_call.1} parent=95 // pred_fallthru
          _
        // Predicated region
        $region101: #{tpu_custom_call.1} parent=95 // pred_check
          %p798 = pneg %p93
        $region102: #{tpu_custom_call.1} parent=95 // pred_check_branch
          %800 = sbr.rel (%p798) target = $region104
        $region103: #{tpu_custom_call.1} parent=95 // pred_region
          %s801 = sand.u32 %s47, 1
          %s802 = scalar_lea.sflag [#allocation6], %s801
          %s803 = sand.u32 %s83, 1
          %s804 = smul.addr %s803, 16
          %s805 = scalar_lea.vmem [#allocation5], %s804
          %s806 = smul.u32 2, %s47
          %s808 = ssub.s32 256, 256
          %809 = vsyncadd %s802, %s808
          %s810 = smul.addr %s806, 2
          %s811 = smul.addr %s810, 64
          %s812 = scalar_lea.hbm %s1, %s811
          %s813 = sshll.u32 %s805, 4
          %s814 = int_to_ptr.vmem [resolvable:$true] %s813
          %819 = dma.hbm_to_vmem [thread:$0]  %s812, 256, %s814, %s802, 128, 128, 8
        $region104: #{tpu_custom_call.1} parent=95 // pred_fallthru
          _
        // Predicated region
        $region105: #{tpu_custom_call.1} parent=95 // pred_check
          %p820 = pneg %p119
        $region106: #{tpu_custom_call.1} parent=95 // pred_check_branch
          %822 = sbr.rel (%p820) target = $region108
        $region107: #{tpu_custom_call.1} parent=95 // pred_region
          %s823 = sand.u32 %s47, 1
          %s824 = scalar_lea.sflag [#allocation6], %s823
          %s825 = sand.u32 %s109, 1
          %s826 = smul.addr %s825, 16
          %s827 = scalar_lea.vmem [#allocation7], %s826
          %s828 = smul.u32 2, %s47
          %s830 = ssub.s32 256, 256
          %831 = vsyncadd %s824, %s830
          %s832 = smul.addr %s828, 128
          %s833 = scalar_lea.hbm %s2, %s832
          %s834 = sshll.u32 %s827, 4
          %s835 = int_to_ptr.vmem [resolvable:$true] %s834
          %840 = dma.hbm_to_vmem [thread:$0]  %s833, 256, %s835, %s824, 128, 128, 8
        $region108: #{tpu_custom_call.1} parent=95 // pred_fallthru
          _
        // Predicated region
        $region109: #{tpu_custom_call.1} parent=95 // pred_check
          %p841 = pneg %p145
        $region110: #{tpu_custom_call.1} parent=95 // pred_check_branch
          %843 = sbr.rel (%p841) target = $region112
        $region111: #{tpu_custom_call.1} parent=95 // pred_region
          %s844 = sand.u32 %s47, 1
          %s845 = scalar_lea.sflag [#allocation9], %s844
          %s846 = sand.u32 %s135, 1
          %s847 = smul.addr %s846, 16
          %s848 = scalar_lea.vmem [#allocation8], %s847
          %s849 = smul.u32 2, %s47
          %s851 = ssub.s32 256, 256
          %852 = vsyncadd %s845, %s851
          %s853 = smul.addr %s849, 128
          %s854 = scalar_lea.hbm %s3, %s853
          %s855 = sshll.u32 %s848, 4
          %s856 = int_to_ptr.vmem [resolvable:$true] %s855
          %861 = dma.hbm_to_vmem [thread:$0]  %s854, 256, %s856, %s845, 128, 128, 8
        $region112: #{tpu_custom_call.1} parent=95 // pred_fallthru
          _
      $region96: #{tpu_custom_call.1} parent=5 // pred_fallthru
        _
      %p862 = scmp.le.s32.totalorder 1, %s47
      %p863 = scmp.lt.s32.totalorder %s47, 3
      %p864 = pnand %p862, %p863
      %p865 = pneg %p864
      // Predicated region
      $region113: #{tpu_custom_call.1} parent=5 // pred_check
        _
      $region114: #{tpu_custom_call.1} parent=5 // pred_check_branch
        %867 = sbr.rel (%p864) target = $region116
      $region115: #{tpu_custom_call.1} parent=5 // pred_region
        %s868 = ssub.s32 %s47, 1
        %s869 = sand.u32 %s60, 1
        %s870 = scalar_lea.sflag [#allocation3], %s869
        %s871 = sand.u32 %s60, 1
        %s872 = smul.addr %s871, 32
        %s873 = scalar_lea.vmem [#allocation2], %s872
        // Predicated region
        $region117: #{tpu_custom_call.1} parent=115 // pred_check
          %p874 = pneg %p73
        $region118: #{tpu_custom_call.1} parent=115 // pred_check_branch
          %876 = sbr.rel (%p874) target = $region120
        $region119: #{tpu_custom_call.1} parent=115 // pred_region
          %877 = dma.done %s870, 512
        $region120: #{tpu_custom_call.1} parent=115 // pred_fallthru
          _
        %s878 = sand.u32 %s52, 1
        %s879 = scalar_lea.sflag [#allocation6], %s878
        %s880 = sand.u32 %s86, 1
        %s881 = smul.addr %s880, 16
        %s882 = scalar_lea.vmem [#allocation5], %s881
        // Predicated region
        $region121: #{tpu_custom_call.1} parent=115 // pred_check
          %p883 = pneg %p99
        $region122: #{tpu_custom_call.1} parent=115 // pred_check_branch
          %885 = sbr.rel (%p883) target = $region124
        $region123: #{tpu_custom_call.1} parent=115 // pred_region
          %886 = dma.done %s879, 256
        $region124: #{tpu_custom_call.1} parent=115 // pred_fallthru
          _
        %s887 = sand.u32 %s52, 1
        %s888 = scalar_lea.sflag [#allocation6], %s887
        %s889 = sand.u32 %s112, 1
        %s890 = smul.addr %s889, 16
        %s891 = scalar_lea.vmem [#allocation7], %s890
        // Predicated region
        $region125: #{tpu_custom_call.1} parent=115 // pred_check
          %p892 = pneg %p125
        $region126: #{tpu_custom_call.1} parent=115 // pred_check_branch
          %894 = sbr.rel (%p892) target = $region128
        $region127: #{tpu_custom_call.1} parent=115 // pred_region
          %895 = dma.done %s888, 256
        $region128: #{tpu_custom_call.1} parent=115 // pred_fallthru
          _
        %s896 = sand.u32 %s52, 1
        %s897 = scalar_lea.sflag [#allocation9], %s896
        %s898 = sand.u32 %s138, 1
        %s899 = smul.addr %s898, 16
        %s900 = scalar_lea.vmem [#allocation8], %s899
        // Predicated region
        $region129: #{tpu_custom_call.1} parent=115 // pred_check
          %p901 = pneg %p151
        $region130: #{tpu_custom_call.1} parent=115 // pred_check_branch
          %903 = sbr.rel (%p901) target = $region132
        $region131: #{tpu_custom_call.1} parent=115 // pred_region
          %904 = dma.done %s897, 256
        $region132: #{tpu_custom_call.1} parent=115 // pred_fallthru
          _
        // Predicated region
        $region133: #{tpu_custom_call.1} parent=115 // pred_check
          %p905 = pneg %p172
        $region134: #{tpu_custom_call.1} parent=115 // pred_check_branch
          %907 = sbr.rel (%p905) target = $region136
        $region135: #{tpu_custom_call.1} parent=115 // pred_region
          %908 = dma.done [#allocation9], 4096
        $region136: #{tpu_custom_call.1} parent=115 // pred_fallthru
          _
        // Predicated region
        $region137: #{tpu_custom_call.1} parent=115 // pred_check
          %p909 = pneg %p193
        $region138: #{tpu_custom_call.1} parent=115 // pred_check_branch
          %911 = sbr.rel (%p909) target = $region140
        $region139: #{tpu_custom_call.1} parent=115 // pred_region
          %912 = dma.done [#allocation12], 4096
        $region140: #{tpu_custom_call.1} parent=115 // pred_fallthru
          _
        // Predicated region
        $region141: #{tpu_custom_call.1} parent=115 // pred_check
          %p913 = pneg %p214
        $region142: #{tpu_custom_call.1} parent=115 // pred_check_branch
          %915 = sbr.rel (%p913) target = $region144
        $region143: #{tpu_custom_call.1} parent=115 // pred_region
          %916 = dma.done [#allocation12], 4096
        $region144: #{tpu_custom_call.1} parent=115 // pred_fallthru
          _
        // Predicated region
        $region145: #{tpu_custom_call.1} parent=115 // pred_check
          %p917 = pneg %p235
        $region146: #{tpu_custom_call.1} parent=115 // pred_check_branch
          %919 = sbr.rel (%p917) target = $region148
        $region147: #{tpu_custom_call.1} parent=115 // pred_region
          %920 = dma.done [#allocation15], 4096
        $region148: #{tpu_custom_call.1} parent=115 // pred_fallthru
          _
        // Predicated region
        $region149: #{tpu_custom_call.1} parent=115 // pred_check
          %p921 = pneg %p319
        $region150: #{tpu_custom_call.1} parent=115 // pred_check_branch
          %923 = sbr.rel (%p921) target = $region152
        $region151: #{tpu_custom_call.1} parent=115 // pred_region
          %924 = dma.done [#allocation15], 4096
        $region152: #{tpu_custom_call.1} parent=115 // pred_fallthru
          _
        // Predicated region
        $region153: #{tpu_custom_call.1} parent=115 // pred_check
          %p925 = pneg %p340
        $region154: #{tpu_custom_call.1} parent=115 // pred_check_branch
          %927 = sbr.rel (%p925) target = $region156
        $region155: #{tpu_custom_call.1} parent=115 // pred_region
          %928 = dma.done [#allocation18], 4096
        $region156: #{tpu_custom_call.1} parent=115 // pred_fallthru
          _
        // Predicated region
        $region157: #{tpu_custom_call.1} parent=115 // pred_check
          %p929 = pneg %p361
        $region158: #{tpu_custom_call.1} parent=115 // pred_check_branch
          %931 = sbr.rel (%p929) target = $region160
        $region159: #{tpu_custom_call.1} parent=115 // pred_region
          %932 = dma.done [#allocation18], 4096
        $region160: #{tpu_custom_call.1} parent=115 // pred_fallthru
          _
        // Predicated region
        $region161: #{tpu_custom_call.1} parent=115 // pred_check
          %p933 = pneg %p382
        $region162: #{tpu_custom_call.1} parent=115 // pred_check_branch
          %935 = sbr.rel (%p933) target = $region164
        $region163: #{tpu_custom_call.1} parent=115 // pred_region
          %936 = dma.done [#allocation21], 4096
        $region164: #{tpu_custom_call.1} parent=115 // pred_fallthru
          _
        // Predicated region
        $region165: #{tpu_custom_call.1} parent=115 // pred_check
          %p937 = pneg %p466
        $region166: #{tpu_custom_call.1} parent=115 // pred_check_branch
          %939 = sbr.rel (%p937) target = $region168
        $region167: #{tpu_custom_call.1} parent=115 // pred_region
          %940 = dma.done [#allocation21], 8192
        $region168: #{tpu_custom_call.1} parent=115 // pred_fallthru
          _
        // Predicated region
        $region169: #{tpu_custom_call.1} parent=115 // pred_check
          %p941 = pneg %p508
        $region170: #{tpu_custom_call.1} parent=115 // pred_check_branch
          %943 = sbr.rel (%p941) target = $region172
        $region171: #{tpu_custom_call.1} parent=115 // pred_region
          %944 = dma.done [#allocation24], 8192
        $region172: #{tpu_custom_call.1} parent=115 // pred_fallthru
          _
        %s945 = sand.u32 %s60, 1
        %s946 = scalar_lea.sflag [#allocation3], %s945
        %s947 = sand.u32 %s60, 1
        %s948 = smul.addr %s947, 32
        %s949 = scalar_lea.vmem [#allocation2], %s948
        %p950 = pneg %p73
        %p951 = pneg %p70
        %s952 = sand.u32 %s52, 1
        %s953 = scalar_lea.sflag [#allocation6], %s952
        %s954 = sand.u32 %s86, 1
        %s955 = smul.addr %s954, 16
        %s956 = scalar_lea.vmem [#allocation5], %s955
        %p957 = pneg %p99
        %p958 = pneg %p96
        %s959 = sand.u32 %s52, 1
        %s960 = scalar_lea.sflag [#allocation6], %s959
        %s961 = sand.u32 %s112, 1
        %s962 = smul.addr %s961, 16
        %s963 = scalar_lea.vmem [#allocation7], %s962
        %p964 = pneg %p125
        %p965 = pneg %p122
        %s966 = sand.u32 %s52, 1
        %s967 = scalar_lea.sflag [#allocation9], %s966
        %s968 = sand.u32 %s138, 1
        %s969 = smul.addr %s968, 16
        %s970 = scalar_lea.vmem [#allocation8], %s969
        %p971 = pneg %p151
        %p972 = pneg %p148
        %p973 = pneg %p172
        %p974 = pneg %p169
        %p975 = pneg %p193
        %p976 = pneg %p190
        %p977 = pneg %p214
        %p978 = pneg %p211
        %p979 = pneg %p235
        %p980 = pneg %p232
        %p981 = pneg %p256
        %p982 = pneg %p253
        %p983 = pneg %p277
        %p984 = pneg %p274
        %p985 = pneg %p298
        %p986 = pneg %p295
        %p987 = pneg %p319
        %p988 = pneg %p316
        %p989 = pneg %p340
        %p990 = pneg %p337
        %p991 = pneg %p361
        %p992 = pneg %p358
        %p993 = pneg %p382
        %p994 = pneg %p379
        %p995 = pneg %p403
        %p996 = pneg %p400
        %p997 = pneg %p424
        %p998 = pneg %p421
        %p999 = pneg %p445
        %p1000 = pneg %p442
        %p1001 = pneg %p466
        %p1002 = pneg %p463
        %p1003 = pneg %p487
        %p1004 = pneg %p484
        %p1005 = pneg %p508
        %p1006 = pneg %p505
        %p1007 = pneg %p529
        %p1008 = pneg %p526
        %p1009 = pneg %p550
        %p1010 = pneg %p547
        %p1011 = pneg %p571
        %p1012 = pneg %p568
        %p1013 = pneg %p597
        %p1014 = pneg %p594
        %s1015 = sand.u32 %s584, 1
        %s1016 = scalar_lea.sflag [#allocation4], %s1015
        %s1017 = sand.u32 %s584, 1
        %s1018 = smul.addr %s1017, 32
        %s1019 = scalar_lea.vmem [#allocation25], %s1018
        %s1020 = smul.u32 2, %s52
        %s1021 = smul.u32 2, %s52
        %s1022 = smul.u32 2, %s52
        %s1023 = smul.u32 2, %s52
        %s1024 = smul.u32 2, %s52
        %v1026 = vld [vmem:[%s873] sm:$0xff]
        %v1027 = vld [vmem:[%s873 + $0x8] sm:$0xff]
        %v1028 = vld [vmem:[%s873 + $0x10] sm:$0xff]
        %v1029 = vld [vmem:[%s873 + $0x18] sm:$0xff]
        %v1030 = vpack.c.bf16 %v1028, %v1026
        %v1031 = vpack.c.bf16 %v1029, %v1027
        %v1032 = vld [vmem:[%s882] sm:$0xff]
        %v1033 = vld [vmem:[%s882 + $0x8] sm:$0xff]
        %v1034 = vld [vmem:[%s891] sm:$0xff]
        %v1035 = vld [vmem:[%s891 + $0x8] sm:$0xff]
        %v1036 = vld [vmem:[%s900] sm:$0xff]
        %v1037 = vld [vmem:[%s900 + $0x8] sm:$0xff]
        %v1038 = vld [vmem:[#allocation10] sm:$0xff]
        %v1039 = vld [vmem:[#allocation10 + $0x8] sm:$0xff]
        %v1040 = vld [vmem:[#allocation10 + $0x10] sm:$0xff]
        %v1041 = vld [vmem:[#allocation10 + $0x18] sm:$0xff]
        %v1042 = vld [vmem:[#allocation10 + $0x20] sm:$0xff]
        %v1043 = vld [vmem:[#allocation10 + $0x28] sm:$0xff]
        %v1044 = vld [vmem:[#allocation10 + $0x30] sm:$0xff]
        %v1045 = vld [vmem:[#allocation10 + $0x38] sm:$0xff]
        %v1046 = vld [vmem:[#allocation10 + $0x40] sm:$0xff]
        %v1047 = vld [vmem:[#allocation10 + $0x48] sm:$0xff]
        %v1048 = vld [vmem:[#allocation10 + $0x50] sm:$0xff]
        %v1049 = vld [vmem:[#allocation10 + $0x58] sm:$0xff]
        %v1050 = vld [vmem:[#allocation10 + $0x60] sm:$0xff]
        %v1051 = vld [vmem:[#allocation10 + $0x68] sm:$0xff]
        %v1052 = vld [vmem:[#allocation10 + $0x70] sm:$0xff]
        %v1053 = vld [vmem:[#allocation10 + $0x78] sm:$0xff]
        %v1054 = vld [vmem:[#allocation10 + $0x80] sm:$0xff]
        %v1055 = vld [vmem:[#allocation10 + $0x88] sm:$0xff]
        %v1056 = vld [vmem:[#allocation10 + $0x90] sm:$0xff]
        %v1057 = vld [vmem:[#allocation10 + $0x98] sm:$0xff]
        %v1058 = vld [vmem:[#allocation10 + $0xa0] sm:$0xff]
        %v1059 = vld [vmem:[#allocation10 + $0xa8] sm:$0xff]
        %v1060 = vld [vmem:[#allocation10 + $0xb0] sm:$0xff]
        %v1061 = vld [vmem:[#allocation10 + $0xb8] sm:$0xff]
        %v1062 = vld [vmem:[#allocation10 + $0xc0] sm:$0xff]
        %v1063 = vld [vmem:[#allocation10 + $0xc8] sm:$0xff]
        %v1064 = vld [vmem:[#allocation10 + $0xd0] sm:$0xff]
        %v1065 = vld [vmem:[#allocation10 + $0xd8] sm:$0xff]
        %v1066 = vld [vmem:[#allocation10 + $0xe0] sm:$0xff]
        %v1067 = vld [vmem:[#allocation10 + $0xe8] sm:$0xff]
        %v1068 = vld [vmem:[#allocation10 + $0xf0] sm:$0xff]
        %v1069 = vld [vmem:[#allocation10 + $0xf8] sm:$0xff]
        %v1102 = vunpack.c.l.b16 %v1038
        %v1103 = vunpack.c.h.b16 %v1038
        %v1104 = vunpack.c.l.b16 %v1039
        %v1105 = vunpack.c.h.b16 %v1039
        %v1106 = vunpack.c.l.b16 %v1040
        %v1107 = vunpack.c.h.b16 %v1040
        %v1108 = vunpack.c.l.b16 %v1041
        %v1109 = vunpack.c.h.b16 %v1041
        %v1110 = vunpack.c.l.b16 %v1042
        %v1111 = vunpack.c.h.b16 %v1042
        %v1112 = vunpack.c.l.b16 %v1043
        %v1113 = vunpack.c.h.b16 %v1043
        %v1114 = vunpack.c.l.b16 %v1044
        %v1115 = vunpack.c.h.b16 %v1044
        %v1116 = vunpack.c.l.b16 %v1045
        %v1117 = vunpack.c.h.b16 %v1045
        %v1118 = vunpack.c.l.b16 %v1046
        %v1119 = vunpack.c.h.b16 %v1046
        %v1120 = vunpack.c.l.b16 %v1047
        %v1121 = vunpack.c.h.b16 %v1047
        %v1122 = vunpack.c.l.b16 %v1048
        %v1123 = vunpack.c.h.b16 %v1048
        %v1124 = vunpack.c.l.b16 %v1049
        %v1125 = vunpack.c.h.b16 %v1049
        %v1126 = vunpack.c.l.b16 %v1050
        %v1127 = vunpack.c.h.b16 %v1050
        %v1128 = vunpack.c.l.b16 %v1051
        %v1129 = vunpack.c.h.b16 %v1051
        %v1130 = vunpack.c.l.b16 %v1052
        %v1131 = vunpack.c.h.b16 %v1052
        %v1132 = vunpack.c.l.b16 %v1053
        %v1133 = vunpack.c.h.b16 %v1053
        %v1134 = vunpack.c.l.b16 %v1054
        %v1135 = vunpack.c.h.b16 %v1054
        %v1136 = vunpack.c.l.b16 %v1055
        %v1137 = vunpack.c.h.b16 %v1055
        %v1138 = vunpack.c.l.b16 %v1056
        %v1139 = vunpack.c.h.b16 %v1056
        %v1140 = vunpack.c.l.b16 %v1057
        %v1141 = vunpack.c.h.b16 %v1057
        %v1142 = vunpack.c.l.b16 %v1058
        %v1143 = vunpack.c.h.b16 %v1058
        %v1144 = vunpack.c.l.b16 %v1059
        %v1145 = vunpack.c.h.b16 %v1059
        %v1146 = vunpack.c.l.b16 %v1060
        %v1147 = vunpack.c.h.b16 %v1060
        %v1148 = vunpack.c.l.b16 %v1061
        %v1149 = vunpack.c.h.b16 %v1061
        %v1150 = vunpack.c.l.b16 %v1062
        %v1151 = vunpack.c.h.b16 %v1062
        %v1152 = vunpack.c.l.b16 %v1063
        %v1153 = vunpack.c.h.b16 %v1063
        %v1154 = vunpack.c.l.b16 %v1064
        %v1155 = vunpack.c.h.b16 %v1064
        %v1156 = vunpack.c.l.b16 %v1065
        %v1157 = vunpack.c.h.b16 %v1065
        %v1158 = vunpack.c.l.b16 %v1066
        %v1159 = vunpack.c.h.b16 %v1066
        %v1160 = vunpack.c.l.b16 %v1067
        %v1161 = vunpack.c.h.b16 %v1067
        %v1162 = vunpack.c.l.b16 %v1068
        %v1163 = vunpack.c.h.b16 %v1068
        %v1164 = vunpack.c.l.b16 %v1069
        %v1165 = vunpack.c.h.b16 %v1069
        %v1166 = vpack.c.b16 %v1104, %v1102
        %v1167 = vpack.c.b16 %v1105, %v1103
        %v1168 = vpack.c.b16 %v1108, %v1106
        %v1169 = vpack.c.b16 %v1109, %v1107
        %v1170 = vpack.c.b16 %v1112, %v1110
        %v1171 = vpack.c.b16 %v1113, %v1111
        %v1172 = vpack.c.b16 %v1116, %v1114
        %v1173 = vpack.c.b16 %v1117, %v1115
        %v1174 = vpack.c.b16 %v1120, %v1118
        %v1175 = vpack.c.b16 %v1121, %v1119
        %v1176 = vpack.c.b16 %v1124, %v1122
        %v1177 = vpack.c.b16 %v1125, %v1123
        %v1178 = vpack.c.b16 %v1128, %v1126
        %v1179 = vpack.c.b16 %v1129, %v1127
        %v1180 = vpack.c.b16 %v1132, %v1130
        %v1181 = vpack.c.b16 %v1133, %v1131
        %v1182 = vpack.c.b16 %v1136, %v1134
        %v1183 = vpack.c.b16 %v1137, %v1135
        %v1184 = vpack.c.b16 %v1140, %v1138
        %v1185 = vpack.c.b16 %v1141, %v1139
        %v1186 = vpack.c.b16 %v1144, %v1142
        %v1187 = vpack.c.b16 %v1145, %v1143
        %v1188 = vpack.c.b16 %v1148, %v1146
        %v1189 = vpack.c.b16 %v1149, %v1147
        %v1190 = vpack.c.b16 %v1152, %v1150
        %v1191 = vpack.c.b16 %v1153, %v1151
        %v1192 = vpack.c.b16 %v1156, %v1154
        %v1193 = vpack.c.b16 %v1157, %v1155
        %v1194 = vpack.c.b16 %v1160, %v1158
        %v1195 = vpack.c.b16 %v1161, %v1159
        %v1196 = vpack.c.b16 %v1164, %v1162
        %v1197 = vpack.c.b16 %v1165, %v1163
        %1230 = vmatprep.subr.bf16.mxu0 %v1181
        %1231 = vmatpush1.bf16.msra.mxu0 %v1180
        %1232 = vmatprep.subr.bf16.mxu0 %v1179
        %1233 = vmatpush1.bf16.msra.mxu0 %v1178
        %1234 = vmatprep.subr.bf16.mxu0 %v1177
        %1235 = vmatpush1.bf16.msra.mxu0 %v1176
        %1236 = vmatprep.subr.bf16.mxu0 %v1175
        %1237 = vmatpush1.bf16.msra.mxu0 %v1174
        %1238 = vmatprep.subr.bf16.mxu0 %v1173
        %1239 = vmatpush1.bf16.msra.mxu0 %v1172
        %1240 = vmatprep.subr.bf16.mxu0 %v1171
        %1241 = vmatpush1.bf16.msra.mxu0 %v1170
        %1242 = vmatprep.subr.bf16.mxu0 %v1169
        %1243 = vmatpush1.bf16.msra.mxu0 %v1168
        %1244 = vmatprep.subr.bf16.mxu0 %v1167
        %1245 = vmatpush1.bf16.msra.mxu0 %v1166
        %1246 = vmatprep.subr.bf16.mxu0 %v1197
        %1247 = vmatpush2.bf16.msra.mxu0 %v1196
        %1248 = vmatprep.subr.bf16.mxu0 %v1195
        %1249 = vmatpush2.bf16.msra.mxu0 %v1194
        %1250 = vmatprep.subr.bf16.mxu0 %v1193
        %1251 = vmatpush2.bf16.msra.mxu0 %v1192
        %1252 = vmatprep.subr.bf16.mxu0 %v1191
        %1253 = vmatpush2.bf16.msra.mxu0 %v1190
        %1254 = vmatprep.subr.bf16.mxu0 %v1189
        %1255 = vmatpush2.bf16.msra.mxu0 %v1188
        %1256 = vmatprep.subr.bf16.mxu0 %v1187
        %1257 = vmatpush2.bf16.msra.mxu0 %v1186
        %1258 = vmatprep.subr.bf16.mxu0 %v1185
        %1259 = vmatpush2.bf16.msra.mxu0 %v1184
        %1260 = vmatprep.subr.bf16.mxu0 %v1183
        %1261 = vmatpush2.bf16.msra.mxu0 %v1182
        %1262 = vmatprep.mubr.bf16.mxu0 %v1031
        %1263 = vmatmul.mubr.bf16.gmra.mxu0 %v1030
        %v1264 = vpop.f32.mrf.mxu0
        %v1265 = vadd.f32 0.0, %v1264
        %v1266 = vpop.f32.mrf.mxu0
        %v1267 = vadd.f32 0.0, %v1266
        %v1268 = vpop.f32.mrf.mxu0
        %v1269 = vadd.f32 0.0, %v1268
        %v1270 = vpop.f32.mrf.mxu0
        %v1271 = vadd.f32 0.0, %v1270
        %1272 = vdwg.mxu0
        %v1273 = vld [vmem:[#allocation11] sm:$0xff]
        %v1274 = vld [vmem:[#allocation11 + $0x8] sm:$0xff]
        %v1275 = vld [vmem:[#allocation11 + $0x10] sm:$0xff]
        %v1276 = vld [vmem:[#allocation11 + $0x18] sm:$0xff]
        %v1277 = vld [vmem:[#allocation11 + $0x20] sm:$0xff]
        %v1278 = vld [vmem:[#allocation11 + $0x28] sm:$0xff]
        %v1279 = vld [vmem:[#allocation11 + $0x30] sm:$0xff]
        %v1280 = vld [vmem:[#allocation11 + $0x38] sm:$0xff]
        %v1281 = vld [vmem:[#allocation11 + $0x40] sm:$0xff]
        %v1282 = vld [vmem:[#allocation11 + $0x48] sm:$0xff]
        %v1283 = vld [vmem:[#allocation11 + $0x50] sm:$0xff]
        %v1284 = vld [vmem:[#allocation11 + $0x58] sm:$0xff]
        %v1285 = vld [vmem:[#allocation11 + $0x60] sm:$0xff]
        %v1286 = vld [vmem:[#allocation11 + $0x68] sm:$0xff]
        %v1287 = vld [vmem:[#allocation11 + $0x70] sm:$0xff]
        %v1288 = vld [vmem:[#allocation11 + $0x78] sm:$0xff]
        %v1289 = vld [vmem:[#allocation11 + $0x80] sm:$0xff]
        %v1290 = vld [vmem:[#allocation11 + $0x88] sm:$0xff]
        %v1291 = vld [vmem:[#allocation11 + $0x90] sm:$0xff]
        %v1292 = vld [vmem:[#allocation11 + $0x98] sm:$0xff]
        %v1293 = vld [vmem:[#allocation11 + $0xa0] sm:$0xff]
        %v1294 = vld [vmem:[#allocation11 + $0xa8] sm:$0xff]
        %v1295 = vld [vmem:[#allocation11 + $0xb0] sm:$0xff]
        %v1296 = vld [vmem:[#allocation11 + $0xb8] sm:$0xff]
        %v1297 = vld [vmem:[#allocation11 + $0xc0] sm:$0xff]
        %v1298 = vld [vmem:[#allocation11 + $0xc8] sm:$0xff]
        %v1299 = vld [vmem:[#allocation11 + $0xd0] sm:$0xff]
        %v1300 = vld [vmem:[#allocation11 + $0xd8] sm:$0xff]
        %v1301 = vld [vmem:[#allocation11 + $0xe0] sm:$0xff]
        %v1302 = vld [vmem:[#allocation11 + $0xe8] sm:$0xff]
        %v1303 = vld [vmem:[#allocation11 + $0xf0] sm:$0xff]
        %v1304 = vld [vmem:[#allocation11 + $0xf8] sm:$0xff]
        %v1337 = vunpack.c.l.b16 %v1273
        %v1338 = vunpack.c.h.b16 %v1273
        %v1339 = vunpack.c.l.b16 %v1274
        %v1340 = vunpack.c.h.b16 %v1274
        %v1341 = vunpack.c.l.b16 %v1275
        %v1342 = vunpack.c.h.b16 %v1275
        %v1343 = vunpack.c.l.b16 %v1276
        %v1344 = vunpack.c.h.b16 %v1276
        %v1345 = vunpack.c.l.b16 %v1277
        %v1346 = vunpack.c.h.b16 %v1277
        %v1347 = vunpack.c.l.b16 %v1278
        %v1348 = vunpack.c.h.b16 %v1278
        %v1349 = vunpack.c.l.b16 %v1279
        %v1350 = vunpack.c.h.b16 %v1279
        %v1351 = vunpack.c.l.b16 %v1280
        %v1352 = vunpack.c.h.b16 %v1280
        %v1353 = vunpack.c.l.b16 %v1281
        %v1354 = vunpack.c.h.b16 %v1281
        %v1355 = vunpack.c.l.b16 %v1282
        %v1356 = vunpack.c.h.b16 %v1282
        %v1357 = vunpack.c.l.b16 %v1283
        %v1358 = vunpack.c.h.b16 %v1283
        %v1359 = vunpack.c.l.b16 %v1284
        %v1360 = vunpack.c.h.b16 %v1284
        %v1361 = vunpack.c.l.b16 %v1285
        %v1362 = vunpack.c.h.b16 %v1285
        %v1363 = vunpack.c.l.b16 %v1286
        %v1364 = vunpack.c.h.b16 %v1286
        %v1365 = vunpack.c.l.b16 %v1287
        %v1366 = vunpack.c.h.b16 %v1287
        %v1367 = vunpack.c.l.b16 %v1288
        %v1368 = vunpack.c.h.b16 %v1288
        %v1369 = vunpack.c.l.b16 %v1289
        %v1370 = vunpack.c.h.b16 %v1289
        %v1371 = vunpack.c.l.b16 %v1290
        %v1372 = vunpack.c.h.b16 %v1290
        %v1373 = vunpack.c.l.b16 %v1291
        %v1374 = vunpack.c.h.b16 %v1291
        %v1375 = vunpack.c.l.b16 %v1292
        %v1376 = vunpack.c.h.b16 %v1292
        %v1377 = vunpack.c.l.b16 %v1293
        %v1378 = vunpack.c.h.b16 %v1293
        %v1379 = vunpack.c.l.b16 %v1294
        %v1380 = vunpack.c.h.b16 %v1294
        %v1381 = vunpack.c.l.b16 %v1295
        %v1382 = vunpack.c.h.b16 %v1295
        %v1383 = vunpack.c.l.b16 %v1296
        %v1384 = vunpack.c.h.b16 %v1296
        %v1385 = vunpack.c.l.b16 %v1297
        %v1386 = vunpack.c.h.b16 %v1297
        %v1387 = vunpack.c.l.b16 %v1298
        %v1388 = vunpack.c.h.b16 %v1298
        %v1389 = vunpack.c.l.b16 %v1299
        %v1390 = vunpack.c.h.b16 %v1299
        %v1391 = vunpack.c.l.b16 %v1300
        %v1392 = vunpack.c.h.b16 %v1300
        %v1393 = vunpack.c.l.b16 %v1301
        %v1394 = vunpack.c.h.b16 %v1301
        %v1395 = vunpack.c.l.b16 %v1302
        %v1396 = vunpack.c.h.b16 %v1302
        %v1397 = vunpack.c.l.b16 %v1303
        %v1398 = vunpack.c.h.b16 %v1303
        %v1399 = vunpack.c.l.b16 %v1304
        %v1400 = vunpack.c.h.b16 %v1304
        %v1401 = vpack.c.b16 %v1339, %v1337
        %v1402 = vpack.c.b16 %v1340, %v1338
        %v1403 = vpack.c.b16 %v1343, %v1341
        %v1404 = vpack.c.b16 %v1344, %v1342
        %v1405 = vpack.c.b16 %v1347, %v1345
        %v1406 = vpack.c.b16 %v1348, %v1346
        %v1407 = vpack.c.b16 %v1351, %v1349
        %v1408 = vpack.c.b16 %v1352, %v1350
        %v1409 = vpack.c.b16 %v1355, %v1353
        %v1410 = vpack.c.b16 %v1356, %v1354
        %v1411 = vpack.c.b16 %v1359, %v1357
        %v1412 = vpack.c.b16 %v1360, %v1358
        %v1413 = vpack.c.b16 %v1363, %v1361
        %v1414 = vpack.c.b16 %v1364, %v1362
        %v1415 = vpack.c.b16 %v1367, %v1365
        %v1416 = vpack.c.b16 %v1368, %v1366
        %v1417 = vpack.c.b16 %v1371, %v1369
        %v1418 = vpack.c.b16 %v1372, %v1370
        %v1419 = vpack.c.b16 %v1375, %v1373
        %v1420 = vpack.c.b16 %v1376, %v1374
        %v1421 = vpack.c.b16 %v1379, %v1377
        %v1422 = vpack.c.b16 %v1380, %v1378
        %v1423 = vpack.c.b16 %v1383, %v1381
        %v1424 = vpack.c.b16 %v1384, %v1382
        %v1425 = vpack.c.b16 %v1387, %v1385
        %v1426 = vpack.c.b16 %v1388, %v1386
        %v1427 = vpack.c.b16 %v1391, %v1389
        %v1428 = vpack.c.b16 %v1392, %v1390
        %v1429 = vpack.c.b16 %v1395, %v1393
        %v1430 = vpack.c.b16 %v1396, %v1394
        %v1431 = vpack.c.b16 %v1399, %v1397
        %v1432 = vpack.c.b16 %v1400, %v1398
        %1465 = vmatprep.subr.bf16.mxu0 %v1416
        %1466 = vmatpush1.bf16.msra.mxu0 %v1415
        %1467 = vmatprep.subr.bf16.mxu0 %v1414
        %1468 = vmatpush1.bf16.msra.mxu0 %v1413
        %1469 = vmatprep.subr.bf16.mxu0 %v1412
        %1470 = vmatpush1.bf16.msra.mxu0 %v1411
        %1471 = vmatprep.subr.bf16.mxu0 %v1410
        %1472 = vmatpush1.bf16.msra.mxu0 %v1409
        %1473 = vmatprep.subr.bf16.mxu0 %v1408
        %1474 = vmatpush1.bf16.msra.mxu0 %v1407
        %1475 = vmatprep.subr.bf16.mxu0 %v1406
        %1476 = vmatpush1.bf16.msra.mxu0 %v1405
        %1477 = vmatprep.subr.bf16.mxu0 %v1404
        %1478 = vmatpush1.bf16.msra.mxu0 %v1403
        %1479 = vmatprep.subr.bf16.mxu0 %v1402
        %1480 = vmatpush1.bf16.msra.mxu0 %v1401
        %1481 = vmatprep.subr.bf16.mxu0 %v1432
        %1482 = vmatpush2.bf16.msra.mxu0 %v1431
        %1483 = vmatprep.subr.bf16.mxu0 %v1430
        %1484 = vmatpush2.bf16.msra.mxu0 %v1429
        %1485 = vmatprep.subr.bf16.mxu0 %v1428
        %1486 = vmatpush2.bf16.msra.mxu0 %v1427
        %1487 = vmatprep.subr.bf16.mxu0 %v1426
        %1488 = vmatpush2.bf16.msra.mxu0 %v1425
        %1489 = vmatprep.subr.bf16.mxu0 %v1424
        %1490 = vmatpush2.bf16.msra.mxu0 %v1423
        %1491 = vmatprep.subr.bf16.mxu0 %v1422
        %1492 = vmatpush2.bf16.msra.mxu0 %v1421
        %1493 = vmatprep.subr.bf16.mxu0 %v1420
        %1494 = vmatpush2.bf16.msra.mxu0 %v1419
        %1495 = vmatprep.subr.bf16.mxu0 %v1418
        %1496 = vmatpush2.bf16.msra.mxu0 %v1417
        %1497 = vmatprep.mubr.bf16.mxu0 %v1031
        %1498 = vmatmul.mubr.bf16.gmra.mxu0 %v1030
        %v1499 = vpop.f32.mrf.mxu0
        %v1500 = vadd.f32 0.0, %v1499
        %v1501 = vpop.f32.mrf.mxu0
        %v1502 = vadd.f32 0.0, %v1501
        %v1503 = vpop.f32.mrf.mxu0
        %v1504 = vadd.f32 0.0, %v1503
        %v1505 = vpop.f32.mrf.mxu0
        %v1506 = vadd.f32 0.0, %v1505
        %1507 = vdwg.mxu0
        %v1508 = vld [vmem:[#allocation13] sm:$0xff]
        %v1509 = vld [vmem:[#allocation13 + $0x8] sm:$0xff]
        %v1510 = vld [vmem:[#allocation13 + $0x10] sm:$0xff]
        %v1511 = vld [vmem:[#allocation13 + $0x18] sm:$0xff]
        %v1512 = vld [vmem:[#allocation13 + $0x20] sm:$0xff]
        %v1513 = vld [vmem:[#allocation13 + $0x28] sm:$0xff]
        %v1514 = vld [vmem:[#allocation13 + $0x30] sm:$0xff]
        %v1515 = vld [vmem:[#allocation13 + $0x38] sm:$0xff]
        %v1516 = vld [vmem:[#allocation13 + $0x40] sm:$0xff]
        %v1517 = vld [vmem:[#allocation13 + $0x48] sm:$0xff]
        %v1518 = vld [vmem:[#allocation13 + $0x50] sm:$0xff]
        %v1519 = vld [vmem:[#allocation13 + $0x58] sm:$0xff]
        %v1520 = vld [vmem:[#allocation13 + $0x60] sm:$0xff]
        %v1521 = vld [vmem:[#allocation13 + $0x68] sm:$0xff]
        %v1522 = vld [vmem:[#allocation13 + $0x70] sm:$0xff]
        %v1523 = vld [vmem:[#allocation13 + $0x78] sm:$0xff]
        %v1524 = vld [vmem:[#allocation13 + $0x80] sm:$0xff]
        %v1525 = vld [vmem:[#allocation13 + $0x88] sm:$0xff]
        %v1526 = vld [vmem:[#allocation13 + $0x90] sm:$0xff]
        %v1527 = vld [vmem:[#allocation13 + $0x98] sm:$0xff]
        %v1528 = vld [vmem:[#allocation13 + $0xa0] sm:$0xff]
        %v1529 = vld [vmem:[#allocation13 + $0xa8] sm:$0xff]
        %v1530 = vld [vmem:[#allocation13 + $0xb0] sm:$0xff]
        %v1531 = vld [vmem:[#allocation13 + $0xb8] sm:$0xff]
        %v1532 = vld [vmem:[#allocation13 + $0xc0] sm:$0xff]
        %v1533 = vld [vmem:[#allocation13 + $0xc8] sm:$0xff]
        %v1534 = vld [vmem:[#allocation13 + $0xd0] sm:$0xff]
        %v1535 = vld [vmem:[#allocation13 + $0xd8] sm:$0xff]
        %v1536 = vld [vmem:[#allocation13 + $0xe0] sm:$0xff]
        %v1537 = vld [vmem:[#allocation13 + $0xe8] sm:$0xff]
        %v1538 = vld [vmem:[#allocation13 + $0xf0] sm:$0xff]
        %v1539 = vld [vmem:[#allocation13 + $0xf8] sm:$0xff]
        %v1572 = vunpack.c.l.b16 %v1508
        %v1573 = vunpack.c.h.b16 %v1508
        %v1574 = vunpack.c.l.b16 %v1509
        %v1575 = vunpack.c.h.b16 %v1509
        %v1576 = vunpack.c.l.b16 %v1510
        %v1577 = vunpack.c.h.b16 %v1510
        %v1578 = vunpack.c.l.b16 %v1511
        %v1579 = vunpack.c.h.b16 %v1511
        %v1580 = vunpack.c.l.b16 %v1512
        %v1581 = vunpack.c.h.b16 %v1512
        %v1582 = vunpack.c.l.b16 %v1513
        %v1583 = vunpack.c.h.b16 %v1513
        %v1584 = vunpack.c.l.b16 %v1514
        %v1585 = vunpack.c.h.b16 %v1514
        %v1586 = vunpack.c.l.b16 %v1515
        %v1587 = vunpack.c.h.b16 %v1515
        %v1588 = vunpack.c.l.b16 %v1516
        %v1589 = vunpack.c.h.b16 %v1516
        %v1590 = vunpack.c.l.b16 %v1517
        %v1591 = vunpack.c.h.b16 %v1517
        %v1592 = vunpack.c.l.b16 %v1518
        %v1593 = vunpack.c.h.b16 %v1518
        %v1594 = vunpack.c.l.b16 %v1519
        %v1595 = vunpack.c.h.b16 %v1519
        %v1596 = vunpack.c.l.b16 %v1520
        %v1597 = vunpack.c.h.b16 %v1520
        %v1598 = vunpack.c.l.b16 %v1521
        %v1599 = vunpack.c.h.b16 %v1521
        %v1600 = vunpack.c.l.b16 %v1522
        %v1601 = vunpack.c.h.b16 %v1522
        %v1602 = vunpack.c.l.b16 %v1523
        %v1603 = vunpack.c.h.b16 %v1523
        %v1604 = vunpack.c.l.b16 %v1524
        %v1605 = vunpack.c.h.b16 %v1524
        %v1606 = vunpack.c.l.b16 %v1525
        %v1607 = vunpack.c.h.b16 %v1525
        %v1608 = vunpack.c.l.b16 %v1526
        %v1609 = vunpack.c.h.b16 %v1526
        %v1610 = vunpack.c.l.b16 %v1527
        %v1611 = vunpack.c.h.b16 %v1527
        %v1612 = vunpack.c.l.b16 %v1528
        %v1613 = vunpack.c.h.b16 %v1528
        %v1614 = vunpack.c.l.b16 %v1529
        %v1615 = vunpack.c.h.b16 %v1529
        %v1616 = vunpack.c.l.b16 %v1530
        %v1617 = vunpack.c.h.b16 %v1530
        %v1618 = vunpack.c.l.b16 %v1531
        %v1619 = vunpack.c.h.b16 %v1531
        %v1620 = vunpack.c.l.b16 %v1532
        %v1621 = vunpack.c.h.b16 %v1532
        %v1622 = vunpack.c.l.b16 %v1533
        %v1623 = vunpack.c.h.b16 %v1533
        %v1624 = vunpack.c.l.b16 %v1534
        %v1625 = vunpack.c.h.b16 %v1534
        %v1626 = vunpack.c.l.b16 %v1535
        %v1627 = vunpack.c.h.b16 %v1535
        %v1628 = vunpack.c.l.b16 %v1536
        %v1629 = vunpack.c.h.b16 %v1536
        %v1630 = vunpack.c.l.b16 %v1537
        %v1631 = vunpack.c.h.b16 %v1537
        %v1632 = vunpack.c.l.b16 %v1538
        %v1633 = vunpack.c.h.b16 %v1538
        %v1634 = vunpack.c.l.b16 %v1539
        %v1635 = vunpack.c.h.b16 %v1539
        %v1636 = vpack.c.b16 %v1574, %v1572
        %v1637 = vpack.c.b16 %v1575, %v1573
        %v1638 = vpack.c.b16 %v1578, %v1576
        %v1639 = vpack.c.b16 %v1579, %v1577
        %v1640 = vpack.c.b16 %v1582, %v1580
        %v1641 = vpack.c.b16 %v1583, %v1581
        %v1642 = vpack.c.b16 %v1586, %v1584
        %v1643 = vpack.c.b16 %v1587, %v1585
        %v1644 = vpack.c.b16 %v1590, %v1588
        %v1645 = vpack.c.b16 %v1591, %v1589
        %v1646 = vpack.c.b16 %v1594, %v1592
        %v1647 = vpack.c.b16 %v1595, %v1593
        %v1648 = vpack.c.b16 %v1598, %v1596
        %v1649 = vpack.c.b16 %v1599, %v1597
        %v1650 = vpack.c.b16 %v1602, %v1600
        %v1651 = vpack.c.b16 %v1603, %v1601
        %v1652 = vpack.c.b16 %v1606, %v1604
        %v1653 = vpack.c.b16 %v1607, %v1605
        %v1654 = vpack.c.b16 %v1610, %v1608
        %v1655 = vpack.c.b16 %v1611, %v1609
        %v1656 = vpack.c.b16 %v1614, %v1612
        %v1657 = vpack.c.b16 %v1615, %v1613
        %v1658 = vpack.c.b16 %v1618, %v1616
        %v1659 = vpack.c.b16 %v1619, %v1617
        %v1660 = vpack.c.b16 %v1622, %v1620
        %v1661 = vpack.c.b16 %v1623, %v1621
        %v1662 = vpack.c.b16 %v1626, %v1624
        %v1663 = vpack.c.b16 %v1627, %v1625
        %v1664 = vpack.c.b16 %v1630, %v1628
        %v1665 = vpack.c.b16 %v1631, %v1629
        %v1666 = vpack.c.b16 %v1634, %v1632
        %v1667 = vpack.c.b16 %v1635, %v1633
        %1700 = vmatprep.subr.bf16.mxu0 %v1651
        %1701 = vmatpush1.bf16.msra.mxu0 %v1650
        %1702 = vmatprep.subr.bf16.mxu0 %v1649
        %1703 = vmatpush1.bf16.msra.mxu0 %v1648
        %1704 = vmatprep.subr.bf16.mxu0 %v1647
        %1705 = vmatpush1.bf16.msra.mxu0 %v1646
        %1706 = vmatprep.subr.bf16.mxu0 %v1645
        %1707 = vmatpush1.bf16.msra.mxu0 %v1644
        %1708 = vmatprep.subr.bf16.mxu0 %v1643
        %1709 = vmatpush1.bf16.msra.mxu0 %v1642
        %1710 = vmatprep.subr.bf16.mxu0 %v1641
        %1711 = vmatpush1.bf16.msra.mxu0 %v1640
        %1712 = vmatprep.subr.bf16.mxu0 %v1639
        %1713 = vmatpush1.bf16.msra.mxu0 %v1638
        %1714 = vmatprep.subr.bf16.mxu0 %v1637
        %1715 = vmatpush1.bf16.msra.mxu0 %v1636
        %1716 = vmatprep.subr.bf16.mxu0 %v1667
        %1717 = vmatpush2.bf16.msra.mxu0 %v1666
        %1718 = vmatprep.subr.bf16.mxu0 %v1665
        %1719 = vmatpush2.bf16.msra.mxu0 %v1664
        %1720 = vmatprep.subr.bf16.mxu0 %v1663
        %1721 = vmatpush2.bf16.msra.mxu0 %v1662
        %1722 = vmatprep.subr.bf16.mxu0 %v1661
        %1723 = vmatpush2.bf16.msra.mxu0 %v1660
        %1724 = vmatprep.subr.bf16.mxu0 %v1659
        %1725 = vmatpush2.bf16.msra.mxu0 %v1658
        %1726 = vmatprep.subr.bf16.mxu0 %v1657
        %1727 = vmatpush2.bf16.msra.mxu0 %v1656
        %1728 = vmatprep.subr.bf16.mxu0 %v1655
        %1729 = vmatpush2.bf16.msra.mxu0 %v1654
        %1730 = vmatprep.subr.bf16.mxu0 %v1653
        %1731 = vmatpush2.bf16.msra.mxu0 %v1652
        %1732 = vmatprep.mubr.bf16.mxu0 %v1031
        %1733 = vmatmul.mubr.bf16.gmra.mxu0 %v1030
        %v1734 = vpop.f32.mrf.mxu0
        %v1735 = vadd.f32 0.0, %v1734
        %v1736 = vpop.f32.mrf.mxu0
        %v1737 = vadd.f32 0.0, %v1736
        %v1738 = vpop.f32.mrf.mxu0
        %v1739 = vadd.f32 0.0, %v1738
        %v1740 = vpop.f32.mrf.mxu0
        %v1741 = vadd.f32 0.0, %v1740
        %1742 = vdwg.mxu0
        %v1743 = vpack.c.bf16 %v1269, %v1265
        %v1744 = vpack.c.bf16 %v1271, %v1267
        %v1747 = vunpack.c.l.b16 %v1743
        %v1748 = vunpack.c.l.b16 %v1744
        %v1749 = vunpack.c.h.b16 %v1743
        %v1750 = vunpack.c.h.b16 %v1744
        %v1751 = vpack.c.b16 %v1748, %v1747
        %v1752 = vpack.c.b16 %v1750, %v1749
        %v1753 = vrot.slane %v1751, 4
        %v1754 = vrot.slane %v1752, 4
        %1755 = vrot.lane.b32.xlu0 %v1751, 96
        %v1756 = vpop.permute.xlu0 %1755
        %1757 = vrot.lane.b32.xlu0 %v1752, 96
        %v1758 = vpop.permute.xlu0 %1757
        %v1759 = vrot.slane %v1756, 4
        %v1760 = vrot.slane %v1758, 4
        %1761 = vrot.lane.b32.xlu0 %v1751, 64
        %v1762 = vpop.permute.xlu0 %1761
        %1763 = vrot.lane.b32.xlu0 %v1752, 64
        %v1764 = vpop.permute.xlu0 %1763
        %v1765 = vrot.slane %v1762, 4
        %v1766 = vrot.slane %v1764, 4
        %1767 = vrot.lane.b32.xlu0 %v1751, 32
        %v1768 = vpop.permute.xlu0 %1767
        %1769 = vrot.lane.b32.xlu0 %v1752, 32
        %v1770 = vpop.permute.xlu0 %1769
        %v1771 = vrot.slane %v1768, 4
        %v1772 = vrot.slane %v1770, 4
        %v1773 = vpack.c.bf16 %v1504, %v1500
        %v1774 = vpack.c.bf16 %v1506, %v1502
        %v1777 = vunpack.c.l.b16 %v1773
        %v1778 = vunpack.c.l.b16 %v1774
        %v1779 = vunpack.c.h.b16 %v1773
        %v1780 = vunpack.c.h.b16 %v1774
        %v1781 = vpack.c.b16 %v1778, %v1777
        %v1782 = vpack.c.b16 %v1780, %v1779
        %v1783 = vrot.slane %v1781, 4
        %v1784 = vrot.slane %v1782, 4
        %1785 = vrot.lane.b32.xlu0 %v1781, 96
        %v1786 = vpop.permute.xlu0 %1785
        %1787 = vrot.lane.b32.xlu0 %v1782, 96
        %v1788 = vpop.permute.xlu0 %1787
        %v1789 = vrot.slane %v1786, 4
        %v1790 = vrot.slane %v1788, 4
        %1791 = vrot.lane.b32.xlu0 %v1781, 64
        %v1792 = vpop.permute.xlu0 %1791
        %1793 = vrot.lane.b32.xlu0 %v1782, 64
        %v1794 = vpop.permute.xlu0 %1793
        %v1795 = vrot.slane %v1792, 4
        %v1796 = vrot.slane %v1794, 4
        %1797 = vrot.lane.b32.xlu0 %v1781, 32
        %v1798 = vpop.permute.xlu0 %1797
        %1799 = vrot.lane.b32.xlu0 %v1782, 32
        %v1800 = vpop.permute.xlu0 %1799
        %v1801 = vrot.slane %v1798, 4
        %v1802 = vrot.slane %v1800, 4
        %v1803 = vpack.c.bf16 %v1739, %v1735
        %v1804 = vpack.c.bf16 %v1741, %v1737
        %v1807 = vunpack.c.l.b16 %v1803
        %v1808 = vunpack.c.l.b16 %v1804
        %v1809 = vunpack.c.h.b16 %v1803
        %v1810 = vunpack.c.h.b16 %v1804
        %v1811 = vpack.c.b16 %v1808, %v1807
        %v1812 = vpack.c.b16 %v1810, %v1809
        %v1813 = vrot.slane %v1811, 4
        %v1814 = vrot.slane %v1812, 4
        %1815 = vrot.lane.b32.xlu0 %v1811, 96
        %v1816 = vpop.permute.xlu0 %1815
        %1817 = vrot.lane.b32.xlu0 %v1812, 96
        %v1818 = vpop.permute.xlu0 %1817
        %v1819 = vrot.slane %v1816, 4
        %v1820 = vrot.slane %v1818, 4
        %1821 = vrot.lane.b32.xlu0 %v1811, 64
        %v1822 = vpop.permute.xlu0 %1821
        %1823 = vrot.lane.b32.xlu0 %v1812, 64
        %v1824 = vpop.permute.xlu0 %1823
        %v1825 = vrot.slane %v1822, 4
        %v1826 = vrot.slane %v1824, 4
        %1827 = vrot.lane.b32.xlu0 %v1811, 32
        %v1828 = vpop.permute.xlu0 %1827
        %1829 = vrot.lane.b32.xlu0 %v1812, 32
        %v1830 = vpop.permute.xlu0 %1829
        %v1831 = vrot.slane %v1828, 4
        %v1832 = vrot.slane %v1830, 4
        %vm1833 = vcmask 261120
        %v1835 = vsel %vm1833, %v1751, 0
        %v1838 = vsel %vm1833, %v1781, 0
        %1840 = vmatprep.subr.bf16.mxu0 0
        %1841 = vmatpush1.bf16.xpose.msra.mxu0 0
        %1842 = vmatprep.subr.bf16.mxu0 0
        %1843 = vmatpush1.bf16.xpose.msra.mxu0 0
        %1844 = vmatprep.subr.bf16.mxu0 0
        %1845 = vmatpush1.bf16.xpose.msra.mxu0 0
        %1846 = vmatprep.subr.bf16.mxu0 0
        %1847 = vmatpush1.bf16.xpose.msra.mxu0 0
        %1848 = vmatprep.subr.bf16.mxu0 0
        %1849 = vmatpush1.bf16.xpose.msra.mxu0 0
        %1850 = vmatprep.subr.bf16.mxu0 0
        %1851 = vmatpush1.bf16.xpose.msra.mxu0 0
        %1852 = vmatprep.subr.bf16.mxu0 0
        %1853 = vmatpush1.bf16.xpose.msra.mxu0 0
        %1854 = vmatprep.subr.bf16.mxu0 0
        %1855 = vmatpush1.bf16.xpose.msra.mxu0 %v1838
        %1856 = vmatprep.subr.bf16.mxu0 0
        %1857 = vmatpush2.bf16.xpose.msra.mxu0 0
        %1858 = vmatprep.subr.bf16.mxu0 0
        %1859 = vmatpush2.bf16.xpose.msra.mxu0 0
        %1860 = vmatprep.subr.bf16.mxu0 0
        %1861 = vmatpush2.bf16.xpose.msra.mxu0 0
        %1862 = vmatprep.subr.bf16.mxu0 0
        %1863 = vmatpush2.bf16.xpose.msra.mxu0 0
        %1864 = vmatprep.subr.bf16.mxu0 0
        %1865 = vmatpush2.bf16.xpose.msra.mxu0 0
        %1866 = vmatprep.subr.bf16.mxu0 0
        %1867 = vmatpush2.bf16.xpose.msra.mxu0 0
        %1868 = vmatprep.subr.bf16.mxu0 0
        %1869 = vmatpush2.bf16.xpose.msra.mxu0 0
        %1870 = vmatprep.subr.bf16.mxu0 0
        %1871 = vmatpush2.bf16.xpose.msra.mxu0 0
        %1872 = vmatprep.mubr.bf16.mxu0 0
        %1873 = vmatmul.mubr.bf16.gmra.mxu0 %v1835
        %v1874 = vpop.f32.mrf.mxu0
        %v1875 = vadd.f32 0.0, %v1874
        %v1876 = vpop.f32.mrf.mxu0
        %v1877 = vpop.f32.mrf.mxu0
        %v1878 = vpop.f32.mrf.mxu0
        %1879 = vdwg.mxu0
        %v1881 = vsel %vm1833, %v1756, 0
        %v1884 = vsel %vm1833, %v1786, 0
        %1886 = vmatprep.subr.bf16.mxu0 0
        %1887 = vmatpush1.bf16.xpose.msra.mxu0 0
        %1888 = vmatprep.subr.bf16.mxu0 0
        %1889 = vmatpush1.bf16.xpose.msra.mxu0 0
        %1890 = vmatprep.subr.bf16.mxu0 0
        %1891 = vmatpush1.bf16.xpose.msra.mxu0 0
        %1892 = vmatprep.subr.bf16.mxu0 0
        %1893 = vmatpush1.bf16.xpose.msra.mxu0 0
        %1894 = vmatprep.subr.bf16.mxu0 0
        %1895 = vmatpush1.bf16.xpose.msra.mxu0 0
        %1896 = vmatprep.subr.bf16.mxu0 0
        %1897 = vmatpush1.bf16.xpose.msra.mxu0 0
        %1898 = vmatprep.subr.bf16.mxu0 0
        %1899 = vmatpush1.bf16.xpose.msra.mxu0 0
        %1900 = vmatprep.subr.bf16.mxu0 0
        %1901 = vmatpush1.bf16.xpose.msra.mxu0 %v1884
        %1902 = vmatprep.subr.bf16.mxu0 0
        %1903 = vmatpush2.bf16.xpose.msra.mxu0 0
        %1904 = vmatprep.subr.bf16.mxu0 0
        %1905 = vmatpush2.bf16.xpose.msra.mxu0 0
        %1906 = vmatprep.subr.bf16.mxu0 0
        %1907 = vmatpush2.bf16.xpose.msra.mxu0 0
        %1908 = vmatprep.subr.bf16.mxu0 0
        %1909 = vmatpush2.bf16.xpose.msra.mxu0 0
        %1910 = vmatprep.subr.bf16.mxu0 0
        %1911 = vmatpush2.bf16.xpose.msra.mxu0 0
        %1912 = vmatprep.subr.bf16.mxu0 0
        %1913 = vmatpush2.bf16.xpose.msra.mxu0 0
        %1914 = vmatprep.subr.bf16.mxu0 0
        %1915 = vmatpush2.bf16.xpose.msra.mxu0 0
        %1916 = vmatprep.subr.bf16.mxu0 0
        %1917 = vmatpush2.bf16.xpose.msra.mxu0 0
        %1918 = vmatprep.mubr.bf16.mxu0 0
        %1919 = vmatmul.mubr.bf16.gmra.mxu0 %v1881
        %v1920 = vpop.f32.mrf.mxu0
        %v1921 = vadd.f32 0.0, %v1920
        %v1922 = vpop.f32.mrf.mxu0
        %v1923 = vpop.f32.mrf.mxu0
        %v1924 = vpop.f32.mrf.mxu0
        %1925 = vdwg.mxu0
        %v1927 = vsel %vm1833, %v1762, 0
        %v1930 = vsel %vm1833, %v1792, 0
        %1932 = vmatprep.subr.bf16.mxu0 0
        %1933 = vmatpush1.bf16.xpose.msra.mxu0 0
        %1934 = vmatprep.subr.bf16.mxu0 0
        %1935 = vmatpush1.bf16.xpose.msra.mxu0 0
        %1936 = vmatprep.subr.bf16.mxu0 0
        %1937 = vmatpush1.bf16.xpose.msra.mxu0 0
        %1938 = vmatprep.subr.bf16.mxu0 0
        %1939 = vmatpush1.bf16.xpose.msra.mxu0 0
        %1940 = vmatprep.subr.bf16.mxu0 0
        %1941 = vmatpush1.bf16.xpose.msra.mxu0 0
        %1942 = vmatprep.subr.bf16.mxu0 0
        %1943 = vmatpush1.bf16.xpose.msra.mxu0 0
        %1944 = vmatprep.subr.bf16.mxu0 0
        %1945 = vmatpush1.bf16.xpose.msra.mxu0 0
        %1946 = vmatprep.subr.bf16.mxu0 0
        %1947 = vmatpush1.bf16.xpose.msra.mxu0 %v1930
        %1948 = vmatprep.subr.bf16.mxu0 0
        %1949 = vmatpush2.bf16.xpose.msra.mxu0 0
        %1950 = vmatprep.subr.bf16.mxu0 0
        %1951 = vmatpush2.bf16.xpose.msra.mxu0 0
        %1952 = vmatprep.subr.bf16.mxu0 0
        %1953 = vmatpush2.bf16.xpose.msra.mxu0 0
        %1954 = vmatprep.subr.bf16.mxu0 0
        %1955 = vmatpush2.bf16.xpose.msra.mxu0 0
        %1956 = vmatprep.subr.bf16.mxu0 0
        %1957 = vmatpush2.bf16.xpose.msra.mxu0 0
        %1958 = vmatprep.subr.bf16.mxu0 0
        %1959 = vmatpush2.bf16.xpose.msra.mxu0 0
        %1960 = vmatprep.subr.bf16.mxu0 0
        %1961 = vmatpush2.bf16.xpose.msra.mxu0 0
        %1962 = vmatprep.subr.bf16.mxu0 0
        %1963 = vmatpush2.bf16.xpose.msra.mxu0 0
        %1964 = vmatprep.mubr.bf16.mxu0 0
        %1965 = vmatmul.mubr.bf16.gmra.mxu0 %v1927
        %v1966 = vpop.f32.mrf.mxu0
        %v1967 = vadd.f32 0.0, %v1966
        %v1968 = vpop.f32.mrf.mxu0
        %v1969 = vpop.f32.mrf.mxu0
        %v1970 = vpop.f32.mrf.mxu0
        %1971 = vdwg.mxu0
        %v1973 = vsel %vm1833, %v1768, 0
        %v1976 = vsel %vm1833, %v1798, 0
        %1978 = vmatprep.subr.bf16.mxu0 0
        %1979 = vmatpush1.bf16.xpose.msra.mxu0 0
        %1980 = vmatprep.subr.bf16.mxu0 0
        %1981 = vmatpush1.bf16.xpose.msra.mxu0 0
        %1982 = vmatprep.subr.bf16.mxu0 0
        %1983 = vmatpush1.bf16.xpose.msra.mxu0 0
        %1984 = vmatprep.subr.bf16.mxu0 0
        %1985 = vmatpush1.bf16.xpose.msra.mxu0 0
        %1986 = vmatprep.subr.bf16.mxu0 0
        %1987 = vmatpush1.bf16.xpose.msra.mxu0 0
        %1988 = vmatprep.subr.bf16.mxu0 0
        %1989 = vmatpush1.bf16.xpose.msra.mxu0 0
        %1990 = vmatprep.subr.bf16.mxu0 0
        %1991 = vmatpush1.bf16.xpose.msra.mxu0 0
        %1992 = vmatprep.subr.bf16.mxu0 0
        %1993 = vmatpush1.bf16.xpose.msra.mxu0 %v1976
        %1994 = vmatprep.subr.bf16.mxu0 0
        %1995 = vmatpush2.bf16.xpose.msra.mxu0 0
        %1996 = vmatprep.subr.bf16.mxu0 0
        %1997 = vmatpush2.bf16.xpose.msra.mxu0 0
        %1998 = vmatprep.subr.bf16.mxu0 0
        %1999 = vmatpush2.bf16.xpose.msra.mxu0 0
        %2000 = vmatprep.subr.bf16.mxu0 0
        %2001 = vmatpush2.bf16.xpose.msra.mxu0 0
        %2002 = vmatprep.subr.bf16.mxu0 0
        %2003 = vmatpush2.bf16.xpose.msra.mxu0 0
        %2004 = vmatprep.subr.bf16.mxu0 0
        %2005 = vmatpush2.bf16.xpose.msra.mxu0 0
        %2006 = vmatprep.subr.bf16.mxu0 0
        %2007 = vmatpush2.bf16.xpose.msra.mxu0 0
        %2008 = vmatprep.subr.bf16.mxu0 0
        %2009 = vmatpush2.bf16.xpose.msra.mxu0 0
        %2010 = vmatprep.mubr.bf16.mxu0 0
        %2011 = vmatmul.mubr.bf16.gmra.mxu0 %v1973
        %v2012 = vpop.f32.mrf.mxu0
        %v2013 = vadd.f32 0.0, %v2012
        %v2014 = vpop.f32.mrf.mxu0
        %v2015 = vpop.f32.mrf.mxu0
        %v2016 = vpop.f32.mrf.mxu0
        %2017 = vdwg.mxu0
        %v2019 = vsel %vm1833, %v1753, 0
        %v2022 = vsel %vm1833, %v1783, 0
        %2024 = vmatprep.subr.bf16.mxu0 0
        %2025 = vmatpush1.bf16.xpose.msra.mxu0 0
        %2026 = vmatprep.subr.bf16.mxu0 0
        %2027 = vmatpush1.bf16.xpose.msra.mxu0 0
        %2028 = vmatprep.subr.bf16.mxu0 0
        %2029 = vmatpush1.bf16.xpose.msra.mxu0 0
        %2030 = vmatprep.subr.bf16.mxu0 0
        %2031 = vmatpush1.bf16.xpose.msra.mxu0 0
        %2032 = vmatprep.subr.bf16.mxu0 0
        %2033 = vmatpush1.bf16.xpose.msra.mxu0 0
        %2034 = vmatprep.subr.bf16.mxu0 0
        %2035 = vmatpush1.bf16.xpose.msra.mxu0 0
        %2036 = vmatprep.subr.bf16.mxu0 0
        %2037 = vmatpush1.bf16.xpose.msra.mxu0 0
        %2038 = vmatprep.subr.bf16.mxu0 0
        %2039 = vmatpush1.bf16.xpose.msra.mxu0 %v2022
        %2040 = vmatprep.subr.bf16.mxu0 0
        %2041 = vmatpush2.bf16.xpose.msra.mxu0 0
        %2042 = vmatprep.subr.bf16.mxu0 0
        %2043 = vmatpush2.bf16.xpose.msra.mxu0 0
        %2044 = vmatprep.subr.bf16.mxu0 0
        %2045 = vmatpush2.bf16.xpose.msra.mxu0 0
        %2046 = vmatprep.subr.bf16.mxu0 0
        %2047 = vmatpush2.bf16.xpose.msra.mxu0 0
        %2048 = vmatprep.subr.bf16.mxu0 0
        %2049 = vmatpush2.bf16.xpose.msra.mxu0 0
        %2050 = vmatprep.subr.bf16.mxu0 0
        %2051 = vmatpush2.bf16.xpose.msra.mxu0 0
        %2052 = vmatprep.subr.bf16.mxu0 0
        %2053 = vmatpush2.bf16.xpose.msra.mxu0 0
        %2054 = vmatprep.subr.bf16.mxu0 0
        %2055 = vmatpush2.bf16.xpose.msra.mxu0 0
        %2056 = vmatprep.mubr.bf16.mxu0 0
        %2057 = vmatmul.mubr.bf16.gmra.mxu0 %v2019
        %v2058 = vpop.f32.mrf.mxu0
        %v2059 = vadd.f32 0.0, %v2058
        %v2060 = vpop.f32.mrf.mxu0
        %v2061 = vpop.f32.mrf.mxu0
        %v2062 = vpop.f32.mrf.mxu0
        %2063 = vdwg.mxu0
        %v2065 = vsel %vm1833, %v1759, 0
        %v2068 = vsel %vm1833, %v1789, 0
        %2070 = vmatprep.subr.bf16.mxu0 0
        %2071 = vmatpush1.bf16.xpose.msra.mxu0 0
        %2072 = vmatprep.subr.bf16.mxu0 0
        %2073 = vmatpush1.bf16.xpose.msra.mxu0 0
        %2074 = vmatprep.subr.bf16.mxu0 0
        %2075 = vmatpush1.bf16.xpose.msra.mxu0 0
        %2076 = vmatprep.subr.bf16.mxu0 0
        %2077 = vmatpush1.bf16.xpose.msra.mxu0 0
        %2078 = vmatprep.subr.bf16.mxu0 0
        %2079 = vmatpush1.bf16.xpose.msra.mxu0 0
        %2080 = vmatprep.subr.bf16.mxu0 0
        %2081 = vmatpush1.bf16.xpose.msra.mxu0 0
        %2082 = vmatprep.subr.bf16.mxu0 0
        %2083 = vmatpush1.bf16.xpose.msra.mxu0 0
        %2084 = vmatprep.subr.bf16.mxu0 0
        %2085 = vmatpush1.bf16.xpose.msra.mxu0 %v2068
        %2086 = vmatprep.subr.bf16.mxu0 0
        %2087 = vmatpush2.bf16.xpose.msra.mxu0 0
        %2088 = vmatprep.subr.bf16.mxu0 0
        %2089 = vmatpush2.bf16.xpose.msra.mxu0 0
        %2090 = vmatprep.subr.bf16.mxu0 0
        %2091 = vmatpush2.bf16.xpose.msra.mxu0 0
        %2092 = vmatprep.subr.bf16.mxu0 0
        %2093 = vmatpush2.bf16.xpose.msra.mxu0 0
        %2094 = vmatprep.subr.bf16.mxu0 0
        %2095 = vmatpush2.bf16.xpose.msra.mxu0 0
        %2096 = vmatprep.subr.bf16.mxu0 0
        %2097 = vmatpush2.bf16.xpose.msra.mxu0 0
        %2098 = vmatprep.subr.bf16.mxu0 0
        %2099 = vmatpush2.bf16.xpose.msra.mxu0 0
        %2100 = vmatprep.subr.bf16.mxu0 0
        %2101 = vmatpush2.bf16.xpose.msra.mxu0 0
        %2102 = vmatprep.mubr.bf16.mxu0 0
        %2103 = vmatmul.mubr.bf16.gmra.mxu0 %v2065
        %v2104 = vpop.f32.mrf.mxu0
        %v2105 = vadd.f32 0.0, %v2104
        %v2106 = vpop.f32.mrf.mxu0
        %v2107 = vpop.f32.mrf.mxu0
        %v2108 = vpop.f32.mrf.mxu0
        %2109 = vdwg.mxu0
        %v2111 = vsel %vm1833, %v1765, 0
        %v2114 = vsel %vm1833, %v1795, 0
        %2116 = vmatprep.subr.bf16.mxu0 0
        %2117 = vmatpush1.bf16.xpose.msra.mxu0 0
        %2118 = vmatprep.subr.bf16.mxu0 0
        %2119 = vmatpush1.bf16.xpose.msra.mxu0 0
        %2120 = vmatprep.subr.bf16.mxu0 0
        %2121 = vmatpush1.bf16.xpose.msra.mxu0 0
        %2122 = vmatprep.subr.bf16.mxu0 0
        %2123 = vmatpush1.bf16.xpose.msra.mxu0 0
        %2124 = vmatprep.subr.bf16.mxu0 0
        %2125 = vmatpush1.bf16.xpose.msra.mxu0 0
        %2126 = vmatprep.subr.bf16.mxu0 0
        %2127 = vmatpush1.bf16.xpose.msra.mxu0 0
        %2128 = vmatprep.subr.bf16.mxu0 0
        %2129 = vmatpush1.bf16.xpose.msra.mxu0 0
        %2130 = vmatprep.subr.bf16.mxu0 0
        %2131 = vmatpush1.bf16.xpose.msra.mxu0 %v2114
        %2132 = vmatprep.subr.bf16.mxu0 0
        %2133 = vmatpush2.bf16.xpose.msra.mxu0 0
        %2134 = vmatprep.subr.bf16.mxu0 0
        %2135 = vmatpush2.bf16.xpose.msra.mxu0 0
        %2136 = vmatprep.subr.bf16.mxu0 0
        %2137 = vmatpush2.bf16.xpose.msra.mxu0 0
        %2138 = vmatprep.subr.bf16.mxu0 0
        %2139 = vmatpush2.bf16.xpose.msra.mxu0 0
        %2140 = vmatprep.subr.bf16.mxu0 0
        %2141 = vmatpush2.bf16.xpose.msra.mxu0 0
        %2142 = vmatprep.subr.bf16.mxu0 0
        %2143 = vmatpush2.bf16.xpose.msra.mxu0 0
        %2144 = vmatprep.subr.bf16.mxu0 0
        %2145 = vmatpush2.bf16.xpose.msra.mxu0 0
        %2146 = vmatprep.subr.bf16.mxu0 0
        %2147 = vmatpush2.bf16.xpose.msra.mxu0 0
        %2148 = vmatprep.mubr.bf16.mxu0 0
        %2149 = vmatmul.mubr.bf16.gmra.mxu0 %v2111
        %v2150 = vpop.f32.mrf.mxu0
        %v2151 = vadd.f32 0.0, %v2150
        %v2152 = vpop.f32.mrf.mxu0
        %v2153 = vpop.f32.mrf.mxu0
        %v2154 = vpop.f32.mrf.mxu0
        %2155 = vdwg.mxu0
        %v2157 = vsel %vm1833, %v1771, 0
        %v2160 = vsel %vm1833, %v1801, 0
        %2162 = vmatprep.subr.bf16.mxu0 0
        %2163 = vmatpush1.bf16.xpose.msra.mxu0 0
        %2164 = vmatprep.subr.bf16.mxu0 0
        %2165 = vmatpush1.bf16.xpose.msra.mxu0 0
        %2166 = vmatprep.subr.bf16.mxu0 0
        %2167 = vmatpush1.bf16.xpose.msra.mxu0 0
        %2168 = vmatprep.subr.bf16.mxu0 0
        %2169 = vmatpush1.bf16.xpose.msra.mxu0 0
        %2170 = vmatprep.subr.bf16.mxu0 0
        %2171 = vmatpush1.bf16.xpose.msra.mxu0 0
        %2172 = vmatprep.subr.bf16.mxu0 0
        %2173 = vmatpush1.bf16.xpose.msra.mxu0 0
        %2174 = vmatprep.subr.bf16.mxu0 0
        %2175 = vmatpush1.bf16.xpose.msra.mxu0 0
        %2176 = vmatprep.subr.bf16.mxu0 0
        %2177 = vmatpush1.bf16.xpose.msra.mxu0 %v2160
        %2178 = vmatprep.subr.bf16.mxu0 0
        %2179 = vmatpush2.bf16.xpose.msra.mxu0 0
        %2180 = vmatprep.subr.bf16.mxu0 0
        %2181 = vmatpush2.bf16.xpose.msra.mxu0 0
        %2182 = vmatprep.subr.bf16.mxu0 0
        %2183 = vmatpush2.bf16.xpose.msra.mxu0 0
        %2184 = vmatprep.subr.bf16.mxu0 0
        %2185 = vmatpush2.bf16.xpose.msra.mxu0 0
        %2186 = vmatprep.subr.bf16.mxu0 0
        %2187 = vmatpush2.bf16.xpose.msra.mxu0 0
        %2188 = vmatprep.subr.bf16.mxu0 0
        %2189 = vmatpush2.bf16.xpose.msra.mxu0 0
        %2190 = vmatprep.subr.bf16.mxu0 0
        %2191 = vmatpush2.bf16.xpose.msra.mxu0 0
        %2192 = vmatprep.subr.bf16.mxu0 0
        %2193 = vmatpush2.bf16.xpose.msra.mxu0 0
        %2194 = vmatprep.mubr.bf16.mxu0 0
        %2195 = vmatmul.mubr.bf16.gmra.mxu0 %v2157
        %v2196 = vpop.f32.mrf.mxu0
        %v2197 = vadd.f32 0.0, %v2196
        %v2198 = vpop.f32.mrf.mxu0
        %v2199 = vpop.f32.mrf.mxu0
        %v2200 = vpop.f32.mrf.mxu0
        %2201 = vdwg.mxu0
        %v2203 = vsel %vm1833, %v1752, 0
        %v2206 = vsel %vm1833, %v1782, 0
        %2208 = vmatprep.subr.bf16.mxu0 0
        %2209 = vmatpush1.bf16.xpose.msra.mxu0 0
        %2210 = vmatprep.subr.bf16.mxu0 0
        %2211 = vmatpush1.bf16.xpose.msra.mxu0 0
        %2212 = vmatprep.subr.bf16.mxu0 0
        %2213 = vmatpush1.bf16.xpose.msra.mxu0 0
        %2214 = vmatprep.subr.bf16.mxu0 0
        %2215 = vmatpush1.bf16.xpose.msra.mxu0 0
        %2216 = vmatprep.subr.bf16.mxu0 0
        %2217 = vmatpush1.bf16.xpose.msra.mxu0 0
        %2218 = vmatprep.subr.bf16.mxu0 0
        %2219 = vmatpush1.bf16.xpose.msra.mxu0 0
        %2220 = vmatprep.subr.bf16.mxu0 0
        %2221 = vmatpush1.bf16.xpose.msra.mxu0 0
        %2222 = vmatprep.subr.bf16.mxu0 0
        %2223 = vmatpush1.bf16.xpose.msra.mxu0 %v2206
        %2224 = vmatprep.subr.bf16.mxu0 0
        %2225 = vmatpush2.bf16.xpose.msra.mxu0 0
        %2226 = vmatprep.subr.bf16.mxu0 0
        %2227 = vmatpush2.bf16.xpose.msra.mxu0 0
        %2228 = vmatprep.subr.bf16.mxu0 0
        %2229 = vmatpush2.bf16.xpose.msra.mxu0 0
        %2230 = vmatprep.subr.bf16.mxu0 0
        %2231 = vmatpush2.bf16.xpose.msra.mxu0 0
        %2232 = vmatprep.subr.bf16.mxu0 0
        %2233 = vmatpush2.bf16.xpose.msra.mxu0 0
        %2234 = vmatprep.subr.bf16.mxu0 0
        %2235 = vmatpush2.bf16.xpose.msra.mxu0 0
        %2236 = vmatprep.subr.bf16.mxu0 0
        %2237 = vmatpush2.bf16.xpose.msra.mxu0 0
        %2238 = vmatprep.subr.bf16.mxu0 0
        %2239 = vmatpush2.bf16.xpose.msra.mxu0 0
        %2240 = vmatprep.mubr.bf16.mxu0 0
        %2241 = vmatmul.mubr.bf16.gmra.mxu0 %v2203
        %v2242 = vpop.f32.mrf.mxu0
        %v2243 = vadd.f32 0.0, %v2242
        %v2244 = vpop.f32.mrf.mxu0
        %v2245 = vpop.f32.mrf.mxu0
        %v2246 = vpop.f32.mrf.mxu0
        %2247 = vdwg.mxu0
        %v2249 = vsel %vm1833, %v1758, 0
        %v2252 = vsel %vm1833, %v1788, 0
        %2254 = vmatprep.subr.bf16.mxu0 0
        %2255 = vmatpush1.bf16.xpose.msra.mxu0 0
        %2256 = vmatprep.subr.bf16.mxu0 0
        %2257 = vmatpush1.bf16.xpose.msra.mxu0 0
        %2258 = vmatprep.subr.bf16.mxu0 0
        %2259 = vmatpush1.bf16.xpose.msra.mxu0 0
        %2260 = vmatprep.subr.bf16.mxu0 0
        %2261 = vmatpush1.bf16.xpose.msra.mxu0 0
        %2262 = vmatprep.subr.bf16.mxu0 0
        %2263 = vmatpush1.bf16.xpose.msra.mxu0 0
        %2264 = vmatprep.subr.bf16.mxu0 0
        %2265 = vmatpush1.bf16.xpose.msra.mxu0 0
        %2266 = vmatprep.subr.bf16.mxu0 0
        %2267 = vmatpush1.bf16.xpose.msra.mxu0 0
        %2268 = vmatprep.subr.bf16.mxu0 0
        %2269 = vmatpush1.bf16.xpose.msra.mxu0 %v2252
        %2270 = vmatprep.subr.bf16.mxu0 0
        %2271 = vmatpush2.bf16.xpose.msra.mxu0 0
        %2272 = vmatprep.subr.bf16.mxu0 0
        %2273 = vmatpush2.bf16.xpose.msra.mxu0 0
        %2274 = vmatprep.subr.bf16.mxu0 0
        %2275 = vmatpush2.bf16.xpose.msra.mxu0 0
        %2276 = vmatprep.subr.bf16.mxu0 0
        %2277 = vmatpush2.bf16.xpose.msra.mxu0 0
        %2278 = vmatprep.subr.bf16.mxu0 0
        %2279 = vmatpush2.bf16.xpose.msra.mxu0 0
        %2280 = vmatprep.subr.bf16.mxu0 0
        %2281 = vmatpush2.bf16.xpose.msra.mxu0 0
        %2282 = vmatprep.subr.bf16.mxu0 0
        %2283 = vmatpush2.bf16.xpose.msra.mxu0 0
        %2284 = vmatprep.subr.bf16.mxu0 0
        %2285 = vmatpush2.bf16.xpose.msra.mxu0 0
        %2286 = vmatprep.mubr.bf16.mxu0 0
        %2287 = vmatmul.mubr.bf16.gmra.mxu0 %v2249
        %v2288 = vpop.f32.mrf.mxu0
        %v2289 = vadd.f32 0.0, %v2288
        %v2290 = vpop.f32.mrf.mxu0
        %v2291 = vpop.f32.mrf.mxu0
        %v2292 = vpop.f32.mrf.mxu0
        %2293 = vdwg.mxu0
        %v2295 = vsel %vm1833, %v1764, 0
        %v2298 = vsel %vm1833, %v1794, 0
        %2300 = vmatprep.subr.bf16.mxu0 0
        %2301 = vmatpush1.bf16.xpose.msra.mxu0 0
        %2302 = vmatprep.subr.bf16.mxu0 0
        %2303 = vmatpush1.bf16.xpose.msra.mxu0 0
        %2304 = vmatprep.subr.bf16.mxu0 0
        %2305 = vmatpush1.bf16.xpose.msra.mxu0 0
        %2306 = vmatprep.subr.bf16.mxu0 0
        %2307 = vmatpush1.bf16.xpose.msra.mxu0 0
        %2308 = vmatprep.subr.bf16.mxu0 0
        %2309 = vmatpush1.bf16.xpose.msra.mxu0 0
        %2310 = vmatprep.subr.bf16.mxu0 0
        %2311 = vmatpush1.bf16.xpose.msra.mxu0 0
        %2312 = vmatprep.subr.bf16.mxu0 0
        %2313 = vmatpush1.bf16.xpose.msra.mxu0 0
        %2314 = vmatprep.subr.bf16.mxu0 0
        %2315 = vmatpush1.bf16.xpose.msra.mxu0 %v2298
        %2316 = vmatprep.subr.bf16.mxu0 0
        %2317 = vmatpush2.bf16.xpose.msra.mxu0 0
        %2318 = vmatprep.subr.bf16.mxu0 0
        %2319 = vmatpush2.bf16.xpose.msra.mxu0 0
        %2320 = vmatprep.subr.bf16.mxu0 0
        %2321 = vmatpush2.bf16.xpose.msra.mxu0 0
        %2322 = vmatprep.subr.bf16.mxu0 0
        %2323 = vmatpush2.bf16.xpose.msra.mxu0 0
        %2324 = vmatprep.subr.bf16.mxu0 0
        %2325 = vmatpush2.bf16.xpose.msra.mxu0 0
        %2326 = vmatprep.subr.bf16.mxu0 0
        %2327 = vmatpush2.bf16.xpose.msra.mxu0 0
        %2328 = vmatprep.subr.bf16.mxu0 0
        %2329 = vmatpush2.bf16.xpose.msra.mxu0 0
        %2330 = vmatprep.subr.bf16.mxu0 0
        %2331 = vmatpush2.bf16.xpose.msra.mxu0 0
        %2332 = vmatprep.mubr.bf16.mxu0 0
        %2333 = vmatmul.mubr.bf16.gmra.mxu0 %v2295
        %v2334 = vpop.f32.mrf.mxu0
        %v2335 = vadd.f32 0.0, %v2334
        %v2336 = vpop.f32.mrf.mxu0
        %v2337 = vpop.f32.mrf.mxu0
        %v2338 = vpop.f32.mrf.mxu0
        %2339 = vdwg.mxu0
        %v2341 = vsel %vm1833, %v1770, 0
        %v2344 = vsel %vm1833, %v1800, 0
        %2346 = vmatprep.subr.bf16.mxu0 0
        %2347 = vmatpush1.bf16.xpose.msra.mxu0 0
        %2348 = vmatprep.subr.bf16.mxu0 0
        %2349 = vmatpush1.bf16.xpose.msra.mxu0 0
        %2350 = vmatprep.subr.bf16.mxu0 0
        %2351 = vmatpush1.bf16.xpose.msra.mxu0 0
        %2352 = vmatprep.subr.bf16.mxu0 0
        %2353 = vmatpush1.bf16.xpose.msra.mxu0 0
        %2354 = vmatprep.subr.bf16.mxu0 0
        %2355 = vmatpush1.bf16.xpose.msra.mxu0 0
        %2356 = vmatprep.subr.bf16.mxu0 0
        %2357 = vmatpush1.bf16.xpose.msra.mxu0 0
        %2358 = vmatprep.subr.bf16.mxu0 0
        %2359 = vmatpush1.bf16.xpose.msra.mxu0 0
        %2360 = vmatprep.subr.bf16.mxu0 0
        %2361 = vmatpush1.bf16.xpose.msra.mxu0 %v2344
        %2362 = vmatprep.subr.bf16.mxu0 0
        %2363 = vmatpush2.bf16.xpose.msra.mxu0 0
        %2364 = vmatprep.subr.bf16.mxu0 0
        %2365 = vmatpush2.bf16.xpose.msra.mxu0 0
        %2366 = vmatprep.subr.bf16.mxu0 0
        %2367 = vmatpush2.bf16.xpose.msra.mxu0 0
        %2368 = vmatprep.subr.bf16.mxu0 0
        %2369 = vmatpush2.bf16.xpose.msra.mxu0 0
        %2370 = vmatprep.subr.bf16.mxu0 0
        %2371 = vmatpush2.bf16.xpose.msra.mxu0 0
        %2372 = vmatprep.subr.bf16.mxu0 0
        %2373 = vmatpush2.bf16.xpose.msra.mxu0 0
        %2374 = vmatprep.subr.bf16.mxu0 0
        %2375 = vmatpush2.bf16.xpose.msra.mxu0 0
        %2376 = vmatprep.subr.bf16.mxu0 0
        %2377 = vmatpush2.bf16.xpose.msra.mxu0 0
        %2378 = vmatprep.mubr.bf16.mxu0 0
        %2379 = vmatmul.mubr.bf16.gmra.mxu0 %v2341
        %v2380 = vpop.f32.mrf.mxu0
        %v2381 = vadd.f32 0.0, %v2380
        %v2382 = vpop.f32.mrf.mxu0
        %v2383 = vpop.f32.mrf.mxu0
        %v2384 = vpop.f32.mrf.mxu0
        %2385 = vdwg.mxu0
        %v2387 = vsel %vm1833, %v1754, 0
        %v2390 = vsel %vm1833, %v1784, 0
        %2392 = vmatprep.subr.bf16.mxu0 0
        %2393 = vmatpush1.bf16.xpose.msra.mxu0 0
        %2394 = vmatprep.subr.bf16.mxu0 0
        %2395 = vmatpush1.bf16.xpose.msra.mxu0 0
        %2396 = vmatprep.subr.bf16.mxu0 0
        %2397 = vmatpush1.bf16.xpose.msra.mxu0 0
        %2398 = vmatprep.subr.bf16.mxu0 0
        %2399 = vmatpush1.bf16.xpose.msra.mxu0 0
        %2400 = vmatprep.subr.bf16.mxu0 0
        %2401 = vmatpush1.bf16.xpose.msra.mxu0 0
        %2402 = vmatprep.subr.bf16.mxu0 0
        %2403 = vmatpush1.bf16.xpose.msra.mxu0 0
        %2404 = vmatprep.subr.bf16.mxu0 0
        %2405 = vmatpush1.bf16.xpose.msra.mxu0 0
        %2406 = vmatprep.subr.bf16.mxu0 0
        %2407 = vmatpush1.bf16.xpose.msra.mxu0 %v2390
        %2408 = vmatprep.subr.bf16.mxu0 0
        %2409 = vmatpush2.bf16.xpose.msra.mxu0 0
        %2410 = vmatprep.subr.bf16.mxu0 0
        %2411 = vmatpush2.bf16.xpose.msra.mxu0 0
        %2412 = vmatprep.subr.bf16.mxu0 0
        %2413 = vmatpush2.bf16.xpose.msra.mxu0 0
        %2414 = vmatprep.subr.bf16.mxu0 0
        %2415 = vmatpush2.bf16.xpose.msra.mxu0 0
        %2416 = vmatprep.subr.bf16.mxu0 0
        %2417 = vmatpush2.bf16.xpose.msra.mxu0 0
        %2418 = vmatprep.subr.bf16.mxu0 0
        %2419 = vmatpush2.bf16.xpose.msra.mxu0 0
        %2420 = vmatprep.subr.bf16.mxu0 0
        %2421 = vmatpush2.bf16.xpose.msra.mxu0 0
        %2422 = vmatprep.subr.bf16.mxu0 0
        %2423 = vmatpush2.bf16.xpose.msra.mxu0 0
        %2424 = vmatprep.mubr.bf16.mxu0 0
        %2425 = vmatmul.mubr.bf16.gmra.mxu0 %v2387
        %v2426 = vpop.f32.mrf.mxu0
        %v2427 = vadd.f32 0.0, %v2426
        %v2428 = vpop.f32.mrf.mxu0
        %v2429 = vpop.f32.mrf.mxu0
        %v2430 = vpop.f32.mrf.mxu0
        %2431 = vdwg.mxu0
        %v2433 = vsel %vm1833, %v1760, 0
        %v2436 = vsel %vm1833, %v1790, 0
        %2438 = vmatprep.subr.bf16.mxu0 0
        %2439 = vmatpush1.bf16.xpose.msra.mxu0 0
        %2440 = vmatprep.subr.bf16.mxu0 0
        %2441 = vmatpush1.bf16.xpose.msra.mxu0 0
        %2442 = vmatprep.subr.bf16.mxu0 0
        %2443 = vmatpush1.bf16.xpose.msra.mxu0 0
        %2444 = vmatprep.subr.bf16.mxu0 0
        %2445 = vmatpush1.bf16.xpose.msra.mxu0 0
        %2446 = vmatprep.subr.bf16.mxu0 0
        %2447 = vmatpush1.bf16.xpose.msra.mxu0 0
        %2448 = vmatprep.subr.bf16.mxu0 0
        %2449 = vmatpush1.bf16.xpose.msra.mxu0 0
        %2450 = vmatprep.subr.bf16.mxu0 0
        %2451 = vmatpush1.bf16.xpose.msra.mxu0 0
        %2452 = vmatprep.subr.bf16.mxu0 0
        %2453 = vmatpush1.bf16.xpose.msra.mxu0 %v2436
        %2454 = vmatprep.subr.bf16.mxu0 0
        %2455 = vmatpush2.bf16.xpose.msra.mxu0 0
        %2456 = vmatprep.subr.bf16.mxu0 0
        %2457 = vmatpush2.bf16.xpose.msra.mxu0 0
        %2458 = vmatprep.subr.bf16.mxu0 0
        %2459 = vmatpush2.bf16.xpose.msra.mxu0 0
        %2460 = vmatprep.subr.bf16.mxu0 0
        %2461 = vmatpush2.bf16.xpose.msra.mxu0 0
        %2462 = vmatprep.subr.bf16.mxu0 0
        %2463 = vmatpush2.bf16.xpose.msra.mxu0 0
        %2464 = vmatprep.subr.bf16.mxu0 0
        %2465 = vmatpush2.bf16.xpose.msra.mxu0 0
        %2466 = vmatprep.subr.bf16.mxu0 0
        %2467 = vmatpush2.bf16.xpose.msra.mxu0 0
        %2468 = vmatprep.subr.bf16.mxu0 0
        %2469 = vmatpush2.bf16.xpose.msra.mxu0 0
        %2470 = vmatprep.mubr.bf16.mxu0 0
        %2471 = vmatmul.mubr.bf16.gmra.mxu0 %v2433
        %v2472 = vpop.f32.mrf.mxu0
        %v2473 = vadd.f32 0.0, %v2472
        %v2474 = vpop.f32.mrf.mxu0
        %v2475 = vpop.f32.mrf.mxu0
        %v2476 = vpop.f32.mrf.mxu0
        %2477 = vdwg.mxu0
        %v2479 = vsel %vm1833, %v1766, 0
        %v2482 = vsel %vm1833, %v1796, 0
        %2484 = vmatprep.subr.bf16.mxu0 0
        %2485 = vmatpush1.bf16.xpose.msra.mxu0 0
        %2486 = vmatprep.subr.bf16.mxu0 0
        %2487 = vmatpush1.bf16.xpose.msra.mxu0 0
        %2488 = vmatprep.subr.bf16.mxu0 0
        %2489 = vmatpush1.bf16.xpose.msra.mxu0 0
        %2490 = vmatprep.subr.bf16.mxu0 0
        %2491 = vmatpush1.bf16.xpose.msra.mxu0 0
        %2492 = vmatprep.subr.bf16.mxu0 0
        %2493 = vmatpush1.bf16.xpose.msra.mxu0 0
        %2494 = vmatprep.subr.bf16.mxu0 0
        %2495 = vmatpush1.bf16.xpose.msra.mxu0 0
        %2496 = vmatprep.subr.bf16.mxu0 0
        %2497 = vmatpush1.bf16.xpose.msra.mxu0 0
        %2498 = vmatprep.subr.bf16.mxu0 0
        %2499 = vmatpush1.bf16.xpose.msra.mxu0 %v2482
        %2500 = vmatprep.subr.bf16.mxu0 0
        %2501 = vmatpush2.bf16.xpose.msra.mxu0 0
        %2502 = vmatprep.subr.bf16.mxu0 0
        %2503 = vmatpush2.bf16.xpose.msra.mxu0 0
        %2504 = vmatprep.subr.bf16.mxu0 0
        %2505 = vmatpush2.bf16.xpose.msra.mxu0 0
        %2506 = vmatprep.subr.bf16.mxu0 0
        %2507 = vmatpush2.bf16.xpose.msra.mxu0 0
        %2508 = vmatprep.subr.bf16.mxu0 0
        %2509 = vmatpush2.bf16.xpose.msra.mxu0 0
        %2510 = vmatprep.subr.bf16.mxu0 0
        %2511 = vmatpush2.bf16.xpose.msra.mxu0 0
        %2512 = vmatprep.subr.bf16.mxu0 0
        %2513 = vmatpush2.bf16.xpose.msra.mxu0 0
        %2514 = vmatprep.subr.bf16.mxu0 0
        %2515 = vmatpush2.bf16.xpose.msra.mxu0 0
        %2516 = vmatprep.mubr.bf16.mxu0 0
        %2517 = vmatmul.mubr.bf16.gmra.mxu0 %v2479
        %v2518 = vpop.f32.mrf.mxu0
        %v2519 = vadd.f32 0.0, %v2518
        %v2520 = vpop.f32.mrf.mxu0
        %v2521 = vpop.f32.mrf.mxu0
        %v2522 = vpop.f32.mrf.mxu0
        %2523 = vdwg.mxu0
        %v2525 = vsel %vm1833, %v1772, 0
        %v2528 = vsel %vm1833, %v1802, 0
        %2530 = vmatprep.subr.bf16.mxu0 0
        %2531 = vmatpush1.bf16.xpose.msra.mxu0 0
        %2532 = vmatprep.subr.bf16.mxu0 0
        %2533 = vmatpush1.bf16.xpose.msra.mxu0 0
        %2534 = vmatprep.subr.bf16.mxu0 0
        %2535 = vmatpush1.bf16.xpose.msra.mxu0 0
        %2536 = vmatprep.subr.bf16.mxu0 0
        %2537 = vmatpush1.bf16.xpose.msra.mxu0 0
        %2538 = vmatprep.subr.bf16.mxu0 0
        %2539 = vmatpush1.bf16.xpose.msra.mxu0 0
        %2540 = vmatprep.subr.bf16.mxu0 0
        %2541 = vmatpush1.bf16.xpose.msra.mxu0 0
        %2542 = vmatprep.subr.bf16.mxu0 0
        %2543 = vmatpush1.bf16.xpose.msra.mxu0 0
        %2544 = vmatprep.subr.bf16.mxu0 0
        %2545 = vmatpush1.bf16.xpose.msra.mxu0 %v2528
        %2546 = vmatprep.subr.bf16.mxu0 0
        %2547 = vmatpush2.bf16.xpose.msra.mxu0 0
        %2548 = vmatprep.subr.bf16.mxu0 0
        %2549 = vmatpush2.bf16.xpose.msra.mxu0 0
        %2550 = vmatprep.subr.bf16.mxu0 0
        %2551 = vmatpush2.bf16.xpose.msra.mxu0 0
        %2552 = vmatprep.subr.bf16.mxu0 0
        %2553 = vmatpush2.bf16.xpose.msra.mxu0 0
        %2554 = vmatprep.subr.bf16.mxu0 0
        %2555 = vmatpush2.bf16.xpose.msra.mxu0 0
        %2556 = vmatprep.subr.bf16.mxu0 0
        %2557 = vmatpush2.bf16.xpose.msra.mxu0 0
        %2558 = vmatprep.subr.bf16.mxu0 0
        %2559 = vmatpush2.bf16.xpose.msra.mxu0 0
        %2560 = vmatprep.subr.bf16.mxu0 0
        %2561 = vmatpush2.bf16.xpose.msra.mxu0 0
        %2562 = vmatprep.mubr.bf16.mxu0 0
        %2563 = vmatmul.mubr.bf16.gmra.mxu0 %v2525
        %v2564 = vpop.f32.mrf.mxu0
        %v2565 = vadd.f32 0.0, %v2564
        %v2566 = vpop.f32.mrf.mxu0
        %v2567 = vpop.f32.mrf.mxu0
        %v2568 = vpop.f32.mrf.mxu0
        %2569 = vdwg.mxu0
        %v2570 = vadd.f32 %v1875, %v1034
        %v2571 = vadd.f32 %v1921, %v1034
        %v2572 = vadd.f32 %v1967, %v1034
        %v2573 = vadd.f32 %v2013, %v1034
        %v2574 = vadd.f32 %v2059, %v1034
        %v2575 = vadd.f32 %v2105, %v1034
        %v2576 = vadd.f32 %v2151, %v1034
        %v2577 = vadd.f32 %v2197, %v1034
        %v2578 = vadd.f32 %v2243, %v1035
        %v2579 = vadd.f32 %v2289, %v1035
        %v2580 = vadd.f32 %v2335, %v1035
        %v2581 = vadd.f32 %v2381, %v1035
        %v2582 = vadd.f32 %v2427, %v1035
        %v2583 = vadd.f32 %v2473, %v1035
        %v2584 = vadd.f32 %v2519, %v1035
        %v2585 = vadd.f32 %v2565, %v1035
        %vm2586 = vcmask 64512
        %v2587 = vsel %vm2586, %v2570, -inf
        %2588 = vmax.xlane.f32.xlu0 %v2587
        %v2589 = vpop.xlane.xlu0 %2588
        %v2590 = vsel %vm2586, %v2571, -inf
        %2591 = vmax.xlane.f32.xlu0 %v2590
        %v2592 = vpop.xlane.xlu0 %2591
        %v2593 = vsel %vm2586, %v2572, -inf
        %2594 = vmax.xlane.f32.xlu0 %v2593
        %v2595 = vpop.xlane.xlu0 %2594
        %v2596 = vsel %vm2586, %v2573, -inf
        %2597 = vmax.xlane.f32.xlu0 %v2596
        %v2598 = vpop.xlane.xlu0 %2597
        %v2599 = vsel %vm2586, %v2574, -inf
        %2600 = vmax.xlane.f32.xlu0 %v2599
        %v2601 = vpop.xlane.xlu0 %2600
        %v2602 = vsel %vm2586, %v2575, -inf
        %2603 = vmax.xlane.f32.xlu0 %v2602
        %v2604 = vpop.xlane.xlu0 %2603
        %v2605 = vsel %vm2586, %v2576, -inf
        %2606 = vmax.xlane.f32.xlu0 %v2605
        %v2607 = vpop.xlane.xlu0 %2606
        %v2608 = vsel %vm2586, %v2577, -inf
        %2609 = vmax.xlane.f32.xlu0 %v2608
        %v2610 = vpop.xlane.xlu0 %2609
        %v2611 = vsel %vm2586, %v2578, -inf
        %2612 = vmax.xlane.f32.xlu0 %v2611
        %v2613 = vpop.xlane.xlu0 %2612
        %v2614 = vsel %vm2586, %v2579, -inf
        %2615 = vmax.xlane.f32.xlu0 %v2614
        %v2616 = vpop.xlane.xlu0 %2615
        %v2617 = vsel %vm2586, %v2580, -inf
        %2618 = vmax.xlane.f32.xlu0 %v2617
        %v2619 = vpop.xlane.xlu0 %2618
        %v2620 = vsel %vm2586, %v2581, -inf
        %2621 = vmax.xlane.f32.xlu0 %v2620
        %v2622 = vpop.xlane.xlu0 %2621
        %v2623 = vsel %vm2586, %v2582, -inf
        %2624 = vmax.xlane.f32.xlu0 %v2623
        %v2625 = vpop.xlane.xlu0 %2624
        %v2626 = vsel %vm2586, %v2583, -inf
        %2627 = vmax.xlane.f32.xlu0 %v2626
        %v2628 = vpop.xlane.xlu0 %2627
        %v2629 = vsel %vm2586, %v2584, -inf
        %2630 = vmax.xlane.f32.xlu0 %v2629
        %v2631 = vpop.xlane.xlu0 %2630
        %v2632 = vsel %vm2586, %v2585, -inf
        %2633 = vmax.xlane.f32.xlu0 %v2632
        %v2634 = vpop.xlane.xlu0 %2633
        %v2635 = vsub.f32 %v2570, %v2589
        %v2636 = vsub.f32 %v2571, %v2592
        %v2637 = vsub.f32 %v2572, %v2595
        %v2638 = vsub.f32 %v2573, %v2598
        %v2639 = vsub.f32 %v2574, %v2601
        %v2640 = vsub.f32 %v2575, %v2604
        %v2641 = vsub.f32 %v2576, %v2607
        %v2642 = vsub.f32 %v2577, %v2610
        %v2643 = vsub.f32 %v2578, %v2613
        %v2644 = vsub.f32 %v2579, %v2616
        %v2645 = vsub.f32 %v2580, %v2619
        %v2646 = vsub.f32 %v2581, %v2622
        %v2647 = vsub.f32 %v2582, %v2625
        %v2648 = vsub.f32 %v2583, %v2628
        %v2649 = vsub.f32 %v2584, %v2631
        %v2650 = vsub.f32 %v2585, %v2634
        %v2651 = vmul.f32 %v2635, 1.442695
        %v2652 = vpow.pop %v2651
        %v2653 = vmul.f32 %v2636, 1.442695
        %v2654 = vpow.pop %v2653
        %v2655 = vmul.f32 %v2637, 1.442695
        %v2656 = vpow.pop %v2655
        %v2657 = vmul.f32 %v2638, 1.442695
        %v2658 = vpow.pop %v2657
        %v2659 = vmul.f32 %v2639, 1.442695
        %v2660 = vpow.pop %v2659
        %v2661 = vmul.f32 %v2640, 1.442695
        %v2662 = vpow.pop %v2661
        %v2663 = vmul.f32 %v2641, 1.442695
        %v2664 = vpow.pop %v2663
        %v2665 = vmul.f32 %v2642, 1.442695
        %v2666 = vpow.pop %v2665
        %v2667 = vmul.f32 %v2643, 1.442695
        %v2668 = vpow.pop %v2667
        %v2669 = vmul.f32 %v2644, 1.442695
        %v2670 = vpow.pop %v2669
        %v2671 = vmul.f32 %v2645, 1.442695
        %v2672 = vpow.pop %v2671
        %v2673 = vmul.f32 %v2646, 1.442695
        %v2674 = vpow.pop %v2673
        %v2675 = vmul.f32 %v2647, 1.442695
        %v2676 = vpow.pop %v2675
        %v2677 = vmul.f32 %v2648, 1.442695
        %v2678 = vpow.pop %v2677
        %v2679 = vmul.f32 %v2649, 1.442695
        %v2680 = vpow.pop %v2679
        %v2681 = vmul.f32 %v2650, 1.442695
        %v2682 = vpow.pop %v2681
        %v2683 = vsel %vm2586, %v2652, 0.0
        %2684 = vadd.xlane.f32.xlu0 %v2683
        %v2685 = vpop.xlane.xlu0 %2684
        %v2686 = vsel %vm2586, %v2654, 0.0
        %2687 = vadd.xlane.f32.xlu0 %v2686
        %v2688 = vpop.xlane.xlu0 %2687
        %v2689 = vsel %vm2586, %v2656, 0.0
        %2690 = vadd.xlane.f32.xlu0 %v2689
        %v2691 = vpop.xlane.xlu0 %2690
        %v2692 = vsel %vm2586, %v2658, 0.0
        %2693 = vadd.xlane.f32.xlu0 %v2692
        %v2694 = vpop.xlane.xlu0 %2693
        %v2695 = vsel %vm2586, %v2660, 0.0
        %2696 = vadd.xlane.f32.xlu0 %v2695
        %v2697 = vpop.xlane.xlu0 %2696
        %v2698 = vsel %vm2586, %v2662, 0.0
        %2699 = vadd.xlane.f32.xlu0 %v2698
        %v2700 = vpop.xlane.xlu0 %2699
        %v2701 = vsel %vm2586, %v2664, 0.0
        %2702 = vadd.xlane.f32.xlu0 %v2701
        %v2703 = vpop.xlane.xlu0 %2702
        %v2704 = vsel %vm2586, %v2666, 0.0
        %2705 = vadd.xlane.f32.xlu0 %v2704
        %v2706 = vpop.xlane.xlu0 %2705
        %v2707 = vsel %vm2586, %v2668, 0.0
        %2708 = vadd.xlane.f32.xlu0 %v2707
        %v2709 = vpop.xlane.xlu0 %2708
        %v2710 = vsel %vm2586, %v2670, 0.0
        %2711 = vadd.xlane.f32.xlu0 %v2710
        %v2712 = vpop.xlane.xlu0 %2711
        %v2713 = vsel %vm2586, %v2672, 0.0
        %2714 = vadd.xlane.f32.xlu0 %v2713
        %v2715 = vpop.xlane.xlu0 %2714
        %v2716 = vsel %vm2586, %v2674, 0.0
        %2717 = vadd.xlane.f32.xlu0 %v2716
        %v2718 = vpop.xlane.xlu0 %2717
        %v2719 = vsel %vm2586, %v2676, 0.0
        %2720 = vadd.xlane.f32.xlu0 %v2719
        %v2721 = vpop.xlane.xlu0 %2720
        %v2722 = vsel %vm2586, %v2678, 0.0
        %2723 = vadd.xlane.f32.xlu0 %v2722
        %v2724 = vpop.xlane.xlu0 %2723
        %v2725 = vsel %vm2586, %v2680, 0.0
        %2726 = vadd.xlane.f32.xlu0 %v2725
        %v2727 = vpop.xlane.xlu0 %2726
        %v2728 = vsel %vm2586, %v2682, 0.0
        %2729 = vadd.xlane.f32.xlu0 %v2728
        %v2730 = vpop.xlane.xlu0 %2729
        %v2731 = vrcp.pop %v2685
        %v2732 = vrcp.pop %v2688
        %v2733 = vrcp.pop %v2691
        %v2734 = vrcp.pop %v2694
        %v2735 = vrcp.pop %v2697
        %v2736 = vrcp.pop %v2700
        %v2737 = vrcp.pop %v2703
        %v2738 = vrcp.pop %v2706
        %v2739 = vrcp.pop %v2709
        %v2740 = vrcp.pop %v2712
        %v2741 = vrcp.pop %v2715
        %v2742 = vrcp.pop %v2718
        %v2743 = vrcp.pop %v2721
        %v2744 = vrcp.pop %v2724
        %v2745 = vrcp.pop %v2727
        %v2746 = vrcp.pop %v2730
        %v2747 = vmul.f32 %v2652, %v2731
        %v2748 = vmul.f32 %v2654, %v2732
        %v2749 = vmul.f32 %v2656, %v2733
        %v2750 = vmul.f32 %v2658, %v2734
        %v2751 = vmul.f32 %v2660, %v2735
        %v2752 = vmul.f32 %v2662, %v2736
        %v2753 = vmul.f32 %v2664, %v2737
        %v2754 = vmul.f32 %v2666, %v2738
        %v2755 = vmul.f32 %v2668, %v2739
        %v2756 = vmul.f32 %v2670, %v2740
        %v2757 = vmul.f32 %v2672, %v2741
        %v2758 = vmul.f32 %v2674, %v2742
        %v2759 = vmul.f32 %v2676, %v2743
        %v2760 = vmul.f32 %v2678, %v2744
        %v2761 = vmul.f32 %v2680, %v2745
        %v2762 = vmul.f32 %v2682, %v2746
        %v2763 = vpack.c.bf16 %v2747, %v2747
        %v2764 = vpack.c.bf16 %v2748, %v2748
        %v2765 = vpack.c.bf16 %v2749, %v2749
        %v2766 = vpack.c.bf16 %v2750, %v2750
        %v2767 = vpack.c.bf16 %v2751, %v2751
        %v2768 = vpack.c.bf16 %v2752, %v2752
        %v2769 = vpack.c.bf16 %v2753, %v2753
        %v2770 = vpack.c.bf16 %v2754, %v2754
        %v2771 = vpack.c.bf16 %v2755, %v2755
        %v2772 = vpack.c.bf16 %v2756, %v2756
        %v2773 = vpack.c.bf16 %v2757, %v2757
        %v2774 = vpack.c.bf16 %v2758, %v2758
        %v2775 = vpack.c.bf16 %v2759, %v2759
        %v2776 = vpack.c.bf16 %v2760, %v2760
        %v2777 = vpack.c.bf16 %v2761, %v2761
        %v2778 = vpack.c.bf16 %v2762, %v2762
        %v2780 = vsel %vm2586, %v2763, 0
        %vm2782 = vcmask 1043456
        %v2784 = vsel %vm2782, %v1811, 0
        %2786 = vmatprep.subr.bf16.mxu0 0
        %2787 = vmatpush1.bf16.msra.mxu0 0
        %2788 = vmatprep.subr.bf16.mxu0 0
        %2789 = vmatpush1.bf16.msra.mxu0 0
        %2790 = vmatprep.subr.bf16.mxu0 0
        %2791 = vmatpush1.bf16.msra.mxu0 0
        %2792 = vmatprep.subr.bf16.mxu0 0
        %2793 = vmatpush1.bf16.msra.mxu0 0
        %2794 = vmatprep.subr.bf16.mxu0 0
        %2795 = vmatpush1.bf16.msra.mxu0 0
        %2796 = vmatprep.subr.bf16.mxu0 0
        %2797 = vmatpush1.bf16.msra.mxu0 0
        %2798 = vmatprep.subr.bf16.mxu0 0
        %2799 = vmatpush1.bf16.msra.mxu0 0
        %2800 = vmatprep.subr.bf16.mxu0 0
        %2801 = vmatpush1.bf16.msra.mxu0 %v2784
        %2802 = vmatprep.subr.bf16.mxu0 0
        %2803 = vmatpush2.bf16.msra.mxu0 0
        %2804 = vmatprep.subr.bf16.mxu0 0
        %2805 = vmatpush2.bf16.msra.mxu0 0
        %2806 = vmatprep.subr.bf16.mxu0 0
        %2807 = vmatpush2.bf16.msra.mxu0 0
        %2808 = vmatprep.subr.bf16.mxu0 0
        %2809 = vmatpush2.bf16.msra.mxu0 0
        %2810 = vmatprep.subr.bf16.mxu0 0
        %2811 = vmatpush2.bf16.msra.mxu0 0
        %2812 = vmatprep.subr.bf16.mxu0 0
        %2813 = vmatpush2.bf16.msra.mxu0 0
        %2814 = vmatprep.subr.bf16.mxu0 0
        %2815 = vmatpush2.bf16.msra.mxu0 0
        %2816 = vmatprep.subr.bf16.mxu0 0
        %2817 = vmatpush2.bf16.msra.mxu0 0
        %2818 = vmatprep.mubr.bf16.mxu0 0
        %2819 = vmatmul.mubr.bf16.gmra.mxu0 %v2780
        %v2820 = vpop.f32.mrf.mxu0
        %v2821 = vadd.f32 0.0, %v2820
        %v2822 = vpop.f32.mrf.mxu0
        %v2823 = vpop.f32.mrf.mxu0
        %v2824 = vpop.f32.mrf.mxu0
        %2825 = vdwg.mxu0
        %v2827 = vsel %vm2586, %v2764, 0
        %v2830 = vsel %vm2782, %v1816, 0
        %2832 = vmatprep.subr.bf16.mxu0 0
        %2833 = vmatpush1.bf16.msra.mxu0 0
        %2834 = vmatprep.subr.bf16.mxu0 0
        %2835 = vmatpush1.bf16.msra.mxu0 0
        %2836 = vmatprep.subr.bf16.mxu0 0
        %2837 = vmatpush1.bf16.msra.mxu0 0
        %2838 = vmatprep.subr.bf16.mxu0 0
        %2839 = vmatpush1.bf16.msra.mxu0 0
        %2840 = vmatprep.subr.bf16.mxu0 0
        %2841 = vmatpush1.bf16.msra.mxu0 0
        %2842 = vmatprep.subr.bf16.mxu0 0
        %2843 = vmatpush1.bf16.msra.mxu0 0
        %2844 = vmatprep.subr.bf16.mxu0 0
        %2845 = vmatpush1.bf16.msra.mxu0 0
        %2846 = vmatprep.subr.bf16.mxu0 0
        %2847 = vmatpush1.bf16.msra.mxu0 %v2830
        %2848 = vmatprep.subr.bf16.mxu0 0
        %2849 = vmatpush2.bf16.msra.mxu0 0
        %2850 = vmatprep.subr.bf16.mxu0 0
        %2851 = vmatpush2.bf16.msra.mxu0 0
        %2852 = vmatprep.subr.bf16.mxu0 0
        %2853 = vmatpush2.bf16.msra.mxu0 0
        %2854 = vmatprep.subr.bf16.mxu0 0
        %2855 = vmatpush2.bf16.msra.mxu0 0
        %2856 = vmatprep.subr.bf16.mxu0 0
        %2857 = vmatpush2.bf16.msra.mxu0 0
        %2858 = vmatprep.subr.bf16.mxu0 0
        %2859 = vmatpush2.bf16.msra.mxu0 0
        %2860 = vmatprep.subr.bf16.mxu0 0
        %2861 = vmatpush2.bf16.msra.mxu0 0
        %2862 = vmatprep.subr.bf16.mxu0 0
        %2863 = vmatpush2.bf16.msra.mxu0 0
        %2864 = vmatprep.mubr.bf16.mxu0 0
        %2865 = vmatmul.mubr.bf16.gmra.mxu0 %v2827
        %v2866 = vpop.f32.mrf.mxu0
        %v2867 = vadd.f32 0.0, %v2866
        %v2868 = vpop.f32.mrf.mxu0
        %v2869 = vpop.f32.mrf.mxu0
        %v2870 = vpop.f32.mrf.mxu0
        %2871 = vdwg.mxu0
        %v2873 = vsel %vm2586, %v2765, 0
        %v2876 = vsel %vm2782, %v1822, 0
        %2878 = vmatprep.subr.bf16.mxu0 0
        %2879 = vmatpush1.bf16.msra.mxu0 0
        %2880 = vmatprep.subr.bf16.mxu0 0
        %2881 = vmatpush1.bf16.msra.mxu0 0
        %2882 = vmatprep.subr.bf16.mxu0 0
        %2883 = vmatpush1.bf16.msra.mxu0 0
        %2884 = vmatprep.subr.bf16.mxu0 0
        %2885 = vmatpush1.bf16.msra.mxu0 0
        %2886 = vmatprep.subr.bf16.mxu0 0
        %2887 = vmatpush1.bf16.msra.mxu0 0
        %2888 = vmatprep.subr.bf16.mxu0 0
        %2889 = vmatpush1.bf16.msra.mxu0 0
        %2890 = vmatprep.subr.bf16.mxu0 0
        %2891 = vmatpush1.bf16.msra.mxu0 0
        %2892 = vmatprep.subr.bf16.mxu0 0
        %2893 = vmatpush1.bf16.msra.mxu0 %v2876
        %2894 = vmatprep.subr.bf16.mxu0 0
        %2895 = vmatpush2.bf16.msra.mxu0 0
        %2896 = vmatprep.subr.bf16.mxu0 0
        %2897 = vmatpush2.bf16.msra.mxu0 0
        %2898 = vmatprep.subr.bf16.mxu0 0
        %2899 = vmatpush2.bf16.msra.mxu0 0
        %2900 = vmatprep.subr.bf16.mxu0 0
        %2901 = vmatpush2.bf16.msra.mxu0 0
        %2902 = vmatprep.subr.bf16.mxu0 0
        %2903 = vmatpush2.bf16.msra.mxu0 0
        %2904 = vmatprep.subr.bf16.mxu0 0
        %2905 = vmatpush2.bf16.msra.mxu0 0
        %2906 = vmatprep.subr.bf16.mxu0 0
        %2907 = vmatpush2.bf16.msra.mxu0 0
        %2908 = vmatprep.subr.bf16.mxu0 0
        %2909 = vmatpush2.bf16.msra.mxu0 0
        %2910 = vmatprep.mubr.bf16.mxu0 0
        %2911 = vmatmul.mubr.bf16.gmra.mxu0 %v2873
        %v2912 = vpop.f32.mrf.mxu0
        %v2913 = vadd.f32 0.0, %v2912
        %v2914 = vpop.f32.mrf.mxu0
        %v2915 = vpop.f32.mrf.mxu0
        %v2916 = vpop.f32.mrf.mxu0
        %2917 = vdwg.mxu0
        %v2919 = vsel %vm2586, %v2766, 0
        %v2922 = vsel %vm2782, %v1828, 0
        %2924 = vmatprep.subr.bf16.mxu0 0
        %2925 = vmatpush1.bf16.msra.mxu0 0
        %2926 = vmatprep.subr.bf16.mxu0 0
        %2927 = vmatpush1.bf16.msra.mxu0 0
        %2928 = vmatprep.subr.bf16.mxu0 0
        %2929 = vmatpush1.bf16.msra.mxu0 0
        %2930 = vmatprep.subr.bf16.mxu0 0
        %2931 = vmatpush1.bf16.msra.mxu0 0
        %2932 = vmatprep.subr.bf16.mxu0 0
        %2933 = vmatpush1.bf16.msra.mxu0 0
        %2934 = vmatprep.subr.bf16.mxu0 0
        %2935 = vmatpush1.bf16.msra.mxu0 0
        %2936 = vmatprep.subr.bf16.mxu0 0
        %2937 = vmatpush1.bf16.msra.mxu0 0
        %2938 = vmatprep.subr.bf16.mxu0 0
        %2939 = vmatpush1.bf16.msra.mxu0 %v2922
        %2940 = vmatprep.subr.bf16.mxu0 0
        %2941 = vmatpush2.bf16.msra.mxu0 0
        %2942 = vmatprep.subr.bf16.mxu0 0
        %2943 = vmatpush2.bf16.msra.mxu0 0
        %2944 = vmatprep.subr.bf16.mxu0 0
        %2945 = vmatpush2.bf16.msra.mxu0 0
        %2946 = vmatprep.subr.bf16.mxu0 0
        %2947 = vmatpush2.bf16.msra.mxu0 0
        %2948 = vmatprep.subr.bf16.mxu0 0
        %2949 = vmatpush2.bf16.msra.mxu0 0
        %2950 = vmatprep.subr.bf16.mxu0 0
        %2951 = vmatpush2.bf16.msra.mxu0 0
        %2952 = vmatprep.subr.bf16.mxu0 0
        %2953 = vmatpush2.bf16.msra.mxu0 0
        %2954 = vmatprep.subr.bf16.mxu0 0
        %2955 = vmatpush2.bf16.msra.mxu0 0
        %2956 = vmatprep.mubr.bf16.mxu0 0
        %2957 = vmatmul.mubr.bf16.gmra.mxu0 %v2919
        %v2958 = vpop.f32.mrf.mxu0
        %v2959 = vadd.f32 0.0, %v2958
        %v2960 = vpop.f32.mrf.mxu0
        %v2961 = vpop.f32.mrf.mxu0
        %v2962 = vpop.f32.mrf.mxu0
        %2963 = vdwg.mxu0
        %v2965 = vsel %vm2586, %v2767, 0
        %v2968 = vsel %vm2782, %v1813, 0
        %2970 = vmatprep.subr.bf16.mxu0 0
        %2971 = vmatpush1.bf16.msra.mxu0 0
        %2972 = vmatprep.subr.bf16.mxu0 0
        %2973 = vmatpush1.bf16.msra.mxu0 0
        %2974 = vmatprep.subr.bf16.mxu0 0
        %2975 = vmatpush1.bf16.msra.mxu0 0
        %2976 = vmatprep.subr.bf16.mxu0 0
        %2977 = vmatpush1.bf16.msra.mxu0 0
        %2978 = vmatprep.subr.bf16.mxu0 0
        %2979 = vmatpush1.bf16.msra.mxu0 0
        %2980 = vmatprep.subr.bf16.mxu0 0
        %2981 = vmatpush1.bf16.msra.mxu0 0
        %2982 = vmatprep.subr.bf16.mxu0 0
        %2983 = vmatpush1.bf16.msra.mxu0 0
        %2984 = vmatprep.subr.bf16.mxu0 0
        %2985 = vmatpush1.bf16.msra.mxu0 %v2968
        %2986 = vmatprep.subr.bf16.mxu0 0
        %2987 = vmatpush2.bf16.msra.mxu0 0
        %2988 = vmatprep.subr.bf16.mxu0 0
        %2989 = vmatpush2.bf16.msra.mxu0 0
        %2990 = vmatprep.subr.bf16.mxu0 0
        %2991 = vmatpush2.bf16.msra.mxu0 0
        %2992 = vmatprep.subr.bf16.mxu0 0
        %2993 = vmatpush2.bf16.msra.mxu0 0
        %2994 = vmatprep.subr.bf16.mxu0 0
        %2995 = vmatpush2.bf16.msra.mxu0 0
        %2996 = vmatprep.subr.bf16.mxu0 0
        %2997 = vmatpush2.bf16.msra.mxu0 0
        %2998 = vmatprep.subr.bf16.mxu0 0
        %2999 = vmatpush2.bf16.msra.mxu0 0
        %3000 = vmatprep.subr.bf16.mxu0 0
        %3001 = vmatpush2.bf16.msra.mxu0 0
        %3002 = vmatprep.mubr.bf16.mxu0 0
        %3003 = vmatmul.mubr.bf16.gmra.mxu0 %v2965
        %v3004 = vpop.f32.mrf.mxu0
        %v3005 = vadd.f32 0.0, %v3004
        %v3006 = vpop.f32.mrf.mxu0
        %v3007 = vpop.f32.mrf.mxu0
        %v3008 = vpop.f32.mrf.mxu0
        %3009 = vdwg.mxu0
        %v3011 = vsel %vm2586, %v2768, 0
        %v3014 = vsel %vm2782, %v1819, 0
        %3016 = vmatprep.subr.bf16.mxu0 0
        %3017 = vmatpush1.bf16.msra.mxu0 0
        %3018 = vmatprep.subr.bf16.mxu0 0
        %3019 = vmatpush1.bf16.msra.mxu0 0
        %3020 = vmatprep.subr.bf16.mxu0 0
        %3021 = vmatpush1.bf16.msra.mxu0 0
        %3022 = vmatprep.subr.bf16.mxu0 0
        %3023 = vmatpush1.bf16.msra.mxu0 0
        %3024 = vmatprep.subr.bf16.mxu0 0
        %3025 = vmatpush1.bf16.msra.mxu0 0
        %3026 = vmatprep.subr.bf16.mxu0 0
        %3027 = vmatpush1.bf16.msra.mxu0 0
        %3028 = vmatprep.subr.bf16.mxu0 0
        %3029 = vmatpush1.bf16.msra.mxu0 0
        %3030 = vmatprep.subr.bf16.mxu0 0
        %3031 = vmatpush1.bf16.msra.mxu0 %v3014
        %3032 = vmatprep.subr.bf16.mxu0 0
        %3033 = vmatpush2.bf16.msra.mxu0 0
        %3034 = vmatprep.subr.bf16.mxu0 0
        %3035 = vmatpush2.bf16.msra.mxu0 0
        %3036 = vmatprep.subr.bf16.mxu0 0
        %3037 = vmatpush2.bf16.msra.mxu0 0
        %3038 = vmatprep.subr.bf16.mxu0 0
        %3039 = vmatpush2.bf16.msra.mxu0 0
        %3040 = vmatprep.subr.bf16.mxu0 0
        %3041 = vmatpush2.bf16.msra.mxu0 0
        %3042 = vmatprep.subr.bf16.mxu0 0
        %3043 = vmatpush2.bf16.msra.mxu0 0
        %3044 = vmatprep.subr.bf16.mxu0 0
        %3045 = vmatpush2.bf16.msra.mxu0 0
        %3046 = vmatprep.subr.bf16.mxu0 0
        %3047 = vmatpush2.bf16.msra.mxu0 0
        %3048 = vmatprep.mubr.bf16.mxu0 0
        %3049 = vmatmul.mubr.bf16.gmra.mxu0 %v3011
        %v3050 = vpop.f32.mrf.mxu0
        %v3051 = vadd.f32 0.0, %v3050
        %v3052 = vpop.f32.mrf.mxu0
        %v3053 = vpop.f32.mrf.mxu0
        %v3054 = vpop.f32.mrf.mxu0
        %3055 = vdwg.mxu0
        %v3057 = vsel %vm2586, %v2769, 0
        %v3060 = vsel %vm2782, %v1825, 0
        %3062 = vmatprep.subr.bf16.mxu0 0
        %3063 = vmatpush1.bf16.msra.mxu0 0
        %3064 = vmatprep.subr.bf16.mxu0 0
        %3065 = vmatpush1.bf16.msra.mxu0 0
        %3066 = vmatprep.subr.bf16.mxu0 0
        %3067 = vmatpush1.bf16.msra.mxu0 0
        %3068 = vmatprep.subr.bf16.mxu0 0
        %3069 = vmatpush1.bf16.msra.mxu0 0
        %3070 = vmatprep.subr.bf16.mxu0 0
        %3071 = vmatpush1.bf16.msra.mxu0 0
        %3072 = vmatprep.subr.bf16.mxu0 0
        %3073 = vmatpush1.bf16.msra.mxu0 0
        %3074 = vmatprep.subr.bf16.mxu0 0
        %3075 = vmatpush1.bf16.msra.mxu0 0
        %3076 = vmatprep.subr.bf16.mxu0 0
        %3077 = vmatpush1.bf16.msra.mxu0 %v3060
        %3078 = vmatprep.subr.bf16.mxu0 0
        %3079 = vmatpush2.bf16.msra.mxu0 0
        %3080 = vmatprep.subr.bf16.mxu0 0
        %3081 = vmatpush2.bf16.msra.mxu0 0
        %3082 = vmatprep.subr.bf16.mxu0 0
        %3083 = vmatpush2.bf16.msra.mxu0 0
        %3084 = vmatprep.subr.bf16.mxu0 0
        %3085 = vmatpush2.bf16.msra.mxu0 0
        %3086 = vmatprep.subr.bf16.mxu0 0
        %3087 = vmatpush2.bf16.msra.mxu0 0
        %3088 = vmatprep.subr.bf16.mxu0 0
        %3089 = vmatpush2.bf16.msra.mxu0 0
        %3090 = vmatprep.subr.bf16.mxu0 0
        %3091 = vmatpush2.bf16.msra.mxu0 0
        %3092 = vmatprep.subr.bf16.mxu0 0
        %3093 = vmatpush2.bf16.msra.mxu0 0
        %3094 = vmatprep.mubr.bf16.mxu0 0
        %3095 = vmatmul.mubr.bf16.gmra.mxu0 %v3057
        %v3096 = vpop.f32.mrf.mxu0
        %v3097 = vadd.f32 0.0, %v3096
        %v3098 = vpop.f32.mrf.mxu0
        %v3099 = vpop.f32.mrf.mxu0
        %v3100 = vpop.f32.mrf.mxu0
        %3101 = vdwg.mxu0
        %v3103 = vsel %vm2586, %v2770, 0
        %v3106 = vsel %vm2782, %v1831, 0
        %3108 = vmatprep.subr.bf16.mxu0 0
        %3109 = vmatpush1.bf16.msra.mxu0 0
        %3110 = vmatprep.subr.bf16.mxu0 0
        %3111 = vmatpush1.bf16.msra.mxu0 0
        %3112 = vmatprep.subr.bf16.mxu0 0
        %3113 = vmatpush1.bf16.msra.mxu0 0
        %3114 = vmatprep.subr.bf16.mxu0 0
        %3115 = vmatpush1.bf16.msra.mxu0 0
        %3116 = vmatprep.subr.bf16.mxu0 0
        %3117 = vmatpush1.bf16.msra.mxu0 0
        %3118 = vmatprep.subr.bf16.mxu0 0
        %3119 = vmatpush1.bf16.msra.mxu0 0
        %3120 = vmatprep.subr.bf16.mxu0 0
        %3121 = vmatpush1.bf16.msra.mxu0 0
        %3122 = vmatprep.subr.bf16.mxu0 0
        %3123 = vmatpush1.bf16.msra.mxu0 %v3106
        %3124 = vmatprep.subr.bf16.mxu0 0
        %3125 = vmatpush2.bf16.msra.mxu0 0
        %3126 = vmatprep.subr.bf16.mxu0 0
        %3127 = vmatpush2.bf16.msra.mxu0 0
        %3128 = vmatprep.subr.bf16.mxu0 0
        %3129 = vmatpush2.bf16.msra.mxu0 0
        %3130 = vmatprep.subr.bf16.mxu0 0
        %3131 = vmatpush2.bf16.msra.mxu0 0
        %3132 = vmatprep.subr.bf16.mxu0 0
        %3133 = vmatpush2.bf16.msra.mxu0 0
        %3134 = vmatprep.subr.bf16.mxu0 0
        %3135 = vmatpush2.bf16.msra.mxu0 0
        %3136 = vmatprep.subr.bf16.mxu0 0
        %3137 = vmatpush2.bf16.msra.mxu0 0
        %3138 = vmatprep.subr.bf16.mxu0 0
        %3139 = vmatpush2.bf16.msra.mxu0 0
        %3140 = vmatprep.mubr.bf16.mxu0 0
        %3141 = vmatmul.mubr.bf16.gmra.mxu0 %v3103
        %v3142 = vpop.f32.mrf.mxu0
        %v3143 = vadd.f32 0.0, %v3142
        %v3144 = vpop.f32.mrf.mxu0
        %v3145 = vpop.f32.mrf.mxu0
        %v3146 = vpop.f32.mrf.mxu0
        %3147 = vdwg.mxu0
        %v3149 = vsel %vm2586, %v2771, 0
        %v3152 = vsel %vm2782, %v1812, 0
        %3154 = vmatprep.subr.bf16.mxu0 0
        %3155 = vmatpush1.bf16.msra.mxu0 0
        %3156 = vmatprep.subr.bf16.mxu0 0
        %3157 = vmatpush1.bf16.msra.mxu0 0
        %3158 = vmatprep.subr.bf16.mxu0 0
        %3159 = vmatpush1.bf16.msra.mxu0 0
        %3160 = vmatprep.subr.bf16.mxu0 0
        %3161 = vmatpush1.bf16.msra.mxu0 0
        %3162 = vmatprep.subr.bf16.mxu0 0
        %3163 = vmatpush1.bf16.msra.mxu0 0
        %3164 = vmatprep.subr.bf16.mxu0 0
        %3165 = vmatpush1.bf16.msra.mxu0 0
        %3166 = vmatprep.subr.bf16.mxu0 0
        %3167 = vmatpush1.bf16.msra.mxu0 0
        %3168 = vmatprep.subr.bf16.mxu0 0
        %3169 = vmatpush1.bf16.msra.mxu0 %v3152
        %3170 = vmatprep.subr.bf16.mxu0 0
        %3171 = vmatpush2.bf16.msra.mxu0 0
        %3172 = vmatprep.subr.bf16.mxu0 0
        %3173 = vmatpush2.bf16.msra.mxu0 0
        %3174 = vmatprep.subr.bf16.mxu0 0
        %3175 = vmatpush2.bf16.msra.mxu0 0
        %3176 = vmatprep.subr.bf16.mxu0 0
        %3177 = vmatpush2.bf16.msra.mxu0 0
        %3178 = vmatprep.subr.bf16.mxu0 0
        %3179 = vmatpush2.bf16.msra.mxu0 0
        %3180 = vmatprep.subr.bf16.mxu0 0
        %3181 = vmatpush2.bf16.msra.mxu0 0
        %3182 = vmatprep.subr.bf16.mxu0 0
        %3183 = vmatpush2.bf16.msra.mxu0 0
        %3184 = vmatprep.subr.bf16.mxu0 0
        %3185 = vmatpush2.bf16.msra.mxu0 0
        %3186 = vmatprep.mubr.bf16.mxu0 0
        %3187 = vmatmul.mubr.bf16.gmra.mxu0 %v3149
        %v3188 = vpop.f32.mrf.mxu0
        %v3189 = vadd.f32 0.0, %v3188
        %v3190 = vpop.f32.mrf.mxu0
        %v3191 = vpop.f32.mrf.mxu0
        %v3192 = vpop.f32.mrf.mxu0
        %3193 = vdwg.mxu0
        %v3195 = vsel %vm2586, %v2772, 0
        %v3198 = vsel %vm2782, %v1818, 0
        %3200 = vmatprep.subr.bf16.mxu0 0
        %3201 = vmatpush1.bf16.msra.mxu0 0
        %3202 = vmatprep.subr.bf16.mxu0 0
        %3203 = vmatpush1.bf16.msra.mxu0 0
        %3204 = vmatprep.subr.bf16.mxu0 0
        %3205 = vmatpush1.bf16.msra.mxu0 0
        %3206 = vmatprep.subr.bf16.mxu0 0
        %3207 = vmatpush1.bf16.msra.mxu0 0
        %3208 = vmatprep.subr.bf16.mxu0 0
        %3209 = vmatpush1.bf16.msra.mxu0 0
        %3210 = vmatprep.subr.bf16.mxu0 0
        %3211 = vmatpush1.bf16.msra.mxu0 0
        %3212 = vmatprep.subr.bf16.mxu0 0
        %3213 = vmatpush1.bf16.msra.mxu0 0
        %3214 = vmatprep.subr.bf16.mxu0 0
        %3215 = vmatpush1.bf16.msra.mxu0 %v3198
        %3216 = vmatprep.subr.bf16.mxu0 0
        %3217 = vmatpush2.bf16.msra.mxu0 0
        %3218 = vmatprep.subr.bf16.mxu0 0
        %3219 = vmatpush2.bf16.msra.mxu0 0
        %3220 = vmatprep.subr.bf16.mxu0 0
        %3221 = vmatpush2.bf16.msra.mxu0 0
        %3222 = vmatprep.subr.bf16.mxu0 0
        %3223 = vmatpush2.bf16.msra.mxu0 0
        %3224 = vmatprep.subr.bf16.mxu0 0
        %3225 = vmatpush2.bf16.msra.mxu0 0
        %3226 = vmatprep.subr.bf16.mxu0 0
        %3227 = vmatpush2.bf16.msra.mxu0 0
        %3228 = vmatprep.subr.bf16.mxu0 0
        %3229 = vmatpush2.bf16.msra.mxu0 0
        %3230 = vmatprep.subr.bf16.mxu0 0
        %3231 = vmatpush2.bf16.msra.mxu0 0
        %3232 = vmatprep.mubr.bf16.mxu0 0
        %3233 = vmatmul.mubr.bf16.gmra.mxu0 %v3195
        %v3234 = vpop.f32.mrf.mxu0
        %v3235 = vadd.f32 0.0, %v3234
        %v3236 = vpop.f32.mrf.mxu0
        %v3237 = vpop.f32.mrf.mxu0
        %v3238 = vpop.f32.mrf.mxu0
        %3239 = vdwg.mxu0
        %v3241 = vsel %vm2586, %v2773, 0
        %v3244 = vsel %vm2782, %v1824, 0
        %3246 = vmatprep.subr.bf16.mxu0 0
        %3247 = vmatpush1.bf16.msra.mxu0 0
        %3248 = vmatprep.subr.bf16.mxu0 0
        %3249 = vmatpush1.bf16.msra.mxu0 0
        %3250 = vmatprep.subr.bf16.mxu0 0
        %3251 = vmatpush1.bf16.msra.mxu0 0
        %3252 = vmatprep.subr.bf16.mxu0 0
        %3253 = vmatpush1.bf16.msra.mxu0 0
        %3254 = vmatprep.subr.bf16.mxu0 0
        %3255 = vmatpush1.bf16.msra.mxu0 0
        %3256 = vmatprep.subr.bf16.mxu0 0
        %3257 = vmatpush1.bf16.msra.mxu0 0
        %3258 = vmatprep.subr.bf16.mxu0 0
        %3259 = vmatpush1.bf16.msra.mxu0 0
        %3260 = vmatprep.subr.bf16.mxu0 0
        %3261 = vmatpush1.bf16.msra.mxu0 %v3244
        %3262 = vmatprep.subr.bf16.mxu0 0
        %3263 = vmatpush2.bf16.msra.mxu0 0
        %3264 = vmatprep.subr.bf16.mxu0 0
        %3265 = vmatpush2.bf16.msra.mxu0 0
        %3266 = vmatprep.subr.bf16.mxu0 0
        %3267 = vmatpush2.bf16.msra.mxu0 0
        %3268 = vmatprep.subr.bf16.mxu0 0
        %3269 = vmatpush2.bf16.msra.mxu0 0
        %3270 = vmatprep.subr.bf16.mxu0 0
        %3271 = vmatpush2.bf16.msra.mxu0 0
        %3272 = vmatprep.subr.bf16.mxu0 0
        %3273 = vmatpush2.bf16.msra.mxu0 0
        %3274 = vmatprep.subr.bf16.mxu0 0
        %3275 = vmatpush2.bf16.msra.mxu0 0
        %3276 = vmatprep.subr.bf16.mxu0 0
        %3277 = vmatpush2.bf16.msra.mxu0 0
        %3278 = vmatprep.mubr.bf16.mxu0 0
        %3279 = vmatmul.mubr.bf16.gmra.mxu0 %v3241
        %v3280 = vpop.f32.mrf.mxu0
        %v3281 = vadd.f32 0.0, %v3280
        %v3282 = vpop.f32.mrf.mxu0
        %v3283 = vpop.f32.mrf.mxu0
        %v3284 = vpop.f32.mrf.mxu0
        %3285 = vdwg.mxu0
        %v3287 = vsel %vm2586, %v2774, 0
        %v3290 = vsel %vm2782, %v1830, 0
        %3292 = vmatprep.subr.bf16.mxu0 0
        %3293 = vmatpush1.bf16.msra.mxu0 0
        %3294 = vmatprep.subr.bf16.mxu0 0
        %3295 = vmatpush1.bf16.msra.mxu0 0
        %3296 = vmatprep.subr.bf16.mxu0 0
        %3297 = vmatpush1.bf16.msra.mxu0 0
        %3298 = vmatprep.subr.bf16.mxu0 0
        %3299 = vmatpush1.bf16.msra.mxu0 0
        %3300 = vmatprep.subr.bf16.mxu0 0
        %3301 = vmatpush1.bf16.msra.mxu0 0
        %3302 = vmatprep.subr.bf16.mxu0 0
        %3303 = vmatpush1.bf16.msra.mxu0 0
        %3304 = vmatprep.subr.bf16.mxu0 0
        %3305 = vmatpush1.bf16.msra.mxu0 0
        %3306 = vmatprep.subr.bf16.mxu0 0
        %3307 = vmatpush1.bf16.msra.mxu0 %v3290
        %3308 = vmatprep.subr.bf16.mxu0 0
        %3309 = vmatpush2.bf16.msra.mxu0 0
        %3310 = vmatprep.subr.bf16.mxu0 0
        %3311 = vmatpush2.bf16.msra.mxu0 0
        %3312 = vmatprep.subr.bf16.mxu0 0
        %3313 = vmatpush2.bf16.msra.mxu0 0
        %3314 = vmatprep.subr.bf16.mxu0 0
        %3315 = vmatpush2.bf16.msra.mxu0 0
        %3316 = vmatprep.subr.bf16.mxu0 0
        %3317 = vmatpush2.bf16.msra.mxu0 0
        %3318 = vmatprep.subr.bf16.mxu0 0
        %3319 = vmatpush2.bf16.msra.mxu0 0
        %3320 = vmatprep.subr.bf16.mxu0 0
        %3321 = vmatpush2.bf16.msra.mxu0 0
        %3322 = vmatprep.subr.bf16.mxu0 0
        %3323 = vmatpush2.bf16.msra.mxu0 0
        %3324 = vmatprep.mubr.bf16.mxu0 0
        %3325 = vmatmul.mubr.bf16.gmra.mxu0 %v3287
        %v3326 = vpop.f32.mrf.mxu0
        %v3327 = vadd.f32 0.0, %v3326
        %v3328 = vpop.f32.mrf.mxu0
        %v3329 = vpop.f32.mrf.mxu0
        %v3330 = vpop.f32.mrf.mxu0
        %3331 = vdwg.mxu0
        %v3333 = vsel %vm2586, %v2775, 0
        %v3336 = vsel %vm2782, %v1814, 0
        %3338 = vmatprep.subr.bf16.mxu0 0
        %3339 = vmatpush1.bf16.msra.mxu0 0
        %3340 = vmatprep.subr.bf16.mxu0 0
        %3341 = vmatpush1.bf16.msra.mxu0 0
        %3342 = vmatprep.subr.bf16.mxu0 0
        %3343 = vmatpush1.bf16.msra.mxu0 0
        %3344 = vmatprep.subr.bf16.mxu0 0
        %3345 = vmatpush1.bf16.msra.mxu0 0
        %3346 = vmatprep.subr.bf16.mxu0 0
        %3347 = vmatpush1.bf16.msra.mxu0 0
        %3348 = vmatprep.subr.bf16.mxu0 0
        %3349 = vmatpush1.bf16.msra.mxu0 0
        %3350 = vmatprep.subr.bf16.mxu0 0
        %3351 = vmatpush1.bf16.msra.mxu0 0
        %3352 = vmatprep.subr.bf16.mxu0 0
        %3353 = vmatpush1.bf16.msra.mxu0 %v3336
        %3354 = vmatprep.subr.bf16.mxu0 0
        %3355 = vmatpush2.bf16.msra.mxu0 0
        %3356 = vmatprep.subr.bf16.mxu0 0
        %3357 = vmatpush2.bf16.msra.mxu0 0
        %3358 = vmatprep.subr.bf16.mxu0 0
        %3359 = vmatpush2.bf16.msra.mxu0 0
        %3360 = vmatprep.subr.bf16.mxu0 0
        %3361 = vmatpush2.bf16.msra.mxu0 0
        %3362 = vmatprep.subr.bf16.mxu0 0
        %3363 = vmatpush2.bf16.msra.mxu0 0
        %3364 = vmatprep.subr.bf16.mxu0 0
        %3365 = vmatpush2.bf16.msra.mxu0 0
        %3366 = vmatprep.subr.bf16.mxu0 0
        %3367 = vmatpush2.bf16.msra.mxu0 0
        %3368 = vmatprep.subr.bf16.mxu0 0
        %3369 = vmatpush2.bf16.msra.mxu0 0
        %3370 = vmatprep.mubr.bf16.mxu0 0
        %3371 = vmatmul.mubr.bf16.gmra.mxu0 %v3333
        %v3372 = vpop.f32.mrf.mxu0
        %v3373 = vadd.f32 0.0, %v3372
        %v3374 = vpop.f32.mrf.mxu0
        %v3375 = vpop.f32.mrf.mxu0
        %v3376 = vpop.f32.mrf.mxu0
        %3377 = vdwg.mxu0
        %v3379 = vsel %vm2586, %v2776, 0
        %v3382 = vsel %vm2782, %v1820, 0
        %3384 = vmatprep.subr.bf16.mxu0 0
        %3385 = vmatpush1.bf16.msra.mxu0 0
        %3386 = vmatprep.subr.bf16.mxu0 0
        %3387 = vmatpush1.bf16.msra.mxu0 0
        %3388 = vmatprep.subr.bf16.mxu0 0
        %3389 = vmatpush1.bf16.msra.mxu0 0
        %3390 = vmatprep.subr.bf16.mxu0 0
        %3391 = vmatpush1.bf16.msra.mxu0 0
        %3392 = vmatprep.subr.bf16.mxu0 0
        %3393 = vmatpush1.bf16.msra.mxu0 0
        %3394 = vmatprep.subr.bf16.mxu0 0
        %3395 = vmatpush1.bf16.msra.mxu0 0
        %3396 = vmatprep.subr.bf16.mxu0 0
        %3397 = vmatpush1.bf16.msra.mxu0 0
        %3398 = vmatprep.subr.bf16.mxu0 0
        %3399 = vmatpush1.bf16.msra.mxu0 %v3382
        %3400 = vmatprep.subr.bf16.mxu0 0
        %3401 = vmatpush2.bf16.msra.mxu0 0
        %3402 = vmatprep.subr.bf16.mxu0 0
        %3403 = vmatpush2.bf16.msra.mxu0 0
        %3404 = vmatprep.subr.bf16.mxu0 0
        %3405 = vmatpush2.bf16.msra.mxu0 0
        %3406 = vmatprep.subr.bf16.mxu0 0
        %3407 = vmatpush2.bf16.msra.mxu0 0
        %3408 = vmatprep.subr.bf16.mxu0 0
        %3409 = vmatpush2.bf16.msra.mxu0 0
        %3410 = vmatprep.subr.bf16.mxu0 0
        %3411 = vmatpush2.bf16.msra.mxu0 0
        %3412 = vmatprep.subr.bf16.mxu0 0
        %3413 = vmatpush2.bf16.msra.mxu0 0
        %3414 = vmatprep.subr.bf16.mxu0 0
        %3415 = vmatpush2.bf16.msra.mxu0 0
        %3416 = vmatprep.mubr.bf16.mxu0 0
        %3417 = vmatmul.mubr.bf16.gmra.mxu0 %v3379
        %v3418 = vpop.f32.mrf.mxu0
        %v3419 = vadd.f32 0.0, %v3418
        %v3420 = vpop.f32.mrf.mxu0
        %v3421 = vpop.f32.mrf.mxu0
        %v3422 = vpop.f32.mrf.mxu0
        %3423 = vdwg.mxu0
        %v3425 = vsel %vm2586, %v2777, 0
        %v3428 = vsel %vm2782, %v1826, 0
        %3430 = vmatprep.subr.bf16.mxu0 0
        %3431 = vmatpush1.bf16.msra.mxu0 0
        %3432 = vmatprep.subr.bf16.mxu0 0
        %3433 = vmatpush1.bf16.msra.mxu0 0
        %3434 = vmatprep.subr.bf16.mxu0 0
        %3435 = vmatpush1.bf16.msra.mxu0 0
        %3436 = vmatprep.subr.bf16.mxu0 0
        %3437 = vmatpush1.bf16.msra.mxu0 0
        %3438 = vmatprep.subr.bf16.mxu0 0
        %3439 = vmatpush1.bf16.msra.mxu0 0
        %3440 = vmatprep.subr.bf16.mxu0 0
        %3441 = vmatpush1.bf16.msra.mxu0 0
        %3442 = vmatprep.subr.bf16.mxu0 0
        %3443 = vmatpush1.bf16.msra.mxu0 0
        %3444 = vmatprep.subr.bf16.mxu0 0
        %3445 = vmatpush1.bf16.msra.mxu0 %v3428
        %3446 = vmatprep.subr.bf16.mxu0 0
        %3447 = vmatpush2.bf16.msra.mxu0 0
        %3448 = vmatprep.subr.bf16.mxu0 0
        %3449 = vmatpush2.bf16.msra.mxu0 0
        %3450 = vmatprep.subr.bf16.mxu0 0
        %3451 = vmatpush2.bf16.msra.mxu0 0
        %3452 = vmatprep.subr.bf16.mxu0 0
        %3453 = vmatpush2.bf16.msra.mxu0 0
        %3454 = vmatprep.subr.bf16.mxu0 0
        %3455 = vmatpush2.bf16.msra.mxu0 0
        %3456 = vmatprep.subr.bf16.mxu0 0
        %3457 = vmatpush2.bf16.msra.mxu0 0
        %3458 = vmatprep.subr.bf16.mxu0 0
        %3459 = vmatpush2.bf16.msra.mxu0 0
        %3460 = vmatprep.subr.bf16.mxu0 0
        %3461 = vmatpush2.bf16.msra.mxu0 0
        %3462 = vmatprep.mubr.bf16.mxu0 0
        %3463 = vmatmul.mubr.bf16.gmra.mxu0 %v3425
        %v3464 = vpop.f32.mrf.mxu0
        %v3465 = vadd.f32 0.0, %v3464
        %v3466 = vpop.f32.mrf.mxu0
        %v3467 = vpop.f32.mrf.mxu0
        %v3468 = vpop.f32.mrf.mxu0
        %3469 = vdwg.mxu0
        %v3471 = vsel %vm2586, %v2778, 0
        %v3474 = vsel %vm2782, %v1832, 0
        %3476 = vmatprep.subr.bf16.mxu0 0
        %3477 = vmatpush1.bf16.msra.mxu0 0
        %3478 = vmatprep.subr.bf16.mxu0 0
        %3479 = vmatpush1.bf16.msra.mxu0 0
        %3480 = vmatprep.subr.bf16.mxu0 0
        %3481 = vmatpush1.bf16.msra.mxu0 0
        %3482 = vmatprep.subr.bf16.mxu0 0
        %3483 = vmatpush1.bf16.msra.mxu0 0
        %3484 = vmatprep.subr.bf16.mxu0 0
        %3485 = vmatpush1.bf16.msra.mxu0 0
        %3486 = vmatprep.subr.bf16.mxu0 0
        %3487 = vmatpush1.bf16.msra.mxu0 0
        %3488 = vmatprep.subr.bf16.mxu0 0
        %3489 = vmatpush1.bf16.msra.mxu0 0
        %3490 = vmatprep.subr.bf16.mxu0 0
        %3491 = vmatpush1.bf16.msra.mxu0 %v3474
        %3492 = vmatprep.subr.bf16.mxu0 0
        %3493 = vmatpush2.bf16.msra.mxu0 0
        %3494 = vmatprep.subr.bf16.mxu0 0
        %3495 = vmatpush2.bf16.msra.mxu0 0
        %3496 = vmatprep.subr.bf16.mxu0 0
        %3497 = vmatpush2.bf16.msra.mxu0 0
        %3498 = vmatprep.subr.bf16.mxu0 0
        %3499 = vmatpush2.bf16.msra.mxu0 0
        %3500 = vmatprep.subr.bf16.mxu0 0
        %3501 = vmatpush2.bf16.msra.mxu0 0
        %3502 = vmatprep.subr.bf16.mxu0 0
        %3503 = vmatpush2.bf16.msra.mxu0 0
        %3504 = vmatprep.subr.bf16.mxu0 0
        %3505 = vmatpush2.bf16.msra.mxu0 0
        %3506 = vmatprep.subr.bf16.mxu0 0
        %3507 = vmatpush2.bf16.msra.mxu0 0
        %3508 = vmatprep.mubr.bf16.mxu0 0
        %3509 = vmatmul.mubr.bf16.gmra.mxu0 %v3471
        %v3510 = vpop.f32.mrf.mxu0
        %v3511 = vadd.f32 0.0, %v3510
        %v3512 = vpop.f32.mrf.mxu0
        %v3513 = vpop.f32.mrf.mxu0
        %v3514 = vpop.f32.mrf.mxu0
        %3515 = vdwg.mxu0
        %v3516 = vpack.c.bf16 %v2821, %v2821
        %v3517 = vpack.c.bf16 %v2867, %v2867
        %v3518 = vpack.c.bf16 %v2913, %v2913
        %v3519 = vpack.c.bf16 %v2959, %v2959
        %v3520 = vpack.c.bf16 %v3005, %v3005
        %v3521 = vpack.c.bf16 %v3051, %v3051
        %v3522 = vpack.c.bf16 %v3097, %v3097
        %v3523 = vpack.c.bf16 %v3143, %v3143
        %v3524 = vpack.c.bf16 %v3189, %v3189
        %v3525 = vpack.c.bf16 %v3235, %v3235
        %v3526 = vpack.c.bf16 %v3281, %v3281
        %v3527 = vpack.c.bf16 %v3327, %v3327
        %v3528 = vpack.c.bf16 %v3373, %v3373
        %v3529 = vpack.c.bf16 %v3419, %v3419
        %v3530 = vpack.c.bf16 %v3465, %v3465
        %v3531 = vpack.c.bf16 %v3511, %v3511
        %3534 = vrot.lane.b32.xlu0 %v3517, 32
        %v3535 = vpop.permute.xlu0 %3534
        %3536 = vrot.lane.b32.xlu0 %v3525, 32
        %v3537 = vpop.permute.xlu0 %3536
        %3540 = vrot.lane.b32.xlu0 %v3518, 64
        %v3541 = vpop.permute.xlu0 %3540
        %3542 = vrot.lane.b32.xlu0 %v3526, 64
        %v3543 = vpop.permute.xlu0 %3542
        %3546 = vrot.lane.b32.xlu0 %v3519, 96
        %v3547 = vpop.permute.xlu0 %3546
        %3548 = vrot.lane.b32.xlu0 %v3527, 96
        %v3549 = vpop.permute.xlu0 %3548
        %3552 = vrot.lane.b32.xlu0 %v3521, 32
        %v3553 = vpop.permute.xlu0 %3552
        %3554 = vrot.lane.b32.xlu0 %v3529, 32
        %v3555 = vpop.permute.xlu0 %3554
        %3558 = vrot.lane.b32.xlu0 %v3522, 64
        %v3559 = vpop.permute.xlu0 %3558
        %3560 = vrot.lane.b32.xlu0 %v3530, 64
        %v3561 = vpop.permute.xlu0 %3560
        %3564 = vrot.lane.b32.xlu0 %v3523, 96
        %v3565 = vpop.permute.xlu0 %3564
        %3566 = vrot.lane.b32.xlu0 %v3531, 96
        %v3567 = vpop.permute.xlu0 %3566
        %v3570 = vsel %vm1833, %v3516, %v3535
        %v3573 = vsel %vm1833, %v3524, %v3537
        %vm3574 = vcmask 523264
        %v3576 = vsel %vm3574, %v3570, %v3541
        %v3578 = vsel %vm3574, %v3573, %v3543
        %vm3579 = vcmask 785408
        %v3581 = vsel %vm3579, %v3576, %v3547
        %v3583 = vsel %vm3579, %v3578, %v3549
        %v3586 = vsel %vm1833, %v3520, %v3553
        %v3589 = vsel %vm1833, %v3528, %v3555
        %v3591 = vsel %vm3574, %v3586, %v3559
        %v3593 = vsel %vm3574, %v3589, %v3561
        %v3595 = vsel %vm3579, %v3591, %v3565
        %v3597 = vsel %vm3579, %v3593, %v3567
        %v3602 = vunpack.c.l.b16 %v3581
        %v3603 = vunpack.c.l.b16 %v3595
        %v3604 = vunpack.c.l.b16 %v3583
        %v3605 = vunpack.c.l.b16 %v3597
        %v3606 = vld [vmem:[#allocation14] sm:$0xff]
        %v3607 = vld [vmem:[#allocation14 + $0x8] sm:$0xff]
        %v3608 = vld [vmem:[#allocation14 + $0x10] sm:$0xff]
        %v3609 = vld [vmem:[#allocation14 + $0x18] sm:$0xff]
        %v3610 = vld [vmem:[#allocation14 + $0x20] sm:$0xff]
        %v3611 = vld [vmem:[#allocation14 + $0x28] sm:$0xff]
        %v3612 = vld [vmem:[#allocation14 + $0x30] sm:$0xff]
        %v3613 = vld [vmem:[#allocation14 + $0x38] sm:$0xff]
        %v3614 = vld [vmem:[#allocation14 + $0x40] sm:$0xff]
        %v3615 = vld [vmem:[#allocation14 + $0x48] sm:$0xff]
        %v3616 = vld [vmem:[#allocation14 + $0x50] sm:$0xff]
        %v3617 = vld [vmem:[#allocation14 + $0x58] sm:$0xff]
        %v3618 = vld [vmem:[#allocation14 + $0x60] sm:$0xff]
        %v3619 = vld [vmem:[#allocation14 + $0x68] sm:$0xff]
        %v3620 = vld [vmem:[#allocation14 + $0x70] sm:$0xff]
        %v3621 = vld [vmem:[#allocation14 + $0x78] sm:$0xff]
        %v3622 = vld [vmem:[#allocation14 + $0x80] sm:$0xff]
        %v3623 = vld [vmem:[#allocation14 + $0x88] sm:$0xff]
        %v3624 = vld [vmem:[#allocation14 + $0x90] sm:$0xff]
        %v3625 = vld [vmem:[#allocation14 + $0x98] sm:$0xff]
        %v3626 = vld [vmem:[#allocation14 + $0xa0] sm:$0xff]
        %v3627 = vld [vmem:[#allocation14 + $0xa8] sm:$0xff]
        %v3628 = vld [vmem:[#allocation14 + $0xb0] sm:$0xff]
        %v3629 = vld [vmem:[#allocation14 + $0xb8] sm:$0xff]
        %v3630 = vld [vmem:[#allocation14 + $0xc0] sm:$0xff]
        %v3631 = vld [vmem:[#allocation14 + $0xc8] sm:$0xff]
        %v3632 = vld [vmem:[#allocation14 + $0xd0] sm:$0xff]
        %v3633 = vld [vmem:[#allocation14 + $0xd8] sm:$0xff]
        %v3634 = vld [vmem:[#allocation14 + $0xe0] sm:$0xff]
        %v3635 = vld [vmem:[#allocation14 + $0xe8] sm:$0xff]
        %v3636 = vld [vmem:[#allocation14 + $0xf0] sm:$0xff]
        %v3637 = vld [vmem:[#allocation14 + $0xf8] sm:$0xff]
        %v3638 = vld [vmem:[%s8] sm:$0x3]
        %v3640 = vlaneseq
        %v3641 = vshrl.u32 %v3640, 7
        %v3642 = vsub.s32 0, %v3641
        %v3643 = vrot.slane %v3638, %v3642
        %v3644 = vlaneseq
        %v3645 = vshrl.u32 %v3644, 7
        %v3646 = vsub.s32 1, %v3645
        %v3647 = vrot.slane %v3638, %v3646
        %v3650 = vpack.c.b16 %v3604, %v3602
        %v3651 = vpack.c.b16 %v3605, %v3603
        %v3686 = vunpack.c.l.b16 %v3606
        %v3687 = vunpack.c.h.b16 %v3606
        %v3688 = vunpack.c.l.b16 %v3607
        %v3689 = vunpack.c.h.b16 %v3607
        %v3690 = vunpack.c.l.b16 %v3608
        %v3691 = vunpack.c.h.b16 %v3608
        %v3692 = vunpack.c.l.b16 %v3609
        %v3693 = vunpack.c.h.b16 %v3609
        %v3694 = vunpack.c.l.b16 %v3610
        %v3695 = vunpack.c.h.b16 %v3610
        %v3696 = vunpack.c.l.b16 %v3611
        %v3697 = vunpack.c.h.b16 %v3611
        %v3698 = vunpack.c.l.b16 %v3612
        %v3699 = vunpack.c.h.b16 %v3612
        %v3700 = vunpack.c.l.b16 %v3613
        %v3701 = vunpack.c.h.b16 %v3613
        %v3702 = vunpack.c.l.b16 %v3614
        %v3703 = vunpack.c.h.b16 %v3614
        %v3704 = vunpack.c.l.b16 %v3615
        %v3705 = vunpack.c.h.b16 %v3615
        %v3706 = vunpack.c.l.b16 %v3616
        %v3707 = vunpack.c.h.b16 %v3616
        %v3708 = vunpack.c.l.b16 %v3617
        %v3709 = vunpack.c.h.b16 %v3617
        %v3710 = vunpack.c.l.b16 %v3618
        %v3711 = vunpack.c.h.b16 %v3618
        %v3712 = vunpack.c.l.b16 %v3619
        %v3713 = vunpack.c.h.b16 %v3619
        %v3714 = vunpack.c.l.b16 %v3620
        %v3715 = vunpack.c.h.b16 %v3620
        %v3716 = vunpack.c.l.b16 %v3621
        %v3717 = vunpack.c.h.b16 %v3621
        %v3718 = vunpack.c.l.b16 %v3622
        %v3719 = vunpack.c.h.b16 %v3622
        %v3720 = vunpack.c.l.b16 %v3623
        %v3721 = vunpack.c.h.b16 %v3623
        %v3722 = vunpack.c.l.b16 %v3624
        %v3723 = vunpack.c.h.b16 %v3624
        %v3724 = vunpack.c.l.b16 %v3625
        %v3725 = vunpack.c.h.b16 %v3625
        %v3726 = vunpack.c.l.b16 %v3626
        %v3727 = vunpack.c.h.b16 %v3626
        %v3728 = vunpack.c.l.b16 %v3627
        %v3729 = vunpack.c.h.b16 %v3627
        %v3730 = vunpack.c.l.b16 %v3628
        %v3731 = vunpack.c.h.b16 %v3628
        %v3732 = vunpack.c.l.b16 %v3629
        %v3733 = vunpack.c.h.b16 %v3629
        %v3734 = vunpack.c.l.b16 %v3630
        %v3735 = vunpack.c.h.b16 %v3630
        %v3736 = vunpack.c.l.b16 %v3631
        %v3737 = vunpack.c.h.b16 %v3631
        %v3738 = vunpack.c.l.b16 %v3632
        %v3739 = vunpack.c.h.b16 %v3632
        %v3740 = vunpack.c.l.b16 %v3633
        %v3741 = vunpack.c.h.b16 %v3633
        %v3742 = vunpack.c.l.b16 %v3634
        %v3743 = vunpack.c.h.b16 %v3634
        %v3744 = vunpack.c.l.b16 %v3635
        %v3745 = vunpack.c.h.b16 %v3635
        %v3746 = vunpack.c.l.b16 %v3636
        %v3747 = vunpack.c.h.b16 %v3636
        %v3748 = vunpack.c.l.b16 %v3637
        %v3749 = vunpack.c.h.b16 %v3637
        %v3750 = vpack.c.b16 %v3688, %v3686
        %v3751 = vpack.c.b16 %v3689, %v3687
        %v3752 = vpack.c.b16 %v3692, %v3690
        %v3753 = vpack.c.b16 %v3693, %v3691
        %v3754 = vpack.c.b16 %v3696, %v3694
        %v3755 = vpack.c.b16 %v3697, %v3695
        %v3756 = vpack.c.b16 %v3700, %v3698
        %v3757 = vpack.c.b16 %v3701, %v3699
        %v3758 = vpack.c.b16 %v3704, %v3702
        %v3759 = vpack.c.b16 %v3705, %v3703
        %v3760 = vpack.c.b16 %v3708, %v3706
        %v3761 = vpack.c.b16 %v3709, %v3707
        %v3762 = vpack.c.b16 %v3712, %v3710
        %v3763 = vpack.c.b16 %v3713, %v3711
        %v3764 = vpack.c.b16 %v3716, %v3714
        %v3765 = vpack.c.b16 %v3717, %v3715
        %v3766 = vpack.c.b16 %v3720, %v3718
        %v3767 = vpack.c.b16 %v3721, %v3719
        %v3768 = vpack.c.b16 %v3724, %v3722
        %v3769 = vpack.c.b16 %v3725, %v3723
        %v3770 = vpack.c.b16 %v3728, %v3726
        %v3771 = vpack.c.b16 %v3729, %v3727
        %v3772 = vpack.c.b16 %v3732, %v3730
        %v3773 = vpack.c.b16 %v3733, %v3731
        %v3774 = vpack.c.b16 %v3736, %v3734
        %v3775 = vpack.c.b16 %v3737, %v3735
        %v3776 = vpack.c.b16 %v3740, %v3738
        %v3777 = vpack.c.b16 %v3741, %v3739
        %v3778 = vpack.c.b16 %v3744, %v3742
        %v3779 = vpack.c.b16 %v3745, %v3743
        %v3780 = vpack.c.b16 %v3748, %v3746
        %v3781 = vpack.c.b16 %v3749, %v3747
        %3814 = vmatprep.subr.bf16.mxu0 %v3765
        %3815 = vmatpush1.bf16.msra.mxu0 %v3764
        %3816 = vmatprep.subr.bf16.mxu0 %v3763
        %3817 = vmatpush1.bf16.msra.mxu0 %v3762
        %3818 = vmatprep.subr.bf16.mxu0 %v3761
        %3819 = vmatpush1.bf16.msra.mxu0 %v3760
        %3820 = vmatprep.subr.bf16.mxu0 %v3759
        %3821 = vmatpush1.bf16.msra.mxu0 %v3758
        %3822 = vmatprep.subr.bf16.mxu0 %v3757
        %3823 = vmatpush1.bf16.msra.mxu0 %v3756
        %3824 = vmatprep.subr.bf16.mxu0 %v3755
        %3825 = vmatpush1.bf16.msra.mxu0 %v3754
        %3826 = vmatprep.subr.bf16.mxu0 %v3753
        %3827 = vmatpush1.bf16.msra.mxu0 %v3752
        %3828 = vmatprep.subr.bf16.mxu0 %v3751
        %3829 = vmatpush1.bf16.msra.mxu0 %v3750
        %3830 = vmatprep.subr.bf16.mxu0 %v3781
        %3831 = vmatpush2.bf16.msra.mxu0 %v3780
        %3832 = vmatprep.subr.bf16.mxu0 %v3779
        %3833 = vmatpush2.bf16.msra.mxu0 %v3778
        %3834 = vmatprep.subr.bf16.mxu0 %v3777
        %3835 = vmatpush2.bf16.msra.mxu0 %v3776
        %3836 = vmatprep.subr.bf16.mxu0 %v3775
        %3837 = vmatpush2.bf16.msra.mxu0 %v3774
        %3838 = vmatprep.subr.bf16.mxu0 %v3773
        %3839 = vmatpush2.bf16.msra.mxu0 %v3772
        %3840 = vmatprep.subr.bf16.mxu0 %v3771
        %3841 = vmatpush2.bf16.msra.mxu0 %v3770
        %3842 = vmatprep.subr.bf16.mxu0 %v3769
        %3843 = vmatpush2.bf16.msra.mxu0 %v3768
        %3844 = vmatprep.subr.bf16.mxu0 %v3767
        %3845 = vmatpush2.bf16.msra.mxu0 %v3766
        %3846 = vmatprep.mubr.bf16.mxu0 %v3651
        %3847 = vmatmul.mubr.bf16.gmra.mxu0 %v3650
        %v3848 = vpop.f32.mrf.mxu0
        %v3849 = vadd.f32 %v3643, %v3848
        %v3850 = vpop.f32.mrf.mxu0
        %v3851 = vadd.f32 %v3647, %v3850
        %v3852 = vpop.f32.mrf.mxu0
        %v3853 = vadd.f32 %v3643, %v3852
        %v3854 = vpop.f32.mrf.mxu0
        %v3855 = vadd.f32 %v3647, %v3854
        %3856 = vdwg.mxu0
        %v3857 = vadd.f32 %v1026, %v3849
        %v3858 = vadd.f32 %v1027, %v3851
        %v3859 = vadd.f32 %v1028, %v3853
        %v3860 = vadd.f32 %v1029, %v3855
        %v3861 = vadd.f32 %v3857, %v3858
        %3862 = vadd.xlane.f32.xlu0 %v3861
        %v3863 = vpop.xlane.xlu0 %3862
        %v3864 = vadd.f32 %v3859, %v3860
        %3865 = vadd.xlane.f32.xlu0 %v3864
        %v3866 = vpop.xlane.xlu0 %3865
        %v3867 = vrcp.pop 256.0
        %v3868 = vmul.f32 %v3863, %v3867
        %v3869 = vmul.f32 %v3866, %v3867
        %v3870 = vsub.f32 %v3857, %v3868
        %v3871 = vsub.f32 %v3858, %v3868
        %v3872 = vsub.f32 %v3859, %v3869
        %v3873 = vsub.f32 %v3860, %v3869
        %v3874 = vmul.f32 %v3870, %v3870
        %v3875 = vmul.f32 %v3871, %v3871
        %v3876 = vmul.f32 %v3872, %v3872
        %v3877 = vmul.f32 %v3873, %v3873
        %v3878 = vadd.f32 %v3874, %v3875
        %3879 = vadd.xlane.f32.xlu0 %v3878
        %v3880 = vpop.xlane.xlu0 %3879
        %v3881 = vadd.f32 %v3876, %v3877
        %3882 = vadd.xlane.f32.xlu0 %v3881
        %v3883 = vpop.xlane.xlu0 %3882
        %v3884 = vmul.f32 %v3880, %v3867
        %v3885 = vmul.f32 %v3883, %v3867
        %v3886 = vadd.f32 %v3884, 1e-05
        %v3887 = vadd.f32 %v3885, 1e-05
        %v3888 = vrsqrt.pop %v3886
        %v3889 = vrsqrt.pop %v3887
        %v3890 = vmul.f32 %v3870, %v3888
        %v3891 = vmul.f32 %v3871, %v3888
        %v3892 = vmul.f32 %v3872, %v3889
        %v3893 = vmul.f32 %v3873, %v3889
        %v3894 = vld [vmem:[%s9] sm:$0x3]
        %v3896 = vlaneseq
        %v3897 = vshrl.u32 %v3896, 7
        %v3898 = vsub.s32 0, %v3897
        %v3899 = vrot.slane %v3894, %v3898
        %v3900 = vlaneseq
        %v3901 = vshrl.u32 %v3900, 7
        %v3902 = vsub.s32 1, %v3901
        %v3903 = vrot.slane %v3894, %v3902
        %v3906 = vmul.f32 %v3890, %v3899
        %v3907 = vmul.f32 %v3891, %v3903
        %v3908 = vmul.f32 %v3892, %v3899
        %v3909 = vmul.f32 %v3893, %v3903
        %v3910 = vld [vmem:[%s10] sm:$0x3]
        %v3912 = vlaneseq
        %v3913 = vshrl.u32 %v3912, 7
        %v3914 = vsub.s32 0, %v3913
        %v3915 = vrot.slane %v3910, %v3914
        %v3916 = vlaneseq
        %v3917 = vshrl.u32 %v3916, 7
        %v3918 = vsub.s32 1, %v3917
        %v3919 = vrot.slane %v3910, %v3918
        %v3922 = vadd.f32 %v3906, %v3915
        %v3923 = vadd.f32 %v3907, %v3919
        %v3924 = vadd.f32 %v3908, %v3915
        %v3925 = vadd.f32 %v3909, %v3919
        %v3926 = vpack.c.bf16 %v3924, %v3922
        %v3927 = vpack.c.bf16 %v3925, %v3923
        %v3928 = vld [vmem:[#allocation16] sm:$0xff]
        %v3929 = vld [vmem:[#allocation16 + $0x8] sm:$0xff]
        %v3930 = vld [vmem:[#allocation16 + $0x10] sm:$0xff]
        %v3931 = vld [vmem:[#allocation16 + $0x18] sm:$0xff]
        %v3932 = vld [vmem:[#allocation16 + $0x20] sm:$0xff]
        %v3933 = vld [vmem:[#allocation16 + $0x28] sm:$0xff]
        %v3934 = vld [vmem:[#allocation16 + $0x30] sm:$0xff]
        %v3935 = vld [vmem:[#allocation16 + $0x38] sm:$0xff]
        %v3936 = vld [vmem:[#allocation16 + $0x40] sm:$0xff]
        %v3937 = vld [vmem:[#allocation16 + $0x48] sm:$0xff]
        %v3938 = vld [vmem:[#allocation16 + $0x50] sm:$0xff]
        %v3939 = vld [vmem:[#allocation16 + $0x58] sm:$0xff]
        %v3940 = vld [vmem:[#allocation16 + $0x60] sm:$0xff]
        %v3941 = vld [vmem:[#allocation16 + $0x68] sm:$0xff]
        %v3942 = vld [vmem:[#allocation16 + $0x70] sm:$0xff]
        %v3943 = vld [vmem:[#allocation16 + $0x78] sm:$0xff]
        %v3944 = vld [vmem:[#allocation16 + $0x80] sm:$0xff]
        %v3945 = vld [vmem:[#allocation16 + $0x88] sm:$0xff]
        %v3946 = vld [vmem:[#allocation16 + $0x90] sm:$0xff]
        %v3947 = vld [vmem:[#allocation16 + $0x98] sm:$0xff]
        %v3948 = vld [vmem:[#allocation16 + $0xa0] sm:$0xff]
        %v3949 = vld [vmem:[#allocation16 + $0xa8] sm:$0xff]
        %v3950 = vld [vmem:[#allocation16 + $0xb0] sm:$0xff]
        %v3951 = vld [vmem:[#allocation16 + $0xb8] sm:$0xff]
        %v3952 = vld [vmem:[#allocation16 + $0xc0] sm:$0xff]
        %v3953 = vld [vmem:[#allocation16 + $0xc8] sm:$0xff]
        %v3954 = vld [vmem:[#allocation16 + $0xd0] sm:$0xff]
        %v3955 = vld [vmem:[#allocation16 + $0xd8] sm:$0xff]
        %v3956 = vld [vmem:[#allocation16 + $0xe0] sm:$0xff]
        %v3957 = vld [vmem:[#allocation16 + $0xe8] sm:$0xff]
        %v3958 = vld [vmem:[#allocation16 + $0xf0] sm:$0xff]
        %v3959 = vld [vmem:[#allocation16 + $0xf8] sm:$0xff]
        %v3992 = vunpack.c.l.b16 %v3928
        %v3993 = vunpack.c.h.b16 %v3928
        %v3994 = vunpack.c.l.b16 %v3929
        %v3995 = vunpack.c.h.b16 %v3929
        %v3996 = vunpack.c.l.b16 %v3930
        %v3997 = vunpack.c.h.b16 %v3930
        %v3998 = vunpack.c.l.b16 %v3931
        %v3999 = vunpack.c.h.b16 %v3931
        %v4000 = vunpack.c.l.b16 %v3932
        %v4001 = vunpack.c.h.b16 %v3932
        %v4002 = vunpack.c.l.b16 %v3933
        %v4003 = vunpack.c.h.b16 %v3933
        %v4004 = vunpack.c.l.b16 %v3934
        %v4005 = vunpack.c.h.b16 %v3934
        %v4006 = vunpack.c.l.b16 %v3935
        %v4007 = vunpack.c.h.b16 %v3935
        %v4008 = vunpack.c.l.b16 %v3936
        %v4009 = vunpack.c.h.b16 %v3936
        %v4010 = vunpack.c.l.b16 %v3937
        %v4011 = vunpack.c.h.b16 %v3937
        %v4012 = vunpack.c.l.b16 %v3938
        %v4013 = vunpack.c.h.b16 %v3938
        %v4014 = vunpack.c.l.b16 %v3939
        %v4015 = vunpack.c.h.b16 %v3939
        %v4016 = vunpack.c.l.b16 %v3940
        %v4017 = vunpack.c.h.b16 %v3940
        %v4018 = vunpack.c.l.b16 %v3941
        %v4019 = vunpack.c.h.b16 %v3941
        %v4020 = vunpack.c.l.b16 %v3942
        %v4021 = vunpack.c.h.b16 %v3942
        %v4022 = vunpack.c.l.b16 %v3943
        %v4023 = vunpack.c.h.b16 %v3943
        %v4024 = vunpack.c.l.b16 %v3944
        %v4025 = vunpack.c.h.b16 %v3944
        %v4026 = vunpack.c.l.b16 %v3945
        %v4027 = vunpack.c.h.b16 %v3945
        %v4028 = vunpack.c.l.b16 %v3946
        %v4029 = vunpack.c.h.b16 %v3946
        %v4030 = vunpack.c.l.b16 %v3947
        %v4031 = vunpack.c.h.b16 %v3947
        %v4032 = vunpack.c.l.b16 %v3948
        %v4033 = vunpack.c.h.b16 %v3948
        %v4034 = vunpack.c.l.b16 %v3949
        %v4035 = vunpack.c.h.b16 %v3949
        %v4036 = vunpack.c.l.b16 %v3950
        %v4037 = vunpack.c.h.b16 %v3950
        %v4038 = vunpack.c.l.b16 %v3951
        %v4039 = vunpack.c.h.b16 %v3951
        %v4040 = vunpack.c.l.b16 %v3952
        %v4041 = vunpack.c.h.b16 %v3952
        %v4042 = vunpack.c.l.b16 %v3953
        %v4043 = vunpack.c.h.b16 %v3953
        %v4044 = vunpack.c.l.b16 %v3954
        %v4045 = vunpack.c.h.b16 %v3954
        %v4046 = vunpack.c.l.b16 %v3955
        %v4047 = vunpack.c.h.b16 %v3955
        %v4048 = vunpack.c.l.b16 %v3956
        %v4049 = vunpack.c.h.b16 %v3956
        %v4050 = vunpack.c.l.b16 %v3957
        %v4051 = vunpack.c.h.b16 %v3957
        %v4052 = vunpack.c.l.b16 %v3958
        %v4053 = vunpack.c.h.b16 %v3958
        %v4054 = vunpack.c.l.b16 %v3959
        %v4055 = vunpack.c.h.b16 %v3959
        %v4056 = vpack.c.b16 %v3994, %v3992
        %v4057 = vpack.c.b16 %v3995, %v3993
        %v4058 = vpack.c.b16 %v3998, %v3996
        %v4059 = vpack.c.b16 %v3999, %v3997
        %v4060 = vpack.c.b16 %v4002, %v4000
        %v4061 = vpack.c.b16 %v4003, %v4001
        %v4062 = vpack.c.b16 %v4006, %v4004
        %v4063 = vpack.c.b16 %v4007, %v4005
        %v4064 = vpack.c.b16 %v4010, %v4008
        %v4065 = vpack.c.b16 %v4011, %v4009
        %v4066 = vpack.c.b16 %v4014, %v4012
        %v4067 = vpack.c.b16 %v4015, %v4013
        %v4068 = vpack.c.b16 %v4018, %v4016
        %v4069 = vpack.c.b16 %v4019, %v4017
        %v4070 = vpack.c.b16 %v4022, %v4020
        %v4071 = vpack.c.b16 %v4023, %v4021
        %v4072 = vpack.c.b16 %v4026, %v4024
        %v4073 = vpack.c.b16 %v4027, %v4025
        %v4074 = vpack.c.b16 %v4030, %v4028
        %v4075 = vpack.c.b16 %v4031, %v4029
        %v4076 = vpack.c.b16 %v4034, %v4032
        %v4077 = vpack.c.b16 %v4035, %v4033
        %v4078 = vpack.c.b16 %v4038, %v4036
        %v4079 = vpack.c.b16 %v4039, %v4037
        %v4080 = vpack.c.b16 %v4042, %v4040
        %v4081 = vpack.c.b16 %v4043, %v4041
        %v4082 = vpack.c.b16 %v4046, %v4044
        %v4083 = vpack.c.b16 %v4047, %v4045
        %v4084 = vpack.c.b16 %v4050, %v4048
        %v4085 = vpack.c.b16 %v4051, %v4049
        %v4086 = vpack.c.b16 %v4054, %v4052
        %v4087 = vpack.c.b16 %v4055, %v4053
        %4120 = vmatprep.subr.bf16.mxu0 %v4071
        %4121 = vmatpush1.bf16.msra.mxu0 %v4070
        %4122 = vmatprep.subr.bf16.mxu0 %v4069
        %4123 = vmatpush1.bf16.msra.mxu0 %v4068
        %4124 = vmatprep.subr.bf16.mxu0 %v4067
        %4125 = vmatpush1.bf16.msra.mxu0 %v4066
        %4126 = vmatprep.subr.bf16.mxu0 %v4065
        %4127 = vmatpush1.bf16.msra.mxu0 %v4064
        %4128 = vmatprep.subr.bf16.mxu0 %v4063
        %4129 = vmatpush1.bf16.msra.mxu0 %v4062
        %4130 = vmatprep.subr.bf16.mxu0 %v4061
        %4131 = vmatpush1.bf16.msra.mxu0 %v4060
        %4132 = vmatprep.subr.bf16.mxu0 %v4059
        %4133 = vmatpush1.bf16.msra.mxu0 %v4058
        %4134 = vmatprep.subr.bf16.mxu0 %v4057
        %4135 = vmatpush1.bf16.msra.mxu0 %v4056
        %4136 = vmatprep.subr.bf16.mxu0 %v4087
        %4137 = vmatpush2.bf16.msra.mxu0 %v4086
        %4138 = vmatprep.subr.bf16.mxu0 %v4085
        %4139 = vmatpush2.bf16.msra.mxu0 %v4084
        %4140 = vmatprep.subr.bf16.mxu0 %v4083
        %4141 = vmatpush2.bf16.msra.mxu0 %v4082
        %4142 = vmatprep.subr.bf16.mxu0 %v4081
        %4143 = vmatpush2.bf16.msra.mxu0 %v4080
        %4144 = vmatprep.subr.bf16.mxu0 %v4079
        %4145 = vmatpush2.bf16.msra.mxu0 %v4078
        %4146 = vmatprep.subr.bf16.mxu0 %v4077
        %4147 = vmatpush2.bf16.msra.mxu0 %v4076
        %4148 = vmatprep.subr.bf16.mxu0 %v4075
        %4149 = vmatpush2.bf16.msra.mxu0 %v4074
        %4150 = vmatprep.subr.bf16.mxu0 %v4073
        %4151 = vmatpush2.bf16.msra.mxu0 %v4072
        %4152 = vmatprep.mubr.bf16.mxu0 %v3927
        %4153 = vmatmul.mubr.bf16.gmra.mxu0 %v3926
        %v4154 = vpop.f32.mrf.mxu0
        %v4155 = vadd.f32 0.0, %v4154
        %v4156 = vpop.f32.mrf.mxu0
        %v4157 = vadd.f32 0.0, %v4156
        %v4158 = vpop.f32.mrf.mxu0
        %v4159 = vadd.f32 0.0, %v4158
        %v4160 = vpop.f32.mrf.mxu0
        %v4161 = vadd.f32 0.0, %v4160
        %4162 = vdwg.mxu0
        %v4163 = vld [vmem:[#allocation17] sm:$0xff]
        %v4164 = vld [vmem:[#allocation17 + $0x8] sm:$0xff]
        %v4165 = vld [vmem:[#allocation17 + $0x10] sm:$0xff]
        %v4166 = vld [vmem:[#allocation17 + $0x18] sm:$0xff]
        %v4167 = vld [vmem:[#allocation17 + $0x20] sm:$0xff]
        %v4168 = vld [vmem:[#allocation17 + $0x28] sm:$0xff]
        %v4169 = vld [vmem:[#allocation17 + $0x30] sm:$0xff]
        %v4170 = vld [vmem:[#allocation17 + $0x38] sm:$0xff]
        %v4171 = vld [vmem:[#allocation17 + $0x40] sm:$0xff]
        %v4172 = vld [vmem:[#allocation17 + $0x48] sm:$0xff]
        %v4173 = vld [vmem:[#allocation17 + $0x50] sm:$0xff]
        %v4174 = vld [vmem:[#allocation17 + $0x58] sm:$0xff]
        %v4175 = vld [vmem:[#allocation17 + $0x60] sm:$0xff]
        %v4176 = vld [vmem:[#allocation17 + $0x68] sm:$0xff]
        %v4177 = vld [vmem:[#allocation17 + $0x70] sm:$0xff]
        %v4178 = vld [vmem:[#allocation17 + $0x78] sm:$0xff]
        %v4179 = vld [vmem:[#allocation17 + $0x80] sm:$0xff]
        %v4180 = vld [vmem:[#allocation17 + $0x88] sm:$0xff]
        %v4181 = vld [vmem:[#allocation17 + $0x90] sm:$0xff]
        %v4182 = vld [vmem:[#allocation17 + $0x98] sm:$0xff]
        %v4183 = vld [vmem:[#allocation17 + $0xa0] sm:$0xff]
        %v4184 = vld [vmem:[#allocation17 + $0xa8] sm:$0xff]
        %v4185 = vld [vmem:[#allocation17 + $0xb0] sm:$0xff]
        %v4186 = vld [vmem:[#allocation17 + $0xb8] sm:$0xff]
        %v4187 = vld [vmem:[#allocation17 + $0xc0] sm:$0xff]
        %v4188 = vld [vmem:[#allocation17 + $0xc8] sm:$0xff]
        %v4189 = vld [vmem:[#allocation17 + $0xd0] sm:$0xff]
        %v4190 = vld [vmem:[#allocation17 + $0xd8] sm:$0xff]
        %v4191 = vld [vmem:[#allocation17 + $0xe0] sm:$0xff]
        %v4192 = vld [vmem:[#allocation17 + $0xe8] sm:$0xff]
        %v4193 = vld [vmem:[#allocation17 + $0xf0] sm:$0xff]
        %v4194 = vld [vmem:[#allocation17 + $0xf8] sm:$0xff]
        %v4197 = vunpack.c.l.b16 %v1032
        %v4198 = vunpack.c.h.b16 %v1032
        %v4199 = vunpack.c.l.b16 %v1033
        %v4200 = vunpack.c.h.b16 %v1033
        %v4201 = vpack.c.b16 %v4199, %v4197
        %v4202 = vpack.c.b16 %v4200, %v4198
        %v4237 = vunpack.c.l.b16 %v4163
        %v4238 = vunpack.c.h.b16 %v4163
        %v4239 = vunpack.c.l.b16 %v4164
        %v4240 = vunpack.c.h.b16 %v4164
        %v4241 = vunpack.c.l.b16 %v4165
        %v4242 = vunpack.c.h.b16 %v4165
        %v4243 = vunpack.c.l.b16 %v4166
        %v4244 = vunpack.c.h.b16 %v4166
        %v4245 = vunpack.c.l.b16 %v4167
        %v4246 = vunpack.c.h.b16 %v4167
        %v4247 = vunpack.c.l.b16 %v4168
        %v4248 = vunpack.c.h.b16 %v4168
        %v4249 = vunpack.c.l.b16 %v4169
        %v4250 = vunpack.c.h.b16 %v4169
        %v4251 = vunpack.c.l.b16 %v4170
        %v4252 = vunpack.c.h.b16 %v4170
        %v4253 = vunpack.c.l.b16 %v4171
        %v4254 = vunpack.c.h.b16 %v4171
        %v4255 = vunpack.c.l.b16 %v4172
        %v4256 = vunpack.c.h.b16 %v4172
        %v4257 = vunpack.c.l.b16 %v4173
        %v4258 = vunpack.c.h.b16 %v4173
        %v4259 = vunpack.c.l.b16 %v4174
        %v4260 = vunpack.c.h.b16 %v4174
        %v4261 = vunpack.c.l.b16 %v4175
        %v4262 = vunpack.c.h.b16 %v4175
        %v4263 = vunpack.c.l.b16 %v4176
        %v4264 = vunpack.c.h.b16 %v4176
        %v4265 = vunpack.c.l.b16 %v4177
        %v4266 = vunpack.c.h.b16 %v4177
        %v4267 = vunpack.c.l.b16 %v4178
        %v4268 = vunpack.c.h.b16 %v4178
        %v4269 = vunpack.c.l.b16 %v4179
        %v4270 = vunpack.c.h.b16 %v4179
        %v4271 = vunpack.c.l.b16 %v4180
        %v4272 = vunpack.c.h.b16 %v4180
        %v4273 = vunpack.c.l.b16 %v4181
        %v4274 = vunpack.c.h.b16 %v4181
        %v4275 = vunpack.c.l.b16 %v4182
        %v4276 = vunpack.c.h.b16 %v4182
        %v4277 = vunpack.c.l.b16 %v4183
        %v4278 = vunpack.c.h.b16 %v4183
        %v4279 = vunpack.c.l.b16 %v4184
        %v4280 = vunpack.c.h.b16 %v4184
        %v4281 = vunpack.c.l.b16 %v4185
        %v4282 = vunpack.c.h.b16 %v4185
        %v4283 = vunpack.c.l.b16 %v4186
        %v4284 = vunpack.c.h.b16 %v4186
        %v4285 = vunpack.c.l.b16 %v4187
        %v4286 = vunpack.c.h.b16 %v4187
        %v4287 = vunpack.c.l.b16 %v4188
        %v4288 = vunpack.c.h.b16 %v4188
        %v4289 = vunpack.c.l.b16 %v4189
        %v4290 = vunpack.c.h.b16 %v4189
        %v4291 = vunpack.c.l.b16 %v4190
        %v4292 = vunpack.c.h.b16 %v4190
        %v4293 = vunpack.c.l.b16 %v4191
        %v4294 = vunpack.c.h.b16 %v4191
        %v4295 = vunpack.c.l.b16 %v4192
        %v4296 = vunpack.c.h.b16 %v4192
        %v4297 = vunpack.c.l.b16 %v4193
        %v4298 = vunpack.c.h.b16 %v4193
        %v4299 = vunpack.c.l.b16 %v4194
        %v4300 = vunpack.c.h.b16 %v4194
        %v4301 = vpack.c.b16 %v4239, %v4237
        %v4302 = vpack.c.b16 %v4240, %v4238
        %v4303 = vpack.c.b16 %v4243, %v4241
        %v4304 = vpack.c.b16 %v4244, %v4242
        %v4305 = vpack.c.b16 %v4247, %v4245
        %v4306 = vpack.c.b16 %v4248, %v4246
        %v4307 = vpack.c.b16 %v4251, %v4249
        %v4308 = vpack.c.b16 %v4252, %v4250
        %v4309 = vpack.c.b16 %v4255, %v4253
        %v4310 = vpack.c.b16 %v4256, %v4254
        %v4311 = vpack.c.b16 %v4259, %v4257
        %v4312 = vpack.c.b16 %v4260, %v4258
        %v4313 = vpack.c.b16 %v4263, %v4261
        %v4314 = vpack.c.b16 %v4264, %v4262
        %v4315 = vpack.c.b16 %v4267, %v4265
        %v4316 = vpack.c.b16 %v4268, %v4266
        %v4317 = vpack.c.b16 %v4271, %v4269
        %v4318 = vpack.c.b16 %v4272, %v4270
        %v4319 = vpack.c.b16 %v4275, %v4273
        %v4320 = vpack.c.b16 %v4276, %v4274
        %v4321 = vpack.c.b16 %v4279, %v4277
        %v4322 = vpack.c.b16 %v4280, %v4278
        %v4323 = vpack.c.b16 %v4283, %v4281
        %v4324 = vpack.c.b16 %v4284, %v4282
        %v4325 = vpack.c.b16 %v4287, %v4285
        %v4326 = vpack.c.b16 %v4288, %v4286
        %v4327 = vpack.c.b16 %v4291, %v4289
        %v4328 = vpack.c.b16 %v4292, %v4290
        %v4329 = vpack.c.b16 %v4295, %v4293
        %v4330 = vpack.c.b16 %v4296, %v4294
        %v4331 = vpack.c.b16 %v4299, %v4297
        %v4332 = vpack.c.b16 %v4300, %v4298
        %4365 = vmatprep.subr.bf16.mxu0 %v4316
        %4366 = vmatpush1.bf16.msra.mxu0 %v4315
        %4367 = vmatprep.subr.bf16.mxu0 %v4314
        %4368 = vmatpush1.bf16.msra.mxu0 %v4313
        %4369 = vmatprep.subr.bf16.mxu0 %v4312
        %4370 = vmatpush1.bf16.msra.mxu0 %v4311
        %4371 = vmatprep.subr.bf16.mxu0 %v4310
        %4372 = vmatpush1.bf16.msra.mxu0 %v4309
        %4373 = vmatprep.subr.bf16.mxu0 %v4308
        %4374 = vmatpush1.bf16.msra.mxu0 %v4307
        %4375 = vmatprep.subr.bf16.mxu0 %v4306
        %4376 = vmatpush1.bf16.msra.mxu0 %v4305
        %4377 = vmatprep.subr.bf16.mxu0 %v4304
        %4378 = vmatpush1.bf16.msra.mxu0 %v4303
        %4379 = vmatprep.subr.bf16.mxu0 %v4302
        %4380 = vmatpush1.bf16.msra.mxu0 %v4301
        %4381 = vmatprep.subr.bf16.mxu0 %v4332
        %4382 = vmatpush2.bf16.msra.mxu0 %v4331
        %4383 = vmatprep.subr.bf16.mxu0 %v4330
        %4384 = vmatpush2.bf16.msra.mxu0 %v4329
        %4385 = vmatprep.subr.bf16.mxu0 %v4328
        %4386 = vmatpush2.bf16.msra.mxu0 %v4327
        %4387 = vmatprep.subr.bf16.mxu0 %v4326
        %4388 = vmatpush2.bf16.msra.mxu0 %v4325
        %4389 = vmatprep.subr.bf16.mxu0 %v4324
        %4390 = vmatpush2.bf16.msra.mxu0 %v4323
        %4391 = vmatprep.subr.bf16.mxu0 %v4322
        %4392 = vmatpush2.bf16.msra.mxu0 %v4321
        %4393 = vmatprep.subr.bf16.mxu0 %v4320
        %4394 = vmatpush2.bf16.msra.mxu0 %v4319
        %4395 = vmatprep.subr.bf16.mxu0 %v4318
        %4396 = vmatpush2.bf16.msra.mxu0 %v4317
        %4397 = vmatprep.mubr.bf16.mxu0 %v4202
        %4398 = vmatmul.mubr.bf16.gmra.mxu0 %v4201
        %v4399 = vpop.f32.mrf.mxu0
        %v4400 = vadd.f32 0.0, %v4399
        %v4401 = vpop.f32.mrf.mxu0
        %v4402 = vadd.f32 0.0, %v4401
        %v4403 = vpop.f32.mrf.mxu0
        %v4404 = vadd.f32 0.0, %v4403
        %v4405 = vpop.f32.mrf.mxu0
        %v4406 = vadd.f32 0.0, %v4405
        %4407 = vdwg.mxu0
        %v4408 = vld [vmem:[#allocation19] sm:$0xff]
        %v4409 = vld [vmem:[#allocation19 + $0x8] sm:$0xff]
        %v4410 = vld [vmem:[#allocation19 + $0x10] sm:$0xff]
        %v4411 = vld [vmem:[#allocation19 + $0x18] sm:$0xff]
        %v4412 = vld [vmem:[#allocation19 + $0x20] sm:$0xff]
        %v4413 = vld [vmem:[#allocation19 + $0x28] sm:$0xff]
        %v4414 = vld [vmem:[#allocation19 + $0x30] sm:$0xff]
        %v4415 = vld [vmem:[#allocation19 + $0x38] sm:$0xff]
        %v4416 = vld [vmem:[#allocation19 + $0x40] sm:$0xff]
        %v4417 = vld [vmem:[#allocation19 + $0x48] sm:$0xff]
        %v4418 = vld [vmem:[#allocation19 + $0x50] sm:$0xff]
        %v4419 = vld [vmem:[#allocation19 + $0x58] sm:$0xff]
        %v4420 = vld [vmem:[#allocation19 + $0x60] sm:$0xff]
        %v4421 = vld [vmem:[#allocation19 + $0x68] sm:$0xff]
        %v4422 = vld [vmem:[#allocation19 + $0x70] sm:$0xff]
        %v4423 = vld [vmem:[#allocation19 + $0x78] sm:$0xff]
        %v4424 = vld [vmem:[#allocation19 + $0x80] sm:$0xff]
        %v4425 = vld [vmem:[#allocation19 + $0x88] sm:$0xff]
        %v4426 = vld [vmem:[#allocation19 + $0x90] sm:$0xff]
        %v4427 = vld [vmem:[#allocation19 + $0x98] sm:$0xff]
        %v4428 = vld [vmem:[#allocation19 + $0xa0] sm:$0xff]
        %v4429 = vld [vmem:[#allocation19 + $0xa8] sm:$0xff]
        %v4430 = vld [vmem:[#allocation19 + $0xb0] sm:$0xff]
        %v4431 = vld [vmem:[#allocation19 + $0xb8] sm:$0xff]
        %v4432 = vld [vmem:[#allocation19 + $0xc0] sm:$0xff]
        %v4433 = vld [vmem:[#allocation19 + $0xc8] sm:$0xff]
        %v4434 = vld [vmem:[#allocation19 + $0xd0] sm:$0xff]
        %v4435 = vld [vmem:[#allocation19 + $0xd8] sm:$0xff]
        %v4436 = vld [vmem:[#allocation19 + $0xe0] sm:$0xff]
        %v4437 = vld [vmem:[#allocation19 + $0xe8] sm:$0xff]
        %v4438 = vld [vmem:[#allocation19 + $0xf0] sm:$0xff]
        %v4439 = vld [vmem:[#allocation19 + $0xf8] sm:$0xff]
        %v4472 = vunpack.c.l.b16 %v4408
        %v4473 = vunpack.c.h.b16 %v4408
        %v4474 = vunpack.c.l.b16 %v4409
        %v4475 = vunpack.c.h.b16 %v4409
        %v4476 = vunpack.c.l.b16 %v4410
        %v4477 = vunpack.c.h.b16 %v4410
        %v4478 = vunpack.c.l.b16 %v4411
        %v4479 = vunpack.c.h.b16 %v4411
        %v4480 = vunpack.c.l.b16 %v4412
        %v4481 = vunpack.c.h.b16 %v4412
        %v4482 = vunpack.c.l.b16 %v4413
        %v4483 = vunpack.c.h.b16 %v4413
        %v4484 = vunpack.c.l.b16 %v4414
        %v4485 = vunpack.c.h.b16 %v4414
        %v4486 = vunpack.c.l.b16 %v4415
        %v4487 = vunpack.c.h.b16 %v4415
        %v4488 = vunpack.c.l.b16 %v4416
        %v4489 = vunpack.c.h.b16 %v4416
        %v4490 = vunpack.c.l.b16 %v4417
        %v4491 = vunpack.c.h.b16 %v4417
        %v4492 = vunpack.c.l.b16 %v4418
        %v4493 = vunpack.c.h.b16 %v4418
        %v4494 = vunpack.c.l.b16 %v4419
        %v4495 = vunpack.c.h.b16 %v4419
        %v4496 = vunpack.c.l.b16 %v4420
        %v4497 = vunpack.c.h.b16 %v4420
        %v4498 = vunpack.c.l.b16 %v4421
        %v4499 = vunpack.c.h.b16 %v4421
        %v4500 = vunpack.c.l.b16 %v4422
        %v4501 = vunpack.c.h.b16 %v4422
        %v4502 = vunpack.c.l.b16 %v4423
        %v4503 = vunpack.c.h.b16 %v4423
        %v4504 = vunpack.c.l.b16 %v4424
        %v4505 = vunpack.c.h.b16 %v4424
        %v4506 = vunpack.c.l.b16 %v4425
        %v4507 = vunpack.c.h.b16 %v4425
        %v4508 = vunpack.c.l.b16 %v4426
        %v4509 = vunpack.c.h.b16 %v4426
        %v4510 = vunpack.c.l.b16 %v4427
        %v4511 = vunpack.c.h.b16 %v4427
        %v4512 = vunpack.c.l.b16 %v4428
        %v4513 = vunpack.c.h.b16 %v4428
        %v4514 = vunpack.c.l.b16 %v4429
        %v4515 = vunpack.c.h.b16 %v4429
        %v4516 = vunpack.c.l.b16 %v4430
        %v4517 = vunpack.c.h.b16 %v4430
        %v4518 = vunpack.c.l.b16 %v4431
        %v4519 = vunpack.c.h.b16 %v4431
        %v4520 = vunpack.c.l.b16 %v4432
        %v4521 = vunpack.c.h.b16 %v4432
        %v4522 = vunpack.c.l.b16 %v4433
        %v4523 = vunpack.c.h.b16 %v4433
        %v4524 = vunpack.c.l.b16 %v4434
        %v4525 = vunpack.c.h.b16 %v4434
        %v4526 = vunpack.c.l.b16 %v4435
        %v4527 = vunpack.c.h.b16 %v4435
        %v4528 = vunpack.c.l.b16 %v4436
        %v4529 = vunpack.c.h.b16 %v4436
        %v4530 = vunpack.c.l.b16 %v4437
        %v4531 = vunpack.c.h.b16 %v4437
        %v4532 = vunpack.c.l.b16 %v4438
        %v4533 = vunpack.c.h.b16 %v4438
        %v4534 = vunpack.c.l.b16 %v4439
        %v4535 = vunpack.c.h.b16 %v4439
        %v4536 = vpack.c.b16 %v4474, %v4472
        %v4537 = vpack.c.b16 %v4475, %v4473
        %v4538 = vpack.c.b16 %v4478, %v4476
        %v4539 = vpack.c.b16 %v4479, %v4477
        %v4540 = vpack.c.b16 %v4482, %v4480
        %v4541 = vpack.c.b16 %v4483, %v4481
        %v4542 = vpack.c.b16 %v4486, %v4484
        %v4543 = vpack.c.b16 %v4487, %v4485
        %v4544 = vpack.c.b16 %v4490, %v4488
        %v4545 = vpack.c.b16 %v4491, %v4489
        %v4546 = vpack.c.b16 %v4494, %v4492
        %v4547 = vpack.c.b16 %v4495, %v4493
        %v4548 = vpack.c.b16 %v4498, %v4496
        %v4549 = vpack.c.b16 %v4499, %v4497
        %v4550 = vpack.c.b16 %v4502, %v4500
        %v4551 = vpack.c.b16 %v4503, %v4501
        %v4552 = vpack.c.b16 %v4506, %v4504
        %v4553 = vpack.c.b16 %v4507, %v4505
        %v4554 = vpack.c.b16 %v4510, %v4508
        %v4555 = vpack.c.b16 %v4511, %v4509
        %v4556 = vpack.c.b16 %v4514, %v4512
        %v4557 = vpack.c.b16 %v4515, %v4513
        %v4558 = vpack.c.b16 %v4518, %v4516
        %v4559 = vpack.c.b16 %v4519, %v4517
        %v4560 = vpack.c.b16 %v4522, %v4520
        %v4561 = vpack.c.b16 %v4523, %v4521
        %v4562 = vpack.c.b16 %v4526, %v4524
        %v4563 = vpack.c.b16 %v4527, %v4525
        %v4564 = vpack.c.b16 %v4530, %v4528
        %v4565 = vpack.c.b16 %v4531, %v4529
        %v4566 = vpack.c.b16 %v4534, %v4532
        %v4567 = vpack.c.b16 %v4535, %v4533
        %4600 = vmatprep.subr.bf16.mxu0 %v4551
        %4601 = vmatpush1.bf16.msra.mxu0 %v4550
        %4602 = vmatprep.subr.bf16.mxu0 %v4549
        %4603 = vmatpush1.bf16.msra.mxu0 %v4548
        %4604 = vmatprep.subr.bf16.mxu0 %v4547
        %4605 = vmatpush1.bf16.msra.mxu0 %v4546
        %4606 = vmatprep.subr.bf16.mxu0 %v4545
        %4607 = vmatpush1.bf16.msra.mxu0 %v4544
        %4608 = vmatprep.subr.bf16.mxu0 %v4543
        %4609 = vmatpush1.bf16.msra.mxu0 %v4542
        %4610 = vmatprep.subr.bf16.mxu0 %v4541
        %4611 = vmatpush1.bf16.msra.mxu0 %v4540
        %4612 = vmatprep.subr.bf16.mxu0 %v4539
        %4613 = vmatpush1.bf16.msra.mxu0 %v4538
        %4614 = vmatprep.subr.bf16.mxu0 %v4537
        %4615 = vmatpush1.bf16.msra.mxu0 %v4536
        %4616 = vmatprep.subr.bf16.mxu0 %v4567
        %4617 = vmatpush2.bf16.msra.mxu0 %v4566
        %4618 = vmatprep.subr.bf16.mxu0 %v4565
        %4619 = vmatpush2.bf16.msra.mxu0 %v4564
        %4620 = vmatprep.subr.bf16.mxu0 %v4563
        %4621 = vmatpush2.bf16.msra.mxu0 %v4562
        %4622 = vmatprep.subr.bf16.mxu0 %v4561
        %4623 = vmatpush2.bf16.msra.mxu0 %v4560
        %4624 = vmatprep.subr.bf16.mxu0 %v4559
        %4625 = vmatpush2.bf16.msra.mxu0 %v4558
        %4626 = vmatprep.subr.bf16.mxu0 %v4557
        %4627 = vmatpush2.bf16.msra.mxu0 %v4556
        %4628 = vmatprep.subr.bf16.mxu0 %v4555
        %4629 = vmatpush2.bf16.msra.mxu0 %v4554
        %4630 = vmatprep.subr.bf16.mxu0 %v4553
        %4631 = vmatpush2.bf16.msra.mxu0 %v4552
        %4632 = vmatprep.mubr.bf16.mxu0 %v4202
        %4633 = vmatmul.mubr.bf16.gmra.mxu0 %v4201
        %v4634 = vpop.f32.mrf.mxu0
        %v4635 = vadd.f32 0.0, %v4634
        %v4636 = vpop.f32.mrf.mxu0
        %v4637 = vadd.f32 0.0, %v4636
        %v4638 = vpop.f32.mrf.mxu0
        %v4639 = vadd.f32 0.0, %v4638
        %v4640 = vpop.f32.mrf.mxu0
        %v4641 = vadd.f32 0.0, %v4640
        %4642 = vdwg.mxu0
        %v4643 = vpack.c.bf16 %v4159, %v4155
        %v4644 = vpack.c.bf16 %v4161, %v4157
        %v4647 = vunpack.c.l.b16 %v4643
        %v4648 = vunpack.c.l.b16 %v4644
        %v4649 = vunpack.c.h.b16 %v4643
        %v4650 = vunpack.c.h.b16 %v4644
        %v4651 = vpack.c.b16 %v4648, %v4647
        %v4652 = vpack.c.b16 %v4650, %v4649
        %v4653 = vrot.slane %v4651, 4
        %v4654 = vrot.slane %v4652, 4
        %4655 = vrot.lane.b32.xlu0 %v4651, 96
        %v4656 = vpop.permute.xlu0 %4655
        %4657 = vrot.lane.b32.xlu0 %v4652, 96
        %v4658 = vpop.permute.xlu0 %4657
        %v4659 = vrot.slane %v4656, 4
        %v4660 = vrot.slane %v4658, 4
        %4661 = vrot.lane.b32.xlu0 %v4651, 64
        %v4662 = vpop.permute.xlu0 %4661
        %4663 = vrot.lane.b32.xlu0 %v4652, 64
        %v4664 = vpop.permute.xlu0 %4663
        %v4665 = vrot.slane %v4662, 4
        %v4666 = vrot.slane %v4664, 4
        %4667 = vrot.lane.b32.xlu0 %v4651, 32
        %v4668 = vpop.permute.xlu0 %4667
        %4669 = vrot.lane.b32.xlu0 %v4652, 32
        %v4670 = vpop.permute.xlu0 %4669
        %v4671 = vrot.slane %v4668, 4
        %v4672 = vrot.slane %v4670, 4
        %v4673 = vpack.c.bf16 %v4404, %v4400
        %v4674 = vpack.c.bf16 %v4406, %v4402
        %v4677 = vunpack.c.l.b16 %v4673
        %v4678 = vunpack.c.l.b16 %v4674
        %v4679 = vunpack.c.h.b16 %v4673
        %v4680 = vunpack.c.h.b16 %v4674
        %v4681 = vpack.c.b16 %v4678, %v4677
        %v4682 = vpack.c.b16 %v4680, %v4679
        %v4683 = vrot.slane %v4681, 4
        %v4684 = vrot.slane %v4682, 4
        %4685 = vrot.lane.b32.xlu0 %v4681, 96
        %v4686 = vpop.permute.xlu0 %4685
        %4687 = vrot.lane.b32.xlu0 %v4682, 96
        %v4688 = vpop.permute.xlu0 %4687
        %v4689 = vrot.slane %v4686, 4
        %v4690 = vrot.slane %v4688, 4
        %4691 = vrot.lane.b32.xlu0 %v4681, 64
        %v4692 = vpop.permute.xlu0 %4691
        %4693 = vrot.lane.b32.xlu0 %v4682, 64
        %v4694 = vpop.permute.xlu0 %4693
        %v4695 = vrot.slane %v4692, 4
        %v4696 = vrot.slane %v4694, 4
        %4697 = vrot.lane.b32.xlu0 %v4681, 32
        %v4698 = vpop.permute.xlu0 %4697
        %4699 = vrot.lane.b32.xlu0 %v4682, 32
        %v4700 = vpop.permute.xlu0 %4699
        %v4701 = vrot.slane %v4698, 4
        %v4702 = vrot.slane %v4700, 4
        %v4703 = vpack.c.bf16 %v4639, %v4635
        %v4704 = vpack.c.bf16 %v4641, %v4637
        %v4707 = vunpack.c.l.b16 %v4703
        %v4708 = vunpack.c.l.b16 %v4704
        %v4709 = vunpack.c.h.b16 %v4703
        %v4710 = vunpack.c.h.b16 %v4704
        %v4711 = vpack.c.b16 %v4708, %v4707
        %v4712 = vpack.c.b16 %v4710, %v4709
        %v4713 = vrot.slane %v4711, 4
        %v4714 = vrot.slane %v4712, 4
        %4715 = vrot.lane.b32.xlu0 %v4711, 96
        %v4716 = vpop.permute.xlu0 %4715
        %4717 = vrot.lane.b32.xlu0 %v4712, 96
        %v4718 = vpop.permute.xlu0 %4717
        %v4719 = vrot.slane %v4716, 4
        %v4720 = vrot.slane %v4718, 4
        %4721 = vrot.lane.b32.xlu0 %v4711, 64
        %v4722 = vpop.permute.xlu0 %4721
        %4723 = vrot.lane.b32.xlu0 %v4712, 64
        %v4724 = vpop.permute.xlu0 %4723
        %v4725 = vrot.slane %v4722, 4
        %v4726 = vrot.slane %v4724, 4
        %4727 = vrot.lane.b32.xlu0 %v4711, 32
        %v4728 = vpop.permute.xlu0 %4727
        %4729 = vrot.lane.b32.xlu0 %v4712, 32
        %v4730 = vpop.permute.xlu0 %4729
        %v4731 = vrot.slane %v4728, 4
        %v4732 = vrot.slane %v4730, 4
        %v4734 = vsel %vm1833, %v4651, 0
        %v4737 = vsel %vm1833, %v4681, 0
        %4739 = vmatprep.subr.bf16.mxu0 0
        %4740 = vmatpush1.bf16.xpose.msra.mxu0 0
        %4741 = vmatprep.subr.bf16.mxu0 0
        %4742 = vmatpush1.bf16.xpose.msra.mxu0 0
        %4743 = vmatprep.subr.bf16.mxu0 0
        %4744 = vmatpush1.bf16.xpose.msra.mxu0 0
        %4745 = vmatprep.subr.bf16.mxu0 0
        %4746 = vmatpush1.bf16.xpose.msra.mxu0 0
        %4747 = vmatprep.subr.bf16.mxu0 0
        %4748 = vmatpush1.bf16.xpose.msra.mxu0 0
        %4749 = vmatprep.subr.bf16.mxu0 0
        %4750 = vmatpush1.bf16.xpose.msra.mxu0 0
        %4751 = vmatprep.subr.bf16.mxu0 0
        %4752 = vmatpush1.bf16.xpose.msra.mxu0 0
        %4753 = vmatprep.subr.bf16.mxu0 0
        %4754 = vmatpush1.bf16.xpose.msra.mxu0 %v4737
        %4755 = vmatprep.subr.bf16.mxu0 0
        %4756 = vmatpush2.bf16.xpose.msra.mxu0 0
        %4757 = vmatprep.subr.bf16.mxu0 0
        %4758 = vmatpush2.bf16.xpose.msra.mxu0 0
        %4759 = vmatprep.subr.bf16.mxu0 0
        %4760 = vmatpush2.bf16.xpose.msra.mxu0 0
        %4761 = vmatprep.subr.bf16.mxu0 0
        %4762 = vmatpush2.bf16.xpose.msra.mxu0 0
        %4763 = vmatprep.subr.bf16.mxu0 0
        %4764 = vmatpush2.bf16.xpose.msra.mxu0 0
        %4765 = vmatprep.subr.bf16.mxu0 0
        %4766 = vmatpush2.bf16.xpose.msra.mxu0 0
        %4767 = vmatprep.subr.bf16.mxu0 0
        %4768 = vmatpush2.bf16.xpose.msra.mxu0 0
        %4769 = vmatprep.subr.bf16.mxu0 0
        %4770 = vmatpush2.bf16.xpose.msra.mxu0 0
        %4771 = vmatprep.mubr.bf16.mxu0 0
        %4772 = vmatmul.mubr.bf16.gmra.mxu0 %v4734
        %v4773 = vpop.f32.mrf.mxu0
        %v4774 = vadd.f32 0.0, %v4773
        %v4775 = vpop.f32.mrf.mxu0
        %v4776 = vpop.f32.mrf.mxu0
        %v4777 = vpop.f32.mrf.mxu0
        %4778 = vdwg.mxu0
        %v4780 = vsel %vm1833, %v4656, 0
        %v4783 = vsel %vm1833, %v4686, 0
        %4785 = vmatprep.subr.bf16.mxu0 0
        %4786 = vmatpush1.bf16.xpose.msra.mxu0 0
        %4787 = vmatprep.subr.bf16.mxu0 0
        %4788 = vmatpush1.bf16.xpose.msra.mxu0 0
        %4789 = vmatprep.subr.bf16.mxu0 0
        %4790 = vmatpush1.bf16.xpose.msra.mxu0 0
        %4791 = vmatprep.subr.bf16.mxu0 0
        %4792 = vmatpush1.bf16.xpose.msra.mxu0 0
        %4793 = vmatprep.subr.bf16.mxu0 0
        %4794 = vmatpush1.bf16.xpose.msra.mxu0 0
        %4795 = vmatprep.subr.bf16.mxu0 0
        %4796 = vmatpush1.bf16.xpose.msra.mxu0 0
        %4797 = vmatprep.subr.bf16.mxu0 0
        %4798 = vmatpush1.bf16.xpose.msra.mxu0 0
        %4799 = vmatprep.subr.bf16.mxu0 0
        %4800 = vmatpush1.bf16.xpose.msra.mxu0 %v4783
        %4801 = vmatprep.subr.bf16.mxu0 0
        %4802 = vmatpush2.bf16.xpose.msra.mxu0 0
        %4803 = vmatprep.subr.bf16.mxu0 0
        %4804 = vmatpush2.bf16.xpose.msra.mxu0 0
        %4805 = vmatprep.subr.bf16.mxu0 0
        %4806 = vmatpush2.bf16.xpose.msra.mxu0 0
        %4807 = vmatprep.subr.bf16.mxu0 0
        %4808 = vmatpush2.bf16.xpose.msra.mxu0 0
        %4809 = vmatprep.subr.bf16.mxu0 0
        %4810 = vmatpush2.bf16.xpose.msra.mxu0 0
        %4811 = vmatprep.subr.bf16.mxu0 0
        %4812 = vmatpush2.bf16.xpose.msra.mxu0 0
        %4813 = vmatprep.subr.bf16.mxu0 0
        %4814 = vmatpush2.bf16.xpose.msra.mxu0 0
        %4815 = vmatprep.subr.bf16.mxu0 0
        %4816 = vmatpush2.bf16.xpose.msra.mxu0 0
        %4817 = vmatprep.mubr.bf16.mxu0 0
        %4818 = vmatmul.mubr.bf16.gmra.mxu0 %v4780
        %v4819 = vpop.f32.mrf.mxu0
        %v4820 = vadd.f32 0.0, %v4819
        %v4821 = vpop.f32.mrf.mxu0
        %v4822 = vpop.f32.mrf.mxu0
        %v4823 = vpop.f32.mrf.mxu0
        %4824 = vdwg.mxu0
        %v4826 = vsel %vm1833, %v4662, 0
        %v4829 = vsel %vm1833, %v4692, 0
        %4831 = vmatprep.subr.bf16.mxu0 0
        %4832 = vmatpush1.bf16.xpose.msra.mxu0 0
        %4833 = vmatprep.subr.bf16.mxu0 0
        %4834 = vmatpush1.bf16.xpose.msra.mxu0 0
        %4835 = vmatprep.subr.bf16.mxu0 0
        %4836 = vmatpush1.bf16.xpose.msra.mxu0 0
        %4837 = vmatprep.subr.bf16.mxu0 0
        %4838 = vmatpush1.bf16.xpose.msra.mxu0 0
        %4839 = vmatprep.subr.bf16.mxu0 0
        %4840 = vmatpush1.bf16.xpose.msra.mxu0 0
        %4841 = vmatprep.subr.bf16.mxu0 0
        %4842 = vmatpush1.bf16.xpose.msra.mxu0 0
        %4843 = vmatprep.subr.bf16.mxu0 0
        %4844 = vmatpush1.bf16.xpose.msra.mxu0 0
        %4845 = vmatprep.subr.bf16.mxu0 0
        %4846 = vmatpush1.bf16.xpose.msra.mxu0 %v4829
        %4847 = vmatprep.subr.bf16.mxu0 0
        %4848 = vmatpush2.bf16.xpose.msra.mxu0 0
        %4849 = vmatprep.subr.bf16.mxu0 0
        %4850 = vmatpush2.bf16.xpose.msra.mxu0 0
        %4851 = vmatprep.subr.bf16.mxu0 0
        %4852 = vmatpush2.bf16.xpose.msra.mxu0 0
        %4853 = vmatprep.subr.bf16.mxu0 0
        %4854 = vmatpush2.bf16.xpose.msra.mxu0 0
        %4855 = vmatprep.subr.bf16.mxu0 0
        %4856 = vmatpush2.bf16.xpose.msra.mxu0 0
        %4857 = vmatprep.subr.bf16.mxu0 0
        %4858 = vmatpush2.bf16.xpose.msra.mxu0 0
        %4859 = vmatprep.subr.bf16.mxu0 0
        %4860 = vmatpush2.bf16.xpose.msra.mxu0 0
        %4861 = vmatprep.subr.bf16.mxu0 0
        %4862 = vmatpush2.bf16.xpose.msra.mxu0 0
        %4863 = vmatprep.mubr.bf16.mxu0 0
        %4864 = vmatmul.mubr.bf16.gmra.mxu0 %v4826
        %v4865 = vpop.f32.mrf.mxu0
        %v4866 = vadd.f32 0.0, %v4865
        %v4867 = vpop.f32.mrf.mxu0
        %v4868 = vpop.f32.mrf.mxu0
        %v4869 = vpop.f32.mrf.mxu0
        %4870 = vdwg.mxu0
        %v4872 = vsel %vm1833, %v4668, 0
        %v4875 = vsel %vm1833, %v4698, 0
        %4877 = vmatprep.subr.bf16.mxu0 0
        %4878 = vmatpush1.bf16.xpose.msra.mxu0 0
        %4879 = vmatprep.subr.bf16.mxu0 0
        %4880 = vmatpush1.bf16.xpose.msra.mxu0 0
        %4881 = vmatprep.subr.bf16.mxu0 0
        %4882 = vmatpush1.bf16.xpose.msra.mxu0 0
        %4883 = vmatprep.subr.bf16.mxu0 0
        %4884 = vmatpush1.bf16.xpose.msra.mxu0 0
        %4885 = vmatprep.subr.bf16.mxu0 0
        %4886 = vmatpush1.bf16.xpose.msra.mxu0 0
        %4887 = vmatprep.subr.bf16.mxu0 0
        %4888 = vmatpush1.bf16.xpose.msra.mxu0 0
        %4889 = vmatprep.subr.bf16.mxu0 0
        %4890 = vmatpush1.bf16.xpose.msra.mxu0 0
        %4891 = vmatprep.subr.bf16.mxu0 0
        %4892 = vmatpush1.bf16.xpose.msra.mxu0 %v4875
        %4893 = vmatprep.subr.bf16.mxu0 0
        %4894 = vmatpush2.bf16.xpose.msra.mxu0 0
        %4895 = vmatprep.subr.bf16.mxu0 0
        %4896 = vmatpush2.bf16.xpose.msra.mxu0 0
        %4897 = vmatprep.subr.bf16.mxu0 0
        %4898 = vmatpush2.bf16.xpose.msra.mxu0 0
        %4899 = vmatprep.subr.bf16.mxu0 0
        %4900 = vmatpush2.bf16.xpose.msra.mxu0 0
        %4901 = vmatprep.subr.bf16.mxu0 0
        %4902 = vmatpush2.bf16.xpose.msra.mxu0 0
        %4903 = vmatprep.subr.bf16.mxu0 0
        %4904 = vmatpush2.bf16.xpose.msra.mxu0 0
        %4905 = vmatprep.subr.bf16.mxu0 0
        %4906 = vmatpush2.bf16.xpose.msra.mxu0 0
        %4907 = vmatprep.subr.bf16.mxu0 0
        %4908 = vmatpush2.bf16.xpose.msra.mxu0 0
        %4909 = vmatprep.mubr.bf16.mxu0 0
        %4910 = vmatmul.mubr.bf16.gmra.mxu0 %v4872
        %v4911 = vpop.f32.mrf.mxu0
        %v4912 = vadd.f32 0.0, %v4911
        %v4913 = vpop.f32.mrf.mxu0
        %v4914 = vpop.f32.mrf.mxu0
        %v4915 = vpop.f32.mrf.mxu0
        %4916 = vdwg.mxu0
        %v4918 = vsel %vm1833, %v4653, 0
        %v4921 = vsel %vm1833, %v4683, 0
        %4923 = vmatprep.subr.bf16.mxu0 0
        %4924 = vmatpush1.bf16.xpose.msra.mxu0 0
        %4925 = vmatprep.subr.bf16.mxu0 0
        %4926 = vmatpush1.bf16.xpose.msra.mxu0 0
        %4927 = vmatprep.subr.bf16.mxu0 0
        %4928 = vmatpush1.bf16.xpose.msra.mxu0 0
        %4929 = vmatprep.subr.bf16.mxu0 0
        %4930 = vmatpush1.bf16.xpose.msra.mxu0 0
        %4931 = vmatprep.subr.bf16.mxu0 0
        %4932 = vmatpush1.bf16.xpose.msra.mxu0 0
        %4933 = vmatprep.subr.bf16.mxu0 0
        %4934 = vmatpush1.bf16.xpose.msra.mxu0 0
        %4935 = vmatprep.subr.bf16.mxu0 0
        %4936 = vmatpush1.bf16.xpose.msra.mxu0 0
        %4937 = vmatprep.subr.bf16.mxu0 0
        %4938 = vmatpush1.bf16.xpose.msra.mxu0 %v4921
        %4939 = vmatprep.subr.bf16.mxu0 0
        %4940 = vmatpush2.bf16.xpose.msra.mxu0 0
        %4941 = vmatprep.subr.bf16.mxu0 0
        %4942 = vmatpush2.bf16.xpose.msra.mxu0 0
        %4943 = vmatprep.subr.bf16.mxu0 0
        %4944 = vmatpush2.bf16.xpose.msra.mxu0 0
        %4945 = vmatprep.subr.bf16.mxu0 0
        %4946 = vmatpush2.bf16.xpose.msra.mxu0 0
        %4947 = vmatprep.subr.bf16.mxu0 0
        %4948 = vmatpush2.bf16.xpose.msra.mxu0 0
        %4949 = vmatprep.subr.bf16.mxu0 0
        %4950 = vmatpush2.bf16.xpose.msra.mxu0 0
        %4951 = vmatprep.subr.bf16.mxu0 0
        %4952 = vmatpush2.bf16.xpose.msra.mxu0 0
        %4953 = vmatprep.subr.bf16.mxu0 0
        %4954 = vmatpush2.bf16.xpose.msra.mxu0 0
        %4955 = vmatprep.mubr.bf16.mxu0 0
        %4956 = vmatmul.mubr.bf16.gmra.mxu0 %v4918
        %v4957 = vpop.f32.mrf.mxu0
        %v4958 = vadd.f32 0.0, %v4957
        %v4959 = vpop.f32.mrf.mxu0
        %v4960 = vpop.f32.mrf.mxu0
        %v4961 = vpop.f32.mrf.mxu0
        %4962 = vdwg.mxu0
        %v4964 = vsel %vm1833, %v4659, 0
        %v4967 = vsel %vm1833, %v4689, 0
        %4969 = vmatprep.subr.bf16.mxu0 0
        %4970 = vmatpush1.bf16.xpose.msra.mxu0 0
        %4971 = vmatprep.subr.bf16.mxu0 0
        %4972 = vmatpush1.bf16.xpose.msra.mxu0 0
        %4973 = vmatprep.subr.bf16.mxu0 0
        %4974 = vmatpush1.bf16.xpose.msra.mxu0 0
        %4975 = vmatprep.subr.bf16.mxu0 0
        %4976 = vmatpush1.bf16.xpose.msra.mxu0 0
        %4977 = vmatprep.subr.bf16.mxu0 0
        %4978 = vmatpush1.bf16.xpose.msra.mxu0 0
        %4979 = vmatprep.subr.bf16.mxu0 0
        %4980 = vmatpush1.bf16.xpose.msra.mxu0 0
        %4981 = vmatprep.subr.bf16.mxu0 0
        %4982 = vmatpush1.bf16.xpose.msra.mxu0 0
        %4983 = vmatprep.subr.bf16.mxu0 0
        %4984 = vmatpush1.bf16.xpose.msra.mxu0 %v4967
        %4985 = vmatprep.subr.bf16.mxu0 0
        %4986 = vmatpush2.bf16.xpose.msra.mxu0 0
        %4987 = vmatprep.subr.bf16.mxu0 0
        %4988 = vmatpush2.bf16.xpose.msra.mxu0 0
        %4989 = vmatprep.subr.bf16.mxu0 0
        %4990 = vmatpush2.bf16.xpose.msra.mxu0 0
        %4991 = vmatprep.subr.bf16.mxu0 0
        %4992 = vmatpush2.bf16.xpose.msra.mxu0 0
        %4993 = vmatprep.subr.bf16.mxu0 0
        %4994 = vmatpush2.bf16.xpose.msra.mxu0 0
        %4995 = vmatprep.subr.bf16.mxu0 0
        %4996 = vmatpush2.bf16.xpose.msra.mxu0 0
        %4997 = vmatprep.subr.bf16.mxu0 0
        %4998 = vmatpush2.bf16.xpose.msra.mxu0 0
        %4999 = vmatprep.subr.bf16.mxu0 0
        %5000 = vmatpush2.bf16.xpose.msra.mxu0 0
        %5001 = vmatprep.mubr.bf16.mxu0 0
        %5002 = vmatmul.mubr.bf16.gmra.mxu0 %v4964
        %v5003 = vpop.f32.mrf.mxu0
        %v5004 = vadd.f32 0.0, %v5003
        %v5005 = vpop.f32.mrf.mxu0
        %v5006 = vpop.f32.mrf.mxu0
        %v5007 = vpop.f32.mrf.mxu0
        %5008 = vdwg.mxu0
        %v5010 = vsel %vm1833, %v4665, 0
        %v5013 = vsel %vm1833, %v4695, 0
        %5015 = vmatprep.subr.bf16.mxu0 0
        %5016 = vmatpush1.bf16.xpose.msra.mxu0 0
        %5017 = vmatprep.subr.bf16.mxu0 0
        %5018 = vmatpush1.bf16.xpose.msra.mxu0 0
        %5019 = vmatprep.subr.bf16.mxu0 0
        %5020 = vmatpush1.bf16.xpose.msra.mxu0 0
        %5021 = vmatprep.subr.bf16.mxu0 0
        %5022 = vmatpush1.bf16.xpose.msra.mxu0 0
        %5023 = vmatprep.subr.bf16.mxu0 0
        %5024 = vmatpush1.bf16.xpose.msra.mxu0 0
        %5025 = vmatprep.subr.bf16.mxu0 0
        %5026 = vmatpush1.bf16.xpose.msra.mxu0 0
        %5027 = vmatprep.subr.bf16.mxu0 0
        %5028 = vmatpush1.bf16.xpose.msra.mxu0 0
        %5029 = vmatprep.subr.bf16.mxu0 0
        %5030 = vmatpush1.bf16.xpose.msra.mxu0 %v5013
        %5031 = vmatprep.subr.bf16.mxu0 0
        %5032 = vmatpush2.bf16.xpose.msra.mxu0 0
        %5033 = vmatprep.subr.bf16.mxu0 0
        %5034 = vmatpush2.bf16.xpose.msra.mxu0 0
        %5035 = vmatprep.subr.bf16.mxu0 0
        %5036 = vmatpush2.bf16.xpose.msra.mxu0 0
        %5037 = vmatprep.subr.bf16.mxu0 0
        %5038 = vmatpush2.bf16.xpose.msra.mxu0 0
        %5039 = vmatprep.subr.bf16.mxu0 0
        %5040 = vmatpush2.bf16.xpose.msra.mxu0 0
        %5041 = vmatprep.subr.bf16.mxu0 0
        %5042 = vmatpush2.bf16.xpose.msra.mxu0 0
        %5043 = vmatprep.subr.bf16.mxu0 0
        %5044 = vmatpush2.bf16.xpose.msra.mxu0 0
        %5045 = vmatprep.subr.bf16.mxu0 0
        %5046 = vmatpush2.bf16.xpose.msra.mxu0 0
        %5047 = vmatprep.mubr.bf16.mxu0 0
        %5048 = vmatmul.mubr.bf16.gmra.mxu0 %v5010
        %v5049 = vpop.f32.mrf.mxu0
        %v5050 = vadd.f32 0.0, %v5049
        %v5051 = vpop.f32.mrf.mxu0
        %v5052 = vpop.f32.mrf.mxu0
        %v5053 = vpop.f32.mrf.mxu0
        %5054 = vdwg.mxu0
        %v5056 = vsel %vm1833, %v4671, 0
        %v5059 = vsel %vm1833, %v4701, 0
        %5061 = vmatprep.subr.bf16.mxu0 0
        %5062 = vmatpush1.bf16.xpose.msra.mxu0 0
        %5063 = vmatprep.subr.bf16.mxu0 0
        %5064 = vmatpush1.bf16.xpose.msra.mxu0 0
        %5065 = vmatprep.subr.bf16.mxu0 0
        %5066 = vmatpush1.bf16.xpose.msra.mxu0 0
        %5067 = vmatprep.subr.bf16.mxu0 0
        %5068 = vmatpush1.bf16.xpose.msra.mxu0 0
        %5069 = vmatprep.subr.bf16.mxu0 0
        %5070 = vmatpush1.bf16.xpose.msra.mxu0 0
        %5071 = vmatprep.subr.bf16.mxu0 0
        %5072 = vmatpush1.bf16.xpose.msra.mxu0 0
        %5073 = vmatprep.subr.bf16.mxu0 0
        %5074 = vmatpush1.bf16.xpose.msra.mxu0 0
        %5075 = vmatprep.subr.bf16.mxu0 0
        %5076 = vmatpush1.bf16.xpose.msra.mxu0 %v5059
        %5077 = vmatprep.subr.bf16.mxu0 0
        %5078 = vmatpush2.bf16.xpose.msra.mxu0 0
        %5079 = vmatprep.subr.bf16.mxu0 0
        %5080 = vmatpush2.bf16.xpose.msra.mxu0 0
        %5081 = vmatprep.subr.bf16.mxu0 0
        %5082 = vmatpush2.bf16.xpose.msra.mxu0 0
        %5083 = vmatprep.subr.bf16.mxu0 0
        %5084 = vmatpush2.bf16.xpose.msra.mxu0 0
        %5085 = vmatprep.subr.bf16.mxu0 0
        %5086 = vmatpush2.bf16.xpose.msra.mxu0 0
        %5087 = vmatprep.subr.bf16.mxu0 0
        %5088 = vmatpush2.bf16.xpose.msra.mxu0 0
        %5089 = vmatprep.subr.bf16.mxu0 0
        %5090 = vmatpush2.bf16.xpose.msra.mxu0 0
        %5091 = vmatprep.subr.bf16.mxu0 0
        %5092 = vmatpush2.bf16.xpose.msra.mxu0 0
        %5093 = vmatprep.mubr.bf16.mxu0 0
        %5094 = vmatmul.mubr.bf16.gmra.mxu0 %v5056
        %v5095 = vpop.f32.mrf.mxu0
        %v5096 = vadd.f32 0.0, %v5095
        %v5097 = vpop.f32.mrf.mxu0
        %v5098 = vpop.f32.mrf.mxu0
        %v5099 = vpop.f32.mrf.mxu0
        %5100 = vdwg.mxu0
        %v5102 = vsel %vm1833, %v4652, 0
        %v5105 = vsel %vm1833, %v4682, 0
        %5107 = vmatprep.subr.bf16.mxu0 0
        %5108 = vmatpush1.bf16.xpose.msra.mxu0 0
        %5109 = vmatprep.subr.bf16.mxu0 0
        %5110 = vmatpush1.bf16.xpose.msra.mxu0 0
        %5111 = vmatprep.subr.bf16.mxu0 0
        %5112 = vmatpush1.bf16.xpose.msra.mxu0 0
        %5113 = vmatprep.subr.bf16.mxu0 0
        %5114 = vmatpush1.bf16.xpose.msra.mxu0 0
        %5115 = vmatprep.subr.bf16.mxu0 0
        %5116 = vmatpush1.bf16.xpose.msra.mxu0 0
        %5117 = vmatprep.subr.bf16.mxu0 0
        %5118 = vmatpush1.bf16.xpose.msra.mxu0 0
        %5119 = vmatprep.subr.bf16.mxu0 0
        %5120 = vmatpush1.bf16.xpose.msra.mxu0 0
        %5121 = vmatprep.subr.bf16.mxu0 0
        %5122 = vmatpush1.bf16.xpose.msra.mxu0 %v5105
        %5123 = vmatprep.subr.bf16.mxu0 0
        %5124 = vmatpush2.bf16.xpose.msra.mxu0 0
        %5125 = vmatprep.subr.bf16.mxu0 0
        %5126 = vmatpush2.bf16.xpose.msra.mxu0 0
        %5127 = vmatprep.subr.bf16.mxu0 0
        %5128 = vmatpush2.bf16.xpose.msra.mxu0 0
        %5129 = vmatprep.subr.bf16.mxu0 0
        %5130 = vmatpush2.bf16.xpose.msra.mxu0 0
        %5131 = vmatprep.subr.bf16.mxu0 0
        %5132 = vmatpush2.bf16.xpose.msra.mxu0 0
        %5133 = vmatprep.subr.bf16.mxu0 0
        %5134 = vmatpush2.bf16.xpose.msra.mxu0 0
        %5135 = vmatprep.subr.bf16.mxu0 0
        %5136 = vmatpush2.bf16.xpose.msra.mxu0 0
        %5137 = vmatprep.subr.bf16.mxu0 0
        %5138 = vmatpush2.bf16.xpose.msra.mxu0 0
        %5139 = vmatprep.mubr.bf16.mxu0 0
        %5140 = vmatmul.mubr.bf16.gmra.mxu0 %v5102
        %v5141 = vpop.f32.mrf.mxu0
        %v5142 = vadd.f32 0.0, %v5141
        %v5143 = vpop.f32.mrf.mxu0
        %v5144 = vpop.f32.mrf.mxu0
        %v5145 = vpop.f32.mrf.mxu0
        %5146 = vdwg.mxu0
        %v5148 = vsel %vm1833, %v4658, 0
        %v5151 = vsel %vm1833, %v4688, 0
        %5153 = vmatprep.subr.bf16.mxu0 0
        %5154 = vmatpush1.bf16.xpose.msra.mxu0 0
        %5155 = vmatprep.subr.bf16.mxu0 0
        %5156 = vmatpush1.bf16.xpose.msra.mxu0 0
        %5157 = vmatprep.subr.bf16.mxu0 0
        %5158 = vmatpush1.bf16.xpose.msra.mxu0 0
        %5159 = vmatprep.subr.bf16.mxu0 0
        %5160 = vmatpush1.bf16.xpose.msra.mxu0 0
        %5161 = vmatprep.subr.bf16.mxu0 0
        %5162 = vmatpush1.bf16.xpose.msra.mxu0 0
        %5163 = vmatprep.subr.bf16.mxu0 0
        %5164 = vmatpush1.bf16.xpose.msra.mxu0 0
        %5165 = vmatprep.subr.bf16.mxu0 0
        %5166 = vmatpush1.bf16.xpose.msra.mxu0 0
        %5167 = vmatprep.subr.bf16.mxu0 0
        %5168 = vmatpush1.bf16.xpose.msra.mxu0 %v5151
        %5169 = vmatprep.subr.bf16.mxu0 0
        %5170 = vmatpush2.bf16.xpose.msra.mxu0 0
        %5171 = vmatprep.subr.bf16.mxu0 0
        %5172 = vmatpush2.bf16.xpose.msra.mxu0 0
        %5173 = vmatprep.subr.bf16.mxu0 0
        %5174 = vmatpush2.bf16.xpose.msra.mxu0 0
        %5175 = vmatprep.subr.bf16.mxu0 0
        %5176 = vmatpush2.bf16.xpose.msra.mxu0 0
        %5177 = vmatprep.subr.bf16.mxu0 0
        %5178 = vmatpush2.bf16.xpose.msra.mxu0 0
        %5179 = vmatprep.subr.bf16.mxu0 0
        %5180 = vmatpush2.bf16.xpose.msra.mxu0 0
        %5181 = vmatprep.subr.bf16.mxu0 0
        %5182 = vmatpush2.bf16.xpose.msra.mxu0 0
        %5183 = vmatprep.subr.bf16.mxu0 0
        %5184 = vmatpush2.bf16.xpose.msra.mxu0 0
        %5185 = vmatprep.mubr.bf16.mxu0 0
        %5186 = vmatmul.mubr.bf16.gmra.mxu0 %v5148
        %v5187 = vpop.f32.mrf.mxu0
        %v5188 = vadd.f32 0.0, %v5187
        %v5189 = vpop.f32.mrf.mxu0
        %v5190 = vpop.f32.mrf.mxu0
        %v5191 = vpop.f32.mrf.mxu0
        %5192 = vdwg.mxu0
        %v5194 = vsel %vm1833, %v4664, 0
        %v5197 = vsel %vm1833, %v4694, 0
        %5199 = vmatprep.subr.bf16.mxu0 0
        %5200 = vmatpush1.bf16.xpose.msra.mxu0 0
        %5201 = vmatprep.subr.bf16.mxu0 0
        %5202 = vmatpush1.bf16.xpose.msra.mxu0 0
        %5203 = vmatprep.subr.bf16.mxu0 0
        %5204 = vmatpush1.bf16.xpose.msra.mxu0 0
        %5205 = vmatprep.subr.bf16.mxu0 0
        %5206 = vmatpush1.bf16.xpose.msra.mxu0 0
        %5207 = vmatprep.subr.bf16.mxu0 0
        %5208 = vmatpush1.bf16.xpose.msra.mxu0 0
        %5209 = vmatprep.subr.bf16.mxu0 0
        %5210 = vmatpush1.bf16.xpose.msra.mxu0 0
        %5211 = vmatprep.subr.bf16.mxu0 0
        %5212 = vmatpush1.bf16.xpose.msra.mxu0 0
        %5213 = vmatprep.subr.bf16.mxu0 0
        %5214 = vmatpush1.bf16.xpose.msra.mxu0 %v5197
        %5215 = vmatprep.subr.bf16.mxu0 0
        %5216 = vmatpush2.bf16.xpose.msra.mxu0 0
        %5217 = vmatprep.subr.bf16.mxu0 0
        %5218 = vmatpush2.bf16.xpose.msra.mxu0 0
        %5219 = vmatprep.subr.bf16.mxu0 0
        %5220 = vmatpush2.bf16.xpose.msra.mxu0 0
        %5221 = vmatprep.subr.bf16.mxu0 0
        %5222 = vmatpush2.bf16.xpose.msra.mxu0 0
        %5223 = vmatprep.subr.bf16.mxu0 0
        %5224 = vmatpush2.bf16.xpose.msra.mxu0 0
        %5225 = vmatprep.subr.bf16.mxu0 0
        %5226 = vmatpush2.bf16.xpose.msra.mxu0 0
        %5227 = vmatprep.subr.bf16.mxu0 0
        %5228 = vmatpush2.bf16.xpose.msra.mxu0 0
        %5229 = vmatprep.subr.bf16.mxu0 0
        %5230 = vmatpush2.bf16.xpose.msra.mxu0 0
        %5231 = vmatprep.mubr.bf16.mxu0 0
        %5232 = vmatmul.mubr.bf16.gmra.mxu0 %v5194
        %v5233 = vpop.f32.mrf.mxu0
        %v5234 = vadd.f32 0.0, %v5233
        %v5235 = vpop.f32.mrf.mxu0
        %v5236 = vpop.f32.mrf.mxu0
        %v5237 = vpop.f32.mrf.mxu0
        %5238 = vdwg.mxu0
        %v5240 = vsel %vm1833, %v4670, 0
        %v5243 = vsel %vm1833, %v4700, 0
        %5245 = vmatprep.subr.bf16.mxu0 0
        %5246 = vmatpush1.bf16.xpose.msra.mxu0 0
        %5247 = vmatprep.subr.bf16.mxu0 0
        %5248 = vmatpush1.bf16.xpose.msra.mxu0 0
        %5249 = vmatprep.subr.bf16.mxu0 0
        %5250 = vmatpush1.bf16.xpose.msra.mxu0 0
        %5251 = vmatprep.subr.bf16.mxu0 0
        %5252 = vmatpush1.bf16.xpose.msra.mxu0 0
        %5253 = vmatprep.subr.bf16.mxu0 0
        %5254 = vmatpush1.bf16.xpose.msra.mxu0 0
        %5255 = vmatprep.subr.bf16.mxu0 0
        %5256 = vmatpush1.bf16.xpose.msra.mxu0 0
        %5257 = vmatprep.subr.bf16.mxu0 0
        %5258 = vmatpush1.bf16.xpose.msra.mxu0 0
        %5259 = vmatprep.subr.bf16.mxu0 0
        %5260 = vmatpush1.bf16.xpose.msra.mxu0 %v5243
        %5261 = vmatprep.subr.bf16.mxu0 0
        %5262 = vmatpush2.bf16.xpose.msra.mxu0 0
        %5263 = vmatprep.subr.bf16.mxu0 0
        %5264 = vmatpush2.bf16.xpose.msra.mxu0 0
        %5265 = vmatprep.subr.bf16.mxu0 0
        %5266 = vmatpush2.bf16.xpose.msra.mxu0 0
        %5267 = vmatprep.subr.bf16.mxu0 0
        %5268 = vmatpush2.bf16.xpose.msra.mxu0 0
        %5269 = vmatprep.subr.bf16.mxu0 0
        %5270 = vmatpush2.bf16.xpose.msra.mxu0 0
        %5271 = vmatprep.subr.bf16.mxu0 0
        %5272 = vmatpush2.bf16.xpose.msra.mxu0 0
        %5273 = vmatprep.subr.bf16.mxu0 0
        %5274 = vmatpush2.bf16.xpose.msra.mxu0 0
        %5275 = vmatprep.subr.bf16.mxu0 0
        %5276 = vmatpush2.bf16.xpose.msra.mxu0 0
        %5277 = vmatprep.mubr.bf16.mxu0 0
        %5278 = vmatmul.mubr.bf16.gmra.mxu0 %v5240
        %v5279 = vpop.f32.mrf.mxu0
        %v5280 = vadd.f32 0.0, %v5279
        %v5281 = vpop.f32.mrf.mxu0
        %v5282 = vpop.f32.mrf.mxu0
        %v5283 = vpop.f32.mrf.mxu0
        %5284 = vdwg.mxu0
        %v5286 = vsel %vm1833, %v4654, 0
        %v5289 = vsel %vm1833, %v4684, 0
        %5291 = vmatprep.subr.bf16.mxu0 0
        %5292 = vmatpush1.bf16.xpose.msra.mxu0 0
        %5293 = vmatprep.subr.bf16.mxu0 0
        %5294 = vmatpush1.bf16.xpose.msra.mxu0 0
        %5295 = vmatprep.subr.bf16.mxu0 0
        %5296 = vmatpush1.bf16.xpose.msra.mxu0 0
        %5297 = vmatprep.subr.bf16.mxu0 0
        %5298 = vmatpush1.bf16.xpose.msra.mxu0 0
        %5299 = vmatprep.subr.bf16.mxu0 0
        %5300 = vmatpush1.bf16.xpose.msra.mxu0 0
        %5301 = vmatprep.subr.bf16.mxu0 0
        %5302 = vmatpush1.bf16.xpose.msra.mxu0 0
        %5303 = vmatprep.subr.bf16.mxu0 0
        %5304 = vmatpush1.bf16.xpose.msra.mxu0 0
        %5305 = vmatprep.subr.bf16.mxu0 0
        %5306 = vmatpush1.bf16.xpose.msra.mxu0 %v5289
        %5307 = vmatprep.subr.bf16.mxu0 0
        %5308 = vmatpush2.bf16.xpose.msra.mxu0 0
        %5309 = vmatprep.subr.bf16.mxu0 0
        %5310 = vmatpush2.bf16.xpose.msra.mxu0 0
        %5311 = vmatprep.subr.bf16.mxu0 0
        %5312 = vmatpush2.bf16.xpose.msra.mxu0 0
        %5313 = vmatprep.subr.bf16.mxu0 0
        %5314 = vmatpush2.bf16.xpose.msra.mxu0 0
        %5315 = vmatprep.subr.bf16.mxu0 0
        %5316 = vmatpush2.bf16.xpose.msra.mxu0 0
        %5317 = vmatprep.subr.bf16.mxu0 0
        %5318 = vmatpush2.bf16.xpose.msra.mxu0 0
        %5319 = vmatprep.subr.bf16.mxu0 0
        %5320 = vmatpush2.bf16.xpose.msra.mxu0 0
        %5321 = vmatprep.subr.bf16.mxu0 0
        %5322 = vmatpush2.bf16.xpose.msra.mxu0 0
        %5323 = vmatprep.mubr.bf16.mxu0 0
        %5324 = vmatmul.mubr.bf16.gmra.mxu0 %v5286
        %v5325 = vpop.f32.mrf.mxu0
        %v5326 = vadd.f32 0.0, %v5325
        %v5327 = vpop.f32.mrf.mxu0
        %v5328 = vpop.f32.mrf.mxu0
        %v5329 = vpop.f32.mrf.mxu0
        %5330 = vdwg.mxu0
        %v5332 = vsel %vm1833, %v4660, 0
        %v5335 = vsel %vm1833, %v4690, 0
        %5337 = vmatprep.subr.bf16.mxu0 0
        %5338 = vmatpush1.bf16.xpose.msra.mxu0 0
        %5339 = vmatprep.subr.bf16.mxu0 0
        %5340 = vmatpush1.bf16.xpose.msra.mxu0 0
        %5341 = vmatprep.subr.bf16.mxu0 0
        %5342 = vmatpush1.bf16.xpose.msra.mxu0 0
        %5343 = vmatprep.subr.bf16.mxu0 0
        %5344 = vmatpush1.bf16.xpose.msra.mxu0 0
        %5345 = vmatprep.subr.bf16.mxu0 0
        %5346 = vmatpush1.bf16.xpose.msra.mxu0 0
        %5347 = vmatprep.subr.bf16.mxu0 0
        %5348 = vmatpush1.bf16.xpose.msra.mxu0 0
        %5349 = vmatprep.subr.bf16.mxu0 0
        %5350 = vmatpush1.bf16.xpose.msra.mxu0 0
        %5351 = vmatprep.subr.bf16.mxu0 0
        %5352 = vmatpush1.bf16.xpose.msra.mxu0 %v5335
        %5353 = vmatprep.subr.bf16.mxu0 0
        %5354 = vmatpush2.bf16.xpose.msra.mxu0 0
        %5355 = vmatprep.subr.bf16.mxu0 0
        %5356 = vmatpush2.bf16.xpose.msra.mxu0 0
        %5357 = vmatprep.subr.bf16.mxu0 0
        %5358 = vmatpush2.bf16.xpose.msra.mxu0 0
        %5359 = vmatprep.subr.bf16.mxu0 0
        %5360 = vmatpush2.bf16.xpose.msra.mxu0 0
        %5361 = vmatprep.subr.bf16.mxu0 0
        %5362 = vmatpush2.bf16.xpose.msra.mxu0 0
        %5363 = vmatprep.subr.bf16.mxu0 0
        %5364 = vmatpush2.bf16.xpose.msra.mxu0 0
        %5365 = vmatprep.subr.bf16.mxu0 0
        %5366 = vmatpush2.bf16.xpose.msra.mxu0 0
        %5367 = vmatprep.subr.bf16.mxu0 0
        %5368 = vmatpush2.bf16.xpose.msra.mxu0 0
        %5369 = vmatprep.mubr.bf16.mxu0 0
        %5370 = vmatmul.mubr.bf16.gmra.mxu0 %v5332
        %v5371 = vpop.f32.mrf.mxu0
        %v5372 = vadd.f32 0.0, %v5371
        %v5373 = vpop.f32.mrf.mxu0
        %v5374 = vpop.f32.mrf.mxu0
        %v5375 = vpop.f32.mrf.mxu0
        %5376 = vdwg.mxu0
        %v5378 = vsel %vm1833, %v4666, 0
        %v5381 = vsel %vm1833, %v4696, 0
        %5383 = vmatprep.subr.bf16.mxu0 0
        %5384 = vmatpush1.bf16.xpose.msra.mxu0 0
        %5385 = vmatprep.subr.bf16.mxu0 0
        %5386 = vmatpush1.bf16.xpose.msra.mxu0 0
        %5387 = vmatprep.subr.bf16.mxu0 0
        %5388 = vmatpush1.bf16.xpose.msra.mxu0 0
        %5389 = vmatprep.subr.bf16.mxu0 0
        %5390 = vmatpush1.bf16.xpose.msra.mxu0 0
        %5391 = vmatprep.subr.bf16.mxu0 0
        %5392 = vmatpush1.bf16.xpose.msra.mxu0 0
        %5393 = vmatprep.subr.bf16.mxu0 0
        %5394 = vmatpush1.bf16.xpose.msra.mxu0 0
        %5395 = vmatprep.subr.bf16.mxu0 0
        %5396 = vmatpush1.bf16.xpose.msra.mxu0 0
        %5397 = vmatprep.subr.bf16.mxu0 0
        %5398 = vmatpush1.bf16.xpose.msra.mxu0 %v5381
        %5399 = vmatprep.subr.bf16.mxu0 0
        %5400 = vmatpush2.bf16.xpose.msra.mxu0 0
        %5401 = vmatprep.subr.bf16.mxu0 0
        %5402 = vmatpush2.bf16.xpose.msra.mxu0 0
        %5403 = vmatprep.subr.bf16.mxu0 0
        %5404 = vmatpush2.bf16.xpose.msra.mxu0 0
        %5405 = vmatprep.subr.bf16.mxu0 0
        %5406 = vmatpush2.bf16.xpose.msra.mxu0 0
        %5407 = vmatprep.subr.bf16.mxu0 0
        %5408 = vmatpush2.bf16.xpose.msra.mxu0 0
        %5409 = vmatprep.subr.bf16.mxu0 0
        %5410 = vmatpush2.bf16.xpose.msra.mxu0 0
        %5411 = vmatprep.subr.bf16.mxu0 0
        %5412 = vmatpush2.bf16.xpose.msra.mxu0 0
        %5413 = vmatprep.subr.bf16.mxu0 0
        %5414 = vmatpush2.bf16.xpose.msra.mxu0 0
        %5415 = vmatprep.mubr.bf16.mxu0 0
        %5416 = vmatmul.mubr.bf16.gmra.mxu0 %v5378
        %v5417 = vpop.f32.mrf.mxu0
        %v5418 = vadd.f32 0.0, %v5417
        %v5419 = vpop.f32.mrf.mxu0
        %v5420 = vpop.f32.mrf.mxu0
        %v5421 = vpop.f32.mrf.mxu0
        %5422 = vdwg.mxu0
        %v5424 = vsel %vm1833, %v4672, 0
        %v5427 = vsel %vm1833, %v4702, 0
        %5429 = vmatprep.subr.bf16.mxu0 0
        %5430 = vmatpush1.bf16.xpose.msra.mxu0 0
        %5431 = vmatprep.subr.bf16.mxu0 0
        %5432 = vmatpush1.bf16.xpose.msra.mxu0 0
        %5433 = vmatprep.subr.bf16.mxu0 0
        %5434 = vmatpush1.bf16.xpose.msra.mxu0 0
        %5435 = vmatprep.subr.bf16.mxu0 0
        %5436 = vmatpush1.bf16.xpose.msra.mxu0 0
        %5437 = vmatprep.subr.bf16.mxu0 0
        %5438 = vmatpush1.bf16.xpose.msra.mxu0 0
        %5439 = vmatprep.subr.bf16.mxu0 0
        %5440 = vmatpush1.bf16.xpose.msra.mxu0 0
        %5441 = vmatprep.subr.bf16.mxu0 0
        %5442 = vmatpush1.bf16.xpose.msra.mxu0 0
        %5443 = vmatprep.subr.bf16.mxu0 0
        %5444 = vmatpush1.bf16.xpose.msra.mxu0 %v5427
        %5445 = vmatprep.subr.bf16.mxu0 0
        %5446 = vmatpush2.bf16.xpose.msra.mxu0 0
        %5447 = vmatprep.subr.bf16.mxu0 0
        %5448 = vmatpush2.bf16.xpose.msra.mxu0 0
        %5449 = vmatprep.subr.bf16.mxu0 0
        %5450 = vmatpush2.bf16.xpose.msra.mxu0 0
        %5451 = vmatprep.subr.bf16.mxu0 0
        %5452 = vmatpush2.bf16.xpose.msra.mxu0 0
        %5453 = vmatprep.subr.bf16.mxu0 0
        %5454 = vmatpush2.bf16.xpose.msra.mxu0 0
        %5455 = vmatprep.subr.bf16.mxu0 0
        %5456 = vmatpush2.bf16.xpose.msra.mxu0 0
        %5457 = vmatprep.subr.bf16.mxu0 0
        %5458 = vmatpush2.bf16.xpose.msra.mxu0 0
        %5459 = vmatprep.subr.bf16.mxu0 0
        %5460 = vmatpush2.bf16.xpose.msra.mxu0 0
        %5461 = vmatprep.mubr.bf16.mxu0 0
        %5462 = vmatmul.mubr.bf16.gmra.mxu0 %v5424
        %v5463 = vpop.f32.mrf.mxu0
        %v5464 = vadd.f32 0.0, %v5463
        %v5465 = vpop.f32.mrf.mxu0
        %v5466 = vpop.f32.mrf.mxu0
        %v5467 = vpop.f32.mrf.mxu0
        %5468 = vdwg.mxu0
        %v5469 = vadd.f32 %v4774, %v1036
        %v5470 = vadd.f32 %v4820, %v1036
        %v5471 = vadd.f32 %v4866, %v1036
        %v5472 = vadd.f32 %v4912, %v1036
        %v5473 = vadd.f32 %v4958, %v1036
        %v5474 = vadd.f32 %v5004, %v1036
        %v5475 = vadd.f32 %v5050, %v1036
        %v5476 = vadd.f32 %v5096, %v1036
        %v5477 = vadd.f32 %v5142, %v1037
        %v5478 = vadd.f32 %v5188, %v1037
        %v5479 = vadd.f32 %v5234, %v1037
        %v5480 = vadd.f32 %v5280, %v1037
        %v5481 = vadd.f32 %v5326, %v1037
        %v5482 = vadd.f32 %v5372, %v1037
        %v5483 = vadd.f32 %v5418, %v1037
        %v5484 = vadd.f32 %v5464, %v1037
        %v5485 = vsel %vm2586, %v5469, -inf
        %5486 = vmax.xlane.f32.xlu0 %v5485
        %v5487 = vpop.xlane.xlu0 %5486
        %v5488 = vsel %vm2586, %v5470, -inf
        %5489 = vmax.xlane.f32.xlu0 %v5488
        %v5490 = vpop.xlane.xlu0 %5489
        %v5491 = vsel %vm2586, %v5471, -inf
        %5492 = vmax.xlane.f32.xlu0 %v5491
        %v5493 = vpop.xlane.xlu0 %5492
        %v5494 = vsel %vm2586, %v5472, -inf
        %5495 = vmax.xlane.f32.xlu0 %v5494
        %v5496 = vpop.xlane.xlu0 %5495
        %v5497 = vsel %vm2586, %v5473, -inf
        %5498 = vmax.xlane.f32.xlu0 %v5497
        %v5499 = vpop.xlane.xlu0 %5498
        %v5500 = vsel %vm2586, %v5474, -inf
        %5501 = vmax.xlane.f32.xlu0 %v5500
        %v5502 = vpop.xlane.xlu0 %5501
        %v5503 = vsel %vm2586, %v5475, -inf
        %5504 = vmax.xlane.f32.xlu0 %v5503
        %v5505 = vpop.xlane.xlu0 %5504
        %v5506 = vsel %vm2586, %v5476, -inf
        %5507 = vmax.xlane.f32.xlu0 %v5506
        %v5508 = vpop.xlane.xlu0 %5507
        %v5509 = vsel %vm2586, %v5477, -inf
        %5510 = vmax.xlane.f32.xlu0 %v5509
        %v5511 = vpop.xlane.xlu0 %5510
        %v5512 = vsel %vm2586, %v5478, -inf
        %5513 = vmax.xlane.f32.xlu0 %v5512
        %v5514 = vpop.xlane.xlu0 %5513
        %v5515 = vsel %vm2586, %v5479, -inf
        %5516 = vmax.xlane.f32.xlu0 %v5515
        %v5517 = vpop.xlane.xlu0 %5516
        %v5518 = vsel %vm2586, %v5480, -inf
        %5519 = vmax.xlane.f32.xlu0 %v5518
        %v5520 = vpop.xlane.xlu0 %5519
        %v5521 = vsel %vm2586, %v5481, -inf
        %5522 = vmax.xlane.f32.xlu0 %v5521
        %v5523 = vpop.xlane.xlu0 %5522
        %v5524 = vsel %vm2586, %v5482, -inf
        %5525 = vmax.xlane.f32.xlu0 %v5524
        %v5526 = vpop.xlane.xlu0 %5525
        %v5527 = vsel %vm2586, %v5483, -inf
        %5528 = vmax.xlane.f32.xlu0 %v5527
        %v5529 = vpop.xlane.xlu0 %5528
        %v5530 = vsel %vm2586, %v5484, -inf
        %5531 = vmax.xlane.f32.xlu0 %v5530
        %v5532 = vpop.xlane.xlu0 %5531
        %v5533 = vsub.f32 %v5469, %v5487
        %v5534 = vsub.f32 %v5470, %v5490
        %v5535 = vsub.f32 %v5471, %v5493
        %v5536 = vsub.f32 %v5472, %v5496
        %v5537 = vsub.f32 %v5473, %v5499
        %v5538 = vsub.f32 %v5474, %v5502
        %v5539 = vsub.f32 %v5475, %v5505
        %v5540 = vsub.f32 %v5476, %v5508
        %v5541 = vsub.f32 %v5477, %v5511
        %v5542 = vsub.f32 %v5478, %v5514
        %v5543 = vsub.f32 %v5479, %v5517
        %v5544 = vsub.f32 %v5480, %v5520
        %v5545 = vsub.f32 %v5481, %v5523
        %v5546 = vsub.f32 %v5482, %v5526
        %v5547 = vsub.f32 %v5483, %v5529
        %v5548 = vsub.f32 %v5484, %v5532
        %v5549 = vmul.f32 %v5533, 1.442695
        %v5550 = vpow.pop %v5549
        %v5551 = vmul.f32 %v5534, 1.442695
        %v5552 = vpow.pop %v5551
        %v5553 = vmul.f32 %v5535, 1.442695
        %v5554 = vpow.pop %v5553
        %v5555 = vmul.f32 %v5536, 1.442695
        %v5556 = vpow.pop %v5555
        %v5557 = vmul.f32 %v5537, 1.442695
        %v5558 = vpow.pop %v5557
        %v5559 = vmul.f32 %v5538, 1.442695
        %v5560 = vpow.pop %v5559
        %v5561 = vmul.f32 %v5539, 1.442695
        %v5562 = vpow.pop %v5561
        %v5563 = vmul.f32 %v5540, 1.442695
        %v5564 = vpow.pop %v5563
        %v5565 = vmul.f32 %v5541, 1.442695
        %v5566 = vpow.pop %v5565
        %v5567 = vmul.f32 %v5542, 1.442695
        %v5568 = vpow.pop %v5567
        %v5569 = vmul.f32 %v5543, 1.442695
        %v5570 = vpow.pop %v5569
        %v5571 = vmul.f32 %v5544, 1.442695
        %v5572 = vpow.pop %v5571
        %v5573 = vmul.f32 %v5545, 1.442695
        %v5574 = vpow.pop %v5573
        %v5575 = vmul.f32 %v5546, 1.442695
        %v5576 = vpow.pop %v5575
        %v5577 = vmul.f32 %v5547, 1.442695
        %v5578 = vpow.pop %v5577
        %v5579 = vmul.f32 %v5548, 1.442695
        %v5580 = vpow.pop %v5579
        %v5581 = vsel %vm2586, %v5550, 0.0
        %5582 = vadd.xlane.f32.xlu0 %v5581
        %v5583 = vpop.xlane.xlu0 %5582
        %v5584 = vsel %vm2586, %v5552, 0.0
        %5585 = vadd.xlane.f32.xlu0 %v5584
        %v5586 = vpop.xlane.xlu0 %5585
        %v5587 = vsel %vm2586, %v5554, 0.0
        %5588 = vadd.xlane.f32.xlu0 %v5587
        %v5589 = vpop.xlane.xlu0 %5588
        %v5590 = vsel %vm2586, %v5556, 0.0
        %5591 = vadd.xlane.f32.xlu0 %v5590
        %v5592 = vpop.xlane.xlu0 %5591
        %v5593 = vsel %vm2586, %v5558, 0.0
        %5594 = vadd.xlane.f32.xlu0 %v5593
        %v5595 = vpop.xlane.xlu0 %5594
        %v5596 = vsel %vm2586, %v5560, 0.0
        %5597 = vadd.xlane.f32.xlu0 %v5596
        %v5598 = vpop.xlane.xlu0 %5597
        %v5599 = vsel %vm2586, %v5562, 0.0
        %5600 = vadd.xlane.f32.xlu0 %v5599
        %v5601 = vpop.xlane.xlu0 %5600
        %v5602 = vsel %vm2586, %v5564, 0.0
        %5603 = vadd.xlane.f32.xlu0 %v5602
        %v5604 = vpop.xlane.xlu0 %5603
        %v5605 = vsel %vm2586, %v5566, 0.0
        %5606 = vadd.xlane.f32.xlu0 %v5605
        %v5607 = vpop.xlane.xlu0 %5606
        %v5608 = vsel %vm2586, %v5568, 0.0
        %5609 = vadd.xlane.f32.xlu0 %v5608
        %v5610 = vpop.xlane.xlu0 %5609
        %v5611 = vsel %vm2586, %v5570, 0.0
        %5612 = vadd.xlane.f32.xlu0 %v5611
        %v5613 = vpop.xlane.xlu0 %5612
        %v5614 = vsel %vm2586, %v5572, 0.0
        %5615 = vadd.xlane.f32.xlu0 %v5614
        %v5616 = vpop.xlane.xlu0 %5615
        %v5617 = vsel %vm2586, %v5574, 0.0
        %5618 = vadd.xlane.f32.xlu0 %v5617
        %v5619 = vpop.xlane.xlu0 %5618
        %v5620 = vsel %vm2586, %v5576, 0.0
        %5621 = vadd.xlane.f32.xlu0 %v5620
        %v5622 = vpop.xlane.xlu0 %5621
        %v5623 = vsel %vm2586, %v5578, 0.0
        %5624 = vadd.xlane.f32.xlu0 %v5623
        %v5625 = vpop.xlane.xlu0 %5624
        %v5626 = vsel %vm2586, %v5580, 0.0
        %5627 = vadd.xlane.f32.xlu0 %v5626
        %v5628 = vpop.xlane.xlu0 %5627
        %v5629 = vrcp.pop %v5583
        %v5630 = vrcp.pop %v5586
        %v5631 = vrcp.pop %v5589
        %v5632 = vrcp.pop %v5592
        %v5633 = vrcp.pop %v5595
        %v5634 = vrcp.pop %v5598
        %v5635 = vrcp.pop %v5601
        %v5636 = vrcp.pop %v5604
        %v5637 = vrcp.pop %v5607
        %v5638 = vrcp.pop %v5610
        %v5639 = vrcp.pop %v5613
        %v5640 = vrcp.pop %v5616
        %v5641 = vrcp.pop %v5619
        %v5642 = vrcp.pop %v5622
        %v5643 = vrcp.pop %v5625
        %v5644 = vrcp.pop %v5628
        %v5645 = vmul.f32 %v5550, %v5629
        %v5646 = vmul.f32 %v5552, %v5630
        %v5647 = vmul.f32 %v5554, %v5631
        %v5648 = vmul.f32 %v5556, %v5632
        %v5649 = vmul.f32 %v5558, %v5633
        %v5650 = vmul.f32 %v5560, %v5634
        %v5651 = vmul.f32 %v5562, %v5635
        %v5652 = vmul.f32 %v5564, %v5636
        %v5653 = vmul.f32 %v5566, %v5637
        %v5654 = vmul.f32 %v5568, %v5638
        %v5655 = vmul.f32 %v5570, %v5639
        %v5656 = vmul.f32 %v5572, %v5640
        %v5657 = vmul.f32 %v5574, %v5641
        %v5658 = vmul.f32 %v5576, %v5642
        %v5659 = vmul.f32 %v5578, %v5643
        %v5660 = vmul.f32 %v5580, %v5644
        %v5661 = vpack.c.bf16 %v5645, %v5645
        %v5662 = vpack.c.bf16 %v5646, %v5646
        %v5663 = vpack.c.bf16 %v5647, %v5647
        %v5664 = vpack.c.bf16 %v5648, %v5648
        %v5665 = vpack.c.bf16 %v5649, %v5649
        %v5666 = vpack.c.bf16 %v5650, %v5650
        %v5667 = vpack.c.bf16 %v5651, %v5651
        %v5668 = vpack.c.bf16 %v5652, %v5652
        %v5669 = vpack.c.bf16 %v5653, %v5653
        %v5670 = vpack.c.bf16 %v5654, %v5654
        %v5671 = vpack.c.bf16 %v5655, %v5655
        %v5672 = vpack.c.bf16 %v5656, %v5656
        %v5673 = vpack.c.bf16 %v5657, %v5657
        %v5674 = vpack.c.bf16 %v5658, %v5658
        %v5675 = vpack.c.bf16 %v5659, %v5659
        %v5676 = vpack.c.bf16 %v5660, %v5660
        %v5678 = vsel %vm2586, %v5661, 0
        %v5681 = vsel %vm2782, %v4711, 0
        %5683 = vmatprep.subr.bf16.mxu0 0
        %5684 = vmatpush1.bf16.msra.mxu0 0
        %5685 = vmatprep.subr.bf16.mxu0 0
        %5686 = vmatpush1.bf16.msra.mxu0 0
        %5687 = vmatprep.subr.bf16.mxu0 0
        %5688 = vmatpush1.bf16.msra.mxu0 0
        %5689 = vmatprep.subr.bf16.mxu0 0
        %5690 = vmatpush1.bf16.msra.mxu0 0
        %5691 = vmatprep.subr.bf16.mxu0 0
        %5692 = vmatpush1.bf16.msra.mxu0 0
        %5693 = vmatprep.subr.bf16.mxu0 0
        %5694 = vmatpush1.bf16.msra.mxu0 0
        %5695 = vmatprep.subr.bf16.mxu0 0
        %5696 = vmatpush1.bf16.msra.mxu0 0
        %5697 = vmatprep.subr.bf16.mxu0 0
        %5698 = vmatpush1.bf16.msra.mxu0 %v5681
        %5699 = vmatprep.subr.bf16.mxu0 0
        %5700 = vmatpush2.bf16.msra.mxu0 0
        %5701 = vmatprep.subr.bf16.mxu0 0
        %5702 = vmatpush2.bf16.msra.mxu0 0
        %5703 = vmatprep.subr.bf16.mxu0 0
        %5704 = vmatpush2.bf16.msra.mxu0 0
        %5705 = vmatprep.subr.bf16.mxu0 0
        %5706 = vmatpush2.bf16.msra.mxu0 0
        %5707 = vmatprep.subr.bf16.mxu0 0
        %5708 = vmatpush2.bf16.msra.mxu0 0
        %5709 = vmatprep.subr.bf16.mxu0 0
        %5710 = vmatpush2.bf16.msra.mxu0 0
        %5711 = vmatprep.subr.bf16.mxu0 0
        %5712 = vmatpush2.bf16.msra.mxu0 0
        %5713 = vmatprep.subr.bf16.mxu0 0
        %5714 = vmatpush2.bf16.msra.mxu0 0
        %5715 = vmatprep.mubr.bf16.mxu0 0
        %5716 = vmatmul.mubr.bf16.gmra.mxu0 %v5678
        %v5717 = vpop.f32.mrf.mxu0
        %v5718 = vadd.f32 0.0, %v5717
        %v5719 = vpop.f32.mrf.mxu0
        %v5720 = vpop.f32.mrf.mxu0
        %v5721 = vpop.f32.mrf.mxu0
        %5722 = vdwg.mxu0
        %v5724 = vsel %vm2586, %v5662, 0
        %v5727 = vsel %vm2782, %v4716, 0
        %5729 = vmatprep.subr.bf16.mxu0 0
        %5730 = vmatpush1.bf16.msra.mxu0 0
        %5731 = vmatprep.subr.bf16.mxu0 0
        %5732 = vmatpush1.bf16.msra.mxu0 0
        %5733 = vmatprep.subr.bf16.mxu0 0
        %5734 = vmatpush1.bf16.msra.mxu0 0
        %5735 = vmatprep.subr.bf16.mxu0 0
        %5736 = vmatpush1.bf16.msra.mxu0 0
        %5737 = vmatprep.subr.bf16.mxu0 0
        %5738 = vmatpush1.bf16.msra.mxu0 0
        %5739 = vmatprep.subr.bf16.mxu0 0
        %5740 = vmatpush1.bf16.msra.mxu0 0
        %5741 = vmatprep.subr.bf16.mxu0 0
        %5742 = vmatpush1.bf16.msra.mxu0 0
        %5743 = vmatprep.subr.bf16.mxu0 0
        %5744 = vmatpush1.bf16.msra.mxu0 %v5727
        %5745 = vmatprep.subr.bf16.mxu0 0
        %5746 = vmatpush2.bf16.msra.mxu0 0
        %5747 = vmatprep.subr.bf16.mxu0 0
        %5748 = vmatpush2.bf16.msra.mxu0 0
        %5749 = vmatprep.subr.bf16.mxu0 0
        %5750 = vmatpush2.bf16.msra.mxu0 0
        %5751 = vmatprep.subr.bf16.mxu0 0
        %5752 = vmatpush2.bf16.msra.mxu0 0
        %5753 = vmatprep.subr.bf16.mxu0 0
        %5754 = vmatpush2.bf16.msra.mxu0 0
        %5755 = vmatprep.subr.bf16.mxu0 0
        %5756 = vmatpush2.bf16.msra.mxu0 0
        %5757 = vmatprep.subr.bf16.mxu0 0
        %5758 = vmatpush2.bf16.msra.mxu0 0
        %5759 = vmatprep.subr.bf16.mxu0 0
        %5760 = vmatpush2.bf16.msra.mxu0 0
        %5761 = vmatprep.mubr.bf16.mxu0 0
        %5762 = vmatmul.mubr.bf16.gmra.mxu0 %v5724
        %v5763 = vpop.f32.mrf.mxu0
        %v5764 = vadd.f32 0.0, %v5763
        %v5765 = vpop.f32.mrf.mxu0
        %v5766 = vpop.f32.mrf.mxu0
        %v5767 = vpop.f32.mrf.mxu0
        %5768 = vdwg.mxu0
        %v5770 = vsel %vm2586, %v5663, 0
        %v5773 = vsel %vm2782, %v4722, 0
        %5775 = vmatprep.subr.bf16.mxu0 0
        %5776 = vmatpush1.bf16.msra.mxu0 0
        %5777 = vmatprep.subr.bf16.mxu0 0
        %5778 = vmatpush1.bf16.msra.mxu0 0
        %5779 = vmatprep.subr.bf16.mxu0 0
        %5780 = vmatpush1.bf16.msra.mxu0 0
        %5781 = vmatprep.subr.bf16.mxu0 0
        %5782 = vmatpush1.bf16.msra.mxu0 0
        %5783 = vmatprep.subr.bf16.mxu0 0
        %5784 = vmatpush1.bf16.msra.mxu0 0
        %5785 = vmatprep.subr.bf16.mxu0 0
        %5786 = vmatpush1.bf16.msra.mxu0 0
        %5787 = vmatprep.subr.bf16.mxu0 0
        %5788 = vmatpush1.bf16.msra.mxu0 0
        %5789 = vmatprep.subr.bf16.mxu0 0
        %5790 = vmatpush1.bf16.msra.mxu0 %v5773
        %5791 = vmatprep.subr.bf16.mxu0 0
        %5792 = vmatpush2.bf16.msra.mxu0 0
        %5793 = vmatprep.subr.bf16.mxu0 0
        %5794 = vmatpush2.bf16.msra.mxu0 0
        %5795 = vmatprep.subr.bf16.mxu0 0
        %5796 = vmatpush2.bf16.msra.mxu0 0
        %5797 = vmatprep.subr.bf16.mxu0 0
        %5798 = vmatpush2.bf16.msra.mxu0 0
        %5799 = vmatprep.subr.bf16.mxu0 0
        %5800 = vmatpush2.bf16.msra.mxu0 0
        %5801 = vmatprep.subr.bf16.mxu0 0
        %5802 = vmatpush2.bf16.msra.mxu0 0
        %5803 = vmatprep.subr.bf16.mxu0 0
        %5804 = vmatpush2.bf16.msra.mxu0 0
        %5805 = vmatprep.subr.bf16.mxu0 0
        %5806 = vmatpush2.bf16.msra.mxu0 0
        %5807 = vmatprep.mubr.bf16.mxu0 0
        %5808 = vmatmul.mubr.bf16.gmra.mxu0 %v5770
        %v5809 = vpop.f32.mrf.mxu0
        %v5810 = vadd.f32 0.0, %v5809
        %v5811 = vpop.f32.mrf.mxu0
        %v5812 = vpop.f32.mrf.mxu0
        %v5813 = vpop.f32.mrf.mxu0
        %5814 = vdwg.mxu0
        %v5816 = vsel %vm2586, %v5664, 0
        %v5819 = vsel %vm2782, %v4728, 0
        %5821 = vmatprep.subr.bf16.mxu0 0
        %5822 = vmatpush1.bf16.msra.mxu0 0
        %5823 = vmatprep.subr.bf16.mxu0 0
        %5824 = vmatpush1.bf16.msra.mxu0 0
        %5825 = vmatprep.subr.bf16.mxu0 0
        %5826 = vmatpush1.bf16.msra.mxu0 0
        %5827 = vmatprep.subr.bf16.mxu0 0
        %5828 = vmatpush1.bf16.msra.mxu0 0
        %5829 = vmatprep.subr.bf16.mxu0 0
        %5830 = vmatpush1.bf16.msra.mxu0 0
        %5831 = vmatprep.subr.bf16.mxu0 0
        %5832 = vmatpush1.bf16.msra.mxu0 0
        %5833 = vmatprep.subr.bf16.mxu0 0
        %5834 = vmatpush1.bf16.msra.mxu0 0
        %5835 = vmatprep.subr.bf16.mxu0 0
        %5836 = vmatpush1.bf16.msra.mxu0 %v5819
        %5837 = vmatprep.subr.bf16.mxu0 0
        %5838 = vmatpush2.bf16.msra.mxu0 0
        %5839 = vmatprep.subr.bf16.mxu0 0
        %5840 = vmatpush2.bf16.msra.mxu0 0
        %5841 = vmatprep.subr.bf16.mxu0 0
        %5842 = vmatpush2.bf16.msra.mxu0 0
        %5843 = vmatprep.subr.bf16.mxu0 0
        %5844 = vmatpush2.bf16.msra.mxu0 0
        %5845 = vmatprep.subr.bf16.mxu0 0
        %5846 = vmatpush2.bf16.msra.mxu0 0
        %5847 = vmatprep.subr.bf16.mxu0 0
        %5848 = vmatpush2.bf16.msra.mxu0 0
        %5849 = vmatprep.subr.bf16.mxu0 0
        %5850 = vmatpush2.bf16.msra.mxu0 0
        %5851 = vmatprep.subr.bf16.mxu0 0
        %5852 = vmatpush2.bf16.msra.mxu0 0
        %5853 = vmatprep.mubr.bf16.mxu0 0
        %5854 = vmatmul.mubr.bf16.gmra.mxu0 %v5816
        %v5855 = vpop.f32.mrf.mxu0
        %v5856 = vadd.f32 0.0, %v5855
        %v5857 = vpop.f32.mrf.mxu0
        %v5858 = vpop.f32.mrf.mxu0
        %v5859 = vpop.f32.mrf.mxu0
        %5860 = vdwg.mxu0
        %v5862 = vsel %vm2586, %v5665, 0
        %v5865 = vsel %vm2782, %v4713, 0
        %5867 = vmatprep.subr.bf16.mxu0 0
        %5868 = vmatpush1.bf16.msra.mxu0 0
        %5869 = vmatprep.subr.bf16.mxu0 0
        %5870 = vmatpush1.bf16.msra.mxu0 0
        %5871 = vmatprep.subr.bf16.mxu0 0
        %5872 = vmatpush1.bf16.msra.mxu0 0
        %5873 = vmatprep.subr.bf16.mxu0 0
        %5874 = vmatpush1.bf16.msra.mxu0 0
        %5875 = vmatprep.subr.bf16.mxu0 0
        %5876 = vmatpush1.bf16.msra.mxu0 0
        %5877 = vmatprep.subr.bf16.mxu0 0
        %5878 = vmatpush1.bf16.msra.mxu0 0
        %5879 = vmatprep.subr.bf16.mxu0 0
        %5880 = vmatpush1.bf16.msra.mxu0 0
        %5881 = vmatprep.subr.bf16.mxu0 0
        %5882 = vmatpush1.bf16.msra.mxu0 %v5865
        %5883 = vmatprep.subr.bf16.mxu0 0
        %5884 = vmatpush2.bf16.msra.mxu0 0
        %5885 = vmatprep.subr.bf16.mxu0 0
        %5886 = vmatpush2.bf16.msra.mxu0 0
        %5887 = vmatprep.subr.bf16.mxu0 0
        %5888 = vmatpush2.bf16.msra.mxu0 0
        %5889 = vmatprep.subr.bf16.mxu0 0
        %5890 = vmatpush2.bf16.msra.mxu0 0
        %5891 = vmatprep.subr.bf16.mxu0 0
        %5892 = vmatpush2.bf16.msra.mxu0 0
        %5893 = vmatprep.subr.bf16.mxu0 0
        %5894 = vmatpush2.bf16.msra.mxu0 0
        %5895 = vmatprep.subr.bf16.mxu0 0
        %5896 = vmatpush2.bf16.msra.mxu0 0
        %5897 = vmatprep.subr.bf16.mxu0 0
        %5898 = vmatpush2.bf16.msra.mxu0 0
        %5899 = vmatprep.mubr.bf16.mxu0 0
        %5900 = vmatmul.mubr.bf16.gmra.mxu0 %v5862
        %v5901 = vpop.f32.mrf.mxu0
        %v5902 = vadd.f32 0.0, %v5901
        %v5903 = vpop.f32.mrf.mxu0
        %v5904 = vpop.f32.mrf.mxu0
        %v5905 = vpop.f32.mrf.mxu0
        %5906 = vdwg.mxu0
        %v5908 = vsel %vm2586, %v5666, 0
        %v5911 = vsel %vm2782, %v4719, 0
        %5913 = vmatprep.subr.bf16.mxu0 0
        %5914 = vmatpush1.bf16.msra.mxu0 0
        %5915 = vmatprep.subr.bf16.mxu0 0
        %5916 = vmatpush1.bf16.msra.mxu0 0
        %5917 = vmatprep.subr.bf16.mxu0 0
        %5918 = vmatpush1.bf16.msra.mxu0 0
        %5919 = vmatprep.subr.bf16.mxu0 0
        %5920 = vmatpush1.bf16.msra.mxu0 0
        %5921 = vmatprep.subr.bf16.mxu0 0
        %5922 = vmatpush1.bf16.msra.mxu0 0
        %5923 = vmatprep.subr.bf16.mxu0 0
        %5924 = vmatpush1.bf16.msra.mxu0 0
        %5925 = vmatprep.subr.bf16.mxu0 0
        %5926 = vmatpush1.bf16.msra.mxu0 0
        %5927 = vmatprep.subr.bf16.mxu0 0
        %5928 = vmatpush1.bf16.msra.mxu0 %v5911
        %5929 = vmatprep.subr.bf16.mxu0 0
        %5930 = vmatpush2.bf16.msra.mxu0 0
        %5931 = vmatprep.subr.bf16.mxu0 0
        %5932 = vmatpush2.bf16.msra.mxu0 0
        %5933 = vmatprep.subr.bf16.mxu0 0
        %5934 = vmatpush2.bf16.msra.mxu0 0
        %5935 = vmatprep.subr.bf16.mxu0 0
        %5936 = vmatpush2.bf16.msra.mxu0 0
        %5937 = vmatprep.subr.bf16.mxu0 0
        %5938 = vmatpush2.bf16.msra.mxu0 0
        %5939 = vmatprep.subr.bf16.mxu0 0
        %5940 = vmatpush2.bf16.msra.mxu0 0
        %5941 = vmatprep.subr.bf16.mxu0 0
        %5942 = vmatpush2.bf16.msra.mxu0 0
        %5943 = vmatprep.subr.bf16.mxu0 0
        %5944 = vmatpush2.bf16.msra.mxu0 0
        %5945 = vmatprep.mubr.bf16.mxu0 0
        %5946 = vmatmul.mubr.bf16.gmra.mxu0 %v5908
        %v5947 = vpop.f32.mrf.mxu0
        %v5948 = vadd.f32 0.0, %v5947
        %v5949 = vpop.f32.mrf.mxu0
        %v5950 = vpop.f32.mrf.mxu0
        %v5951 = vpop.f32.mrf.mxu0
        %5952 = vdwg.mxu0
        %v5954 = vsel %vm2586, %v5667, 0
        %v5957 = vsel %vm2782, %v4725, 0
        %5959 = vmatprep.subr.bf16.mxu0 0
        %5960 = vmatpush1.bf16.msra.mxu0 0
        %5961 = vmatprep.subr.bf16.mxu0 0
        %5962 = vmatpush1.bf16.msra.mxu0 0
        %5963 = vmatprep.subr.bf16.mxu0 0
        %5964 = vmatpush1.bf16.msra.mxu0 0
        %5965 = vmatprep.subr.bf16.mxu0 0
        %5966 = vmatpush1.bf16.msra.mxu0 0
        %5967 = vmatprep.subr.bf16.mxu0 0
        %5968 = vmatpush1.bf16.msra.mxu0 0
        %5969 = vmatprep.subr.bf16.mxu0 0
        %5970 = vmatpush1.bf16.msra.mxu0 0
        %5971 = vmatprep.subr.bf16.mxu0 0
        %5972 = vmatpush1.bf16.msra.mxu0 0
        %5973 = vmatprep.subr.bf16.mxu0 0
        %5974 = vmatpush1.bf16.msra.mxu0 %v5957
        %5975 = vmatprep.subr.bf16.mxu0 0
        %5976 = vmatpush2.bf16.msra.mxu0 0
        %5977 = vmatprep.subr.bf16.mxu0 0
        %5978 = vmatpush2.bf16.msra.mxu0 0
        %5979 = vmatprep.subr.bf16.mxu0 0
        %5980 = vmatpush2.bf16.msra.mxu0 0
        %5981 = vmatprep.subr.bf16.mxu0 0
        %5982 = vmatpush2.bf16.msra.mxu0 0
        %5983 = vmatprep.subr.bf16.mxu0 0
        %5984 = vmatpush2.bf16.msra.mxu0 0
        %5985 = vmatprep.subr.bf16.mxu0 0
        %5986 = vmatpush2.bf16.msra.mxu0 0
        %5987 = vmatprep.subr.bf16.mxu0 0
        %5988 = vmatpush2.bf16.msra.mxu0 0
        %5989 = vmatprep.subr.bf16.mxu0 0
        %5990 = vmatpush2.bf16.msra.mxu0 0
        %5991 = vmatprep.mubr.bf16.mxu0 0
        %5992 = vmatmul.mubr.bf16.gmra.mxu0 %v5954
        %v5993 = vpop.f32.mrf.mxu0
        %v5994 = vadd.f32 0.0, %v5993
        %v5995 = vpop.f32.mrf.mxu0
        %v5996 = vpop.f32.mrf.mxu0
        %v5997 = vpop.f32.mrf.mxu0
        %5998 = vdwg.mxu0
        %v6000 = vsel %vm2586, %v5668, 0
        %v6003 = vsel %vm2782, %v4731, 0
        %6005 = vmatprep.subr.bf16.mxu0 0
        %6006 = vmatpush1.bf16.msra.mxu0 0
        %6007 = vmatprep.subr.bf16.mxu0 0
        %6008 = vmatpush1.bf16.msra.mxu0 0
        %6009 = vmatprep.subr.bf16.mxu0 0
        %6010 = vmatpush1.bf16.msra.mxu0 0
        %6011 = vmatprep.subr.bf16.mxu0 0
        %6012 = vmatpush1.bf16.msra.mxu0 0
        %6013 = vmatprep.subr.bf16.mxu0 0
        %6014 = vmatpush1.bf16.msra.mxu0 0
        %6015 = vmatprep.subr.bf16.mxu0 0
        %6016 = vmatpush1.bf16.msra.mxu0 0
        %6017 = vmatprep.subr.bf16.mxu0 0
        %6018 = vmatpush1.bf16.msra.mxu0 0
        %6019 = vmatprep.subr.bf16.mxu0 0
        %6020 = vmatpush1.bf16.msra.mxu0 %v6003
        %6021 = vmatprep.subr.bf16.mxu0 0
        %6022 = vmatpush2.bf16.msra.mxu0 0
        %6023 = vmatprep.subr.bf16.mxu0 0
        %6024 = vmatpush2.bf16.msra.mxu0 0
        %6025 = vmatprep.subr.bf16.mxu0 0
        %6026 = vmatpush2.bf16.msra.mxu0 0
        %6027 = vmatprep.subr.bf16.mxu0 0
        %6028 = vmatpush2.bf16.msra.mxu0 0
        %6029 = vmatprep.subr.bf16.mxu0 0
        %6030 = vmatpush2.bf16.msra.mxu0 0
        %6031 = vmatprep.subr.bf16.mxu0 0
        %6032 = vmatpush2.bf16.msra.mxu0 0
        %6033 = vmatprep.subr.bf16.mxu0 0
        %6034 = vmatpush2.bf16.msra.mxu0 0
        %6035 = vmatprep.subr.bf16.mxu0 0
        %6036 = vmatpush2.bf16.msra.mxu0 0
        %6037 = vmatprep.mubr.bf16.mxu0 0
        %6038 = vmatmul.mubr.bf16.gmra.mxu0 %v6000
        %v6039 = vpop.f32.mrf.mxu0
        %v6040 = vadd.f32 0.0, %v6039
        %v6041 = vpop.f32.mrf.mxu0
        %v6042 = vpop.f32.mrf.mxu0
        %v6043 = vpop.f32.mrf.mxu0
        %6044 = vdwg.mxu0
        %v6046 = vsel %vm2586, %v5669, 0
        %v6049 = vsel %vm2782, %v4712, 0
        %6051 = vmatprep.subr.bf16.mxu0 0
        %6052 = vmatpush1.bf16.msra.mxu0 0
        %6053 = vmatprep.subr.bf16.mxu0 0
        %6054 = vmatpush1.bf16.msra.mxu0 0
        %6055 = vmatprep.subr.bf16.mxu0 0
        %6056 = vmatpush1.bf16.msra.mxu0 0
        %6057 = vmatprep.subr.bf16.mxu0 0
        %6058 = vmatpush1.bf16.msra.mxu0 0
        %6059 = vmatprep.subr.bf16.mxu0 0
        %6060 = vmatpush1.bf16.msra.mxu0 0
        %6061 = vmatprep.subr.bf16.mxu0 0
        %6062 = vmatpush1.bf16.msra.mxu0 0
        %6063 = vmatprep.subr.bf16.mxu0 0
        %6064 = vmatpush1.bf16.msra.mxu0 0
        %6065 = vmatprep.subr.bf16.mxu0 0
        %6066 = vmatpush1.bf16.msra.mxu0 %v6049
        %6067 = vmatprep.subr.bf16.mxu0 0
        %6068 = vmatpush2.bf16.msra.mxu0 0
        %6069 = vmatprep.subr.bf16.mxu0 0
        %6070 = vmatpush2.bf16.msra.mxu0 0
        %6071 = vmatprep.subr.bf16.mxu0 0
        %6072 = vmatpush2.bf16.msra.mxu0 0
        %6073 = vmatprep.subr.bf16.mxu0 0
        %6074 = vmatpush2.bf16.msra.mxu0 0
        %6075 = vmatprep.subr.bf16.mxu0 0
        %6076 = vmatpush2.bf16.msra.mxu0 0
        %6077 = vmatprep.subr.bf16.mxu0 0
        %6078 = vmatpush2.bf16.msra.mxu0 0
        %6079 = vmatprep.subr.bf16.mxu0 0
        %6080 = vmatpush2.bf16.msra.mxu0 0
        %6081 = vmatprep.subr.bf16.mxu0 0
        %6082 = vmatpush2.bf16.msra.mxu0 0
        %6083 = vmatprep.mubr.bf16.mxu0 0
        %6084 = vmatmul.mubr.bf16.gmra.mxu0 %v6046
        %v6085 = vpop.f32.mrf.mxu0
        %v6086 = vadd.f32 0.0, %v6085
        %v6087 = vpop.f32.mrf.mxu0
        %v6088 = vpop.f32.mrf.mxu0
        %v6089 = vpop.f32.mrf.mxu0
        %6090 = vdwg.mxu0
        %v6092 = vsel %vm2586, %v5670, 0
        %v6095 = vsel %vm2782, %v4718, 0
        %6097 = vmatprep.subr.bf16.mxu0 0
        %6098 = vmatpush1.bf16.msra.mxu0 0
        %6099 = vmatprep.subr.bf16.mxu0 0
        %6100 = vmatpush1.bf16.msra.mxu0 0
        %6101 = vmatprep.subr.bf16.mxu0 0
        %6102 = vmatpush1.bf16.msra.mxu0 0
        %6103 = vmatprep.subr.bf16.mxu0 0
        %6104 = vmatpush1.bf16.msra.mxu0 0
        %6105 = vmatprep.subr.bf16.mxu0 0
        %6106 = vmatpush1.bf16.msra.mxu0 0
        %6107 = vmatprep.subr.bf16.mxu0 0
        %6108 = vmatpush1.bf16.msra.mxu0 0
        %6109 = vmatprep.subr.bf16.mxu0 0
        %6110 = vmatpush1.bf16.msra.mxu0 0
        %6111 = vmatprep.subr.bf16.mxu0 0
        %6112 = vmatpush1.bf16.msra.mxu0 %v6095
        %6113 = vmatprep.subr.bf16.mxu0 0
        %6114 = vmatpush2.bf16.msra.mxu0 0
        %6115 = vmatprep.subr.bf16.mxu0 0
        %6116 = vmatpush2.bf16.msra.mxu0 0
        %6117 = vmatprep.subr.bf16.mxu0 0
        %6118 = vmatpush2.bf16.msra.mxu0 0
        %6119 = vmatprep.subr.bf16.mxu0 0
        %6120 = vmatpush2.bf16.msra.mxu0 0
        %6121 = vmatprep.subr.bf16.mxu0 0
        %6122 = vmatpush2.bf16.msra.mxu0 0
        %6123 = vmatprep.subr.bf16.mxu0 0
        %6124 = vmatpush2.bf16.msra.mxu0 0
        %6125 = vmatprep.subr.bf16.mxu0 0
        %6126 = vmatpush2.bf16.msra.mxu0 0
        %6127 = vmatprep.subr.bf16.mxu0 0
        %6128 = vmatpush2.bf16.msra.mxu0 0
        %6129 = vmatprep.mubr.bf16.mxu0 0
        %6130 = vmatmul.mubr.bf16.gmra.mxu0 %v6092
        %v6131 = vpop.f32.mrf.mxu0
        %v6132 = vadd.f32 0.0, %v6131
        %v6133 = vpop.f32.mrf.mxu0
        %v6134 = vpop.f32.mrf.mxu0
        %v6135 = vpop.f32.mrf.mxu0
        %6136 = vdwg.mxu0
        %v6138 = vsel %vm2586, %v5671, 0
        %v6141 = vsel %vm2782, %v4724, 0
        %6143 = vmatprep.subr.bf16.mxu0 0
        %6144 = vmatpush1.bf16.msra.mxu0 0
        %6145 = vmatprep.subr.bf16.mxu0 0
        %6146 = vmatpush1.bf16.msra.mxu0 0
        %6147 = vmatprep.subr.bf16.mxu0 0
        %6148 = vmatpush1.bf16.msra.mxu0 0
        %6149 = vmatprep.subr.bf16.mxu0 0
        %6150 = vmatpush1.bf16.msra.mxu0 0
        %6151 = vmatprep.subr.bf16.mxu0 0
        %6152 = vmatpush1.bf16.msra.mxu0 0
        %6153 = vmatprep.subr.bf16.mxu0 0
        %6154 = vmatpush1.bf16.msra.mxu0 0
        %6155 = vmatprep.subr.bf16.mxu0 0
        %6156 = vmatpush1.bf16.msra.mxu0 0
        %6157 = vmatprep.subr.bf16.mxu0 0
        %6158 = vmatpush1.bf16.msra.mxu0 %v6141
        %6159 = vmatprep.subr.bf16.mxu0 0
        %6160 = vmatpush2.bf16.msra.mxu0 0
        %6161 = vmatprep.subr.bf16.mxu0 0
        %6162 = vmatpush2.bf16.msra.mxu0 0
        %6163 = vmatprep.subr.bf16.mxu0 0
        %6164 = vmatpush2.bf16.msra.mxu0 0
        %6165 = vmatprep.subr.bf16.mxu0 0
        %6166 = vmatpush2.bf16.msra.mxu0 0
        %6167 = vmatprep.subr.bf16.mxu0 0
        %6168 = vmatpush2.bf16.msra.mxu0 0
        %6169 = vmatprep.subr.bf16.mxu0 0
        %6170 = vmatpush2.bf16.msra.mxu0 0
        %6171 = vmatprep.subr.bf16.mxu0 0
        %6172 = vmatpush2.bf16.msra.mxu0 0
        %6173 = vmatprep.subr.bf16.mxu0 0
        %6174 = vmatpush2.bf16.msra.mxu0 0
        %6175 = vmatprep.mubr.bf16.mxu0 0
        %6176 = vmatmul.mubr.bf16.gmra.mxu0 %v6138
        %v6177 = vpop.f32.mrf.mxu0
        %v6178 = vadd.f32 0.0, %v6177
        %v6179 = vpop.f32.mrf.mxu0
        %v6180 = vpop.f32.mrf.mxu0
        %v6181 = vpop.f32.mrf.mxu0
        %6182 = vdwg.mxu0
        %v6184 = vsel %vm2586, %v5672, 0
        %v6187 = vsel %vm2782, %v4730, 0
        %6189 = vmatprep.subr.bf16.mxu0 0
        %6190 = vmatpush1.bf16.msra.mxu0 0
        %6191 = vmatprep.subr.bf16.mxu0 0
        %6192 = vmatpush1.bf16.msra.mxu0 0
        %6193 = vmatprep.subr.bf16.mxu0 0
        %6194 = vmatpush1.bf16.msra.mxu0 0
        %6195 = vmatprep.subr.bf16.mxu0 0
        %6196 = vmatpush1.bf16.msra.mxu0 0
        %6197 = vmatprep.subr.bf16.mxu0 0
        %6198 = vmatpush1.bf16.msra.mxu0 0
        %6199 = vmatprep.subr.bf16.mxu0 0
        %6200 = vmatpush1.bf16.msra.mxu0 0
        %6201 = vmatprep.subr.bf16.mxu0 0
        %6202 = vmatpush1.bf16.msra.mxu0 0
        %6203 = vmatprep.subr.bf16.mxu0 0
        %6204 = vmatpush1.bf16.msra.mxu0 %v6187
        %6205 = vmatprep.subr.bf16.mxu0 0
        %6206 = vmatpush2.bf16.msra.mxu0 0
        %6207 = vmatprep.subr.bf16.mxu0 0
        %6208 = vmatpush2.bf16.msra.mxu0 0
        %6209 = vmatprep.subr.bf16.mxu0 0
        %6210 = vmatpush2.bf16.msra.mxu0 0
        %6211 = vmatprep.subr.bf16.mxu0 0
        %6212 = vmatpush2.bf16.msra.mxu0 0
        %6213 = vmatprep.subr.bf16.mxu0 0
        %6214 = vmatpush2.bf16.msra.mxu0 0
        %6215 = vmatprep.subr.bf16.mxu0 0
        %6216 = vmatpush2.bf16.msra.mxu0 0
        %6217 = vmatprep.subr.bf16.mxu0 0
        %6218 = vmatpush2.bf16.msra.mxu0 0
        %6219 = vmatprep.subr.bf16.mxu0 0
        %6220 = vmatpush2.bf16.msra.mxu0 0
        %6221 = vmatprep.mubr.bf16.mxu0 0
        %6222 = vmatmul.mubr.bf16.gmra.mxu0 %v6184
        %v6223 = vpop.f32.mrf.mxu0
        %v6224 = vadd.f32 0.0, %v6223
        %v6225 = vpop.f32.mrf.mxu0
        %v6226 = vpop.f32.mrf.mxu0
        %v6227 = vpop.f32.mrf.mxu0
        %6228 = vdwg.mxu0
        %v6230 = vsel %vm2586, %v5673, 0
        %v6233 = vsel %vm2782, %v4714, 0
        %6235 = vmatprep.subr.bf16.mxu0 0
        %6236 = vmatpush1.bf16.msra.mxu0 0
        %6237 = vmatprep.subr.bf16.mxu0 0
        %6238 = vmatpush1.bf16.msra.mxu0 0
        %6239 = vmatprep.subr.bf16.mxu0 0
        %6240 = vmatpush1.bf16.msra.mxu0 0
        %6241 = vmatprep.subr.bf16.mxu0 0
        %6242 = vmatpush1.bf16.msra.mxu0 0
        %6243 = vmatprep.subr.bf16.mxu0 0
        %6244 = vmatpush1.bf16.msra.mxu0 0
        %6245 = vmatprep.subr.bf16.mxu0 0
        %6246 = vmatpush1.bf16.msra.mxu0 0
        %6247 = vmatprep.subr.bf16.mxu0 0
        %6248 = vmatpush1.bf16.msra.mxu0 0
        %6249 = vmatprep.subr.bf16.mxu0 0
        %6250 = vmatpush1.bf16.msra.mxu0 %v6233
        %6251 = vmatprep.subr.bf16.mxu0 0
        %6252 = vmatpush2.bf16.msra.mxu0 0
        %6253 = vmatprep.subr.bf16.mxu0 0
        %6254 = vmatpush2.bf16.msra.mxu0 0
        %6255 = vmatprep.subr.bf16.mxu0 0
        %6256 = vmatpush2.bf16.msra.mxu0 0
        %6257 = vmatprep.subr.bf16.mxu0 0
        %6258 = vmatpush2.bf16.msra.mxu0 0
        %6259 = vmatprep.subr.bf16.mxu0 0
        %6260 = vmatpush2.bf16.msra.mxu0 0
        %6261 = vmatprep.subr.bf16.mxu0 0
        %6262 = vmatpush2.bf16.msra.mxu0 0
        %6263 = vmatprep.subr.bf16.mxu0 0
        %6264 = vmatpush2.bf16.msra.mxu0 0
        %6265 = vmatprep.subr.bf16.mxu0 0
        %6266 = vmatpush2.bf16.msra.mxu0 0
        %6267 = vmatprep.mubr.bf16.mxu0 0
        %6268 = vmatmul.mubr.bf16.gmra.mxu0 %v6230
        %v6269 = vpop.f32.mrf.mxu0
        %v6270 = vadd.f32 0.0, %v6269
        %v6271 = vpop.f32.mrf.mxu0
        %v6272 = vpop.f32.mrf.mxu0
        %v6273 = vpop.f32.mrf.mxu0
        %6274 = vdwg.mxu0
        %v6276 = vsel %vm2586, %v5674, 0
        %v6279 = vsel %vm2782, %v4720, 0
        %6281 = vmatprep.subr.bf16.mxu0 0
        %6282 = vmatpush1.bf16.msra.mxu0 0
        %6283 = vmatprep.subr.bf16.mxu0 0
        %6284 = vmatpush1.bf16.msra.mxu0 0
        %6285 = vmatprep.subr.bf16.mxu0 0
        %6286 = vmatpush1.bf16.msra.mxu0 0
        %6287 = vmatprep.subr.bf16.mxu0 0
        %6288 = vmatpush1.bf16.msra.mxu0 0
        %6289 = vmatprep.subr.bf16.mxu0 0
        %6290 = vmatpush1.bf16.msra.mxu0 0
        %6291 = vmatprep.subr.bf16.mxu0 0
        %6292 = vmatpush1.bf16.msra.mxu0 0
        %6293 = vmatprep.subr.bf16.mxu0 0
        %6294 = vmatpush1.bf16.msra.mxu0 0
        %6295 = vmatprep.subr.bf16.mxu0 0
        %6296 = vmatpush1.bf16.msra.mxu0 %v6279
        %6297 = vmatprep.subr.bf16.mxu0 0
        %6298 = vmatpush2.bf16.msra.mxu0 0
        %6299 = vmatprep.subr.bf16.mxu0 0
        %6300 = vmatpush2.bf16.msra.mxu0 0
        %6301 = vmatprep.subr.bf16.mxu0 0
        %6302 = vmatpush2.bf16.msra.mxu0 0
        %6303 = vmatprep.subr.bf16.mxu0 0
        %6304 = vmatpush2.bf16.msra.mxu0 0
        %6305 = vmatprep.subr.bf16.mxu0 0
        %6306 = vmatpush2.bf16.msra.mxu0 0
        %6307 = vmatprep.subr.bf16.mxu0 0
        %6308 = vmatpush2.bf16.msra.mxu0 0
        %6309 = vmatprep.subr.bf16.mxu0 0
        %6310 = vmatpush2.bf16.msra.mxu0 0
        %6311 = vmatprep.subr.bf16.mxu0 0
        %6312 = vmatpush2.bf16.msra.mxu0 0
        %6313 = vmatprep.mubr.bf16.mxu0 0
        %6314 = vmatmul.mubr.bf16.gmra.mxu0 %v6276
        %v6315 = vpop.f32.mrf.mxu0
        %v6316 = vadd.f32 0.0, %v6315
        %v6317 = vpop.f32.mrf.mxu0
        %v6318 = vpop.f32.mrf.mxu0
        %v6319 = vpop.f32.mrf.mxu0
        %6320 = vdwg.mxu0
        %v6322 = vsel %vm2586, %v5675, 0
        %v6325 = vsel %vm2782, %v4726, 0
        %6327 = vmatprep.subr.bf16.mxu0 0
        %6328 = vmatpush1.bf16.msra.mxu0 0
        %6329 = vmatprep.subr.bf16.mxu0 0
        %6330 = vmatpush1.bf16.msra.mxu0 0
        %6331 = vmatprep.subr.bf16.mxu0 0
        %6332 = vmatpush1.bf16.msra.mxu0 0
        %6333 = vmatprep.subr.bf16.mxu0 0
        %6334 = vmatpush1.bf16.msra.mxu0 0
        %6335 = vmatprep.subr.bf16.mxu0 0
        %6336 = vmatpush1.bf16.msra.mxu0 0
        %6337 = vmatprep.subr.bf16.mxu0 0
        %6338 = vmatpush1.bf16.msra.mxu0 0
        %6339 = vmatprep.subr.bf16.mxu0 0
        %6340 = vmatpush1.bf16.msra.mxu0 0
        %6341 = vmatprep.subr.bf16.mxu0 0
        %6342 = vmatpush1.bf16.msra.mxu0 %v6325
        %6343 = vmatprep.subr.bf16.mxu0 0
        %6344 = vmatpush2.bf16.msra.mxu0 0
        %6345 = vmatprep.subr.bf16.mxu0 0
        %6346 = vmatpush2.bf16.msra.mxu0 0
        %6347 = vmatprep.subr.bf16.mxu0 0
        %6348 = vmatpush2.bf16.msra.mxu0 0
        %6349 = vmatprep.subr.bf16.mxu0 0
        %6350 = vmatpush2.bf16.msra.mxu0 0
        %6351 = vmatprep.subr.bf16.mxu0 0
        %6352 = vmatpush2.bf16.msra.mxu0 0
        %6353 = vmatprep.subr.bf16.mxu0 0
        %6354 = vmatpush2.bf16.msra.mxu0 0
        %6355 = vmatprep.subr.bf16.mxu0 0
        %6356 = vmatpush2.bf16.msra.mxu0 0
        %6357 = vmatprep.subr.bf16.mxu0 0
        %6358 = vmatpush2.bf16.msra.mxu0 0
        %6359 = vmatprep.mubr.bf16.mxu0 0
        %6360 = vmatmul.mubr.bf16.gmra.mxu0 %v6322
        %v6361 = vpop.f32.mrf.mxu0
        %v6362 = vadd.f32 0.0, %v6361
        %v6363 = vpop.f32.mrf.mxu0
        %v6364 = vpop.f32.mrf.mxu0
        %v6365 = vpop.f32.mrf.mxu0
        %6366 = vdwg.mxu0
        %v6368 = vsel %vm2586, %v5676, 0
        %v6371 = vsel %vm2782, %v4732, 0
        %6373 = vmatprep.subr.bf16.mxu0 0
        %6374 = vmatpush1.bf16.msra.mxu0 0
        %6375 = vmatprep.subr.bf16.mxu0 0
        %6376 = vmatpush1.bf16.msra.mxu0 0
        %6377 = vmatprep.subr.bf16.mxu0 0
        %6378 = vmatpush1.bf16.msra.mxu0 0
        %6379 = vmatprep.subr.bf16.mxu0 0
        %6380 = vmatpush1.bf16.msra.mxu0 0
        %6381 = vmatprep.subr.bf16.mxu0 0
        %6382 = vmatpush1.bf16.msra.mxu0 0
        %6383 = vmatprep.subr.bf16.mxu0 0
        %6384 = vmatpush1.bf16.msra.mxu0 0
        %6385 = vmatprep.subr.bf16.mxu0 0
        %6386 = vmatpush1.bf16.msra.mxu0 0
        %6387 = vmatprep.subr.bf16.mxu0 0
        %6388 = vmatpush1.bf16.msra.mxu0 %v6371
        %6389 = vmatprep.subr.bf16.mxu0 0
        %6390 = vmatpush2.bf16.msra.mxu0 0
        %6391 = vmatprep.subr.bf16.mxu0 0
        %6392 = vmatpush2.bf16.msra.mxu0 0
        %6393 = vmatprep.subr.bf16.mxu0 0
        %6394 = vmatpush2.bf16.msra.mxu0 0
        %6395 = vmatprep.subr.bf16.mxu0 0
        %6396 = vmatpush2.bf16.msra.mxu0 0
        %6397 = vmatprep.subr.bf16.mxu0 0
        %6398 = vmatpush2.bf16.msra.mxu0 0
        %6399 = vmatprep.subr.bf16.mxu0 0
        %6400 = vmatpush2.bf16.msra.mxu0 0
        %6401 = vmatprep.subr.bf16.mxu0 0
        %6402 = vmatpush2.bf16.msra.mxu0 0
        %6403 = vmatprep.subr.bf16.mxu0 0
        %6404 = vmatpush2.bf16.msra.mxu0 0
        %6405 = vmatprep.mubr.bf16.mxu0 0
        %6406 = vmatmul.mubr.bf16.gmra.mxu0 %v6368
        %v6407 = vpop.f32.mrf.mxu0
        %v6408 = vadd.f32 0.0, %v6407
        %v6409 = vpop.f32.mrf.mxu0
        %v6410 = vpop.f32.mrf.mxu0
        %v6411 = vpop.f32.mrf.mxu0
        %6412 = vdwg.mxu0
        %v6413 = vpack.c.bf16 %v5718, %v5718
        %v6414 = vpack.c.bf16 %v5764, %v5764
        %v6415 = vpack.c.bf16 %v5810, %v5810
        %v6416 = vpack.c.bf16 %v5856, %v5856
        %v6417 = vpack.c.bf16 %v5902, %v5902
        %v6418 = vpack.c.bf16 %v5948, %v5948
        %v6419 = vpack.c.bf16 %v5994, %v5994
        %v6420 = vpack.c.bf16 %v6040, %v6040
        %v6421 = vpack.c.bf16 %v6086, %v6086
        %v6422 = vpack.c.bf16 %v6132, %v6132
        %v6423 = vpack.c.bf16 %v6178, %v6178
        %v6424 = vpack.c.bf16 %v6224, %v6224
        %v6425 = vpack.c.bf16 %v6270, %v6270
        %v6426 = vpack.c.bf16 %v6316, %v6316
        %v6427 = vpack.c.bf16 %v6362, %v6362
        %v6428 = vpack.c.bf16 %v6408, %v6408
        %6431 = vrot.lane.b32.xlu0 %v6414, 32
        %v6432 = vpop.permute.xlu0 %6431
        %6433 = vrot.lane.b32.xlu0 %v6422, 32
        %v6434 = vpop.permute.xlu0 %6433
        %6437 = vrot.lane.b32.xlu0 %v6415, 64
        %v6438 = vpop.permute.xlu0 %6437
        %6439 = vrot.lane.b32.xlu0 %v6423, 64
        %v6440 = vpop.permute.xlu0 %6439
        %6443 = vrot.lane.b32.xlu0 %v6416, 96
        %v6444 = vpop.permute.xlu0 %6443
        %6445 = vrot.lane.b32.xlu0 %v6424, 96
        %v6446 = vpop.permute.xlu0 %6445
        %6449 = vrot.lane.b32.xlu0 %v6418, 32
        %v6450 = vpop.permute.xlu0 %6449
        %6451 = vrot.lane.b32.xlu0 %v6426, 32
        %v6452 = vpop.permute.xlu0 %6451
        %6455 = vrot.lane.b32.xlu0 %v6419, 64
        %v6456 = vpop.permute.xlu0 %6455
        %6457 = vrot.lane.b32.xlu0 %v6427, 64
        %v6458 = vpop.permute.xlu0 %6457
        %6461 = vrot.lane.b32.xlu0 %v6420, 96
        %v6462 = vpop.permute.xlu0 %6461
        %6463 = vrot.lane.b32.xlu0 %v6428, 96
        %v6464 = vpop.permute.xlu0 %6463
        %v6467 = vsel %vm1833, %v6413, %v6432
        %v6470 = vsel %vm1833, %v6421, %v6434
        %v6472 = vsel %vm3574, %v6467, %v6438
        %v6474 = vsel %vm3574, %v6470, %v6440
        %v6476 = vsel %vm3579, %v6472, %v6444
        %v6478 = vsel %vm3579, %v6474, %v6446
        %v6481 = vsel %vm1833, %v6417, %v6450
        %v6484 = vsel %vm1833, %v6425, %v6452
        %v6486 = vsel %vm3574, %v6481, %v6456
        %v6488 = vsel %vm3574, %v6484, %v6458
        %v6490 = vsel %vm3579, %v6486, %v6462
        %v6492 = vsel %vm3579, %v6488, %v6464
        %v6497 = vunpack.c.l.b16 %v6476
        %v6498 = vunpack.c.l.b16 %v6490
        %v6499 = vunpack.c.l.b16 %v6478
        %v6500 = vunpack.c.l.b16 %v6492
        %v6501 = vld [vmem:[#allocation20] sm:$0xff]
        %v6502 = vld [vmem:[#allocation20 + $0x8] sm:$0xff]
        %v6503 = vld [vmem:[#allocation20 + $0x10] sm:$0xff]
        %v6504 = vld [vmem:[#allocation20 + $0x18] sm:$0xff]
        %v6505 = vld [vmem:[#allocation20 + $0x20] sm:$0xff]
        %v6506 = vld [vmem:[#allocation20 + $0x28] sm:$0xff]
        %v6507 = vld [vmem:[#allocation20 + $0x30] sm:$0xff]
        %v6508 = vld [vmem:[#allocation20 + $0x38] sm:$0xff]
        %v6509 = vld [vmem:[#allocation20 + $0x40] sm:$0xff]
        %v6510 = vld [vmem:[#allocation20 + $0x48] sm:$0xff]
        %v6511 = vld [vmem:[#allocation20 + $0x50] sm:$0xff]
        %v6512 = vld [vmem:[#allocation20 + $0x58] sm:$0xff]
        %v6513 = vld [vmem:[#allocation20 + $0x60] sm:$0xff]
        %v6514 = vld [vmem:[#allocation20 + $0x68] sm:$0xff]
        %v6515 = vld [vmem:[#allocation20 + $0x70] sm:$0xff]
        %v6516 = vld [vmem:[#allocation20 + $0x78] sm:$0xff]
        %v6517 = vld [vmem:[#allocation20 + $0x80] sm:$0xff]
        %v6518 = vld [vmem:[#allocation20 + $0x88] sm:$0xff]
        %v6519 = vld [vmem:[#allocation20 + $0x90] sm:$0xff]
        %v6520 = vld [vmem:[#allocation20 + $0x98] sm:$0xff]
        %v6521 = vld [vmem:[#allocation20 + $0xa0] sm:$0xff]
        %v6522 = vld [vmem:[#allocation20 + $0xa8] sm:$0xff]
        %v6523 = vld [vmem:[#allocation20 + $0xb0] sm:$0xff]
        %v6524 = vld [vmem:[#allocation20 + $0xb8] sm:$0xff]
        %v6525 = vld [vmem:[#allocation20 + $0xc0] sm:$0xff]
        %v6526 = vld [vmem:[#allocation20 + $0xc8] sm:$0xff]
        %v6527 = vld [vmem:[#allocation20 + $0xd0] sm:$0xff]
        %v6528 = vld [vmem:[#allocation20 + $0xd8] sm:$0xff]
        %v6529 = vld [vmem:[#allocation20 + $0xe0] sm:$0xff]
        %v6530 = vld [vmem:[#allocation20 + $0xe8] sm:$0xff]
        %v6531 = vld [vmem:[#allocation20 + $0xf0] sm:$0xff]
        %v6532 = vld [vmem:[#allocation20 + $0xf8] sm:$0xff]
        %v6533 = vld [vmem:[%s15] sm:$0x3]
        %v6535 = vlaneseq
        %v6536 = vshrl.u32 %v6535, 7
        %v6537 = vsub.s32 0, %v6536
        %v6538 = vrot.slane %v6533, %v6537
        %v6539 = vlaneseq
        %v6540 = vshrl.u32 %v6539, 7
        %v6541 = vsub.s32 1, %v6540
        %v6542 = vrot.slane %v6533, %v6541
        %v6545 = vpack.c.b16 %v6499, %v6497
        %v6546 = vpack.c.b16 %v6500, %v6498
        %v6581 = vunpack.c.l.b16 %v6501
        %v6582 = vunpack.c.h.b16 %v6501
        %v6583 = vunpack.c.l.b16 %v6502
        %v6584 = vunpack.c.h.b16 %v6502
        %v6585 = vunpack.c.l.b16 %v6503
        %v6586 = vunpack.c.h.b16 %v6503
        %v6587 = vunpack.c.l.b16 %v6504
        %v6588 = vunpack.c.h.b16 %v6504
        %v6589 = vunpack.c.l.b16 %v6505
        %v6590 = vunpack.c.h.b16 %v6505
        %v6591 = vunpack.c.l.b16 %v6506
        %v6592 = vunpack.c.h.b16 %v6506
        %v6593 = vunpack.c.l.b16 %v6507
        %v6594 = vunpack.c.h.b16 %v6507
        %v6595 = vunpack.c.l.b16 %v6508
        %v6596 = vunpack.c.h.b16 %v6508
        %v6597 = vunpack.c.l.b16 %v6509
        %v6598 = vunpack.c.h.b16 %v6509
        %v6599 = vunpack.c.l.b16 %v6510
        %v6600 = vunpack.c.h.b16 %v6510
        %v6601 = vunpack.c.l.b16 %v6511
        %v6602 = vunpack.c.h.b16 %v6511
        %v6603 = vunpack.c.l.b16 %v6512
        %v6604 = vunpack.c.h.b16 %v6512
        %v6605 = vunpack.c.l.b16 %v6513
        %v6606 = vunpack.c.h.b16 %v6513
        %v6607 = vunpack.c.l.b16 %v6514
        %v6608 = vunpack.c.h.b16 %v6514
        %v6609 = vunpack.c.l.b16 %v6515
        %v6610 = vunpack.c.h.b16 %v6515
        %v6611 = vunpack.c.l.b16 %v6516
        %v6612 = vunpack.c.h.b16 %v6516
        %v6613 = vunpack.c.l.b16 %v6517
        %v6614 = vunpack.c.h.b16 %v6517
        %v6615 = vunpack.c.l.b16 %v6518
        %v6616 = vunpack.c.h.b16 %v6518
        %v6617 = vunpack.c.l.b16 %v6519
        %v6618 = vunpack.c.h.b16 %v6519
        %v6619 = vunpack.c.l.b16 %v6520
        %v6620 = vunpack.c.h.b16 %v6520
        %v6621 = vunpack.c.l.b16 %v6521
        %v6622 = vunpack.c.h.b16 %v6521
        %v6623 = vunpack.c.l.b16 %v6522
        %v6624 = vunpack.c.h.b16 %v6522
        %v6625 = vunpack.c.l.b16 %v6523
        %v6626 = vunpack.c.h.b16 %v6523
        %v6627 = vunpack.c.l.b16 %v6524
        %v6628 = vunpack.c.h.b16 %v6524
        %v6629 = vunpack.c.l.b16 %v6525
        %v6630 = vunpack.c.h.b16 %v6525
        %v6631 = vunpack.c.l.b16 %v6526
        %v6632 = vunpack.c.h.b16 %v6526
        %v6633 = vunpack.c.l.b16 %v6527
        %v6634 = vunpack.c.h.b16 %v6527
        %v6635 = vunpack.c.l.b16 %v6528
        %v6636 = vunpack.c.h.b16 %v6528
        %v6637 = vunpack.c.l.b16 %v6529
        %v6638 = vunpack.c.h.b16 %v6529
        %v6639 = vunpack.c.l.b16 %v6530
        %v6640 = vunpack.c.h.b16 %v6530
        %v6641 = vunpack.c.l.b16 %v6531
        %v6642 = vunpack.c.h.b16 %v6531
        %v6643 = vunpack.c.l.b16 %v6532
        %v6644 = vunpack.c.h.b16 %v6532
        %v6645 = vpack.c.b16 %v6583, %v6581
        %v6646 = vpack.c.b16 %v6584, %v6582
        %v6647 = vpack.c.b16 %v6587, %v6585
        %v6648 = vpack.c.b16 %v6588, %v6586
        %v6649 = vpack.c.b16 %v6591, %v6589
        %v6650 = vpack.c.b16 %v6592, %v6590
        %v6651 = vpack.c.b16 %v6595, %v6593
        %v6652 = vpack.c.b16 %v6596, %v6594
        %v6653 = vpack.c.b16 %v6599, %v6597
        %v6654 = vpack.c.b16 %v6600, %v6598
        %v6655 = vpack.c.b16 %v6603, %v6601
        %v6656 = vpack.c.b16 %v6604, %v6602
        %v6657 = vpack.c.b16 %v6607, %v6605
        %v6658 = vpack.c.b16 %v6608, %v6606
        %v6659 = vpack.c.b16 %v6611, %v6609
        %v6660 = vpack.c.b16 %v6612, %v6610
        %v6661 = vpack.c.b16 %v6615, %v6613
        %v6662 = vpack.c.b16 %v6616, %v6614
        %v6663 = vpack.c.b16 %v6619, %v6617
        %v6664 = vpack.c.b16 %v6620, %v6618
        %v6665 = vpack.c.b16 %v6623, %v6621
        %v6666 = vpack.c.b16 %v6624, %v6622
        %v6667 = vpack.c.b16 %v6627, %v6625
        %v6668 = vpack.c.b16 %v6628, %v6626
        %v6669 = vpack.c.b16 %v6631, %v6629
        %v6670 = vpack.c.b16 %v6632, %v6630
        %v6671 = vpack.c.b16 %v6635, %v6633
        %v6672 = vpack.c.b16 %v6636, %v6634
        %v6673 = vpack.c.b16 %v6639, %v6637
        %v6674 = vpack.c.b16 %v6640, %v6638
        %v6675 = vpack.c.b16 %v6643, %v6641
        %v6676 = vpack.c.b16 %v6644, %v6642
        %6709 = vmatprep.subr.bf16.mxu0 %v6660
        %6710 = vmatpush1.bf16.msra.mxu0 %v6659
        %6711 = vmatprep.subr.bf16.mxu0 %v6658
        %6712 = vmatpush1.bf16.msra.mxu0 %v6657
        %6713 = vmatprep.subr.bf16.mxu0 %v6656
        %6714 = vmatpush1.bf16.msra.mxu0 %v6655
        %6715 = vmatprep.subr.bf16.mxu0 %v6654
        %6716 = vmatpush1.bf16.msra.mxu0 %v6653
        %6717 = vmatprep.subr.bf16.mxu0 %v6652
        %6718 = vmatpush1.bf16.msra.mxu0 %v6651
        %6719 = vmatprep.subr.bf16.mxu0 %v6650
        %6720 = vmatpush1.bf16.msra.mxu0 %v6649
        %6721 = vmatprep.subr.bf16.mxu0 %v6648
        %6722 = vmatpush1.bf16.msra.mxu0 %v6647
        %6723 = vmatprep.subr.bf16.mxu0 %v6646
        %6724 = vmatpush1.bf16.msra.mxu0 %v6645
        %6725 = vmatprep.subr.bf16.mxu0 %v6676
        %6726 = vmatpush2.bf16.msra.mxu0 %v6675
        %6727 = vmatprep.subr.bf16.mxu0 %v6674
        %6728 = vmatpush2.bf16.msra.mxu0 %v6673
        %6729 = vmatprep.subr.bf16.mxu0 %v6672
        %6730 = vmatpush2.bf16.msra.mxu0 %v6671
        %6731 = vmatprep.subr.bf16.mxu0 %v6670
        %6732 = vmatpush2.bf16.msra.mxu0 %v6669
        %6733 = vmatprep.subr.bf16.mxu0 %v6668
        %6734 = vmatpush2.bf16.msra.mxu0 %v6667
        %6735 = vmatprep.subr.bf16.mxu0 %v6666
        %6736 = vmatpush2.bf16.msra.mxu0 %v6665
        %6737 = vmatprep.subr.bf16.mxu0 %v6664
        %6738 = vmatpush2.bf16.msra.mxu0 %v6663
        %6739 = vmatprep.subr.bf16.mxu0 %v6662
        %6740 = vmatpush2.bf16.msra.mxu0 %v6661
        %6741 = vmatprep.mubr.bf16.mxu0 %v6546
        %6742 = vmatmul.mubr.bf16.gmra.mxu0 %v6545
        %v6743 = vpop.f32.mrf.mxu0
        %v6744 = vadd.f32 %v6538, %v6743
        %v6745 = vpop.f32.mrf.mxu0
        %v6746 = vadd.f32 %v6542, %v6745
        %v6747 = vpop.f32.mrf.mxu0
        %v6748 = vadd.f32 %v6538, %v6747
        %v6749 = vpop.f32.mrf.mxu0
        %v6750 = vadd.f32 %v6542, %v6749
        %6751 = vdwg.mxu0
        %v6752 = vadd.f32 %v3922, %v6744
        %v6753 = vadd.f32 %v3923, %v6746
        %v6754 = vadd.f32 %v3924, %v6748
        %v6755 = vadd.f32 %v3925, %v6750
        %v6756 = vadd.f32 %v6752, %v6753
        %6757 = vadd.xlane.f32.xlu0 %v6756
        %v6758 = vpop.xlane.xlu0 %6757
        %v6759 = vadd.f32 %v6754, %v6755
        %6760 = vadd.xlane.f32.xlu0 %v6759
        %v6761 = vpop.xlane.xlu0 %6760
        %v6762 = vmul.f32 %v6758, %v3867
        %v6763 = vmul.f32 %v6761, %v3867
        %v6764 = vsub.f32 %v6752, %v6762
        %v6765 = vsub.f32 %v6753, %v6762
        %v6766 = vsub.f32 %v6754, %v6763
        %v6767 = vsub.f32 %v6755, %v6763
        %v6768 = vmul.f32 %v6764, %v6764
        %v6769 = vmul.f32 %v6765, %v6765
        %v6770 = vmul.f32 %v6766, %v6766
        %v6771 = vmul.f32 %v6767, %v6767
        %v6772 = vadd.f32 %v6768, %v6769
        %6773 = vadd.xlane.f32.xlu0 %v6772
        %v6774 = vpop.xlane.xlu0 %6773
        %v6775 = vadd.f32 %v6770, %v6771
        %6776 = vadd.xlane.f32.xlu0 %v6775
        %v6777 = vpop.xlane.xlu0 %6776
        %v6778 = vmul.f32 %v6774, %v3867
        %v6779 = vmul.f32 %v6777, %v3867
        %v6780 = vadd.f32 %v6778, 1e-05
        %v6781 = vadd.f32 %v6779, 1e-05
        %v6782 = vrsqrt.pop %v6780
        %v6783 = vrsqrt.pop %v6781
        %v6784 = vmul.f32 %v6764, %v6782
        %v6785 = vmul.f32 %v6765, %v6782
        %v6786 = vmul.f32 %v6766, %v6783
        %v6787 = vmul.f32 %v6767, %v6783
        %v6788 = vld [vmem:[%s16] sm:$0x3]
        %v6790 = vlaneseq
        %v6791 = vshrl.u32 %v6790, 7
        %v6792 = vsub.s32 0, %v6791
        %v6793 = vrot.slane %v6788, %v6792
        %v6794 = vlaneseq
        %v6795 = vshrl.u32 %v6794, 7
        %v6796 = vsub.s32 1, %v6795
        %v6797 = vrot.slane %v6788, %v6796
        %v6800 = vmul.f32 %v6784, %v6793
        %v6801 = vmul.f32 %v6785, %v6797
        %v6802 = vmul.f32 %v6786, %v6793
        %v6803 = vmul.f32 %v6787, %v6797
        %v6804 = vld [vmem:[%s17] sm:$0x3]
        %v6806 = vlaneseq
        %v6807 = vshrl.u32 %v6806, 7
        %v6808 = vsub.s32 0, %v6807
        %v6809 = vrot.slane %v6804, %v6808
        %v6810 = vlaneseq
        %v6811 = vshrl.u32 %v6810, 7
        %v6812 = vsub.s32 1, %v6811
        %v6813 = vrot.slane %v6804, %v6812
        %v6816 = vadd.f32 %v6800, %v6809
        %v6817 = vadd.f32 %v6801, %v6813
        %v6818 = vadd.f32 %v6802, %v6809
        %v6819 = vadd.f32 %v6803, %v6813
        %v6820 = vpack.c.bf16 %v6818, %v6816
        %v6821 = vpack.c.bf16 %v6819, %v6817
        %v6822 = vld [vmem:[#allocation22] sm:$0xff]
        %v6823 = vld [vmem:[#allocation22 + $0x8] sm:$0xff]
        %v6824 = vld [vmem:[#allocation22 + $0x10] sm:$0xff]
        %v6825 = vld [vmem:[#allocation22 + $0x18] sm:$0xff]
        %v6826 = vld [vmem:[#allocation22 + $0x20] sm:$0xff]
        %v6827 = vld [vmem:[#allocation22 + $0x28] sm:$0xff]
        %v6828 = vld [vmem:[#allocation22 + $0x30] sm:$0xff]
        %v6829 = vld [vmem:[#allocation22 + $0x38] sm:$0xff]
        %v6830 = vld [vmem:[#allocation22 + $0x40] sm:$0xff]
        %v6831 = vld [vmem:[#allocation22 + $0x48] sm:$0xff]
        %v6832 = vld [vmem:[#allocation22 + $0x50] sm:$0xff]
        %v6833 = vld [vmem:[#allocation22 + $0x58] sm:$0xff]
        %v6834 = vld [vmem:[#allocation22 + $0x60] sm:$0xff]
        %v6835 = vld [vmem:[#allocation22 + $0x68] sm:$0xff]
        %v6836 = vld [vmem:[#allocation22 + $0x70] sm:$0xff]
        %v6837 = vld [vmem:[#allocation22 + $0x78] sm:$0xff]
        %v6838 = vld [vmem:[#allocation22 + $0x80] sm:$0xff]
        %v6839 = vld [vmem:[#allocation22 + $0x88] sm:$0xff]
        %v6840 = vld [vmem:[#allocation22 + $0x90] sm:$0xff]
        %v6841 = vld [vmem:[#allocation22 + $0x98] sm:$0xff]
        %v6842 = vld [vmem:[#allocation22 + $0xa0] sm:$0xff]
        %v6843 = vld [vmem:[#allocation22 + $0xa8] sm:$0xff]
        %v6844 = vld [vmem:[#allocation22 + $0xb0] sm:$0xff]
        %v6845 = vld [vmem:[#allocation22 + $0xb8] sm:$0xff]
        %v6846 = vld [vmem:[#allocation22 + $0xc0] sm:$0xff]
        %v6847 = vld [vmem:[#allocation22 + $0xc8] sm:$0xff]
        %v6848 = vld [vmem:[#allocation22 + $0xd0] sm:$0xff]
        %v6849 = vld [vmem:[#allocation22 + $0xd8] sm:$0xff]
        %v6850 = vld [vmem:[#allocation22 + $0xe0] sm:$0xff]
        %v6851 = vld [vmem:[#allocation22 + $0xe8] sm:$0xff]
        %v6852 = vld [vmem:[#allocation22 + $0xf0] sm:$0xff]
        %v6853 = vld [vmem:[#allocation22 + $0xf8] sm:$0xff]
        %v6854 = vld [vmem:[#allocation22 + $0x100] sm:$0xff]
        %v6855 = vld [vmem:[#allocation22 + $0x108] sm:$0xff]
        %v6856 = vld [vmem:[#allocation22 + $0x110] sm:$0xff]
        %v6857 = vld [vmem:[#allocation22 + $0x118] sm:$0xff]
        %v6858 = vld [vmem:[#allocation22 + $0x120] sm:$0xff]
        %v6859 = vld [vmem:[#allocation22 + $0x128] sm:$0xff]
        %v6860 = vld [vmem:[#allocation22 + $0x130] sm:$0xff]
        %v6861 = vld [vmem:[#allocation22 + $0x138] sm:$0xff]
        %v6862 = vld [vmem:[#allocation22 + $0x140] sm:$0xff]
        %v6863 = vld [vmem:[#allocation22 + $0x148] sm:$0xff]
        %v6864 = vld [vmem:[#allocation22 + $0x150] sm:$0xff]
        %v6865 = vld [vmem:[#allocation22 + $0x158] sm:$0xff]
        %v6866 = vld [vmem:[#allocation22 + $0x160] sm:$0xff]
        %v6867 = vld [vmem:[#allocation22 + $0x168] sm:$0xff]
        %v6868 = vld [vmem:[#allocation22 + $0x170] sm:$0xff]
        %v6869 = vld [vmem:[#allocation22 + $0x178] sm:$0xff]
        %v6870 = vld [vmem:[#allocation22 + $0x180] sm:$0xff]
        %v6871 = vld [vmem:[#allocation22 + $0x188] sm:$0xff]
        %v6872 = vld [vmem:[#allocation22 + $0x190] sm:$0xff]
        %v6873 = vld [vmem:[#allocation22 + $0x198] sm:$0xff]
        %v6874 = vld [vmem:[#allocation22 + $0x1a0] sm:$0xff]
        %v6875 = vld [vmem:[#allocation22 + $0x1a8] sm:$0xff]
        %v6876 = vld [vmem:[#allocation22 + $0x1b0] sm:$0xff]
        %v6877 = vld [vmem:[#allocation22 + $0x1b8] sm:$0xff]
        %v6878 = vld [vmem:[#allocation22 + $0x1c0] sm:$0xff]
        %v6879 = vld [vmem:[#allocation22 + $0x1c8] sm:$0xff]
        %v6880 = vld [vmem:[#allocation22 + $0x1d0] sm:$0xff]
        %v6881 = vld [vmem:[#allocation22 + $0x1d8] sm:$0xff]
        %v6882 = vld [vmem:[#allocation22 + $0x1e0] sm:$0xff]
        %v6883 = vld [vmem:[#allocation22 + $0x1e8] sm:$0xff]
        %v6884 = vld [vmem:[#allocation22 + $0x1f0] sm:$0xff]
        %v6885 = vld [vmem:[#allocation22 + $0x1f8] sm:$0xff]
        %v6886 = vld [vmem:[%s19] sm:$0xf]
        %v6888 = vlaneseq
        %v6889 = vshrl.u32 %v6888, 7
        %v6890 = vsub.s32 0, %v6889
        %v6891 = vrot.slane %v6886, %v6890
        %v6892 = vlaneseq
        %v6893 = vshrl.u32 %v6892, 7
        %v6894 = vsub.s32 1, %v6893
        %v6895 = vrot.slane %v6886, %v6894
        %v6896 = vlaneseq
        %v6897 = vshrl.u32 %v6896, 7
        %v6898 = vsub.s32 2, %v6897
        %v6899 = vrot.slane %v6886, %v6898
        %v6900 = vlaneseq
        %v6901 = vshrl.u32 %v6900, 7
        %v6902 = vsub.s32 3, %v6901
        %v6903 = vrot.slane %v6886, %v6902
        %v6972 = vunpack.c.l.b16 %v6822
        %v6973 = vunpack.c.h.b16 %v6822
        %v6974 = vunpack.c.l.b16 %v6823
        %v6975 = vunpack.c.h.b16 %v6823
        %v6976 = vunpack.c.l.b16 %v6824
        %v6977 = vunpack.c.h.b16 %v6824
        %v6978 = vunpack.c.l.b16 %v6825
        %v6979 = vunpack.c.h.b16 %v6825
        %v6980 = vunpack.c.l.b16 %v6826
        %v6981 = vunpack.c.h.b16 %v6826
        %v6982 = vunpack.c.l.b16 %v6827
        %v6983 = vunpack.c.h.b16 %v6827
        %v6984 = vunpack.c.l.b16 %v6828
        %v6985 = vunpack.c.h.b16 %v6828
        %v6986 = vunpack.c.l.b16 %v6829
        %v6987 = vunpack.c.h.b16 %v6829
        %v6988 = vunpack.c.l.b16 %v6830
        %v6989 = vunpack.c.h.b16 %v6830
        %v6990 = vunpack.c.l.b16 %v6831
        %v6991 = vunpack.c.h.b16 %v6831
        %v6992 = vunpack.c.l.b16 %v6832
        %v6993 = vunpack.c.h.b16 %v6832
        %v6994 = vunpack.c.l.b16 %v6833
        %v6995 = vunpack.c.h.b16 %v6833
        %v6996 = vunpack.c.l.b16 %v6834
        %v6997 = vunpack.c.h.b16 %v6834
        %v6998 = vunpack.c.l.b16 %v6835
        %v6999 = vunpack.c.h.b16 %v6835
        %v7000 = vunpack.c.l.b16 %v6836
        %v7001 = vunpack.c.h.b16 %v6836
        %v7002 = vunpack.c.l.b16 %v6837
        %v7003 = vunpack.c.h.b16 %v6837
        %v7004 = vunpack.c.l.b16 %v6838
        %v7005 = vunpack.c.h.b16 %v6838
        %v7006 = vunpack.c.l.b16 %v6839
        %v7007 = vunpack.c.h.b16 %v6839
        %v7008 = vunpack.c.l.b16 %v6840
        %v7009 = vunpack.c.h.b16 %v6840
        %v7010 = vunpack.c.l.b16 %v6841
        %v7011 = vunpack.c.h.b16 %v6841
        %v7012 = vunpack.c.l.b16 %v6842
        %v7013 = vunpack.c.h.b16 %v6842
        %v7014 = vunpack.c.l.b16 %v6843
        %v7015 = vunpack.c.h.b16 %v6843
        %v7016 = vunpack.c.l.b16 %v6844
        %v7017 = vunpack.c.h.b16 %v6844
        %v7018 = vunpack.c.l.b16 %v6845
        %v7019 = vunpack.c.h.b16 %v6845
        %v7020 = vunpack.c.l.b16 %v6846
        %v7021 = vunpack.c.h.b16 %v6846
        %v7022 = vunpack.c.l.b16 %v6847
        %v7023 = vunpack.c.h.b16 %v6847
        %v7024 = vunpack.c.l.b16 %v6848
        %v7025 = vunpack.c.h.b16 %v6848
        %v7026 = vunpack.c.l.b16 %v6849
        %v7027 = vunpack.c.h.b16 %v6849
        %v7028 = vunpack.c.l.b16 %v6850
        %v7029 = vunpack.c.h.b16 %v6850
        %v7030 = vunpack.c.l.b16 %v6851
        %v7031 = vunpack.c.h.b16 %v6851
        %v7032 = vunpack.c.l.b16 %v6852
        %v7033 = vunpack.c.h.b16 %v6852
        %v7034 = vunpack.c.l.b16 %v6853
        %v7035 = vunpack.c.h.b16 %v6853
        %v7036 = vunpack.c.l.b16 %v6854
        %v7037 = vunpack.c.h.b16 %v6854
        %v7038 = vunpack.c.l.b16 %v6855
        %v7039 = vunpack.c.h.b16 %v6855
        %v7040 = vunpack.c.l.b16 %v6856
        %v7041 = vunpack.c.h.b16 %v6856
        %v7042 = vunpack.c.l.b16 %v6857
        %v7043 = vunpack.c.h.b16 %v6857
        %v7044 = vunpack.c.l.b16 %v6858
        %v7045 = vunpack.c.h.b16 %v6858
        %v7046 = vunpack.c.l.b16 %v6859
        %v7047 = vunpack.c.h.b16 %v6859
        %v7048 = vunpack.c.l.b16 %v6860
        %v7049 = vunpack.c.h.b16 %v6860
        %v7050 = vunpack.c.l.b16 %v6861
        %v7051 = vunpack.c.h.b16 %v6861
        %v7052 = vunpack.c.l.b16 %v6862
        %v7053 = vunpack.c.h.b16 %v6862
        %v7054 = vunpack.c.l.b16 %v6863
        %v7055 = vunpack.c.h.b16 %v6863
        %v7056 = vunpack.c.l.b16 %v6864
        %v7057 = vunpack.c.h.b16 %v6864
        %v7058 = vunpack.c.l.b16 %v6865
        %v7059 = vunpack.c.h.b16 %v6865
        %v7060 = vunpack.c.l.b16 %v6866
        %v7061 = vunpack.c.h.b16 %v6866
        %v7062 = vunpack.c.l.b16 %v6867
        %v7063 = vunpack.c.h.b16 %v6867
        %v7064 = vunpack.c.l.b16 %v6868
        %v7065 = vunpack.c.h.b16 %v6868
        %v7066 = vunpack.c.l.b16 %v6869
        %v7067 = vunpack.c.h.b16 %v6869
        %v7068 = vunpack.c.l.b16 %v6870
        %v7069 = vunpack.c.h.b16 %v6870
        %v7070 = vunpack.c.l.b16 %v6871
        %v7071 = vunpack.c.h.b16 %v6871
        %v7072 = vunpack.c.l.b16 %v6872
        %v7073 = vunpack.c.h.b16 %v6872
        %v7074 = vunpack.c.l.b16 %v6873
        %v7075 = vunpack.c.h.b16 %v6873
        %v7076 = vunpack.c.l.b16 %v6874
        %v7077 = vunpack.c.h.b16 %v6874
        %v7078 = vunpack.c.l.b16 %v6875
        %v7079 = vunpack.c.h.b16 %v6875
        %v7080 = vunpack.c.l.b16 %v6876
        %v7081 = vunpack.c.h.b16 %v6876
        %v7082 = vunpack.c.l.b16 %v6877
        %v7083 = vunpack.c.h.b16 %v6877
        %v7084 = vunpack.c.l.b16 %v6878
        %v7085 = vunpack.c.h.b16 %v6878
        %v7086 = vunpack.c.l.b16 %v6879
        %v7087 = vunpack.c.h.b16 %v6879
        %v7088 = vunpack.c.l.b16 %v6880
        %v7089 = vunpack.c.h.b16 %v6880
        %v7090 = vunpack.c.l.b16 %v6881
        %v7091 = vunpack.c.h.b16 %v6881
        %v7092 = vunpack.c.l.b16 %v6882
        %v7093 = vunpack.c.h.b16 %v6882
        %v7094 = vunpack.c.l.b16 %v6883
        %v7095 = vunpack.c.h.b16 %v6883
        %v7096 = vunpack.c.l.b16 %v6884
        %v7097 = vunpack.c.h.b16 %v6884
        %v7098 = vunpack.c.l.b16 %v6885
        %v7099 = vunpack.c.h.b16 %v6885
        %v7100 = vpack.c.b16 %v6976, %v6972
        %v7101 = vpack.c.b16 %v6977, %v6973
        %v7102 = vpack.c.b16 %v6978, %v6974
        %v7103 = vpack.c.b16 %v6979, %v6975
        %v7104 = vpack.c.b16 %v6984, %v6980
        %v7105 = vpack.c.b16 %v6985, %v6981
        %v7106 = vpack.c.b16 %v6986, %v6982
        %v7107 = vpack.c.b16 %v6987, %v6983
        %v7108 = vpack.c.b16 %v6992, %v6988
        %v7109 = vpack.c.b16 %v6993, %v6989
        %v7110 = vpack.c.b16 %v6994, %v6990
        %v7111 = vpack.c.b16 %v6995, %v6991
        %v7112 = vpack.c.b16 %v7000, %v6996
        %v7113 = vpack.c.b16 %v7001, %v6997
        %v7114 = vpack.c.b16 %v7002, %v6998
        %v7115 = vpack.c.b16 %v7003, %v6999
        %v7116 = vpack.c.b16 %v7008, %v7004
        %v7117 = vpack.c.b16 %v7009, %v7005
        %v7118 = vpack.c.b16 %v7010, %v7006
        %v7119 = vpack.c.b16 %v7011, %v7007
        %v7120 = vpack.c.b16 %v7016, %v7012
        %v7121 = vpack.c.b16 %v7017, %v7013
        %v7122 = vpack.c.b16 %v7018, %v7014
        %v7123 = vpack.c.b16 %v7019, %v7015
        %v7124 = vpack.c.b16 %v7024, %v7020
        %v7125 = vpack.c.b16 %v7025, %v7021
        %v7126 = vpack.c.b16 %v7026, %v7022
        %v7127 = vpack.c.b16 %v7027, %v7023
        %v7128 = vpack.c.b16 %v7032, %v7028
        %v7129 = vpack.c.b16 %v7033, %v7029
        %v7130 = vpack.c.b16 %v7034, %v7030
        %v7131 = vpack.c.b16 %v7035, %v7031
        %v7132 = vpack.c.b16 %v7040, %v7036
        %v7133 = vpack.c.b16 %v7041, %v7037
        %v7134 = vpack.c.b16 %v7042, %v7038
        %v7135 = vpack.c.b16 %v7043, %v7039
        %v7136 = vpack.c.b16 %v7048, %v7044
        %v7137 = vpack.c.b16 %v7049, %v7045
        %v7138 = vpack.c.b16 %v7050, %v7046
        %v7139 = vpack.c.b16 %v7051, %v7047
        %v7140 = vpack.c.b16 %v7056, %v7052
        %v7141 = vpack.c.b16 %v7057, %v7053
        %v7142 = vpack.c.b16 %v7058, %v7054
        %v7143 = vpack.c.b16 %v7059, %v7055
        %v7144 = vpack.c.b16 %v7064, %v7060
        %v7145 = vpack.c.b16 %v7065, %v7061
        %v7146 = vpack.c.b16 %v7066, %v7062
        %v7147 = vpack.c.b16 %v7067, %v7063
        %v7148 = vpack.c.b16 %v7072, %v7068
        %v7149 = vpack.c.b16 %v7073, %v7069
        %v7150 = vpack.c.b16 %v7074, %v7070
        %v7151 = vpack.c.b16 %v7075, %v7071
        %v7152 = vpack.c.b16 %v7080, %v7076
        %v7153 = vpack.c.b16 %v7081, %v7077
        %v7154 = vpack.c.b16 %v7082, %v7078
        %v7155 = vpack.c.b16 %v7083, %v7079
        %v7156 = vpack.c.b16 %v7088, %v7084
        %v7157 = vpack.c.b16 %v7089, %v7085
        %v7158 = vpack.c.b16 %v7090, %v7086
        %v7159 = vpack.c.b16 %v7091, %v7087
        %v7160 = vpack.c.b16 %v7096, %v7092
        %v7161 = vpack.c.b16 %v7097, %v7093
        %v7162 = vpack.c.b16 %v7098, %v7094
        %v7163 = vpack.c.b16 %v7099, %v7095
        %7228 = vmatprep.subr.bf16.mxu0 %v7129
        %7229 = vmatpush1.bf16.msra.mxu0 %v7128
        %7230 = vmatprep.subr.bf16.mxu0 %v7125
        %7231 = vmatpush1.bf16.msra.mxu0 %v7124
        %7232 = vmatprep.subr.bf16.mxu0 %v7121
        %7233 = vmatpush1.bf16.msra.mxu0 %v7120
        %7234 = vmatprep.subr.bf16.mxu0 %v7117
        %7235 = vmatpush1.bf16.msra.mxu0 %v7116
        %7236 = vmatprep.subr.bf16.mxu0 %v7113
        %7237 = vmatpush1.bf16.msra.mxu0 %v7112
        %7238 = vmatprep.subr.bf16.mxu0 %v7109
        %7239 = vmatpush1.bf16.msra.mxu0 %v7108
        %7240 = vmatprep.subr.bf16.mxu0 %v7105
        %7241 = vmatpush1.bf16.msra.mxu0 %v7104
        %7242 = vmatprep.subr.bf16.mxu0 %v7101
        %7243 = vmatpush1.bf16.msra.mxu0 %v7100
        %7244 = vmatprep.subr.bf16.mxu0 %v7161
        %7245 = vmatpush2.bf16.msra.mxu0 %v7160
        %7246 = vmatprep.subr.bf16.mxu0 %v7157
        %7247 = vmatpush2.bf16.msra.mxu0 %v7156
        %7248 = vmatprep.subr.bf16.mxu0 %v7153
        %7249 = vmatpush2.bf16.msra.mxu0 %v7152
        %7250 = vmatprep.subr.bf16.mxu0 %v7149
        %7251 = vmatpush2.bf16.msra.mxu0 %v7148
        %7252 = vmatprep.subr.bf16.mxu0 %v7145
        %7253 = vmatpush2.bf16.msra.mxu0 %v7144
        %7254 = vmatprep.subr.bf16.mxu0 %v7141
        %7255 = vmatpush2.bf16.msra.mxu0 %v7140
        %7256 = vmatprep.subr.bf16.mxu0 %v7137
        %7257 = vmatpush2.bf16.msra.mxu0 %v7136
        %7258 = vmatprep.subr.bf16.mxu0 %v7133
        %7259 = vmatpush2.bf16.msra.mxu0 %v7132
        %7260 = vmatprep.mubr.bf16.mxu0 %v6821
        %7261 = vmatmul.mubr.bf16.gmra.mxu0 %v6820
        %v7262 = vpop.f32.mrf.mxu0
        %v7263 = vadd.f32 %v6891, %v7262
        %v7264 = vpop.f32.mrf.mxu0
        %v7265 = vadd.f32 %v6895, %v7264
        %v7266 = vpop.f32.mrf.mxu0
        %v7267 = vadd.f32 %v6891, %v7266
        %v7268 = vpop.f32.mrf.mxu0
        %v7269 = vadd.f32 %v6895, %v7268
        %7270 = vdwg.mxu0
        %7271 = vmatprep.subr.bf16.mxu0 %v7131
        %7272 = vmatpush1.bf16.msra.mxu0 %v7130
        %7273 = vmatprep.subr.bf16.mxu0 %v7127
        %7274 = vmatpush1.bf16.msra.mxu0 %v7126
        %7275 = vmatprep.subr.bf16.mxu0 %v7123
        %7276 = vmatpush1.bf16.msra.mxu0 %v7122
        %7277 = vmatprep.subr.bf16.mxu0 %v7119
        %7278 = vmatpush1.bf16.msra.mxu0 %v7118
        %7279 = vmatprep.subr.bf16.mxu0 %v7115
        %7280 = vmatpush1.bf16.msra.mxu0 %v7114
        %7281 = vmatprep.subr.bf16.mxu0 %v7111
        %7282 = vmatpush1.bf16.msra.mxu0 %v7110
        %7283 = vmatprep.subr.bf16.mxu0 %v7107
        %7284 = vmatpush1.bf16.msra.mxu0 %v7106
        %7285 = vmatprep.subr.bf16.mxu0 %v7103
        %7286 = vmatpush1.bf16.msra.mxu0 %v7102
        %7287 = vmatprep.subr.bf16.mxu0 %v7163
        %7288 = vmatpush2.bf16.msra.mxu0 %v7162
        %7289 = vmatprep.subr.bf16.mxu0 %v7159
        %7290 = vmatpush2.bf16.msra.mxu0 %v7158
        %7291 = vmatprep.subr.bf16.mxu0 %v7155
        %7292 = vmatpush2.bf16.msra.mxu0 %v7154
        %7293 = vmatprep.subr.bf16.mxu0 %v7151
        %7294 = vmatpush2.bf16.msra.mxu0 %v7150
        %7295 = vmatprep.subr.bf16.mxu0 %v7147
        %7296 = vmatpush2.bf16.msra.mxu0 %v7146
        %7297 = vmatprep.subr.bf16.mxu0 %v7143
        %7298 = vmatpush2.bf16.msra.mxu0 %v7142
        %7299 = vmatprep.subr.bf16.mxu0 %v7139
        %7300 = vmatpush2.bf16.msra.mxu0 %v7138
        %7301 = vmatprep.subr.bf16.mxu0 %v7135
        %7302 = vmatpush2.bf16.msra.mxu0 %v7134
        %7303 = vmatprep.mubr.bf16.mxu0 %v6821
        %7304 = vmatmul.mubr.bf16.gmra.mxu0 %v6820
        %v7305 = vpop.f32.mrf.mxu0
        %v7306 = vadd.f32 %v6899, %v7305
        %v7307 = vpop.f32.mrf.mxu0
        %v7308 = vadd.f32 %v6903, %v7307
        %v7309 = vpop.f32.mrf.mxu0
        %v7310 = vadd.f32 %v6899, %v7309
        %v7311 = vpop.f32.mrf.mxu0
        %v7312 = vadd.f32 %v6903, %v7311
        %7313 = vdwg.mxu0
        %v7314 = vmax.f32 %v7263, 0.0
        %v7315 = vmax.f32 %v7265, 0.0
        %v7316 = vmax.f32 %v7306, 0.0
        %v7317 = vmax.f32 %v7308, 0.0
        %v7318 = vmax.f32 %v7267, 0.0
        %v7319 = vmax.f32 %v7269, 0.0
        %v7320 = vmax.f32 %v7310, 0.0
        %v7321 = vmax.f32 %v7312, 0.0
        %v7322 = vpack.c.bf16 %v7318, %v7314
        %v7323 = vpack.c.bf16 %v7319, %v7315
        %v7324 = vpack.c.bf16 %v7320, %v7316
        %v7325 = vpack.c.bf16 %v7321, %v7317
        %v7326 = vld [vmem:[#allocation23] sm:$0xff]
        %v7327 = vld [vmem:[#allocation23 + $0x8] sm:$0xff]
        %v7328 = vld [vmem:[#allocation23 + $0x10] sm:$0xff]
        %v7329 = vld [vmem:[#allocation23 + $0x18] sm:$0xff]
        %v7330 = vld [vmem:[#allocation23 + $0x20] sm:$0xff]
        %v7331 = vld [vmem:[#allocation23 + $0x28] sm:$0xff]
        %v7332 = vld [vmem:[#allocation23 + $0x30] sm:$0xff]
        %v7333 = vld [vmem:[#allocation23 + $0x38] sm:$0xff]
        %v7334 = vld [vmem:[#allocation23 + $0x40] sm:$0xff]
        %v7335 = vld [vmem:[#allocation23 + $0x48] sm:$0xff]
        %v7336 = vld [vmem:[#allocation23 + $0x50] sm:$0xff]
        %v7337 = vld [vmem:[#allocation23 + $0x58] sm:$0xff]
        %v7338 = vld [vmem:[#allocation23 + $0x60] sm:$0xff]
        %v7339 = vld [vmem:[#allocation23 + $0x68] sm:$0xff]
        %v7340 = vld [vmem:[#allocation23 + $0x70] sm:$0xff]
        %v7341 = vld [vmem:[#allocation23 + $0x78] sm:$0xff]
        %v7342 = vld [vmem:[#allocation23 + $0x80] sm:$0xff]
        %v7343 = vld [vmem:[#allocation23 + $0x88] sm:$0xff]
        %v7344 = vld [vmem:[#allocation23 + $0x90] sm:$0xff]
        %v7345 = vld [vmem:[#allocation23 + $0x98] sm:$0xff]
        %v7346 = vld [vmem:[#allocation23 + $0xa0] sm:$0xff]
        %v7347 = vld [vmem:[#allocation23 + $0xa8] sm:$0xff]
        %v7348 = vld [vmem:[#allocation23 + $0xb0] sm:$0xff]
        %v7349 = vld [vmem:[#allocation23 + $0xb8] sm:$0xff]
        %v7350 = vld [vmem:[#allocation23 + $0xc0] sm:$0xff]
        %v7351 = vld [vmem:[#allocation23 + $0xc8] sm:$0xff]
        %v7352 = vld [vmem:[#allocation23 + $0xd0] sm:$0xff]
        %v7353 = vld [vmem:[#allocation23 + $0xd8] sm:$0xff]
        %v7354 = vld [vmem:[#allocation23 + $0xe0] sm:$0xff]
        %v7355 = vld [vmem:[#allocation23 + $0xe8] sm:$0xff]
        %v7356 = vld [vmem:[#allocation23 + $0xf0] sm:$0xff]
        %v7357 = vld [vmem:[#allocation23 + $0xf8] sm:$0xff]
        %v7358 = vld [vmem:[#allocation23 + $0x100] sm:$0xff]
        %v7359 = vld [vmem:[#allocation23 + $0x108] sm:$0xff]
        %v7360 = vld [vmem:[#allocation23 + $0x110] sm:$0xff]
        %v7361 = vld [vmem:[#allocation23 + $0x118] sm:$0xff]
        %v7362 = vld [vmem:[#allocation23 + $0x120] sm:$0xff]
        %v7363 = vld [vmem:[#allocation23 + $0x128] sm:$0xff]
        %v7364 = vld [vmem:[#allocation23 + $0x130] sm:$0xff]
        %v7365 = vld [vmem:[#allocation23 + $0x138] sm:$0xff]
        %v7366 = vld [vmem:[#allocation23 + $0x140] sm:$0xff]
        %v7367 = vld [vmem:[#allocation23 + $0x148] sm:$0xff]
        %v7368 = vld [vmem:[#allocation23 + $0x150] sm:$0xff]
        %v7369 = vld [vmem:[#allocation23 + $0x158] sm:$0xff]
        %v7370 = vld [vmem:[#allocation23 + $0x160] sm:$0xff]
        %v7371 = vld [vmem:[#allocation23 + $0x168] sm:$0xff]
        %v7372 = vld [vmem:[#allocation23 + $0x170] sm:$0xff]
        %v7373 = vld [vmem:[#allocation23 + $0x178] sm:$0xff]
        %v7374 = vld [vmem:[#allocation23 + $0x180] sm:$0xff]
        %v7375 = vld [vmem:[#allocation23 + $0x188] sm:$0xff]
        %v7376 = vld [vmem:[#allocation23 + $0x190] sm:$0xff]
        %v7377 = vld [vmem:[#allocation23 + $0x198] sm:$0xff]
        %v7378 = vld [vmem:[#allocation23 + $0x1a0] sm:$0xff]
        %v7379 = vld [vmem:[#allocation23 + $0x1a8] sm:$0xff]
        %v7380 = vld [vmem:[#allocation23 + $0x1b0] sm:$0xff]
        %v7381 = vld [vmem:[#allocation23 + $0x1b8] sm:$0xff]
        %v7382 = vld [vmem:[#allocation23 + $0x1c0] sm:$0xff]
        %v7383 = vld [vmem:[#allocation23 + $0x1c8] sm:$0xff]
        %v7384 = vld [vmem:[#allocation23 + $0x1d0] sm:$0xff]
        %v7385 = vld [vmem:[#allocation23 + $0x1d8] sm:$0xff]
        %v7386 = vld [vmem:[#allocation23 + $0x1e0] sm:$0xff]
        %v7387 = vld [vmem:[#allocation23 + $0x1e8] sm:$0xff]
        %v7388 = vld [vmem:[#allocation23 + $0x1f0] sm:$0xff]
        %v7389 = vld [vmem:[#allocation23 + $0x1f8] sm:$0xff]
        %v7390 = vld [vmem:[%s21] sm:$0x3]
        %v7392 = vlaneseq
        %v7393 = vshrl.u32 %v7392, 7
        %v7394 = vsub.s32 0, %v7393
        %v7395 = vrot.slane %v7390, %v7394
        %v7396 = vlaneseq
        %v7397 = vshrl.u32 %v7396, 7
        %v7398 = vsub.s32 1, %v7397
        %v7399 = vrot.slane %v7390, %v7398
        %v7466 = vunpack.c.l.b16 %v7326
        %v7467 = vunpack.c.h.b16 %v7326
        %v7468 = vunpack.c.l.b16 %v7327
        %v7469 = vunpack.c.h.b16 %v7327
        %v7470 = vunpack.c.l.b16 %v7328
        %v7471 = vunpack.c.h.b16 %v7328
        %v7472 = vunpack.c.l.b16 %v7329
        %v7473 = vunpack.c.h.b16 %v7329
        %v7474 = vunpack.c.l.b16 %v7330
        %v7475 = vunpack.c.h.b16 %v7330
        %v7476 = vunpack.c.l.b16 %v7331
        %v7477 = vunpack.c.h.b16 %v7331
        %v7478 = vunpack.c.l.b16 %v7332
        %v7479 = vunpack.c.h.b16 %v7332
        %v7480 = vunpack.c.l.b16 %v7333
        %v7481 = vunpack.c.h.b16 %v7333
        %v7482 = vunpack.c.l.b16 %v7334
        %v7483 = vunpack.c.h.b16 %v7334
        %v7484 = vunpack.c.l.b16 %v7335
        %v7485 = vunpack.c.h.b16 %v7335
        %v7486 = vunpack.c.l.b16 %v7336
        %v7487 = vunpack.c.h.b16 %v7336
        %v7488 = vunpack.c.l.b16 %v7337
        %v7489 = vunpack.c.h.b16 %v7337
        %v7490 = vunpack.c.l.b16 %v7338
        %v7491 = vunpack.c.h.b16 %v7338
        %v7492 = vunpack.c.l.b16 %v7339
        %v7493 = vunpack.c.h.b16 %v7339
        %v7494 = vunpack.c.l.b16 %v7340
        %v7495 = vunpack.c.h.b16 %v7340
        %v7496 = vunpack.c.l.b16 %v7341
        %v7497 = vunpack.c.h.b16 %v7341
        %v7498 = vunpack.c.l.b16 %v7342
        %v7499 = vunpack.c.h.b16 %v7342
        %v7500 = vunpack.c.l.b16 %v7343
        %v7501 = vunpack.c.h.b16 %v7343
        %v7502 = vunpack.c.l.b16 %v7344
        %v7503 = vunpack.c.h.b16 %v7344
        %v7504 = vunpack.c.l.b16 %v7345
        %v7505 = vunpack.c.h.b16 %v7345
        %v7506 = vunpack.c.l.b16 %v7346
        %v7507 = vunpack.c.h.b16 %v7346
        %v7508 = vunpack.c.l.b16 %v7347
        %v7509 = vunpack.c.h.b16 %v7347
        %v7510 = vunpack.c.l.b16 %v7348
        %v7511 = vunpack.c.h.b16 %v7348
        %v7512 = vunpack.c.l.b16 %v7349
        %v7513 = vunpack.c.h.b16 %v7349
        %v7514 = vunpack.c.l.b16 %v7350
        %v7515 = vunpack.c.h.b16 %v7350
        %v7516 = vunpack.c.l.b16 %v7351
        %v7517 = vunpack.c.h.b16 %v7351
        %v7518 = vunpack.c.l.b16 %v7352
        %v7519 = vunpack.c.h.b16 %v7352
        %v7520 = vunpack.c.l.b16 %v7353
        %v7521 = vunpack.c.h.b16 %v7353
        %v7522 = vunpack.c.l.b16 %v7354
        %v7523 = vunpack.c.h.b16 %v7354
        %v7524 = vunpack.c.l.b16 %v7355
        %v7525 = vunpack.c.h.b16 %v7355
        %v7526 = vunpack.c.l.b16 %v7356
        %v7527 = vunpack.c.h.b16 %v7356
        %v7528 = vunpack.c.l.b16 %v7357
        %v7529 = vunpack.c.h.b16 %v7357
        %v7530 = vunpack.c.l.b16 %v7358
        %v7531 = vunpack.c.h.b16 %v7358
        %v7532 = vunpack.c.l.b16 %v7359
        %v7533 = vunpack.c.h.b16 %v7359
        %v7534 = vunpack.c.l.b16 %v7360
        %v7535 = vunpack.c.h.b16 %v7360
        %v7536 = vunpack.c.l.b16 %v7361
        %v7537 = vunpack.c.h.b16 %v7361
        %v7538 = vunpack.c.l.b16 %v7362
        %v7539 = vunpack.c.h.b16 %v7362
        %v7540 = vunpack.c.l.b16 %v7363
        %v7541 = vunpack.c.h.b16 %v7363
        %v7542 = vunpack.c.l.b16 %v7364
        %v7543 = vunpack.c.h.b16 %v7364
        %v7544 = vunpack.c.l.b16 %v7365
        %v7545 = vunpack.c.h.b16 %v7365
        %v7546 = vunpack.c.l.b16 %v7366
        %v7547 = vunpack.c.h.b16 %v7366
        %v7548 = vunpack.c.l.b16 %v7367
        %v7549 = vunpack.c.h.b16 %v7367
        %v7550 = vunpack.c.l.b16 %v7368
        %v7551 = vunpack.c.h.b16 %v7368
        %v7552 = vunpack.c.l.b16 %v7369
        %v7553 = vunpack.c.h.b16 %v7369
        %v7554 = vunpack.c.l.b16 %v7370
        %v7555 = vunpack.c.h.b16 %v7370
        %v7556 = vunpack.c.l.b16 %v7371
        %v7557 = vunpack.c.h.b16 %v7371
        %v7558 = vunpack.c.l.b16 %v7372
        %v7559 = vunpack.c.h.b16 %v7372
        %v7560 = vunpack.c.l.b16 %v7373
        %v7561 = vunpack.c.h.b16 %v7373
        %v7562 = vunpack.c.l.b16 %v7374
        %v7563 = vunpack.c.h.b16 %v7374
        %v7564 = vunpack.c.l.b16 %v7375
        %v7565 = vunpack.c.h.b16 %v7375
        %v7566 = vunpack.c.l.b16 %v7376
        %v7567 = vunpack.c.h.b16 %v7376
        %v7568 = vunpack.c.l.b16 %v7377
        %v7569 = vunpack.c.h.b16 %v7377
        %v7570 = vunpack.c.l.b16 %v7378
        %v7571 = vunpack.c.h.b16 %v7378
        %v7572 = vunpack.c.l.b16 %v7379
        %v7573 = vunpack.c.h.b16 %v7379
        %v7574 = vunpack.c.l.b16 %v7380
        %v7575 = vunpack.c.h.b16 %v7380
        %v7576 = vunpack.c.l.b16 %v7381
        %v7577 = vunpack.c.h.b16 %v7381
        %v7578 = vunpack.c.l.b16 %v7382
        %v7579 = vunpack.c.h.b16 %v7382
        %v7580 = vunpack.c.l.b16 %v7383
        %v7581 = vunpack.c.h.b16 %v7383
        %v7582 = vunpack.c.l.b16 %v7384
        %v7583 = vunpack.c.h.b16 %v7384
        %v7584 = vunpack.c.l.b16 %v7385
        %v7585 = vunpack.c.h.b16 %v7385
        %v7586 = vunpack.c.l.b16 %v7386
        %v7587 = vunpack.c.h.b16 %v7386
        %v7588 = vunpack.c.l.b16 %v7387
        %v7589 = vunpack.c.h.b16 %v7387
        %v7590 = vunpack.c.l.b16 %v7388
        %v7591 = vunpack.c.h.b16 %v7388
        %v7592 = vunpack.c.l.b16 %v7389
        %v7593 = vunpack.c.h.b16 %v7389
        %v7594 = vpack.c.b16 %v7468, %v7466
        %v7595 = vpack.c.b16 %v7469, %v7467
        %v7596 = vpack.c.b16 %v7472, %v7470
        %v7597 = vpack.c.b16 %v7473, %v7471
        %v7598 = vpack.c.b16 %v7476, %v7474
        %v7599 = vpack.c.b16 %v7477, %v7475
        %v7600 = vpack.c.b16 %v7480, %v7478
        %v7601 = vpack.c.b16 %v7481, %v7479
        %v7602 = vpack.c.b16 %v7484, %v7482
        %v7603 = vpack.c.b16 %v7485, %v7483
        %v7604 = vpack.c.b16 %v7488, %v7486
        %v7605 = vpack.c.b16 %v7489, %v7487
        %v7606 = vpack.c.b16 %v7492, %v7490
        %v7607 = vpack.c.b16 %v7493, %v7491
        %v7608 = vpack.c.b16 %v7496, %v7494
        %v7609 = vpack.c.b16 %v7497, %v7495
        %v7610 = vpack.c.b16 %v7500, %v7498
        %v7611 = vpack.c.b16 %v7501, %v7499
        %v7612 = vpack.c.b16 %v7504, %v7502
        %v7613 = vpack.c.b16 %v7505, %v7503
        %v7614 = vpack.c.b16 %v7508, %v7506
        %v7615 = vpack.c.b16 %v7509, %v7507
        %v7616 = vpack.c.b16 %v7512, %v7510
        %v7617 = vpack.c.b16 %v7513, %v7511
        %v7618 = vpack.c.b16 %v7516, %v7514
        %v7619 = vpack.c.b16 %v7517, %v7515
        %v7620 = vpack.c.b16 %v7520, %v7518
        %v7621 = vpack.c.b16 %v7521, %v7519
        %v7622 = vpack.c.b16 %v7524, %v7522
        %v7623 = vpack.c.b16 %v7525, %v7523
        %v7624 = vpack.c.b16 %v7528, %v7526
        %v7625 = vpack.c.b16 %v7529, %v7527
        %v7626 = vpack.c.b16 %v7532, %v7530
        %v7627 = vpack.c.b16 %v7533, %v7531
        %v7628 = vpack.c.b16 %v7536, %v7534
        %v7629 = vpack.c.b16 %v7537, %v7535
        %v7630 = vpack.c.b16 %v7540, %v7538
        %v7631 = vpack.c.b16 %v7541, %v7539
        %v7632 = vpack.c.b16 %v7544, %v7542
        %v7633 = vpack.c.b16 %v7545, %v7543
        %v7634 = vpack.c.b16 %v7548, %v7546
        %v7635 = vpack.c.b16 %v7549, %v7547
        %v7636 = vpack.c.b16 %v7552, %v7550
        %v7637 = vpack.c.b16 %v7553, %v7551
        %v7638 = vpack.c.b16 %v7556, %v7554
        %v7639 = vpack.c.b16 %v7557, %v7555
        %v7640 = vpack.c.b16 %v7560, %v7558
        %v7641 = vpack.c.b16 %v7561, %v7559
        %v7642 = vpack.c.b16 %v7564, %v7562
        %v7643 = vpack.c.b16 %v7565, %v7563
        %v7644 = vpack.c.b16 %v7568, %v7566
        %v7645 = vpack.c.b16 %v7569, %v7567
        %v7646 = vpack.c.b16 %v7572, %v7570
        %v7647 = vpack.c.b16 %v7573, %v7571
        %v7648 = vpack.c.b16 %v7576, %v7574
        %v7649 = vpack.c.b16 %v7577, %v7575
        %v7650 = vpack.c.b16 %v7580, %v7578
        %v7651 = vpack.c.b16 %v7581, %v7579
        %v7652 = vpack.c.b16 %v7584, %v7582
        %v7653 = vpack.c.b16 %v7585, %v7583
        %v7654 = vpack.c.b16 %v7588, %v7586
        %v7655 = vpack.c.b16 %v7589, %v7587
        %v7656 = vpack.c.b16 %v7592, %v7590
        %v7657 = vpack.c.b16 %v7593, %v7591
        %7722 = vmatprep.subr.bf16.mxu0 %v7609
        %7723 = vmatpush1.bf16.msra.mxu0 %v7608
        %7724 = vmatprep.subr.bf16.mxu0 %v7607
        %7725 = vmatpush1.bf16.msra.mxu0 %v7606
        %7726 = vmatprep.subr.bf16.mxu0 %v7605
        %7727 = vmatpush1.bf16.msra.mxu0 %v7604
        %7728 = vmatprep.subr.bf16.mxu0 %v7603
        %7729 = vmatpush1.bf16.msra.mxu0 %v7602
        %7730 = vmatprep.subr.bf16.mxu0 %v7601
        %7731 = vmatpush1.bf16.msra.mxu0 %v7600
        %7732 = vmatprep.subr.bf16.mxu0 %v7599
        %7733 = vmatpush1.bf16.msra.mxu0 %v7598
        %7734 = vmatprep.subr.bf16.mxu0 %v7597
        %7735 = vmatpush1.bf16.msra.mxu0 %v7596
        %7736 = vmatprep.subr.bf16.mxu0 %v7595
        %7737 = vmatpush1.bf16.msra.mxu0 %v7594
        %7738 = vmatprep.subr.bf16.mxu0 %v7625
        %7739 = vmatpush2.bf16.msra.mxu0 %v7624
        %7740 = vmatprep.subr.bf16.mxu0 %v7623
        %7741 = vmatpush2.bf16.msra.mxu0 %v7622
        %7742 = vmatprep.subr.bf16.mxu0 %v7621
        %7743 = vmatpush2.bf16.msra.mxu0 %v7620
        %7744 = vmatprep.subr.bf16.mxu0 %v7619
        %7745 = vmatpush2.bf16.msra.mxu0 %v7618
        %7746 = vmatprep.subr.bf16.mxu0 %v7617
        %7747 = vmatpush2.bf16.msra.mxu0 %v7616
        %7748 = vmatprep.subr.bf16.mxu0 %v7615
        %7749 = vmatpush2.bf16.msra.mxu0 %v7614
        %7750 = vmatprep.subr.bf16.mxu0 %v7613
        %7751 = vmatpush2.bf16.msra.mxu0 %v7612
        %7752 = vmatprep.subr.bf16.mxu0 %v7611
        %7753 = vmatpush2.bf16.msra.mxu0 %v7610
        %7754 = vmatprep.mubr.bf16.mxu0 %v7323
        %7755 = vmatmul.mubr.bf16.gmra.mxu0 %v7322
        %v7756 = vpop.f32.mrf.mxu0
        %v7757 = vadd.f32 %v7395, %v7756
        %v7758 = vpop.f32.mrf.mxu0
        %v7759 = vadd.f32 %v7399, %v7758
        %v7760 = vpop.f32.mrf.mxu0
        %v7761 = vadd.f32 %v7395, %v7760
        %v7762 = vpop.f32.mrf.mxu0
        %v7763 = vadd.f32 %v7399, %v7762
        %7764 = vdwg.mxu0
        %7765 = vmatprep.subr.bf16.mxu0 %v7641
        %7766 = vmatpush1.bf16.msra.mxu0 %v7640
        %7767 = vmatprep.subr.bf16.mxu0 %v7639
        %7768 = vmatpush1.bf16.msra.mxu0 %v7638
        %7769 = vmatprep.subr.bf16.mxu0 %v7637
        %7770 = vmatpush1.bf16.msra.mxu0 %v7636
        %7771 = vmatprep.subr.bf16.mxu0 %v7635
        %7772 = vmatpush1.bf16.msra.mxu0 %v7634
        %7773 = vmatprep.subr.bf16.mxu0 %v7633
        %7774 = vmatpush1.bf16.msra.mxu0 %v7632
        %7775 = vmatprep.subr.bf16.mxu0 %v7631
        %7776 = vmatpush1.bf16.msra.mxu0 %v7630
        %7777 = vmatprep.subr.bf16.mxu0 %v7629
        %7778 = vmatpush1.bf16.msra.mxu0 %v7628
        %7779 = vmatprep.subr.bf16.mxu0 %v7627
        %7780 = vmatpush1.bf16.msra.mxu0 %v7626
        %7781 = vmatprep.subr.bf16.mxu0 %v7657
        %7782 = vmatpush2.bf16.msra.mxu0 %v7656
        %7783 = vmatprep.subr.bf16.mxu0 %v7655
        %7784 = vmatpush2.bf16.msra.mxu0 %v7654
        %7785 = vmatprep.subr.bf16.mxu0 %v7653
        %7786 = vmatpush2.bf16.msra.mxu0 %v7652
        %7787 = vmatprep.subr.bf16.mxu0 %v7651
        %7788 = vmatpush2.bf16.msra.mxu0 %v7650
        %7789 = vmatprep.subr.bf16.mxu0 %v7649
        %7790 = vmatpush2.bf16.msra.mxu0 %v7648
        %7791 = vmatprep.subr.bf16.mxu0 %v7647
        %7792 = vmatpush2.bf16.msra.mxu0 %v7646
        %7793 = vmatprep.subr.bf16.mxu0 %v7645
        %7794 = vmatpush2.bf16.msra.mxu0 %v7644
        %7795 = vmatprep.subr.bf16.mxu0 %v7643
        %7796 = vmatpush2.bf16.msra.mxu0 %v7642
        %7797 = vmatprep.mubr.bf16.mxu0 %v7325
        %7798 = vmatmul.mubr.bf16.gmra.mxu0 %v7324
        %v7799 = vpop.f32.mrf.mxu0
        %v7800 = vadd.f32 %v7757, %v7799
        %v7801 = vpop.f32.mrf.mxu0
        %v7802 = vadd.f32 %v7759, %v7801
        %v7803 = vpop.f32.mrf.mxu0
        %v7804 = vadd.f32 %v7761, %v7803
        %v7805 = vpop.f32.mrf.mxu0
        %v7806 = vadd.f32 %v7763, %v7805
        %7807 = vdwg.mxu0
        %v7808 = vadd.f32 %v6816, %v7800
        %v7809 = vadd.f32 %v6817, %v7802
        %v7810 = vadd.f32 %v6818, %v7804
        %v7811 = vadd.f32 %v6819, %v7806
        %v7812 = vadd.f32 %v7808, %v7809
        %7813 = vadd.xlane.f32.xlu0 %v7812
        %v7814 = vpop.xlane.xlu0 %7813
        %v7815 = vadd.f32 %v7810, %v7811
        %7816 = vadd.xlane.f32.xlu0 %v7815
        %v7817 = vpop.xlane.xlu0 %7816
        %v7818 = vmul.f32 %v7814, %v3867
        %v7819 = vmul.f32 %v7817, %v3867
        %v7820 = vsub.f32 %v7808, %v7818
        %v7821 = vsub.f32 %v7809, %v7818
        %v7822 = vsub.f32 %v7810, %v7819
        %v7823 = vsub.f32 %v7811, %v7819
        %v7824 = vmul.f32 %v7820, %v7820
        %v7825 = vmul.f32 %v7821, %v7821
        %v7826 = vmul.f32 %v7822, %v7822
        %v7827 = vmul.f32 %v7823, %v7823
        %v7828 = vadd.f32 %v7824, %v7825
        %7829 = vadd.xlane.f32.xlu0 %v7828
        %v7830 = vpop.xlane.xlu0 %7829
        %v7831 = vadd.f32 %v7826, %v7827
        %7832 = vadd.xlane.f32.xlu0 %v7831
        %v7833 = vpop.xlane.xlu0 %7832
        %v7834 = vmul.f32 %v7830, %v3867
        %v7835 = vmul.f32 %v7833, %v3867
        %v7836 = vadd.f32 %v7834, 1e-05
        %v7837 = vadd.f32 %v7835, 1e-05
        %v7838 = vrsqrt.pop %v7836
        %v7839 = vrsqrt.pop %v7837
        %v7840 = vmul.f32 %v7820, %v7838
        %v7841 = vmul.f32 %v7821, %v7838
        %v7842 = vmul.f32 %v7822, %v7839
        %v7843 = vmul.f32 %v7823, %v7839
        %v7844 = vld [vmem:[%s22] sm:$0x3]
        %v7846 = vlaneseq
        %v7847 = vshrl.u32 %v7846, 7
        %v7848 = vsub.s32 0, %v7847
        %v7849 = vrot.slane %v7844, %v7848
        %v7850 = vlaneseq
        %v7851 = vshrl.u32 %v7850, 7
        %v7852 = vsub.s32 1, %v7851
        %v7853 = vrot.slane %v7844, %v7852
        %v7856 = vmul.f32 %v7840, %v7849
        %v7857 = vmul.f32 %v7841, %v7853
        %v7858 = vmul.f32 %v7842, %v7849
        %v7859 = vmul.f32 %v7843, %v7853
        %v7860 = vld [vmem:[%s23] sm:$0x3]
        %v7862 = vlaneseq
        %v7863 = vshrl.u32 %v7862, 7
        %v7864 = vsub.s32 0, %v7863
        %v7865 = vrot.slane %v7860, %v7864
        %v7866 = vlaneseq
        %v7867 = vshrl.u32 %v7866, 7
        %v7868 = vsub.s32 1, %v7867
        %v7869 = vrot.slane %v7860, %v7868
        %v7872 = vadd.f32 %v7856, %v7865
        %v7873 = vadd.f32 %v7857, %v7869
        %v7874 = vadd.f32 %v7858, %v7865
        %v7875 = vadd.f32 %v7859, %v7869
        %7876 = vst [vmem:[%s1019] sm:$0xff] %v7872
        %7877 = vst [vmem:[%s1019 + $0x8] sm:$0xff] %v7873
        %7878 = vst [vmem:[%s1019 + $0x10] sm:$0xff] %v7874
        %7879 = vst [vmem:[%s1019 + $0x18] sm:$0xff] %v7875
        %s7880 = sand.u32 %s584, 1
        %s7881 = scalar_lea.sflag [#allocation4], %s7880
        %s7882 = sand.u32 %s584, 1
        %s7883 = smul.addr %s7882, 32
        %s7884 = scalar_lea.vmem [#allocation25], %s7883
        // Predicated region
        $region173: #{tpu_custom_call.1} parent=115 // pred_check
          %p7885 = pneg %p594
        $region174: #{tpu_custom_call.1} parent=115 // pred_check_branch
          %7887 = sbr.rel (%p7885) target = $region176
        $region175: #{tpu_custom_call.1} parent=115 // pred_region
          %s7888 = smul.u32 2, %s52
          %s7890 = ssub.s32 512, 512
          %7891 = vsyncadd %s7881, %s7890
          %s7892 = smul.addr %s7888, 2
          %s7893 = smul.addr %s7892, 128
          %s7894 = scalar_lea.hbm %s24, %s7893
          %s7895 = sshll.u32 %s7884, 4
          %s7896 = int_to_ptr.vmem [resolvable:$true] %s7895
          %7901 = dma.vmem_to_hbm [thread:$0]  %s7896, 512, %s7894, %s7881, 256, 256, 16
        $region176: #{tpu_custom_call.1} parent=115 // pred_fallthru
          _
      $region116: #{tpu_custom_call.1} parent=5 // pred_fallthru
        _
      %p7902 = scmp.le.s32.totalorder 2, %s47
      // Predicated region
      $region177: #{tpu_custom_call.1} parent=5 // pred_check
        %p7903 = pneg %p7902
      $region178: #{tpu_custom_call.1} parent=5 // pred_check_branch
        %7905 = sbr.rel (%p7903) target = $region180
      $region179: #{tpu_custom_call.1} parent=5 // pred_region
        %s7906 = ssub.s32 %s47, 2
        // Predicated region
        $region181: #{tpu_custom_call.1} parent=179 // pred_check
          %p7907 = pneg %p600
        $region182: #{tpu_custom_call.1} parent=179 // pred_check_branch
          %7909 = sbr.rel (%p7907) target = $region184
        $region183: #{tpu_custom_call.1} parent=179 // pred_region
          %s7910 = sand.u32 %s585, 1
          %s7911 = scalar_lea.sflag [#allocation4], %s7910
          %s7912 = sand.u32 %s585, 1
          %s7913 = smul.addr %s7912, 32
          %s7914 = scalar_lea.vmem [#allocation25], %s7913
          %7915 = dma.done %s7911, 512
        $region184: #{tpu_custom_call.1} parent=179 // pred_fallthru
          _
      $region180: #{tpu_custom_call.1} parent=5 // pred_fallthru
        _
    $region6: #{tpu_custom_call.1} parent=1 // loop_footer
      %s51 = sadd.s32 1, %s47
    $region7: #{tpu_custom_call.1} parent=1 // loop_footer_branch
      %46 = sbr.rel target = $region3
    $region8: #{tpu_custom_call.1} parent=1 // loop_exit
      _
    %7916 = vsyncpa [#allocation3], 1
    %s7917 = scalar_lea.sflag [#allocation3], 1
    %7918 = vsyncpa %s7917, 1
    %7919 = vsyncpa [#allocation6], 1
    %s7920 = scalar_lea.sflag [#allocation6], 1
    %7921 = vsyncpa %s7920, 1
    %7922 = vsyncpa [#allocation9], 1
    %s7923 = scalar_lea.sflag [#allocation9], 1
    %7924 = vsyncpa %s7923, 1
    %7925 = vsyncpa [#allocation12], 1
    %7926 = vsyncpa [#allocation15], 1
    %7927 = vsyncpa [#allocation18], 1
    %7928 = vsyncpa [#allocation21], 1
    %7929 = vsyncpa [#allocation24], 1
    %7930 = vsyncpa [#allocation4], 1
    %s7931 = scalar_lea.sflag [#allocation4], 1
    %7932 = vsyncpa %s7931, 1

</llo_original>
